<compile_context>
chip_gen: v7x
topology: tpu7x:2x2x1
jax: 0.10.0
libtpu: 0.0.40
codegen_flags: <defaults>
</compile_context>

<pallas_src>
import functools

import jax
import jax.numpy as jnp
from jax import lax
from jax.experimental import pallas as pl
from jax.experimental.pallas import tpu as pltpu

K = 5          # kernel size of both conv and conv_transpose
PAD = 2        # padding of both (=> "same" spatial size at stride 1)
KK = K * K
_SQRT_HALF = 0.7071067811865476


def _round_up(x, m):
    return (x + m - 1) // m * m


def _fused_conv_convt_gelu_kernel(x_ref, w1_ref, b1_ref, w2_ref, b2_ref,
                                  qmask_ref, o_ref, v1p_ref,
                                  *, c1_p, cout_p, wp, nq):
    # ---------- conv (cin -> c1): in-kernel im2col as 25 shifted matmuls ----------
    acc1 = jnp.zeros((c1_p, nq), jnp.float32)
    for idx in range(KK):
        ky, kx = idx // K, idx % K
        off = ky * wp + kx                      # static flat shift of the padded image
        acc1 = acc1 + jnp.dot(w1_ref[idx], x_ref[:, pl.ds(off, nq)],
                              preferred_element_type=jnp.float32)
    # bias + mask: zero the wrap-around / past-last-row lanes so the next layer
    # sees an exactly zero-padded activation.
    v1 = (acc1 + b1_ref[...]) * qmask_ref[...]

    # ---------- keep v1 resident in VMEM as a zero-padded flat image ----------
    v1p_ref[...] = jnp.zeros_like(v1p_ref)
    v1p_ref[:, pl.ds(PAD * wp + PAD, nq)] = v1

    # ---------- conv_transpose (c1 -> cout): == conv with spatially flipped kernel,
    # swapped channels, padding K-1-PAD (= PAD here) ----------
    acc2 = jnp.zeros((cout_p, nq), jnp.float32)
    for idx in range(KK):
        ky, kx = idx // K, idx % K
        off = ky * wp + kx
        acc2 = acc2 + jnp.dot(w2_ref[idx], v1p_ref[:, pl.ds(off, nq)],
                              preferred_element_type=jnp.float32)
    v2 = acc2 + b2_ref[...]

    # ---------- fused exact erf-GELU epilogue: 0.5*v2*(erf(v2/sqrt(2)) + 1) ----------
    o_ref[...] = (v2 * 0.5) * (lax.erf(v2 * _SQRT_HALF) + 1.0)


def forward(x_nchw, w_conv, b_conv, w_convT, b_convT):
    """Pallas equivalent of Model.forward (Conv2d -> ConvTranspose2d -> erf-GELU)."""
    n, cin, h, w = x_nchw.shape
    assert n == 1, "kernel is specialized to batch size 1"
    c1 = w_conv.shape[0]
    cout = w_convT.shape[1]
    assert w_conv.shape == (c1, cin, K, K)
    assert w_convT.shape == (c1, cout, K, K)

    wp, hp = w + 2 * PAD, h + 2 * PAD
    cin_p = _round_up(cin, 8)
    c1_p = _round_up(c1, 8)
    cout_p = _round_up(cout, 8)
    nq = _round_up(h * wp, 128)                            # lane-dense padded spatial extent
    xlen = _round_up(max(hp * wp, nq + (K - 1) * (wp + 1)), 128)

    # Flattened zero-padded input image: (cin_p, xlen), channels on sublanes.
    x_pad = jnp.pad(x_nchw[0], ((0, cin_p - cin), (PAD, PAD), (PAD, PAD)))
    xflat = jnp.pad(x_pad.reshape(cin_p, hp * wp), ((0, 0), (0, xlen - hp * wp)))

    # Conv weight as 25 aligned (c1_p, cin_p) slabs, slot order (ky, kx).
    w1s = jnp.transpose(w_conv, (2, 3, 0, 1))                              # (K, K, c1, cin)
    w1s = jnp.pad(w1s, ((0, 0), (0, 0), (0, c1_p - c1), (0, cin_p - cin)))
    w1s = w1s.reshape(KK, c1_p, cin_p)
    b1c = jnp.pad(b_conv, (0, c1_p - c1)).reshape(c1_p, 1)

    # ConvTranspose (stride=1, pad=2): flip spatially, swap in/out channels.
    w2s = jnp.transpose(jnp.flip(w_convT, axis=(2, 3)), (2, 3, 1, 0))      # (K, K, cout, c1)
    w2s = jnp.pad(w2s, ((0, 0), (0, 0), (0, cout_p - cout), (0, c1_p - c1)))
    w2s = w2s.reshape(KK, cout_p, c1_p)
    b2c = jnp.pad(b_convT, (0, cout_p - cout)).reshape(cout_p, 1)

    # Validity mask of the lane-dense spatial index q = y*wp + x.
    q = jnp.arange(nq, dtype=jnp.int32)
    qmask = (((q % wp) < w) & (q < h * wp)).astype(jnp.float32).reshape(1, nq)

    kernel = functools.partial(_fused_conv_convt_gelu_kernel,
                               c1_p=c1_p, cout_p=cout_p, wp=wp, nq=nq)

    out = pl.pallas_call(
        kernel,
        out_shape=jax.ShapeDtypeStruct((cout_p, nq), jnp.float32),
        in_specs=[pl.BlockSpec(memory_space=pltpu.MemorySpace.VMEM)] * 6,
        out_specs=pl.BlockSpec(memory_space=pltpu.MemorySpace.VMEM),
        scratch_shapes=[pltpu.VMEM((c1_p, xlen), jnp.float32)],  # VMEM-resident padded v1
    )(xflat, w1s, b1c, w2s, b2c, qmask)

    # Crop the lane-padding / wp-stride garbage columns; result is already NCHW.
    return out[:cout, : h * wp].reshape(cout, h, wp)[:, :, :w][None]


if __name__ == "__main__":
    key = jax.random.PRNGKey(0)
    k_x, k_w1, k_b1, k_w2, k_b2 = jax.random.split(key, 5)

    # Deterministic synthetic parameters (shapes from Model.__init__)
    w_conv = 0.1 * jax.random.normal(k_w1, (9, 6, 5, 5), dtype=jnp.float32)
    b_conv = 0.1 * jax.random.normal(k_b1, (9,), dtype=jnp.float32)
    w_convT = 0.1 * jax.random.normal(k_w2, (9, 6, 5, 5), dtype=jnp.float32)
    b_convT = 0.1 * jax.random.normal(k_b2, (6,), dtype=jnp.float32)

    # Input like x1 = torch.randn(1, 6, 20, 20)
    x1 = jax.random.normal(k_x, (1, 6, 20, 20), dtype=jnp.float32)

    out = jax.jit(forward)(x1, w_conv, b_conv, w_convT, b_convT)
    out = jax.block_until_ready(out)
    assert out.shape == (1, 6, 20, 20), out.shape

    # Independent XLA reference: real conv + equivalent flipped-kernel conv for the
    # transposed conv, followed by the exact erf-GELU of the module.
    dn = ("NCHW", "OIHW", "NCHW")
    hp = lax.Precision.HIGHEST
    v1_ref = lax.conv_general_dilated(
        x1, w_conv, window_strides=(1, 1), padding=((PAD, PAD), (PAD, PAD)),
        dimension_numbers=dn, precision=hp) + b_conv[None, :, None, None]
    w2_eq = jnp.transpose(jnp.flip(w_convT, axis=(2, 3)), (1, 0, 2, 3))   # (6, 9, 5, 5) OIHW
    v2_ref = lax.conv_general_dilated(
        v1_ref, w2_eq, window_strides=(1, 1), padding=((PAD, PAD), (PAD, PAD)),
        dimension_numbers=dn, precision=hp) + b_convT[None, :, None, None]
    ref = 0.5 * v2_ref * (lax.erf(v2_ref * _SQRT_HALF) + 1.0)

    err = float(jnp.max(jnp.abs(out - ref)))
    assert jnp.allclose(out, ref, atol=1e-3, rtol=1e-3), err

    print("KERNEL_OK")
</pallas_src>

<mosaic_0001>
module attributes {stable_mosaic.version = 11 : i64} {
  func.func @_fused_conv_convt_gelu_kernel(%arg0: memref<8x640xf32, #tpu.memory_space<vmem>>, %arg1: memref<25x16x8xf32, #tpu.memory_space<vmem>>, %arg2: memref<16x1xf32, #tpu.memory_space<vmem>>, %arg3: memref<25x8x16xf32, #tpu.memory_space<vmem>>, %arg4: memref<8x1xf32, #tpu.memory_space<vmem>>, %arg5: memref<1x512xf32, #tpu.memory_space<vmem>>, %arg6: memref<8x512xf32, #tpu.memory_space<vmem>>, %arg7: memref<16x640xf32, #tpu.memory_space<vmem>>) attributes {dimension_semantics = [], scalar_prefetch = 0 : i64, scratch_operands = 1 : i64, tpu.core_type = #tpu.core_type<tc>} {
    %cst = arith.constant 0.000000e+00 : f32
    %0 = vector.broadcast %cst : f32 to vector<16x512xf32>
    %c0 = arith.constant 0 : index
    %c0_0 = arith.constant 0 : index
    %c0_1 = arith.constant 0 : index
    %1 = vector.load %arg1[%c0, %c0_0, %c0_1] : memref<25x16x8xf32, #tpu.memory_space<vmem>>, vector<1x16x8xf32>
    %2 = vector.shape_cast %1 : vector<1x16x8xf32> to vector<16x8xf32>
    %c0_2 = arith.constant 0 : index
    %c0_3 = arith.constant 0 : index
    %3 = vector.load %arg0[%c0_2, %c0_3] : memref<8x640xf32, #tpu.memory_space<vmem>>, vector<8x512xf32>
    %cst_4 = arith.constant dense<0.000000e+00> : vector<16x512xf32>
    %4 = tpu.matmul %2, %3, %cst_4 {dimension_numbers = #tpu.dot_dimension_numbers<[1], [0], [0], [1], [0, 0, 1, 1], [], []>} : vector<16x8xf32>, vector<8x512xf32>, vector<16x512xf32> -> vector<16x512xf32>
    %5 = arith.addf %0, %4 : vector<16x512xf32>
    %c1 = arith.constant 1 : index
    %c0_5 = arith.constant 0 : index
    %c0_6 = arith.constant 0 : index
    %6 = vector.load %arg1[%c1, %c0_5, %c0_6] : memref<25x16x8xf32, #tpu.memory_space<vmem>>, vector<1x16x8xf32>
    %7 = vector.shape_cast %6 : vector<1x16x8xf32> to vector<16x8xf32>
    %c0_7 = arith.constant 0 : index
    %c1_8 = arith.constant 1 : index
    %8 = vector.load %arg0[%c0_7, %c1_8] : memref<8x640xf32, #tpu.memory_space<vmem>>, vector<8x512xf32>
    %cst_9 = arith.constant dense<0.000000e+00> : vector<16x512xf32>
    %9 = tpu.matmul %7, %8, %cst_9 {dimension_numbers = #tpu.dot_dimension_numbers<[1], [0], [0], [1], [0, 0, 1, 1], [], []>} : vector<16x8xf32>, vector<8x512xf32>, vector<16x512xf32> -> vector<16x512xf32>
    %10 = arith.addf %5, %9 : vector<16x512xf32>
    %c2 = arith.constant 2 : index
    %c0_10 = arith.constant 0 : index
    %c0_11 = arith.constant 0 : index
    %11 = vector.load %arg1[%c2, %c0_10, %c0_11] : memref<25x16x8xf32, #tpu.memory_space<vmem>>, vector<1x16x8xf32>
    %12 = vector.shape_cast %11 : vector<1x16x8xf32> to vector<16x8xf32>
    %c0_12 = arith.constant 0 : index
    %c2_13 = arith.constant 2 : index
    %13 = vector.load %arg0[%c0_12, %c2_13] : memref<8x640xf32, #tpu.memory_space<vmem>>, vector<8x512xf32>
    %cst_14 = arith.constant dense<0.000000e+00> : vector<16x512xf32>
    %14 = tpu.matmul %12, %13, %cst_14 {dimension_numbers = #tpu.dot_dimension_numbers<[1], [0], [0], [1], [0, 0, 1, 1], [], []>} : vector<16x8xf32>, vector<8x512xf32>, vector<16x512xf32> -> vector<16x512xf32>
    %15 = arith.addf %10, %14 : vector<16x512xf32>
    %c3 = arith.constant 3 : index
    %c0_15 = arith.constant 0 : index
    %c0_16 = arith.constant 0 : index
    %16 = vector.load %arg1[%c3, %c0_15, %c0_16] : memref<25x16x8xf32, #tpu.memory_space<vmem>>, vector<1x16x8xf32>
    %17 = vector.shape_cast %16 : vector<1x16x8xf32> to vector<16x8xf32>
    %c0_17 = arith.constant 0 : index
    %c3_18 = arith.constant 3 : index
    %18 = vector.load %arg0[%c0_17, %c3_18] : memref<8x640xf32, #tpu.memory_space<vmem>>, vector<8x512xf32>
    %cst_19 = arith.constant dense<0.000000e+00> : vector<16x512xf32>
    %19 = tpu.matmul %17, %18, %cst_19 {dimension_numbers = #tpu.dot_dimension_numbers<[1], [0], [0], [1], [0, 0, 1, 1], [], []>} : vector<16x8xf32>, vector<8x512xf32>, vector<16x512xf32> -> vector<16x512xf32>
    %20 = arith.addf %15, %19 : vector<16x512xf32>
    %c4 = arith.constant 4 : index
    %c0_20 = arith.constant 0 : index
    %c0_21 = arith.constant 0 : index
    %21 = vector.load %arg1[%c4, %c0_20, %c0_21] : memref<25x16x8xf32, #tpu.memory_space<vmem>>, vector<1x16x8xf32>
    %22 = vector.shape_cast %21 : vector<1x16x8xf32> to vector<16x8xf32>
    %c0_22 = arith.constant 0 : index
    %c4_23 = arith.constant 4 : index
    %23 = vector.load %arg0[%c0_22, %c4_23] : memref<8x640xf32, #tpu.memory_space<vmem>>, vector<8x512xf32>
    %cst_24 = arith.constant dense<0.000000e+00> : vector<16x512xf32>
    %24 = tpu.matmul %22, %23, %cst_24 {dimension_numbers = #tpu.dot_dimension_numbers<[1], [0], [0], [1], [0, 0, 1, 1], [], []>} : vector<16x8xf32>, vector<8x512xf32>, vector<16x512xf32> -> vector<16x512xf32>
    %25 = arith.addf %20, %24 : vector<16x512xf32>
    %c5 = arith.constant 5 : index
    %c0_25 = arith.constant 0 : index
    %c0_26 = arith.constant 0 : index
    %26 = vector.load %arg1[%c5, %c0_25, %c0_26] : memref<25x16x8xf32, #tpu.memory_space<vmem>>, vector<1x16x8xf32>
    %27 = vector.shape_cast %26 : vector<1x16x8xf32> to vector<16x8xf32>
    %c0_27 = arith.constant 0 : index
    %c24 = arith.constant 24 : index
    %28 = vector.load %arg0[%c0_27, %c24] : memref<8x640xf32, #tpu.memory_space<vmem>>, vector<8x512xf32>
    %cst_28 = arith.constant dense<0.000000e+00> : vector<16x512xf32>
    %29 = tpu.matmul %27, %28, %cst_28 {dimension_numbers = #tpu.dot_dimension_numbers<[1], [0], [0], [1], [0, 0, 1, 1], [], []>} : vector<16x8xf32>, vector<8x512xf32>, vector<16x512xf32> -> vector<16x512xf32>
    %30 = arith.addf %25, %29 : vector<16x512xf32>
    %c6 = arith.constant 6 : index
    %c0_29 = arith.constant 0 : index
    %c0_30 = arith.constant 0 : index
    %31 = vector.load %arg1[%c6, %c0_29, %c0_30] : memref<25x16x8xf32, #tpu.memory_space<vmem>>, vector<1x16x8xf32>
    %32 = vector.shape_cast %31 : vector<1x16x8xf32> to vector<16x8xf32>
    %c0_31 = arith.constant 0 : index
    %c25 = arith.constant 25 : index
    %33 = vector.load %arg0[%c0_31, %c25] : memref<8x640xf32, #tpu.memory_space<vmem>>, vector<8x512xf32>
    %cst_32 = arith.constant dense<0.000000e+00> : vector<16x512xf32>
    %34 = tpu.matmul %32, %33, %cst_32 {dimension_numbers = #tpu.dot_dimension_numbers<[1], [0], [0], [1], [0, 0, 1, 1], [], []>} : vector<16x8xf32>, vector<8x512xf32>, vector<16x512xf32> -> vector<16x512xf32>
    %35 = arith.addf %30, %34 : vector<16x512xf32>
    %c7 = arith.constant 7 : index
    %c0_33 = arith.constant 0 : index
    %c0_34 = arith.constant 0 : index
    %36 = vector.load %arg1[%c7, %c0_33, %c0_34] : memref<25x16x8xf32, #tpu.memory_space<vmem>>, vector<1x16x8xf32>
    %37 = vector.shape_cast %36 : vector<1x16x8xf32> to vector<16x8xf32>
    %c0_35 = arith.constant 0 : index
    %c26 = arith.constant 26 : index
    %38 = vector.load %arg0[%c0_35, %c26] : memref<8x640xf32, #tpu.memory_space<vmem>>, vector<8x512xf32>
    %cst_36 = arith.constant dense<0.000000e+00> : vector<16x512xf32>
    %39 = tpu.matmul %37, %38, %cst_36 {dimension_numbers = #tpu.dot_dimension_numbers<[1], [0], [0], [1], [0, 0, 1, 1], [], []>} : vector<16x8xf32>, vector<8x512xf32>, vector<16x512xf32> -> vector<16x512xf32>
    %40 = arith.addf %35, %39 : vector<16x512xf32>
    %c8 = arith.constant 8 : index
    %c0_37 = arith.constant 0 : index
    %c0_38 = arith.constant 0 : index
    %41 = vector.load %arg1[%c8, %c0_37, %c0_38] : memref<25x16x8xf32, #tpu.memory_space<vmem>>, vector<1x16x8xf32>
    %42 = vector.shape_cast %41 : vector<1x16x8xf32> to vector<16x8xf32>
    %c0_39 = arith.constant 0 : index
    %c27 = arith.constant 27 : index
    %43 = vector.load %arg0[%c0_39, %c27] : memref<8x640xf32, #tpu.memory_space<vmem>>, vector<8x512xf32>
    %cst_40 = arith.constant dense<0.000000e+00> : vector<16x512xf32>
    %44 = tpu.matmul %42, %43, %cst_40 {dimension_numbers = #tpu.dot_dimension_numbers<[1], [0], [0], [1], [0, 0, 1, 1], [], []>} : vector<16x8xf32>, vector<8x512xf32>, vector<16x512xf32> -> vector<16x512xf32>
    %45 = arith.addf %40, %44 : vector<16x512xf32>
    %c9 = arith.constant 9 : index
    %c0_41 = arith.constant 0 : index
    %c0_42 = arith.constant 0 : index
    %46 = vector.load %arg1[%c9, %c0_41, %c0_42] : memref<25x16x8xf32, #tpu.memory_space<vmem>>, vector<1x16x8xf32>
    %47 = vector.shape_cast %46 : vector<1x16x8xf32> to vector<16x8xf32>
    %c0_43 = arith.constant 0 : index
    %c28 = arith.constant 28 : index
    %48 = vector.load %arg0[%c0_43, %c28] : memref<8x640xf32, #tpu.memory_space<vmem>>, vector<8x512xf32>
    %cst_44 = arith.constant dense<0.000000e+00> : vector<16x512xf32>
    %49 = tpu.matmul %47, %48, %cst_44 {dimension_numbers = #tpu.dot_dimension_numbers<[1], [0], [0], [1], [0, 0, 1, 1], [], []>} : vector<16x8xf32>, vector<8x512xf32>, vector<16x512xf32> -> vector<16x512xf32>
    %50 = arith.addf %45, %49 : vector<16x512xf32>
    %c10 = arith.constant 10 : index
    %c0_45 = arith.constant 0 : index
    %c0_46 = arith.constant 0 : index
    %51 = vector.load %arg1[%c10, %c0_45, %c0_46] : memref<25x16x8xf32, #tpu.memory_space<vmem>>, vector<1x16x8xf32>
    %52 = vector.shape_cast %51 : vector<1x16x8xf32> to vector<16x8xf32>
    %c0_47 = arith.constant 0 : index
    %c48 = arith.constant 48 : index
    %53 = vector.load %arg0[%c0_47, %c48] : memref<8x640xf32, #tpu.memory_space<vmem>>, vector<8x512xf32>
    %cst_48 = arith.constant dense<0.000000e+00> : vector<16x512xf32>
    %54 = tpu.matmul %52, %53, %cst_48 {dimension_numbers = #tpu.dot_dimension_numbers<[1], [0], [0], [1], [0, 0, 1, 1], [], []>} : vector<16x8xf32>, vector<8x512xf32>, vector<16x512xf32> -> vector<16x512xf32>
    %55 = arith.addf %50, %54 : vector<16x512xf32>
    %c11 = arith.constant 11 : index
    %c0_49 = arith.constant 0 : index
    %c0_50 = arith.constant 0 : index
    %56 = vector.load %arg1[%c11, %c0_49, %c0_50] : memref<25x16x8xf32, #tpu.memory_space<vmem>>, vector<1x16x8xf32>
    %57 = vector.shape_cast %56 : vector<1x16x8xf32> to vector<16x8xf32>
    %c0_51 = arith.constant 0 : index
    %c49 = arith.constant 49 : index
    %58 = vector.load %arg0[%c0_51, %c49] : memref<8x640xf32, #tpu.memory_space<vmem>>, vector<8x512xf32>
    %cst_52 = arith.constant dense<0.000000e+00> : vector<16x512xf32>
    %59 = tpu.matmul %57, %58, %cst_52 {dimension_numbers = #tpu.dot_dimension_numbers<[1], [0], [0], [1], [0, 0, 1, 1], [], []>} : vector<16x8xf32>, vector<8x512xf32>, vector<16x512xf32> -> vector<16x512xf32>
    %60 = arith.addf %55, %59 : vector<16x512xf32>
    %c12 = arith.constant 12 : index
    %c0_53 = arith.constant 0 : index
    %c0_54 = arith.constant 0 : index
    %61 = vector.load %arg1[%c12, %c0_53, %c0_54] : memref<25x16x8xf32, #tpu.memory_space<vmem>>, vector<1x16x8xf32>
    %62 = vector.shape_cast %61 : vector<1x16x8xf32> to vector<16x8xf32>
    %c0_55 = arith.constant 0 : index
    %c50 = arith.constant 50 : index
    %63 = vector.load %arg0[%c0_55, %c50] : memref<8x640xf32, #tpu.memory_space<vmem>>, vector<8x512xf32>
    %cst_56 = arith.constant dense<0.000000e+00> : vector<16x512xf32>
    %64 = tpu.matmul %62, %63, %cst_56 {dimension_numbers = #tpu.dot_dimension_numbers<[1], [0], [0], [1], [0, 0, 1, 1], [], []>} : vector<16x8xf32>, vector<8x512xf32>, vector<16x512xf32> -> vector<16x512xf32>
    %65 = arith.addf %60, %64 : vector<16x512xf32>
    %c13 = arith.constant 13 : index
    %c0_57 = arith.constant 0 : index
    %c0_58 = arith.constant 0 : index
    %66 = vector.load %arg1[%c13, %c0_57, %c0_58] : memref<25x16x8xf32, #tpu.memory_space<vmem>>, vector<1x16x8xf32>
    %67 = vector.shape_cast %66 : vector<1x16x8xf32> to vector<16x8xf32>
    %c0_59 = arith.constant 0 : index
    %c51 = arith.constant 51 : index
    %68 = vector.load %arg0[%c0_59, %c51] : memref<8x640xf32, #tpu.memory_space<vmem>>, vector<8x512xf32>
    %cst_60 = arith.constant dense<0.000000e+00> : vector<16x512xf32>
    %69 = tpu.matmul %67, %68, %cst_60 {dimension_numbers = #tpu.dot_dimension_numbers<[1], [0], [0], [1], [0, 0, 1, 1], [], []>} : vector<16x8xf32>, vector<8x512xf32>, vector<16x512xf32> -> vector<16x512xf32>
    %70 = arith.addf %65, %69 : vector<16x512xf32>
    %c14 = arith.constant 14 : index
    %c0_61 = arith.constant 0 : index
    %c0_62 = arith.constant 0 : index
    %71 = vector.load %arg1[%c14, %c0_61, %c0_62] : memref<25x16x8xf32, #tpu.memory_space<vmem>>, vector<1x16x8xf32>
    %72 = vector.shape_cast %71 : vector<1x16x8xf32> to vector<16x8xf32>
    %c0_63 = arith.constant 0 : index
    %c52 = arith.constant 52 : index
    %73 = vector.load %arg0[%c0_63, %c52] : memref<8x640xf32, #tpu.memory_space<vmem>>, vector<8x512xf32>
    %cst_64 = arith.constant dense<0.000000e+00> : vector<16x512xf32>
    %74 = tpu.matmul %72, %73, %cst_64 {dimension_numbers = #tpu.dot_dimension_numbers<[1], [0], [0], [1], [0, 0, 1, 1], [], []>} : vector<16x8xf32>, vector<8x512xf32>, vector<16x512xf32> -> vector<16x512xf32>
    %75 = arith.addf %70, %74 : vector<16x512xf32>
    %c15 = arith.constant 15 : index
    %c0_65 = arith.constant 0 : index
    %c0_66 = arith.constant 0 : index
    %76 = vector.load %arg1[%c15, %c0_65, %c0_66] : memref<25x16x8xf32, #tpu.memory_space<vmem>>, vector<1x16x8xf32>
    %77 = vector.shape_cast %76 : vector<1x16x8xf32> to vector<16x8xf32>
    %c0_67 = arith.constant 0 : index
    %c72 = arith.constant 72 : index
    %78 = vector.load %arg0[%c0_67, %c72] : memref<8x640xf32, #tpu.memory_space<vmem>>, vector<8x512xf32>
    %cst_68 = arith.constant dense<0.000000e+00> : vector<16x512xf32>
    %79 = tpu.matmul %77, %78, %cst_68 {dimension_numbers = #tpu.dot_dimension_numbers<[1], [0], [0], [1], [0, 0, 1, 1], [], []>} : vector<16x8xf32>, vector<8x512xf32>, vector<16x512xf32> -> vector<16x512xf32>
    %80 = arith.addf %75, %79 : vector<16x512xf32>
    %c16 = arith.constant 16 : index
    %c0_69 = arith.constant 0 : index
    %c0_70 = arith.constant 0 : index
    %81 = vector.load %arg1[%c16, %c0_69, %c0_70] : memref<25x16x8xf32, #tpu.memory_space<vmem>>, vector<1x16x8xf32>
    %82 = vector.shape_cast %81 : vector<1x16x8xf32> to vector<16x8xf32>
    %c0_71 = arith.constant 0 : index
    %c73 = arith.constant 73 : index
    %83 = vector.load %arg0[%c0_71, %c73] : memref<8x640xf32, #tpu.memory_space<vmem>>, vector<8x512xf32>
    %cst_72 = arith.constant dense<0.000000e+00> : vector<16x512xf32>
    %84 = tpu.matmul %82, %83, %cst_72 {dimension_numbers = #tpu.dot_dimension_numbers<[1], [0], [0], [1], [0, 0, 1, 1], [], []>} : vector<16x8xf32>, vector<8x512xf32>, vector<16x512xf32> -> vector<16x512xf32>
    %85 = arith.addf %80, %84 : vector<16x512xf32>
    %c17 = arith.constant 17 : index
    %c0_73 = arith.constant 0 : index
    %c0_74 = arith.constant 0 : index
    %86 = vector.load %arg1[%c17, %c0_73, %c0_74] : memref<25x16x8xf32, #tpu.memory_space<vmem>>, vector<1x16x8xf32>
    %87 = vector.shape_cast %86 : vector<1x16x8xf32> to vector<16x8xf32>
    %c0_75 = arith.constant 0 : index
    %c74 = arith.constant 74 : index
    %88 = vector.load %arg0[%c0_75, %c74] : memref<8x640xf32, #tpu.memory_space<vmem>>, vector<8x512xf32>
    %cst_76 = arith.constant dense<0.000000e+00> : vector<16x512xf32>
    %89 = tpu.matmul %87, %88, %cst_76 {dimension_numbers = #tpu.dot_dimension_numbers<[1], [0], [0], [1], [0, 0, 1, 1], [], []>} : vector<16x8xf32>, vector<8x512xf32>, vector<16x512xf32> -> vector<16x512xf32>
    %90 = arith.addf %85, %89 : vector<16x512xf32>
    %c18 = arith.constant 18 : index
    %c0_77 = arith.constant 0 : index
    %c0_78 = arith.constant 0 : index
    %91 = vector.load %arg1[%c18, %c0_77, %c0_78] : memref<25x16x8xf32, #tpu.memory_space<vmem>>, vector<1x16x8xf32>
    %92 = vector.shape_cast %91 : vector<1x16x8xf32> to vector<16x8xf32>
    %c0_79 = arith.constant 0 : index
    %c75 = arith.constant 75 : index
    %93 = vector.load %arg0[%c0_79, %c75] : memref<8x640xf32, #tpu.memory_space<vmem>>, vector<8x512xf32>
    %cst_80 = arith.constant dense<0.000000e+00> : vector<16x512xf32>
    %94 = tpu.matmul %92, %93, %cst_80 {dimension_numbers = #tpu.dot_dimension_numbers<[1], [0], [0], [1], [0, 0, 1, 1], [], []>} : vector<16x8xf32>, vector<8x512xf32>, vector<16x512xf32> -> vector<16x512xf32>
    %95 = arith.addf %90, %94 : vector<16x512xf32>
    %c19 = arith.constant 19 : index
    %c0_81 = arith.constant 0 : index
    %c0_82 = arith.constant 0 : index
    %96 = vector.load %arg1[%c19, %c0_81, %c0_82] : memref<25x16x8xf32, #tpu.memory_space<vmem>>, vector<1x16x8xf32>
    %97 = vector.shape_cast %96 : vector<1x16x8xf32> to vector<16x8xf32>
    %c0_83 = arith.constant 0 : index
    %c76 = arith.constant 76 : index
    %98 = vector.load %arg0[%c0_83, %c76] : memref<8x640xf32, #tpu.memory_space<vmem>>, vector<8x512xf32>
    %cst_84 = arith.constant dense<0.000000e+00> : vector<16x512xf32>
    %99 = tpu.matmul %97, %98, %cst_84 {dimension_numbers = #tpu.dot_dimension_numbers<[1], [0], [0], [1], [0, 0, 1, 1], [], []>} : vector<16x8xf32>, vector<8x512xf32>, vector<16x512xf32> -> vector<16x512xf32>
    %100 = arith.addf %95, %99 : vector<16x512xf32>
    %c20 = arith.constant 20 : index
    %c0_85 = arith.constant 0 : index
    %c0_86 = arith.constant 0 : index
    %101 = vector.load %arg1[%c20, %c0_85, %c0_86] : memref<25x16x8xf32, #tpu.memory_space<vmem>>, vector<1x16x8xf32>
    %102 = vector.shape_cast %101 : vector<1x16x8xf32> to vector<16x8xf32>
    %c0_87 = arith.constant 0 : index
    %c96 = arith.constant 96 : index
    %103 = vector.load %arg0[%c0_87, %c96] : memref<8x640xf32, #tpu.memory_space<vmem>>, vector<8x512xf32>
    %cst_88 = arith.constant dense<0.000000e+00> : vector<16x512xf32>
    %104 = tpu.matmul %102, %103, %cst_88 {dimension_numbers = #tpu.dot_dimension_numbers<[1], [0], [0], [1], [0, 0, 1, 1], [], []>} : vector<16x8xf32>, vector<8x512xf32>, vector<16x512xf32> -> vector<16x512xf32>
    %105 = arith.addf %100, %104 : vector<16x512xf32>
    %c21 = arith.constant 21 : index
    %c0_89 = arith.constant 0 : index
    %c0_90 = arith.constant 0 : index
    %106 = vector.load %arg1[%c21, %c0_89, %c0_90] : memref<25x16x8xf32, #tpu.memory_space<vmem>>, vector<1x16x8xf32>
    %107 = vector.shape_cast %106 : vector<1x16x8xf32> to vector<16x8xf32>
    %c0_91 = arith.constant 0 : index
    %c97 = arith.constant 97 : index
    %108 = vector.load %arg0[%c0_91, %c97] : memref<8x640xf32, #tpu.memory_space<vmem>>, vector<8x512xf32>
    %cst_92 = arith.constant dense<0.000000e+00> : vector<16x512xf32>
    %109 = tpu.matmul %107, %108, %cst_92 {dimension_numbers = #tpu.dot_dimension_numbers<[1], [0], [0], [1], [0, 0, 1, 1], [], []>} : vector<16x8xf32>, vector<8x512xf32>, vector<16x512xf32> -> vector<16x512xf32>
    %110 = arith.addf %105, %109 : vector<16x512xf32>
    %c22 = arith.constant 22 : index
    %c0_93 = arith.constant 0 : index
    %c0_94 = arith.constant 0 : index
    %111 = vector.load %arg1[%c22, %c0_93, %c0_94] : memref<25x16x8xf32, #tpu.memory_space<vmem>>, vector<1x16x8xf32>
    %112 = vector.shape_cast %111 : vector<1x16x8xf32> to vector<16x8xf32>
    %c0_95 = arith.constant 0 : index
    %c98 = arith.constant 98 : index
    %113 = vector.load %arg0[%c0_95, %c98] : memref<8x640xf32, #tpu.memory_space<vmem>>, vector<8x512xf32>
    %cst_96 = arith.constant dense<0.000000e+00> : vector<16x512xf32>
    %114 = tpu.matmul %112, %113, %cst_96 {dimension_numbers = #tpu.dot_dimension_numbers<[1], [0], [0], [1], [0, 0, 1, 1], [], []>} : vector<16x8xf32>, vector<8x512xf32>, vector<16x512xf32> -> vector<16x512xf32>
    %115 = arith.addf %110, %114 : vector<16x512xf32>
    %c23 = arith.constant 23 : index
    %c0_97 = arith.constant 0 : index
    %c0_98 = arith.constant 0 : index
    %116 = vector.load %arg1[%c23, %c0_97, %c0_98] : memref<25x16x8xf32, #tpu.memory_space<vmem>>, vector<1x16x8xf32>
    %117 = vector.shape_cast %116 : vector<1x16x8xf32> to vector<16x8xf32>
    %c0_99 = arith.constant 0 : index
    %c99 = arith.constant 99 : index
    %118 = vector.load %arg0[%c0_99, %c99] : memref<8x640xf32, #tpu.memory_space<vmem>>, vector<8x512xf32>
    %cst_100 = arith.constant dense<0.000000e+00> : vector<16x512xf32>
    %119 = tpu.matmul %117, %118, %cst_100 {dimension_numbers = #tpu.dot_dimension_numbers<[1], [0], [0], [1], [0, 0, 1, 1], [], []>} : vector<16x8xf32>, vector<8x512xf32>, vector<16x512xf32> -> vector<16x512xf32>
    %120 = arith.addf %115, %119 : vector<16x512xf32>
    %c24_101 = arith.constant 24 : index
    %c0_102 = arith.constant 0 : index
    %c0_103 = arith.constant 0 : index
    %121 = vector.load %arg1[%c24_101, %c0_102, %c0_103] : memref<25x16x8xf32, #tpu.memory_space<vmem>>, vector<1x16x8xf32>
    %122 = vector.shape_cast %121 : vector<1x16x8xf32> to vector<16x8xf32>
    %c0_104 = arith.constant 0 : index
    %c100 = arith.constant 100 : index
    %123 = vector.load %arg0[%c0_104, %c100] : memref<8x640xf32, #tpu.memory_space<vmem>>, vector<8x512xf32>
    %cst_105 = arith.constant dense<0.000000e+00> : vector<16x512xf32>
    %124 = tpu.matmul %122, %123, %cst_105 {dimension_numbers = #tpu.dot_dimension_numbers<[1], [0], [0], [1], [0, 0, 1, 1], [], []>} : vector<16x8xf32>, vector<8x512xf32>, vector<16x512xf32> -> vector<16x512xf32>
    %125 = arith.addf %120, %124 : vector<16x512xf32>
    %c0_106 = arith.constant 0 : index
    %c0_107 = arith.constant 0 : index
    %126 = vector.load %arg2[%c0_106, %c0_107] : memref<16x1xf32, #tpu.memory_space<vmem>>, vector<16x1xf32>
    %127 = vector.broadcast %126 : vector<16x1xf32> to vector<16x512xf32>
    %128 = arith.addf %125, %127 : vector<16x512xf32>
    %c0_108 = arith.constant 0 : index
    %c0_109 = arith.constant 0 : index
    %129 = vector.load %arg5[%c0_108, %c0_109] : memref<1x512xf32, #tpu.memory_space<vmem>>, vector<1x512xf32>
    %130 = vector.broadcast %129 : vector<1x512xf32> to vector<16x512xf32>
    %131 = arith.mulf %128, %130 : vector<16x512xf32>
    %cst_110 = arith.constant 0.000000e+00 : f32
    %132 = vector.broadcast %cst_110 : f32 to vector<16x640xf32>
    %c0_111 = arith.constant 0 : index
    %c0_112 = arith.constant 0 : index
    %133 = vector.load %arg7[%c0_111, %c0_112] : memref<16x640xf32, #tpu.memory_space<vmem>>, vector<16x640xf32>
    tpu.vector_store %arg7[%c0_111, %c0_112], %132 {strides = array<i32>} : memref<16x640xf32, #tpu.memory_space<vmem>>, vector<16x640xf32>,
    %c0_113 = arith.constant 0 : index
    %c50_114 = arith.constant 50 : index
    %134 = vector.load %arg7[%c0_113, %c50_114] : memref<16x640xf32, #tpu.memory_space<vmem>>, vector<16x512xf32>
    tpu.vector_store %arg7[%c0_113, %c50_114], %131 {strides = array<i32>} : memref<16x640xf32, #tpu.memory_space<vmem>>, vector<16x512xf32>,
    %cst_115 = arith.constant 0.000000e+00 : f32
    %135 = vector.broadcast %cst_115 : f32 to vector<8x512xf32>
    %c0_116 = arith.constant 0 : index
    %c0_117 = arith.constant 0 : index
    %c0_118 = arith.constant 0 : index
    %136 = vector.load %arg3[%c0_116, %c0_117, %c0_118] : memref<25x8x16xf32, #tpu.memory_space<vmem>>, vector<1x8x16xf32>
    %137 = vector.shape_cast %136 : vector<1x8x16xf32> to vector<8x16xf32>
    %c0_119 = arith.constant 0 : index
    %c0_120 = arith.constant 0 : index
    %138 = vector.load %arg7[%c0_119, %c0_120] : memref<16x640xf32, #tpu.memory_space<vmem>>, vector<16x512xf32>
    %cst_121 = arith.constant dense<0.000000e+00> : vector<8x512xf32>
    %139 = tpu.matmul %137, %138, %cst_121 {dimension_numbers = #tpu.dot_dimension_numbers<[1], [0], [0], [1], [0, 0, 1, 1], [], []>} : vector<8x16xf32>, vector<16x512xf32>, vector<8x512xf32> -> vector<8x512xf32>
    %140 = arith.addf %135, %139 : vector<8x512xf32>
    %c1_122 = arith.constant 1 : index
    %c0_123 = arith.constant 0 : index
    %c0_124 = arith.constant 0 : index
    %141 = vector.load %arg3[%c1_122, %c0_123, %c0_124] : memref<25x8x16xf32, #tpu.memory_space<vmem>>, vector<1x8x16xf32>
    %142 = vector.shape_cast %141 : vector<1x8x16xf32> to vector<8x16xf32>
    %c0_125 = arith.constant 0 : index
    %c1_126 = arith.constant 1 : index
    %143 = vector.load %arg7[%c0_125, %c1_126] : memref<16x640xf32, #tpu.memory_space<vmem>>, vector<16x512xf32>
    %cst_127 = arith.constant dense<0.000000e+00> : vector<8x512xf32>
    %144 = tpu.matmul %142, %143, %cst_127 {dimension_numbers = #tpu.dot_dimension_numbers<[1], [0], [0], [1], [0, 0, 1, 1], [], []>} : vector<8x16xf32>, vector<16x512xf32>, vector<8x512xf32> -> vector<8x512xf32>
    %145 = arith.addf %140, %144 : vector<8x512xf32>
    %c2_128 = arith.constant 2 : index
    %c0_129 = arith.constant 0 : index
    %c0_130 = arith.constant 0 : index
    %146 = vector.load %arg3[%c2_128, %c0_129, %c0_130] : memref<25x8x16xf32, #tpu.memory_space<vmem>>, vector<1x8x16xf32>
    %147 = vector.shape_cast %146 : vector<1x8x16xf32> to vector<8x16xf32>
    %c0_131 = arith.constant 0 : index
    %c2_132 = arith.constant 2 : index
    %148 = vector.load %arg7[%c0_131, %c2_132] : memref<16x640xf32, #tpu.memory_space<vmem>>, vector<16x512xf32>
    %cst_133 = arith.constant dense<0.000000e+00> : vector<8x512xf32>
    %149 = tpu.matmul %147, %148, %cst_133 {dimension_numbers = #tpu.dot_dimension_numbers<[1], [0], [0], [1], [0, 0, 1, 1], [], []>} : vector<8x16xf32>, vector<16x512xf32>, vector<8x512xf32> -> vector<8x512xf32>
    %150 = arith.addf %145, %149 : vector<8x512xf32>
    %c3_134 = arith.constant 3 : index
    %c0_135 = arith.constant 0 : index
    %c0_136 = arith.constant 0 : index
    %151 = vector.load %arg3[%c3_134, %c0_135, %c0_136] : memref<25x8x16xf32, #tpu.memory_space<vmem>>, vector<1x8x16xf32>
    %152 = vector.shape_cast %151 : vector<1x8x16xf32> to vector<8x16xf32>
    %c0_137 = arith.constant 0 : index
    %c3_138 = arith.constant 3 : index
    %153 = vector.load %arg7[%c0_137, %c3_138] : memref<16x640xf32, #tpu.memory_space<vmem>>, vector<16x512xf32>
    %cst_139 = arith.constant dense<0.000000e+00> : vector<8x512xf32>
    %154 = tpu.matmul %152, %153, %cst_139 {dimension_numbers = #tpu.dot_dimension_numbers<[1], [0], [0], [1], [0, 0, 1, 1], [], []>} : vector<8x16xf32>, vector<16x512xf32>, vector<8x512xf32> -> vector<8x512xf32>
    %155 = arith.addf %150, %154 : vector<8x512xf32>
    %c4_140 = arith.constant 4 : index
    %c0_141 = arith.constant 0 : index
    %c0_142 = arith.constant 0 : index
    %156 = vector.load %arg3[%c4_140, %c0_141, %c0_142] : memref<25x8x16xf32, #tpu.memory_space<vmem>>, vector<1x8x16xf32>
    %157 = vector.shape_cast %156 : vector<1x8x16xf32> to vector<8x16xf32>
    %c0_143 = arith.constant 0 : index
    %c4_144 = arith.constant 4 : index
    %158 = vector.load %arg7[%c0_143, %c4_144] : memref<16x640xf32, #tpu.memory_space<vmem>>, vector<16x512xf32>
    %cst_145 = arith.constant dense<0.000000e+00> : vector<8x512xf32>
    %159 = tpu.matmul %157, %158, %cst_145 {dimension_numbers = #tpu.dot_dimension_numbers<[1], [0], [0], [1], [0, 0, 1, 1], [], []>} : vector<8x16xf32>, vector<16x512xf32>, vector<8x512xf32> -> vector<8x512xf32>
    %160 = arith.addf %155, %159 : vector<8x512xf32>
    %c5_146 = arith.constant 5 : index
    %c0_147 = arith.constant 0 : index
    %c0_148 = arith.constant 0 : index
    %161 = vector.load %arg3[%c5_146, %c0_147, %c0_148] : memref<25x8x16xf32, #tpu.memory_space<vmem>>, vector<1x8x16xf32>
    %162 = vector.shape_cast %161 : vector<1x8x16xf32> to vector<8x16xf32>
    %c0_149 = arith.constant 0 : index
    %c24_150 = arith.constant 24 : index
    %163 = vector.load %arg7[%c0_149, %c24_150] : memref<16x640xf32, #tpu.memory_space<vmem>>, vector<16x512xf32>
    %cst_151 = arith.constant dense<0.000000e+00> : vector<8x512xf32>
    %164 = tpu.matmul %162, %163, %cst_151 {dimension_numbers = #tpu.dot_dimension_numbers<[1], [0], [0], [1], [0, 0, 1, 1], [], []>} : vector<8x16xf32>, vector<16x512xf32>, vector<8x512xf32> -> vector<8x512xf32>
    %165 = arith.addf %160, %164 : vector<8x512xf32>
    %c6_152 = arith.constant 6 : index
    %c0_153 = arith.constant 0 : index
    %c0_154 = arith.constant 0 : index
    %166 = vector.load %arg3[%c6_152, %c0_153, %c0_154] : memref<25x8x16xf32, #tpu.memory_space<vmem>>, vector<1x8x16xf32>
    %167 = vector.shape_cast %166 : vector<1x8x16xf32> to vector<8x16xf32>
    %c0_155 = arith.constant 0 : index
    %c25_156 = arith.constant 25 : index
    %168 = vector.load %arg7[%c0_155, %c25_156] : memref<16x640xf32, #tpu.memory_space<vmem>>, vector<16x512xf32>
    %cst_157 = arith.constant dense<0.000000e+00> : vector<8x512xf32>
    %169 = tpu.matmul %167, %168, %cst_157 {dimension_numbers = #tpu.dot_dimension_numbers<[1], [0], [0], [1], [0, 0, 1, 1], [], []>} : vector<8x16xf32>, vector<16x512xf32>, vector<8x512xf32> -> vector<8x512xf32>
    %170 = arith.addf %165, %169 : vector<8x512xf32>
    %c7_158 = arith.constant 7 : index
    %c0_159 = arith.constant 0 : index
    %c0_160 = arith.constant 0 : index
    %171 = vector.load %arg3[%c7_158, %c0_159, %c0_160] : memref<25x8x16xf32, #tpu.memory_space<vmem>>, vector<1x8x16xf32>
    %172 = vector.shape_cast %171 : vector<1x8x16xf32> to vector<8x16xf32>
    %c0_161 = arith.constant 0 : index
    %c26_162 = arith.constant 26 : index
    %173 = vector.load %arg7[%c0_161, %c26_162] : memref<16x640xf32, #tpu.memory_space<vmem>>, vector<16x512xf32>
    %cst_163 = arith.constant dense<0.000000e+00> : vector<8x512xf32>
    %174 = tpu.matmul %172, %173, %cst_163 {dimension_numbers = #tpu.dot_dimension_numbers<[1], [0], [0], [1], [0, 0, 1, 1], [], []>} : vector<8x16xf32>, vector<16x512xf32>, vector<8x512xf32> -> vector<8x512xf32>
    %175 = arith.addf %170, %174 : vector<8x512xf32>
    %c8_164 = arith.constant 8 : index
    %c0_165 = arith.constant 0 : index
    %c0_166 = arith.constant 0 : index
    %176 = vector.load %arg3[%c8_164, %c0_165, %c0_166] : memref<25x8x16xf32, #tpu.memory_space<vmem>>, vector<1x8x16xf32>
    %177 = vector.shape_cast %176 : vector<1x8x16xf32> to vector<8x16xf32>
    %c0_167 = arith.constant 0 : index
    %c27_168 = arith.constant 27 : index
    %178 = vector.load %arg7[%c0_167, %c27_168] : memref<16x640xf32, #tpu.memory_space<vmem>>, vector<16x512xf32>
    %cst_169 = arith.constant dense<0.000000e+00> : vector<8x512xf32>
    %179 = tpu.matmul %177, %178, %cst_169 {dimension_numbers = #tpu.dot_dimension_numbers<[1], [0], [0], [1], [0, 0, 1, 1], [], []>} : vector<8x16xf32>, vector<16x512xf32>, vector<8x512xf32> -> vector<8x512xf32>
    %180 = arith.addf %175, %179 : vector<8x512xf32>
    %c9_170 = arith.constant 9 : index
    %c0_171 = arith.constant 0 : index
    %c0_172 = arith.constant 0 : index
    %181 = vector.load %arg3[%c9_170, %c0_171, %c0_172] : memref<25x8x16xf32, #tpu.memory_space<vmem>>, vector<1x8x16xf32>
    %182 = vector.shape_cast %181 : vector<1x8x16xf32> to vector<8x16xf32>
    %c0_173 = arith.constant 0 : index
    %c28_174 = arith.constant 28 : index
    %183 = vector.load %arg7[%c0_173, %c28_174] : memref<16x640xf32, #tpu.memory_space<vmem>>, vector<16x512xf32>
    %cst_175 = arith.constant dense<0.000000e+00> : vector<8x512xf32>
    %184 = tpu.matmul %182, %183, %cst_175 {dimension_numbers = #tpu.dot_dimension_numbers<[1], [0], [0], [1], [0, 0, 1, 1], [], []>} : vector<8x16xf32>, vector<16x512xf32>, vector<8x512xf32> -> vector<8x512xf32>
    %185 = arith.addf %180, %184 : vector<8x512xf32>
    %c10_176 = arith.constant 10 : index
    %c0_177 = arith.constant 0 : index
    %c0_178 = arith.constant 0 : index
    %186 = vector.load %arg3[%c10_176, %c0_177, %c0_178] : memref<25x8x16xf32, #tpu.memory_space<vmem>>, vector<1x8x16xf32>
    %187 = vector.shape_cast %186 : vector<1x8x16xf32> to vector<8x16xf32>
    %c0_179 = arith.constant 0 : index
    %c48_180 = arith.constant 48 : index
    %188 = vector.load %arg7[%c0_179, %c48_180] : memref<16x640xf32, #tpu.memory_space<vmem>>, vector<16x512xf32>
    %cst_181 = arith.constant dense<0.000000e+00> : vector<8x512xf32>
    %189 = tpu.matmul %187, %188, %cst_181 {dimension_numbers = #tpu.dot_dimension_numbers<[1], [0], [0], [1], [0, 0, 1, 1], [], []>} : vector<8x16xf32>, vector<16x512xf32>, vector<8x512xf32> -> vector<8x512xf32>
    %190 = arith.addf %185, %189 : vector<8x512xf32>
    %c11_182 = arith.constant 11 : index
    %c0_183 = arith.constant 0 : index
    %c0_184 = arith.constant 0 : index
    %191 = vector.load %arg3[%c11_182, %c0_183, %c0_184] : memref<25x8x16xf32, #tpu.memory_space<vmem>>, vector<1x8x16xf32>
    %192 = vector.shape_cast %191 : vector<1x8x16xf32> to vector<8x16xf32>
    %c0_185 = arith.constant 0 : index
    %c49_186 = arith.constant 49 : index
    %193 = vector.load %arg7[%c0_185, %c49_186] : memref<16x640xf32, #tpu.memory_space<vmem>>, vector<16x512xf32>
    %cst_187 = arith.constant dense<0.000000e+00> : vector<8x512xf32>
    %194 = tpu.matmul %192, %193, %cst_187 {dimension_numbers = #tpu.dot_dimension_numbers<[1], [0], [0], [1], [0, 0, 1, 1], [], []>} : vector<8x16xf32>, vector<16x512xf32>, vector<8x512xf32> -> vector<8x512xf32>
    %195 = arith.addf %190, %194 : vector<8x512xf32>
    %c12_188 = arith.constant 12 : index
    %c0_189 = arith.constant 0 : index
    %c0_190 = arith.constant 0 : index
    %196 = vector.load %arg3[%c12_188, %c0_189, %c0_190] : memref<25x8x16xf32, #tpu.memory_space<vmem>>, vector<1x8x16xf32>
    %197 = vector.shape_cast %196 : vector<1x8x16xf32> to vector<8x16xf32>
    %c0_191 = arith.constant 0 : index
    %c50_192 = arith.constant 50 : index
    %198 = vector.load %arg7[%c0_191, %c50_192] : memref<16x640xf32, #tpu.memory_space<vmem>>, vector<16x512xf32>
    %cst_193 = arith.constant dense<0.000000e+00> : vector<8x512xf32>
    %199 = tpu.matmul %197, %198, %cst_193 {dimension_numbers = #tpu.dot_dimension_numbers<[1], [0], [0], [1], [0, 0, 1, 1], [], []>} : vector<8x16xf32>, vector<16x512xf32>, vector<8x512xf32> -> vector<8x512xf32>
    %200 = arith.addf %195, %199 : vector<8x512xf32>
    %c13_194 = arith.constant 13 : index
    %c0_195 = arith.constant 0 : index
    %c0_196 = arith.constant 0 : index
    %201 = vector.load %arg3[%c13_194, %c0_195, %c0_196] : memref<25x8x16xf32, #tpu.memory_space<vmem>>, vector<1x8x16xf32>
    %202 = vector.shape_cast %201 : vector<1x8x16xf32> to vector<8x16xf32>
    %c0_197 = arith.constant 0 : index
    %c51_198 = arith.constant 51 : index
    %203 = vector.load %arg7[%c0_197, %c51_198] : memref<16x640xf32, #tpu.memory_space<vmem>>, vector<16x512xf32>
    %cst_199 = arith.constant dense<0.000000e+00> : vector<8x512xf32>
    %204 = tpu.matmul %202, %203, %cst_199 {dimension_numbers = #tpu.dot_dimension_numbers<[1], [0], [0], [1], [0, 0, 1, 1], [], []>} : vector<8x16xf32>, vector<16x512xf32>, vector<8x512xf32> -> vector<8x512xf32>
    %205 = arith.addf %200, %204 : vector<8x512xf32>
    %c14_200 = arith.constant 14 : index
    %c0_201 = arith.constant 0 : index
    %c0_202 = arith.constant 0 : index
    %206 = vector.load %arg3[%c14_200, %c0_201, %c0_202] : memref<25x8x16xf32, #tpu.memory_space<vmem>>, vector<1x8x16xf32>
    %207 = vector.shape_cast %206 : vector<1x8x16xf32> to vector<8x16xf32>
    %c0_203 = arith.constant 0 : index
    %c52_204 = arith.constant 52 : index
    %208 = vector.load %arg7[%c0_203, %c52_204] : memref<16x640xf32, #tpu.memory_space<vmem>>, vector<16x512xf32>
    %cst_205 = arith.constant dense<0.000000e+00> : vector<8x512xf32>
    %209 = tpu.matmul %207, %208, %cst_205 {dimension_numbers = #tpu.dot_dimension_numbers<[1], [0], [0], [1], [0, 0, 1, 1], [], []>} : vector<8x16xf32>, vector<16x512xf32>, vector<8x512xf32> -> vector<8x512xf32>
    %210 = arith.addf %205, %209 : vector<8x512xf32>
    %c15_206 = arith.constant 15 : index
    %c0_207 = arith.constant 0 : index
    %c0_208 = arith.constant 0 : index
    %211 = vector.load %arg3[%c15_206, %c0_207, %c0_208] : memref<25x8x16xf32, #tpu.memory_space<vmem>>, vector<1x8x16xf32>
    %212 = vector.shape_cast %211 : vector<1x8x16xf32> to vector<8x16xf32>
    %c0_209 = arith.constant 0 : index
    %c72_210 = arith.constant 72 : index
    %213 = vector.load %arg7[%c0_209, %c72_210] : memref<16x640xf32, #tpu.memory_space<vmem>>, vector<16x512xf32>
    %cst_211 = arith.constant dense<0.000000e+00> : vector<8x512xf32>
    %214 = tpu.matmul %212, %213, %cst_211 {dimension_numbers = #tpu.dot_dimension_numbers<[1], [0], [0], [1], [0, 0, 1, 1], [], []>} : vector<8x16xf32>, vector<16x512xf32>, vector<8x512xf32> -> vector<8x512xf32>
    %215 = arith.addf %210, %214 : vector<8x512xf32>
    %c16_212 = arith.constant 16 : index
    %c0_213 = arith.constant 0 : index
    %c0_214 = arith.constant 0 : index
    %216 = vector.load %arg3[%c16_212, %c0_213, %c0_214] : memref<25x8x16xf32, #tpu.memory_space<vmem>>, vector<1x8x16xf32>
    %217 = vector.shape_cast %216 : vector<1x8x16xf32> to vector<8x16xf32>
    %c0_215 = arith.constant 0 : index
    %c73_216 = arith.constant 73 : index
    %218 = vector.load %arg7[%c0_215, %c73_216] : memref<16x640xf32, #tpu.memory_space<vmem>>, vector<16x512xf32>
    %cst_217 = arith.constant dense<0.000000e+00> : vector<8x512xf32>
    %219 = tpu.matmul %217, %218, %cst_217 {dimension_numbers = #tpu.dot_dimension_numbers<[1], [0], [0], [1], [0, 0, 1, 1], [], []>} : vector<8x16xf32>, vector<16x512xf32>, vector<8x512xf32> -> vector<8x512xf32>
    %220 = arith.addf %215, %219 : vector<8x512xf32>
    %c17_218 = arith.constant 17 : index
    %c0_219 = arith.constant 0 : index
    %c0_220 = arith.constant 0 : index
    %221 = vector.load %arg3[%c17_218, %c0_219, %c0_220] : memref<25x8x16xf32, #tpu.memory_space<vmem>>, vector<1x8x16xf32>
    %222 = vector.shape_cast %221 : vector<1x8x16xf32> to vector<8x16xf32>
    %c0_221 = arith.constant 0 : index
    %c74_222 = arith.constant 74 : index
    %223 = vector.load %arg7[%c0_221, %c74_222] : memref<16x640xf32, #tpu.memory_space<vmem>>, vector<16x512xf32>
    %cst_223 = arith.constant dense<0.000000e+00> : vector<8x512xf32>
    %224 = tpu.matmul %222, %223, %cst_223 {dimension_numbers = #tpu.dot_dimension_numbers<[1], [0], [0], [1], [0, 0, 1, 1], [], []>} : vector<8x16xf32>, vector<16x512xf32>, vector<8x512xf32> -> vector<8x512xf32>
    %225 = arith.addf %220, %224 : vector<8x512xf32>
    %c18_224 = arith.constant 18 : index
    %c0_225 = arith.constant 0 : index
    %c0_226 = arith.constant 0 : index
    %226 = vector.load %arg3[%c18_224, %c0_225, %c0_226] : memref<25x8x16xf32, #tpu.memory_space<vmem>>, vector<1x8x16xf32>
    %227 = vector.shape_cast %226 : vector<1x8x16xf32> to vector<8x16xf32>
    %c0_227 = arith.constant 0 : index
    %c75_228 = arith.constant 75 : index
    %228 = vector.load %arg7[%c0_227, %c75_228] : memref<16x640xf32, #tpu.memory_space<vmem>>, vector<16x512xf32>
    %cst_229 = arith.constant dense<0.000000e+00> : vector<8x512xf32>
    %229 = tpu.matmul %227, %228, %cst_229 {dimension_numbers = #tpu.dot_dimension_numbers<[1], [0], [0], [1], [0, 0, 1, 1], [], []>} : vector<8x16xf32>, vector<16x512xf32>, vector<8x512xf32> -> vector<8x512xf32>
    %230 = arith.addf %225, %229 : vector<8x512xf32>
    %c19_230 = arith.constant 19 : index
    %c0_231 = arith.constant 0 : index
    %c0_232 = arith.constant 0 : index
    %231 = vector.load %arg3[%c19_230, %c0_231, %c0_232] : memref<25x8x16xf32, #tpu.memory_space<vmem>>, vector<1x8x16xf32>
    %232 = vector.shape_cast %231 : vector<1x8x16xf32> to vector<8x16xf32>
    %c0_233 = arith.constant 0 : index
    %c76_234 = arith.constant 76 : index
    %233 = vector.load %arg7[%c0_233, %c76_234] : memref<16x640xf32, #tpu.memory_space<vmem>>, vector<16x512xf32>
    %cst_235 = arith.constant dense<0.000000e+00> : vector<8x512xf32>
    %234 = tpu.matmul %232, %233, %cst_235 {dimension_numbers = #tpu.dot_dimension_numbers<[1], [0], [0], [1], [0, 0, 1, 1], [], []>} : vector<8x16xf32>, vector<16x512xf32>, vector<8x512xf32> -> vector<8x512xf32>
    %235 = arith.addf %230, %234 : vector<8x512xf32>
    %c20_236 = arith.constant 20 : index
    %c0_237 = arith.constant 0 : index
    %c0_238 = arith.constant 0 : index
    %236 = vector.load %arg3[%c20_236, %c0_237, %c0_238] : memref<25x8x16xf32, #tpu.memory_space<vmem>>, vector<1x8x16xf32>
    %237 = vector.shape_cast %236 : vector<1x8x16xf32> to vector<8x16xf32>
    %c0_239 = arith.constant 0 : index
    %c96_240 = arith.constant 96 : index
    %238 = vector.load %arg7[%c0_239, %c96_240] : memref<16x640xf32, #tpu.memory_space<vmem>>, vector<16x512xf32>
    %cst_241 = arith.constant dense<0.000000e+00> : vector<8x512xf32>
    %239 = tpu.matmul %237, %238, %cst_241 {dimension_numbers = #tpu.dot_dimension_numbers<[1], [0], [0], [1], [0, 0, 1, 1], [], []>} : vector<8x16xf32>, vector<16x512xf32>, vector<8x512xf32> -> vector<8x512xf32>
    %240 = arith.addf %235, %239 : vector<8x512xf32>
    %c21_242 = arith.constant 21 : index
    %c0_243 = arith.constant 0 : index
    %c0_244 = arith.constant 0 : index
    %241 = vector.load %arg3[%c21_242, %c0_243, %c0_244] : memref<25x8x16xf32, #tpu.memory_space<vmem>>, vector<1x8x16xf32>
    %242 = vector.shape_cast %241 : vector<1x8x16xf32> to vector<8x16xf32>
    %c0_245 = arith.constant 0 : index
    %c97_246 = arith.constant 97 : index
    %243 = vector.load %arg7[%c0_245, %c97_246] : memref<16x640xf32, #tpu.memory_space<vmem>>, vector<16x512xf32>
    %cst_247 = arith.constant dense<0.000000e+00> : vector<8x512xf32>
    %244 = tpu.matmul %242, %243, %cst_247 {dimension_numbers = #tpu.dot_dimension_numbers<[1], [0], [0], [1], [0, 0, 1, 1], [], []>} : vector<8x16xf32>, vector<16x512xf32>, vector<8x512xf32> -> vector<8x512xf32>
    %245 = arith.addf %240, %244 : vector<8x512xf32>
    %c22_248 = arith.constant 22 : index
    %c0_249 = arith.constant 0 : index
    %c0_250 = arith.constant 0 : index
    %246 = vector.load %arg3[%c22_248, %c0_249, %c0_250] : memref<25x8x16xf32, #tpu.memory_space<vmem>>, vector<1x8x16xf32>
    %247 = vector.shape_cast %246 : vector<1x8x16xf32> to vector<8x16xf32>
    %c0_251 = arith.constant 0 : index
    %c98_252 = arith.constant 98 : index
    %248 = vector.load %arg7[%c0_251, %c98_252] : memref<16x640xf32, #tpu.memory_space<vmem>>, vector<16x512xf32>
    %cst_253 = arith.constant dense<0.000000e+00> : vector<8x512xf32>
    %249 = tpu.matmul %247, %248, %cst_253 {dimension_numbers = #tpu.dot_dimension_numbers<[1], [0], [0], [1], [0, 0, 1, 1], [], []>} : vector<8x16xf32>, vector<16x512xf32>, vector<8x512xf32> -> vector<8x512xf32>
    %250 = arith.addf %245, %249 : vector<8x512xf32>
    %c23_254 = arith.constant 23 : index
    %c0_255 = arith.constant 0 : index
    %c0_256 = arith.constant 0 : index
    %251 = vector.load %arg3[%c23_254, %c0_255, %c0_256] : memref<25x8x16xf32, #tpu.memory_space<vmem>>, vector<1x8x16xf32>
    %252 = vector.shape_cast %251 : vector<1x8x16xf32> to vector<8x16xf32>
    %c0_257 = arith.constant 0 : index
    %c99_258 = arith.constant 99 : index
    %253 = vector.load %arg7[%c0_257, %c99_258] : memref<16x640xf32, #tpu.memory_space<vmem>>, vector<16x512xf32>
    %cst_259 = arith.constant dense<0.000000e+00> : vector<8x512xf32>
    %254 = tpu.matmul %252, %253, %cst_259 {dimension_numbers = #tpu.dot_dimension_numbers<[1], [0], [0], [1], [0, 0, 1, 1], [], []>} : vector<8x16xf32>, vector<16x512xf32>, vector<8x512xf32> -> vector<8x512xf32>
    %255 = arith.addf %250, %254 : vector<8x512xf32>
    %c24_260 = arith.constant 24 : index
    %c0_261 = arith.constant 0 : index
    %c0_262 = arith.constant 0 : index
    %256 = vector.load %arg3[%c24_260, %c0_261, %c0_262] : memref<25x8x16xf32, #tpu.memory_space<vmem>>, vector<1x8x16xf32>
    %257 = vector.shape_cast %256 : vector<1x8x16xf32> to vector<8x16xf32>
    %c0_263 = arith.constant 0 : index
    %c100_264 = arith.constant 100 : index
    %258 = vector.load %arg7[%c0_263, %c100_264] : memref<16x640xf32, #tpu.memory_space<vmem>>, vector<16x512xf32>
    %cst_265 = arith.constant dense<0.000000e+00> : vector<8x512xf32>
    %259 = tpu.matmul %257, %258, %cst_265 {dimension_numbers = #tpu.dot_dimension_numbers<[1], [0], [0], [1], [0, 0, 1, 1], [], []>} : vector<8x16xf32>, vector<16x512xf32>, vector<8x512xf32> -> vector<8x512xf32>
    %260 = arith.addf %255, %259 : vector<8x512xf32>
    %c0_266 = arith.constant 0 : index
    %c0_267 = arith.constant 0 : index
    %261 = vector.load %arg4[%c0_266, %c0_267] : memref<8x1xf32, #tpu.memory_space<vmem>>, vector<8x1xf32>
    %262 = vector.broadcast %261 : vector<8x1xf32> to vector<8x512xf32>
    %263 = arith.addf %260, %262 : vector<8x512xf32>
    %cst_268 = arith.constant 5.000000e-01 : f32
    %264 = vector.broadcast %cst_268 : f32 to vector<8x512xf32>
    %265 = arith.mulf %263, %264 : vector<8x512xf32>
    %cst_269 = arith.constant 0.707106769 : f32
    %266 = vector.broadcast %cst_269 : f32 to vector<8x512xf32>
    %267 = arith.mulf %263, %266 : vector<8x512xf32>
    %268 = math.erf %267 : vector<8x512xf32>
    %cst_270 = arith.constant 1.000000e+00 : f32
    %269 = vector.broadcast %cst_270 : f32 to vector<8x512xf32>
    %270 = arith.addf %268, %269 : vector<8x512xf32>
    %271 = arith.mulf %265, %270 : vector<8x512xf32>
    %c0_271 = arith.constant 0 : index
    %c0_272 = arith.constant 0 : index
    %272 = vector.load %arg6[%c0_271, %c0_272] : memref<8x512xf32, #tpu.memory_space<vmem>>, vector<8x512xf32>
    tpu.vector_store %arg6[%c0_271, %c0_272], %271 {strides = array<i32>} : memref<8x512xf32, #tpu.memory_space<vmem>>, vector<8x512xf32>,
    return
  }
}

</mosaic_0001>

<llo_original>
// kernel: forward.1
$region0: #{forward.1}
  #allocation0 [shape = 'u32[]', space=smem, size = 0x4, offset = 0x4, fixed_abs, tag = 'smem constant byte address 0x4 - core index']
  #allocation1 [shape = 'u32[144,128]{1,0:T(1,128)}', space=vmem, size = 0x12000, scoped, tag = 'internal scratch']
  #allocation2 [shape = 'f32[16,640]{1,0:T(8,128)}', space=vmem, size = 0xa000, scoped, tag = 'scratch operand']
  %s0 = inlined_call_operand.vmem [shape: f32[8,640], index: 0, kind: input, shape index: {}]
  %s1 = inlined_call_operand.vmem [shape: f32[25,16,8], index: 1, kind: input, shape index: {}]
  %s2 = inlined_call_operand.vmem [shape: f32[16,1], index: 2, kind: input, shape index: {}]
  %s3 = inlined_call_operand.vmem [shape: f32[25,8,16], index: 3, kind: input, shape index: {}]
  %s4 = inlined_call_operand.vmem [shape: f32[8,1], index: 4, kind: input, shape index: {}]
  %s5 = inlined_call_operand.vmem [shape: f32[1,512], index: 5, kind: input, shape index: {}]
  %s6 = inlined_call_operand.vmem [shape: f32[8,512], index: 6, kind: output, shape index: {}]
  %s7 = sld [smem:[#allocation0]]
  $region34: #{forward.1} parent=0
    _
  %s9 = ssub.s32 1, %s7
  %s10 = scalar_select 0, %s9, %s7
  // Predicated region
  $region2: #{forward.1} parent=0 // pred_check
    _
  $region3: #{forward.1} parent=0 // pred_check_branch
    %12 = sbr.rel (0) target = $region5
  $region4: #{forward.1} parent=0 // pred_region
    _
  $region5: #{forward.1} parent=0 // pred_fallthru
    _
  // Predicated region
  $region6: #{forward.1} parent=0 // pred_check
    _
  $region7: #{forward.1} parent=0 // pred_check_branch
    %14 = sbr.rel (0) target = $region9
  $region8: #{forward.1} parent=0 // pred_region
    _
  $region9: #{forward.1} parent=0 // pred_fallthru
    _
  // Predicated region
  $region10: #{forward.1} parent=0 // pred_check
    _
  $region11: #{forward.1} parent=0 // pred_check_branch
    %16 = sbr.rel (0) target = $region13
  $region12: #{forward.1} parent=0 // pred_region
    _
  $region13: #{forward.1} parent=0 // pred_fallthru
    _
  // Predicated region
  $region14: #{forward.1} parent=0 // pred_check
    _
  $region15: #{forward.1} parent=0 // pred_check_branch
    %18 = sbr.rel (0) target = $region17
  $region16: #{forward.1} parent=0 // pred_region
    _
  $region17: #{forward.1} parent=0 // pred_fallthru
    _
  // Predicated region
  $region18: #{forward.1} parent=0 // pred_check
    _
  $region19: #{forward.1} parent=0 // pred_check_branch
    %20 = sbr.rel (0) target = $region21
  $region20: #{forward.1} parent=0 // pred_region
    _
  $region21: #{forward.1} parent=0 // pred_fallthru
    _
  // Predicated region
  $region22: #{forward.1} parent=0 // pred_check
    _
  $region23: #{forward.1} parent=0 // pred_check_branch
    %22 = sbr.rel (0) target = $region25
  $region24: #{forward.1} parent=0 // pred_region
    _
  $region25: #{forward.1} parent=0 // pred_fallthru
    _
  %v23 = vld [vmem:[%s1] sm:$0xff]
  %v24 = vld [vmem:[%s1 + $0x8] sm:$0xff]
  %v25 = vld [vmem:[%s0] sm:$0xff]
  %v26 = vld [vmem:[%s0 + $0x8] sm:$0xff]
  %v27 = vld [vmem:[%s0 + $0x10] sm:$0xff]
  %v28 = vld [vmem:[%s0 + $0x18] sm:$0xff]
  %s29 = scalar_lea.vmem %s1, 16
  %v30 = vld [vmem:[%s29] sm:$0xff]
  %v31 = vld [vmem:[%s29 + $0x8] sm:$0xff]
  %v32 = vld [vmem:[%s0] sm:$0xff]
  %v33 = vld [vmem:[%s0 + $0x8] sm:$0xff]
  %v34 = vld [vmem:[%s0 + $0x10] sm:$0xff]
  %v35 = vld [vmem:[%s0 + $0x18] sm:$0xff]
  %v36 = vld [vmem:[%s0 + $0x20] sm:$0xff]
  %42 = vrot.lane.b32.xlu0 %v32, 127
  %v43 = vpop.permute.xlu0 %42
  %44 = vrot.lane.b32.xlu0 %v33, 127
  %v45 = vpop.permute.xlu0 %44
  %46 = vrot.lane.b32.xlu0 %v34, 127
  %v47 = vpop.permute.xlu0 %46
  %48 = vrot.lane.b32.xlu0 %v35, 127
  %v49 = vpop.permute.xlu0 %48
  %50 = vrot.lane.b32.xlu0 %v36, 127
  %v51 = vpop.permute.xlu0 %50
  %vm52 = vcmask 1039360
  %v53 = vsel %vm52, %v43, %v45
  %v54 = vsel %vm52, %v45, %v47
  %v55 = vsel %vm52, %v47, %v49
  %v56 = vsel %vm52, %v49, %v51
  %vm61 = vcmask 64512
  %v63 = vsel %vm61, %v30, 0
  %v66 = vsel %vm61, %v31, 0
  %68 = vmatprep.subr.mxu0 %v54
  %69 = vmatpush1.msra.mxu0 %v53
  %70 = vmatprep.subr.mxu0 0.0
  %71 = vmatpush1.msra.mxu0 0.0
  %72 = vmatprep.subr.mxu0 0.0
  %73 = vmatpush1.msra.mxu0 0.0
  %74 = vmatprep.subr.mxu0 0.0
  %75 = vmatpush1.msra.mxu0 0.0
  %76 = vmatprep.subr.mxu0 0.0
  %77 = vmatpush1.msra.mxu0 0.0
  %78 = vmatprep.subr.mxu0 0.0
  %79 = vmatpush1.msra.mxu0 0.0
  %80 = vmatprep.subr.mxu0 0.0
  %81 = vmatpush1.msra.mxu0 0.0
  %82 = vmatprep.subr.mxu0 0.0
  %83 = vmatpush1.msra.mxu0 0.0
  %84 = vmatprep.subr.mxu0 0.0
  %85 = vmatpush1.msra.mxu0 0.0
  %86 = vmatprep.subr.mxu0 0.0
  %87 = vmatpush1.msra.mxu0 0.0
  %88 = vmatprep.subr.mxu0 0.0
  %89 = vmatpush1.msra.mxu0 0.0
  %90 = vmatprep.subr.mxu0 0.0
  %91 = vmatpush1.msra.mxu0 0.0
  %92 = vmatprep.subr.mxu0 0.0
  %93 = vmatpush1.msra.mxu0 0.0
  %94 = vmatprep.subr.mxu0 0.0
  %95 = vmatpush1.msra.mxu0 0.0
  %96 = vmatprep.subr.mxu0 0.0
  %97 = vmatpush1.msra.mxu0 0.0
  %98 = vmatprep.subr.mxu0 0.0
  %99 = vmatpush1.msra.mxu0 0.0
  %100 = vmatprep.subr.mxu0 0.0
  %101 = vmatpush1.msra.mxu0 0.0
  %102 = vmatprep.subr.mxu0 0.0
  %103 = vmatpush1.msra.mxu0 0.0
  %104 = vmatprep.subr.mxu0 0.0
  %105 = vmatpush1.msra.mxu0 0.0
  %106 = vmatprep.subr.mxu0 0.0
  %107 = vmatpush1.msra.mxu0 0.0
  %108 = vmatprep.subr.mxu0 0.0
  %109 = vmatpush1.msra.mxu0 0.0
  %110 = vmatprep.subr.mxu0 0.0
  %111 = vmatpush1.msra.mxu0 0.0
  %112 = vmatprep.subr.mxu0 0.0
  %113 = vmatpush1.msra.mxu0 0.0
  %114 = vmatprep.subr.mxu0 0.0
  %115 = vmatpush1.msra.mxu0 0.0
  %116 = vmatprep.subr.mxu0 0.0
  %117 = vmatpush1.msra.mxu0 0.0
  %118 = vmatprep.subr.mxu0 0.0
  %119 = vmatpush1.msra.mxu0 0.0
  %120 = vmatprep.subr.mxu0 0.0
  %121 = vmatpush1.msra.mxu0 0.0
  %122 = vmatprep.subr.mxu0 0.0
  %123 = vmatpush1.msra.mxu0 0.0
  %124 = vmatprep.subr.mxu0 0.0
  %125 = vmatpush1.msra.mxu0 0.0
  %126 = vmatprep.subr.mxu0 0.0
  %127 = vmatpush1.msra.mxu0 0.0
  %128 = vmatprep.subr.mxu0 0.0
  %129 = vmatpush1.msra.mxu0 0.0
  %130 = vmatprep.subr.mxu0 0.0
  %131 = vmatpush1.msra.mxu0 0.0
  %132 = vmatprep.mubr.f32.mxu0 0.0
  %133 = vmatmul.mubr.f32.gmra.mrb[0].mxu0 %v63
  %v134 = vpop.f32.mrb[0].mxu0
  %v135 = vadd.f32 0.0, %v134
  %v136 = vpop.f32.mrb[0].mxu0
  %v137 = vadd.f32 0.0, %v136
  %138 = vmatprep.mubr.f32.mxu0 0.0
  %139 = vmatmul.mubr.f32.gmra.mrb[0].mxu0 %v66
  %v140 = vpop.f32.mrb[0].mxu0
  %v141 = vadd.f32 0.0, %v140
  %v142 = vpop.f32.mrb[0].mxu0
  %v143 = vadd.f32 0.0, %v142
  %144 = vdwg.mxu0
  %145 = vmatprep.subr.mxu0 %v56
  %146 = vmatpush1.msra.mxu0 %v55
  %147 = vmatprep.subr.mxu0 0.0
  %148 = vmatpush1.msra.mxu0 0.0
  %149 = vmatprep.subr.mxu0 0.0
  %150 = vmatpush1.msra.mxu0 0.0
  %151 = vmatprep.subr.mxu0 0.0
  %152 = vmatpush1.msra.mxu0 0.0
  %153 = vmatprep.subr.mxu0 0.0
  %154 = vmatpush1.msra.mxu0 0.0
  %155 = vmatprep.subr.mxu0 0.0
  %156 = vmatpush1.msra.mxu0 0.0
  %157 = vmatprep.subr.mxu0 0.0
  %158 = vmatpush1.msra.mxu0 0.0
  %159 = vmatprep.subr.mxu0 0.0
  %160 = vmatpush1.msra.mxu0 0.0
  %161 = vmatprep.subr.mxu0 0.0
  %162 = vmatpush1.msra.mxu0 0.0
  %163 = vmatprep.subr.mxu0 0.0
  %164 = vmatpush1.msra.mxu0 0.0
  %165 = vmatprep.subr.mxu0 0.0
  %166 = vmatpush1.msra.mxu0 0.0
  %167 = vmatprep.subr.mxu0 0.0
  %168 = vmatpush1.msra.mxu0 0.0
  %169 = vmatprep.subr.mxu0 0.0
  %170 = vmatpush1.msra.mxu0 0.0
  %171 = vmatprep.subr.mxu0 0.0
  %172 = vmatpush1.msra.mxu0 0.0
  %173 = vmatprep.subr.mxu0 0.0
  %174 = vmatpush1.msra.mxu0 0.0
  %175 = vmatprep.subr.mxu0 0.0
  %176 = vmatpush1.msra.mxu0 0.0
  %177 = vmatprep.subr.mxu0 0.0
  %178 = vmatpush1.msra.mxu0 0.0
  %179 = vmatprep.subr.mxu0 0.0
  %180 = vmatpush1.msra.mxu0 0.0
  %181 = vmatprep.subr.mxu0 0.0
  %182 = vmatpush1.msra.mxu0 0.0
  %183 = vmatprep.subr.mxu0 0.0
  %184 = vmatpush1.msra.mxu0 0.0
  %185 = vmatprep.subr.mxu0 0.0
  %186 = vmatpush1.msra.mxu0 0.0
  %187 = vmatprep.subr.mxu0 0.0
  %188 = vmatpush1.msra.mxu0 0.0
  %189 = vmatprep.subr.mxu0 0.0
  %190 = vmatpush1.msra.mxu0 0.0
  %191 = vmatprep.subr.mxu0 0.0
  %192 = vmatpush1.msra.mxu0 0.0
  %193 = vmatprep.subr.mxu0 0.0
  %194 = vmatpush1.msra.mxu0 0.0
  %195 = vmatprep.subr.mxu0 0.0
  %196 = vmatpush1.msra.mxu0 0.0
  %197 = vmatprep.subr.mxu0 0.0
  %198 = vmatpush1.msra.mxu0 0.0
  %199 = vmatprep.subr.mxu0 0.0
  %200 = vmatpush1.msra.mxu0 0.0
  %201 = vmatprep.subr.mxu0 0.0
  %202 = vmatpush1.msra.mxu0 0.0
  %203 = vmatprep.subr.mxu0 0.0
  %204 = vmatpush1.msra.mxu0 0.0
  %205 = vmatprep.subr.mxu0 0.0
  %206 = vmatpush1.msra.mxu0 0.0
  %207 = vmatprep.subr.mxu0 0.0
  %208 = vmatpush1.msra.mxu0 0.0
  %209 = vmatprep.mubr.f32.mxu0 0.0
  %210 = vmatmul.mubr.f32.gmra.mrb[0].mxu0 %v63
  %v211 = vpop.f32.mrb[0].mxu0
  %v212 = vadd.f32 0.0, %v211
  %v213 = vpop.f32.mrb[0].mxu0
  %v214 = vadd.f32 0.0, %v213
  %215 = vmatprep.mubr.f32.mxu0 0.0
  %216 = vmatmul.mubr.f32.gmra.mrb[0].mxu0 %v66
  %v217 = vpop.f32.mrb[0].mxu0
  %v218 = vadd.f32 0.0, %v217
  %v219 = vpop.f32.mrb[0].mxu0
  %v220 = vadd.f32 0.0, %v219
  %221 = vdwg.mxu0
  %v223 = vsel %vm61, %v23, 0
  %v226 = vsel %vm61, %v24, 0
  %228 = vmatprep.subr.mxu0 %v26
  %229 = vmatpush1.msra.mxu0 %v25
  %230 = vmatprep.subr.mxu0 0.0
  %231 = vmatpush1.msra.mxu0 0.0
  %232 = vmatprep.subr.mxu0 0.0
  %233 = vmatpush1.msra.mxu0 0.0
  %234 = vmatprep.subr.mxu0 0.0
  %235 = vmatpush1.msra.mxu0 0.0
  %236 = vmatprep.subr.mxu0 0.0
  %237 = vmatpush1.msra.mxu0 0.0
  %238 = vmatprep.subr.mxu0 0.0
  %239 = vmatpush1.msra.mxu0 0.0
  %240 = vmatprep.subr.mxu0 0.0
  %241 = vmatpush1.msra.mxu0 0.0
  %242 = vmatprep.subr.mxu0 0.0
  %243 = vmatpush1.msra.mxu0 0.0
  %244 = vmatprep.subr.mxu0 0.0
  %245 = vmatpush1.msra.mxu0 0.0
  %246 = vmatprep.subr.mxu0 0.0
  %247 = vmatpush1.msra.mxu0 0.0
  %248 = vmatprep.subr.mxu0 0.0
  %249 = vmatpush1.msra.mxu0 0.0
  %250 = vmatprep.subr.mxu0 0.0
  %251 = vmatpush1.msra.mxu0 0.0
  %252 = vmatprep.subr.mxu0 0.0
  %253 = vmatpush1.msra.mxu0 0.0
  %254 = vmatprep.subr.mxu0 0.0
  %255 = vmatpush1.msra.mxu0 0.0
  %256 = vmatprep.subr.mxu0 0.0
  %257 = vmatpush1.msra.mxu0 0.0
  %258 = vmatprep.subr.mxu0 0.0
  %259 = vmatpush1.msra.mxu0 0.0
  %260 = vmatprep.subr.mxu0 0.0
  %261 = vmatpush1.msra.mxu0 0.0
  %262 = vmatprep.subr.mxu0 0.0
  %263 = vmatpush1.msra.mxu0 0.0
  %264 = vmatprep.subr.mxu0 0.0
  %265 = vmatpush1.msra.mxu0 0.0
  %266 = vmatprep.subr.mxu0 0.0
  %267 = vmatpush1.msra.mxu0 0.0
  %268 = vmatprep.subr.mxu0 0.0
  %269 = vmatpush1.msra.mxu0 0.0
  %270 = vmatprep.subr.mxu0 0.0
  %271 = vmatpush1.msra.mxu0 0.0
  %272 = vmatprep.subr.mxu0 0.0
  %273 = vmatpush1.msra.mxu0 0.0
  %274 = vmatprep.subr.mxu0 0.0
  %275 = vmatpush1.msra.mxu0 0.0
  %276 = vmatprep.subr.mxu0 0.0
  %277 = vmatpush1.msra.mxu0 0.0
  %278 = vmatprep.subr.mxu0 0.0
  %279 = vmatpush1.msra.mxu0 0.0
  %280 = vmatprep.subr.mxu0 0.0
  %281 = vmatpush1.msra.mxu0 0.0
  %282 = vmatprep.subr.mxu0 0.0
  %283 = vmatpush1.msra.mxu0 0.0
  %284 = vmatprep.subr.mxu0 0.0
  %285 = vmatpush1.msra.mxu0 0.0
  %286 = vmatprep.subr.mxu0 0.0
  %287 = vmatpush1.msra.mxu0 0.0
  %288 = vmatprep.subr.mxu0 0.0
  %289 = vmatpush1.msra.mxu0 0.0
  %290 = vmatprep.subr.mxu0 0.0
  %291 = vmatpush1.msra.mxu0 0.0
  %292 = vmatprep.mubr.f32.mxu0 0.0
  %293 = vmatmul.mubr.f32.gmra.mrb[0].mxu0 %v223
  %v294 = vpop.f32.mrb[0].mxu0
  %v295 = vadd.f32 %v135, %v294
  %v296 = vpop.f32.mrb[0].mxu0
  %v297 = vadd.f32 %v137, %v296
  %298 = vmatprep.mubr.f32.mxu0 0.0
  %299 = vmatmul.mubr.f32.gmra.mrb[0].mxu0 %v226
  %v300 = vpop.f32.mrb[0].mxu0
  %v301 = vadd.f32 %v141, %v300
  %v302 = vpop.f32.mrb[0].mxu0
  %v303 = vadd.f32 %v143, %v302
  %304 = vdwg.mxu0
  %305 = vmatprep.subr.mxu0 %v28
  %306 = vmatpush1.msra.mxu0 %v27
  %307 = vmatprep.subr.mxu0 0.0
  %308 = vmatpush1.msra.mxu0 0.0
  %309 = vmatprep.subr.mxu0 0.0
  %310 = vmatpush1.msra.mxu0 0.0
  %311 = vmatprep.subr.mxu0 0.0
  %312 = vmatpush1.msra.mxu0 0.0
  %313 = vmatprep.subr.mxu0 0.0
  %314 = vmatpush1.msra.mxu0 0.0
  %315 = vmatprep.subr.mxu0 0.0
  %316 = vmatpush1.msra.mxu0 0.0
  %317 = vmatprep.subr.mxu0 0.0
  %318 = vmatpush1.msra.mxu0 0.0
  %319 = vmatprep.subr.mxu0 0.0
  %320 = vmatpush1.msra.mxu0 0.0
  %321 = vmatprep.subr.mxu0 0.0
  %322 = vmatpush1.msra.mxu0 0.0
  %323 = vmatprep.subr.mxu0 0.0
  %324 = vmatpush1.msra.mxu0 0.0
  %325 = vmatprep.subr.mxu0 0.0
  %326 = vmatpush1.msra.mxu0 0.0
  %327 = vmatprep.subr.mxu0 0.0
  %328 = vmatpush1.msra.mxu0 0.0
  %329 = vmatprep.subr.mxu0 0.0
  %330 = vmatpush1.msra.mxu0 0.0
  %331 = vmatprep.subr.mxu0 0.0
  %332 = vmatpush1.msra.mxu0 0.0
  %333 = vmatprep.subr.mxu0 0.0
  %334 = vmatpush1.msra.mxu0 0.0
  %335 = vmatprep.subr.mxu0 0.0
  %336 = vmatpush1.msra.mxu0 0.0
  %337 = vmatprep.subr.mxu0 0.0
  %338 = vmatpush1.msra.mxu0 0.0
  %339 = vmatprep.subr.mxu0 0.0
  %340 = vmatpush1.msra.mxu0 0.0
  %341 = vmatprep.subr.mxu0 0.0
  %342 = vmatpush1.msra.mxu0 0.0
  %343 = vmatprep.subr.mxu0 0.0
  %344 = vmatpush1.msra.mxu0 0.0
  %345 = vmatprep.subr.mxu0 0.0
  %346 = vmatpush1.msra.mxu0 0.0
  %347 = vmatprep.subr.mxu0 0.0
  %348 = vmatpush1.msra.mxu0 0.0
  %349 = vmatprep.subr.mxu0 0.0
  %350 = vmatpush1.msra.mxu0 0.0
  %351 = vmatprep.subr.mxu0 0.0
  %352 = vmatpush1.msra.mxu0 0.0
  %353 = vmatprep.subr.mxu0 0.0
  %354 = vmatpush1.msra.mxu0 0.0
  %355 = vmatprep.subr.mxu0 0.0
  %356 = vmatpush1.msra.mxu0 0.0
  %357 = vmatprep.subr.mxu0 0.0
  %358 = vmatpush1.msra.mxu0 0.0
  %359 = vmatprep.subr.mxu0 0.0
  %360 = vmatpush1.msra.mxu0 0.0
  %361 = vmatprep.subr.mxu0 0.0
  %362 = vmatpush1.msra.mxu0 0.0
  %363 = vmatprep.subr.mxu0 0.0
  %364 = vmatpush1.msra.mxu0 0.0
  %365 = vmatprep.subr.mxu0 0.0
  %366 = vmatpush1.msra.mxu0 0.0
  %367 = vmatprep.subr.mxu0 0.0
  %368 = vmatpush1.msra.mxu0 0.0
  %369 = vmatprep.mubr.f32.mxu0 0.0
  %370 = vmatmul.mubr.f32.gmra.mrb[0].mxu0 %v223
  %v371 = vpop.f32.mrb[0].mxu0
  %v372 = vadd.f32 %v212, %v371
  %v373 = vpop.f32.mrb[0].mxu0
  %v374 = vadd.f32 %v214, %v373
  %375 = vmatprep.mubr.f32.mxu0 0.0
  %376 = vmatmul.mubr.f32.gmra.mrb[0].mxu0 %v226
  %v377 = vpop.f32.mrb[0].mxu0
  %v378 = vadd.f32 %v218, %v377
  %v379 = vpop.f32.mrb[0].mxu0
  %v380 = vadd.f32 %v220, %v379
  %381 = vdwg.mxu0
  %s382 = scalar_lea.vmem %s1, 32
  %v383 = vld [vmem:[%s382] sm:$0xff]
  %v384 = vld [vmem:[%s382 + $0x8] sm:$0xff]
  %385 = vrot.lane.b32.xlu0 %v32, 126
  %v386 = vpop.permute.xlu0 %385
  %387 = vrot.lane.b32.xlu0 %v33, 126
  %v388 = vpop.permute.xlu0 %387
  %389 = vrot.lane.b32.xlu0 %v34, 126
  %v390 = vpop.permute.xlu0 %389
  %391 = vrot.lane.b32.xlu0 %v35, 126
  %v392 = vpop.permute.xlu0 %391
  %393 = vrot.lane.b32.xlu0 %v36, 126
  %v394 = vpop.permute.xlu0 %393
  %vm395 = vcmask 1031168
  %v396 = vsel %vm395, %v386, %v388
  %v397 = vsel %vm395, %v388, %v390
  %v398 = vsel %vm395, %v390, %v392
  %v399 = vsel %vm395, %v392, %v394
  %v405 = vsel %vm61, %v383, 0
  %v408 = vsel %vm61, %v384, 0
  %410 = vmatprep.subr.mxu0 %v397
  %411 = vmatpush1.msra.mxu0 %v396
  %412 = vmatprep.subr.mxu0 0.0
  %413 = vmatpush1.msra.mxu0 0.0
  %414 = vmatprep.subr.mxu0 0.0
  %415 = vmatpush1.msra.mxu0 0.0
  %416 = vmatprep.subr.mxu0 0.0
  %417 = vmatpush1.msra.mxu0 0.0
  %418 = vmatprep.subr.mxu0 0.0
  %419 = vmatpush1.msra.mxu0 0.0
  %420 = vmatprep.subr.mxu0 0.0
  %421 = vmatpush1.msra.mxu0 0.0
  %422 = vmatprep.subr.mxu0 0.0
  %423 = vmatpush1.msra.mxu0 0.0
  %424 = vmatprep.subr.mxu0 0.0
  %425 = vmatpush1.msra.mxu0 0.0
  %426 = vmatprep.subr.mxu0 0.0
  %427 = vmatpush1.msra.mxu0 0.0
  %428 = vmatprep.subr.mxu0 0.0
  %429 = vmatpush1.msra.mxu0 0.0
  %430 = vmatprep.subr.mxu0 0.0
  %431 = vmatpush1.msra.mxu0 0.0
  %432 = vmatprep.subr.mxu0 0.0
  %433 = vmatpush1.msra.mxu0 0.0
  %434 = vmatprep.subr.mxu0 0.0
  %435 = vmatpush1.msra.mxu0 0.0
  %436 = vmatprep.subr.mxu0 0.0
  %437 = vmatpush1.msra.mxu0 0.0
  %438 = vmatprep.subr.mxu0 0.0
  %439 = vmatpush1.msra.mxu0 0.0
  %440 = vmatprep.subr.mxu0 0.0
  %441 = vmatpush1.msra.mxu0 0.0
  %442 = vmatprep.subr.mxu0 0.0
  %443 = vmatpush1.msra.mxu0 0.0
  %444 = vmatprep.subr.mxu0 0.0
  %445 = vmatpush1.msra.mxu0 0.0
  %446 = vmatprep.subr.mxu0 0.0
  %447 = vmatpush1.msra.mxu0 0.0
  %448 = vmatprep.subr.mxu0 0.0
  %449 = vmatpush1.msra.mxu0 0.0
  %450 = vmatprep.subr.mxu0 0.0
  %451 = vmatpush1.msra.mxu0 0.0
  %452 = vmatprep.subr.mxu0 0.0
  %453 = vmatpush1.msra.mxu0 0.0
  %454 = vmatprep.subr.mxu0 0.0
  %455 = vmatpush1.msra.mxu0 0.0
  %456 = vmatprep.subr.mxu0 0.0
  %457 = vmatpush1.msra.mxu0 0.0
  %458 = vmatprep.subr.mxu0 0.0
  %459 = vmatpush1.msra.mxu0 0.0
  %460 = vmatprep.subr.mxu0 0.0
  %461 = vmatpush1.msra.mxu0 0.0
  %462 = vmatprep.subr.mxu0 0.0
  %463 = vmatpush1.msra.mxu0 0.0
  %464 = vmatprep.subr.mxu0 0.0
  %465 = vmatpush1.msra.mxu0 0.0
  %466 = vmatprep.subr.mxu0 0.0
  %467 = vmatpush1.msra.mxu0 0.0
  %468 = vmatprep.subr.mxu0 0.0
  %469 = vmatpush1.msra.mxu0 0.0
  %470 = vmatprep.subr.mxu0 0.0
  %471 = vmatpush1.msra.mxu0 0.0
  %472 = vmatprep.subr.mxu0 0.0
  %473 = vmatpush1.msra.mxu0 0.0
  %474 = vmatprep.mubr.f32.mxu0 0.0
  %475 = vmatmul.mubr.f32.gmra.mrb[0].mxu0 %v405
  %v476 = vpop.f32.mrb[0].mxu0
  %v477 = vadd.f32 0.0, %v476
  %v478 = vpop.f32.mrb[0].mxu0
  %v479 = vadd.f32 0.0, %v478
  %480 = vmatprep.mubr.f32.mxu0 0.0
  %481 = vmatmul.mubr.f32.gmra.mrb[0].mxu0 %v408
  %v482 = vpop.f32.mrb[0].mxu0
  %v483 = vadd.f32 0.0, %v482
  %v484 = vpop.f32.mrb[0].mxu0
  %v485 = vadd.f32 0.0, %v484
  %486 = vdwg.mxu0
  %487 = vmatprep.subr.mxu0 %v399
  %488 = vmatpush1.msra.mxu0 %v398
  %489 = vmatprep.subr.mxu0 0.0
  %490 = vmatpush1.msra.mxu0 0.0
  %491 = vmatprep.subr.mxu0 0.0
  %492 = vmatpush1.msra.mxu0 0.0
  %493 = vmatprep.subr.mxu0 0.0
  %494 = vmatpush1.msra.mxu0 0.0
  %495 = vmatprep.subr.mxu0 0.0
  %496 = vmatpush1.msra.mxu0 0.0
  %497 = vmatprep.subr.mxu0 0.0
  %498 = vmatpush1.msra.mxu0 0.0
  %499 = vmatprep.subr.mxu0 0.0
  %500 = vmatpush1.msra.mxu0 0.0
  %501 = vmatprep.subr.mxu0 0.0
  %502 = vmatpush1.msra.mxu0 0.0
  %503 = vmatprep.subr.mxu0 0.0
  %504 = vmatpush1.msra.mxu0 0.0
  %505 = vmatprep.subr.mxu0 0.0
  %506 = vmatpush1.msra.mxu0 0.0
  %507 = vmatprep.subr.mxu0 0.0
  %508 = vmatpush1.msra.mxu0 0.0
  %509 = vmatprep.subr.mxu0 0.0
  %510 = vmatpush1.msra.mxu0 0.0
  %511 = vmatprep.subr.mxu0 0.0
  %512 = vmatpush1.msra.mxu0 0.0
  %513 = vmatprep.subr.mxu0 0.0
  %514 = vmatpush1.msra.mxu0 0.0
  %515 = vmatprep.subr.mxu0 0.0
  %516 = vmatpush1.msra.mxu0 0.0
  %517 = vmatprep.subr.mxu0 0.0
  %518 = vmatpush1.msra.mxu0 0.0
  %519 = vmatprep.subr.mxu0 0.0
  %520 = vmatpush1.msra.mxu0 0.0
  %521 = vmatprep.subr.mxu0 0.0
  %522 = vmatpush1.msra.mxu0 0.0
  %523 = vmatprep.subr.mxu0 0.0
  %524 = vmatpush1.msra.mxu0 0.0
  %525 = vmatprep.subr.mxu0 0.0
  %526 = vmatpush1.msra.mxu0 0.0
  %527 = vmatprep.subr.mxu0 0.0
  %528 = vmatpush1.msra.mxu0 0.0
  %529 = vmatprep.subr.mxu0 0.0
  %530 = vmatpush1.msra.mxu0 0.0
  %531 = vmatprep.subr.mxu0 0.0
  %532 = vmatpush1.msra.mxu0 0.0
  %533 = vmatprep.subr.mxu0 0.0
  %534 = vmatpush1.msra.mxu0 0.0
  %535 = vmatprep.subr.mxu0 0.0
  %536 = vmatpush1.msra.mxu0 0.0
  %537 = vmatprep.subr.mxu0 0.0
  %538 = vmatpush1.msra.mxu0 0.0
  %539 = vmatprep.subr.mxu0 0.0
  %540 = vmatpush1.msra.mxu0 0.0
  %541 = vmatprep.subr.mxu0 0.0
  %542 = vmatpush1.msra.mxu0 0.0
  %543 = vmatprep.subr.mxu0 0.0
  %544 = vmatpush1.msra.mxu0 0.0
  %545 = vmatprep.subr.mxu0 0.0
  %546 = vmatpush1.msra.mxu0 0.0
  %547 = vmatprep.subr.mxu0 0.0
  %548 = vmatpush1.msra.mxu0 0.0
  %549 = vmatprep.subr.mxu0 0.0
  %550 = vmatpush1.msra.mxu0 0.0
  %551 = vmatprep.mubr.f32.mxu0 0.0
  %552 = vmatmul.mubr.f32.gmra.mrb[0].mxu0 %v405
  %v553 = vpop.f32.mrb[0].mxu0
  %v554 = vadd.f32 0.0, %v553
  %v555 = vpop.f32.mrb[0].mxu0
  %v556 = vadd.f32 0.0, %v555
  %557 = vmatprep.mubr.f32.mxu0 0.0
  %558 = vmatmul.mubr.f32.gmra.mrb[0].mxu0 %v408
  %v559 = vpop.f32.mrb[0].mxu0
  %v560 = vadd.f32 0.0, %v559
  %v561 = vpop.f32.mrb[0].mxu0
  %v562 = vadd.f32 0.0, %v561
  %563 = vdwg.mxu0
  %v564 = vadd.f32 %v295, %v477
  %v565 = vadd.f32 %v297, %v479
  %v566 = vadd.f32 %v372, %v554
  %v567 = vadd.f32 %v374, %v556
  %v568 = vadd.f32 %v301, %v483
  %v569 = vadd.f32 %v303, %v485
  %v570 = vadd.f32 %v378, %v560
  %v571 = vadd.f32 %v380, %v562
  %s572 = scalar_lea.vmem %s1, 48
  %v573 = vld [vmem:[%s572] sm:$0xff]
  %v574 = vld [vmem:[%s572 + $0x8] sm:$0xff]
  %575 = vrot.lane.b32.xlu0 %v32, 125
  %v576 = vpop.permute.xlu0 %575
  %577 = vrot.lane.b32.xlu0 %v33, 125
  %v578 = vpop.permute.xlu0 %577
  %579 = vrot.lane.b32.xlu0 %v34, 125
  %v580 = vpop.permute.xlu0 %579
  %581 = vrot.lane.b32.xlu0 %v35, 125
  %v582 = vpop.permute.xlu0 %581
  %583 = vrot.lane.b32.xlu0 %v36, 125
  %v584 = vpop.permute.xlu0 %583
  %vm585 = vcmask 1022976
  %v586 = vsel %vm585, %v576, %v578
  %v587 = vsel %vm585, %v578, %v580
  %v588 = vsel %vm585, %v580, %v582
  %v589 = vsel %vm585, %v582, %v584
  %v595 = vsel %vm61, %v573, 0
  %v598 = vsel %vm61, %v574, 0
  %600 = vmatprep.subr.mxu0 %v587
  %601 = vmatpush1.msra.mxu0 %v586
  %602 = vmatprep.subr.mxu0 0.0
  %603 = vmatpush1.msra.mxu0 0.0
  %604 = vmatprep.subr.mxu0 0.0
  %605 = vmatpush1.msra.mxu0 0.0
  %606 = vmatprep.subr.mxu0 0.0
  %607 = vmatpush1.msra.mxu0 0.0
  %608 = vmatprep.subr.mxu0 0.0
  %609 = vmatpush1.msra.mxu0 0.0
  %610 = vmatprep.subr.mxu0 0.0
  %611 = vmatpush1.msra.mxu0 0.0
  %612 = vmatprep.subr.mxu0 0.0
  %613 = vmatpush1.msra.mxu0 0.0
  %614 = vmatprep.subr.mxu0 0.0
  %615 = vmatpush1.msra.mxu0 0.0
  %616 = vmatprep.subr.mxu0 0.0
  %617 = vmatpush1.msra.mxu0 0.0
  %618 = vmatprep.subr.mxu0 0.0
  %619 = vmatpush1.msra.mxu0 0.0
  %620 = vmatprep.subr.mxu0 0.0
  %621 = vmatpush1.msra.mxu0 0.0
  %622 = vmatprep.subr.mxu0 0.0
  %623 = vmatpush1.msra.mxu0 0.0
  %624 = vmatprep.subr.mxu0 0.0
  %625 = vmatpush1.msra.mxu0 0.0
  %626 = vmatprep.subr.mxu0 0.0
  %627 = vmatpush1.msra.mxu0 0.0
  %628 = vmatprep.subr.mxu0 0.0
  %629 = vmatpush1.msra.mxu0 0.0
  %630 = vmatprep.subr.mxu0 0.0
  %631 = vmatpush1.msra.mxu0 0.0
  %632 = vmatprep.subr.mxu0 0.0
  %633 = vmatpush1.msra.mxu0 0.0
  %634 = vmatprep.subr.mxu0 0.0
  %635 = vmatpush1.msra.mxu0 0.0
  %636 = vmatprep.subr.mxu0 0.0
  %637 = vmatpush1.msra.mxu0 0.0
  %638 = vmatprep.subr.mxu0 0.0
  %639 = vmatpush1.msra.mxu0 0.0
  %640 = vmatprep.subr.mxu0 0.0
  %641 = vmatpush1.msra.mxu0 0.0
  %642 = vmatprep.subr.mxu0 0.0
  %643 = vmatpush1.msra.mxu0 0.0
  %644 = vmatprep.subr.mxu0 0.0
  %645 = vmatpush1.msra.mxu0 0.0
  %646 = vmatprep.subr.mxu0 0.0
  %647 = vmatpush1.msra.mxu0 0.0
  %648 = vmatprep.subr.mxu0 0.0
  %649 = vmatpush1.msra.mxu0 0.0
  %650 = vmatprep.subr.mxu0 0.0
  %651 = vmatpush1.msra.mxu0 0.0
  %652 = vmatprep.subr.mxu0 0.0
  %653 = vmatpush1.msra.mxu0 0.0
  %654 = vmatprep.subr.mxu0 0.0
  %655 = vmatpush1.msra.mxu0 0.0
  %656 = vmatprep.subr.mxu0 0.0
  %657 = vmatpush1.msra.mxu0 0.0
  %658 = vmatprep.subr.mxu0 0.0
  %659 = vmatpush1.msra.mxu0 0.0
  %660 = vmatprep.subr.mxu0 0.0
  %661 = vmatpush1.msra.mxu0 0.0
  %662 = vmatprep.subr.mxu0 0.0
  %663 = vmatpush1.msra.mxu0 0.0
  %664 = vmatprep.mubr.f32.mxu0 0.0
  %665 = vmatmul.mubr.f32.gmra.mrb[0].mxu0 %v595
  %v666 = vpop.f32.mrb[0].mxu0
  %v667 = vadd.f32 0.0, %v666
  %v668 = vpop.f32.mrb[0].mxu0
  %v669 = vadd.f32 0.0, %v668
  %670 = vmatprep.mubr.f32.mxu0 0.0
  %671 = vmatmul.mubr.f32.gmra.mrb[0].mxu0 %v598
  %v672 = vpop.f32.mrb[0].mxu0
  %v673 = vadd.f32 0.0, %v672
  %v674 = vpop.f32.mrb[0].mxu0
  %v675 = vadd.f32 0.0, %v674
  %676 = vdwg.mxu0
  %677 = vmatprep.subr.mxu0 %v589
  %678 = vmatpush1.msra.mxu0 %v588
  %679 = vmatprep.subr.mxu0 0.0
  %680 = vmatpush1.msra.mxu0 0.0
  %681 = vmatprep.subr.mxu0 0.0
  %682 = vmatpush1.msra.mxu0 0.0
  %683 = vmatprep.subr.mxu0 0.0
  %684 = vmatpush1.msra.mxu0 0.0
  %685 = vmatprep.subr.mxu0 0.0
  %686 = vmatpush1.msra.mxu0 0.0
  %687 = vmatprep.subr.mxu0 0.0
  %688 = vmatpush1.msra.mxu0 0.0
  %689 = vmatprep.subr.mxu0 0.0
  %690 = vmatpush1.msra.mxu0 0.0
  %691 = vmatprep.subr.mxu0 0.0
  %692 = vmatpush1.msra.mxu0 0.0
  %693 = vmatprep.subr.mxu0 0.0
  %694 = vmatpush1.msra.mxu0 0.0
  %695 = vmatprep.subr.mxu0 0.0
  %696 = vmatpush1.msra.mxu0 0.0
  %697 = vmatprep.subr.mxu0 0.0
  %698 = vmatpush1.msra.mxu0 0.0
  %699 = vmatprep.subr.mxu0 0.0
  %700 = vmatpush1.msra.mxu0 0.0
  %701 = vmatprep.subr.mxu0 0.0
  %702 = vmatpush1.msra.mxu0 0.0
  %703 = vmatprep.subr.mxu0 0.0
  %704 = vmatpush1.msra.mxu0 0.0
  %705 = vmatprep.subr.mxu0 0.0
  %706 = vmatpush1.msra.mxu0 0.0
  %707 = vmatprep.subr.mxu0 0.0
  %708 = vmatpush1.msra.mxu0 0.0
  %709 = vmatprep.subr.mxu0 0.0
  %710 = vmatpush1.msra.mxu0 0.0
  %711 = vmatprep.subr.mxu0 0.0
  %712 = vmatpush1.msra.mxu0 0.0
  %713 = vmatprep.subr.mxu0 0.0
  %714 = vmatpush1.msra.mxu0 0.0
  %715 = vmatprep.subr.mxu0 0.0
  %716 = vmatpush1.msra.mxu0 0.0
  %717 = vmatprep.subr.mxu0 0.0
  %718 = vmatpush1.msra.mxu0 0.0
  %719 = vmatprep.subr.mxu0 0.0
  %720 = vmatpush1.msra.mxu0 0.0
  %721 = vmatprep.subr.mxu0 0.0
  %722 = vmatpush1.msra.mxu0 0.0
  %723 = vmatprep.subr.mxu0 0.0
  %724 = vmatpush1.msra.mxu0 0.0
  %725 = vmatprep.subr.mxu0 0.0
  %726 = vmatpush1.msra.mxu0 0.0
  %727 = vmatprep.subr.mxu0 0.0
  %728 = vmatpush1.msra.mxu0 0.0
  %729 = vmatprep.subr.mxu0 0.0
  %730 = vmatpush1.msra.mxu0 0.0
  %731 = vmatprep.subr.mxu0 0.0
  %732 = vmatpush1.msra.mxu0 0.0
  %733 = vmatprep.subr.mxu0 0.0
  %734 = vmatpush1.msra.mxu0 0.0
  %735 = vmatprep.subr.mxu0 0.0
  %736 = vmatpush1.msra.mxu0 0.0
  %737 = vmatprep.subr.mxu0 0.0
  %738 = vmatpush1.msra.mxu0 0.0
  %739 = vmatprep.subr.mxu0 0.0
  %740 = vmatpush1.msra.mxu0 0.0
  %741 = vmatprep.mubr.f32.mxu0 0.0
  %742 = vmatmul.mubr.f32.gmra.mrb[0].mxu0 %v595
  %v743 = vpop.f32.mrb[0].mxu0
  %v744 = vadd.f32 0.0, %v743
  %v745 = vpop.f32.mrb[0].mxu0
  %v746 = vadd.f32 0.0, %v745
  %747 = vmatprep.mubr.f32.mxu0 0.0
  %748 = vmatmul.mubr.f32.gmra.mrb[0].mxu0 %v598
  %v749 = vpop.f32.mrb[0].mxu0
  %v750 = vadd.f32 0.0, %v749
  %v751 = vpop.f32.mrb[0].mxu0
  %v752 = vadd.f32 0.0, %v751
  %753 = vdwg.mxu0
  %v754 = vadd.f32 %v564, %v667
  %v755 = vadd.f32 %v565, %v669
  %v756 = vadd.f32 %v566, %v744
  %v757 = vadd.f32 %v567, %v746
  %v758 = vadd.f32 %v568, %v673
  %v759 = vadd.f32 %v569, %v675
  %v760 = vadd.f32 %v570, %v750
  %v761 = vadd.f32 %v571, %v752
  %s762 = scalar_lea.vmem %s1, 64
  %v763 = vld [vmem:[%s762] sm:$0xff]
  %v764 = vld [vmem:[%s762 + $0x8] sm:$0xff]
  %765 = vrot.lane.b32.xlu0 %v32, 124
  %v766 = vpop.permute.xlu0 %765
  %767 = vrot.lane.b32.xlu0 %v33, 124
  %v768 = vpop.permute.xlu0 %767
  %769 = vrot.lane.b32.xlu0 %v34, 124
  %v770 = vpop.permute.xlu0 %769
  %771 = vrot.lane.b32.xlu0 %v35, 124
  %v772 = vpop.permute.xlu0 %771
  %773 = vrot.lane.b32.xlu0 %v36, 124
  %v774 = vpop.permute.xlu0 %773
  %vm775 = vcmask 1014784
  %v776 = vsel %vm775, %v766, %v768
  %v777 = vsel %vm775, %v768, %v770
  %v778 = vsel %vm775, %v770, %v772
  %v779 = vsel %vm775, %v772, %v774
  %v785 = vsel %vm61, %v763, 0
  %v788 = vsel %vm61, %v764, 0
  %790 = vmatprep.subr.mxu0 %v777
  %791 = vmatpush1.msra.mxu0 %v776
  %792 = vmatprep.subr.mxu0 0.0
  %793 = vmatpush1.msra.mxu0 0.0
  %794 = vmatprep.subr.mxu0 0.0
  %795 = vmatpush1.msra.mxu0 0.0
  %796 = vmatprep.subr.mxu0 0.0
  %797 = vmatpush1.msra.mxu0 0.0
  %798 = vmatprep.subr.mxu0 0.0
  %799 = vmatpush1.msra.mxu0 0.0
  %800 = vmatprep.subr.mxu0 0.0
  %801 = vmatpush1.msra.mxu0 0.0
  %802 = vmatprep.subr.mxu0 0.0
  %803 = vmatpush1.msra.mxu0 0.0
  %804 = vmatprep.subr.mxu0 0.0
  %805 = vmatpush1.msra.mxu0 0.0
  %806 = vmatprep.subr.mxu0 0.0
  %807 = vmatpush1.msra.mxu0 0.0
  %808 = vmatprep.subr.mxu0 0.0
  %809 = vmatpush1.msra.mxu0 0.0
  %810 = vmatprep.subr.mxu0 0.0
  %811 = vmatpush1.msra.mxu0 0.0
  %812 = vmatprep.subr.mxu0 0.0
  %813 = vmatpush1.msra.mxu0 0.0
  %814 = vmatprep.subr.mxu0 0.0
  %815 = vmatpush1.msra.mxu0 0.0
  %816 = vmatprep.subr.mxu0 0.0
  %817 = vmatpush1.msra.mxu0 0.0
  %818 = vmatprep.subr.mxu0 0.0
  %819 = vmatpush1.msra.mxu0 0.0
  %820 = vmatprep.subr.mxu0 0.0
  %821 = vmatpush1.msra.mxu0 0.0
  %822 = vmatprep.subr.mxu0 0.0
  %823 = vmatpush1.msra.mxu0 0.0
  %824 = vmatprep.subr.mxu0 0.0
  %825 = vmatpush1.msra.mxu0 0.0
  %826 = vmatprep.subr.mxu0 0.0
  %827 = vmatpush1.msra.mxu0 0.0
  %828 = vmatprep.subr.mxu0 0.0
  %829 = vmatpush1.msra.mxu0 0.0
  %830 = vmatprep.subr.mxu0 0.0
  %831 = vmatpush1.msra.mxu0 0.0
  %832 = vmatprep.subr.mxu0 0.0
  %833 = vmatpush1.msra.mxu0 0.0
  %834 = vmatprep.subr.mxu0 0.0
  %835 = vmatpush1.msra.mxu0 0.0
  %836 = vmatprep.subr.mxu0 0.0
  %837 = vmatpush1.msra.mxu0 0.0
  %838 = vmatprep.subr.mxu0 0.0
  %839 = vmatpush1.msra.mxu0 0.0
  %840 = vmatprep.subr.mxu0 0.0
  %841 = vmatpush1.msra.mxu0 0.0
  %842 = vmatprep.subr.mxu0 0.0
  %843 = vmatpush1.msra.mxu0 0.0
  %844 = vmatprep.subr.mxu0 0.0
  %845 = vmatpush1.msra.mxu0 0.0
  %846 = vmatprep.subr.mxu0 0.0
  %847 = vmatpush1.msra.mxu0 0.0
  %848 = vmatprep.subr.mxu0 0.0
  %849 = vmatpush1.msra.mxu0 0.0
  %850 = vmatprep.subr.mxu0 0.0
  %851 = vmatpush1.msra.mxu0 0.0
  %852 = vmatprep.subr.mxu0 0.0
  %853 = vmatpush1.msra.mxu0 0.0
  %854 = vmatprep.mubr.f32.mxu0 0.0
  %855 = vmatmul.mubr.f32.gmra.mrb[0].mxu0 %v785
  %v856 = vpop.f32.mrb[0].mxu0
  %v857 = vadd.f32 0.0, %v856
  %v858 = vpop.f32.mrb[0].mxu0
  %v859 = vadd.f32 0.0, %v858
  %860 = vmatprep.mubr.f32.mxu0 0.0
  %861 = vmatmul.mubr.f32.gmra.mrb[0].mxu0 %v788
  %v862 = vpop.f32.mrb[0].mxu0
  %v863 = vadd.f32 0.0, %v862
  %v864 = vpop.f32.mrb[0].mxu0
  %v865 = vadd.f32 0.0, %v864
  %866 = vdwg.mxu0
  %867 = vmatprep.subr.mxu0 %v779
  %868 = vmatpush1.msra.mxu0 %v778
  %869 = vmatprep.subr.mxu0 0.0
  %870 = vmatpush1.msra.mxu0 0.0
  %871 = vmatprep.subr.mxu0 0.0
  %872 = vmatpush1.msra.mxu0 0.0
  %873 = vmatprep.subr.mxu0 0.0
  %874 = vmatpush1.msra.mxu0 0.0
  %875 = vmatprep.subr.mxu0 0.0
  %876 = vmatpush1.msra.mxu0 0.0
  %877 = vmatprep.subr.mxu0 0.0
  %878 = vmatpush1.msra.mxu0 0.0
  %879 = vmatprep.subr.mxu0 0.0
  %880 = vmatpush1.msra.mxu0 0.0
  %881 = vmatprep.subr.mxu0 0.0
  %882 = vmatpush1.msra.mxu0 0.0
  %883 = vmatprep.subr.mxu0 0.0
  %884 = vmatpush1.msra.mxu0 0.0
  %885 = vmatprep.subr.mxu0 0.0
  %886 = vmatpush1.msra.mxu0 0.0
  %887 = vmatprep.subr.mxu0 0.0
  %888 = vmatpush1.msra.mxu0 0.0
  %889 = vmatprep.subr.mxu0 0.0
  %890 = vmatpush1.msra.mxu0 0.0
  %891 = vmatprep.subr.mxu0 0.0
  %892 = vmatpush1.msra.mxu0 0.0
  %893 = vmatprep.subr.mxu0 0.0
  %894 = vmatpush1.msra.mxu0 0.0
  %895 = vmatprep.subr.mxu0 0.0
  %896 = vmatpush1.msra.mxu0 0.0
  %897 = vmatprep.subr.mxu0 0.0
  %898 = vmatpush1.msra.mxu0 0.0
  %899 = vmatprep.subr.mxu0 0.0
  %900 = vmatpush1.msra.mxu0 0.0
  %901 = vmatprep.subr.mxu0 0.0
  %902 = vmatpush1.msra.mxu0 0.0
  %903 = vmatprep.subr.mxu0 0.0
  %904 = vmatpush1.msra.mxu0 0.0
  %905 = vmatprep.subr.mxu0 0.0
  %906 = vmatpush1.msra.mxu0 0.0
  %907 = vmatprep.subr.mxu0 0.0
  %908 = vmatpush1.msra.mxu0 0.0
  %909 = vmatprep.subr.mxu0 0.0
  %910 = vmatpush1.msra.mxu0 0.0
  %911 = vmatprep.subr.mxu0 0.0
  %912 = vmatpush1.msra.mxu0 0.0
  %913 = vmatprep.subr.mxu0 0.0
  %914 = vmatpush1.msra.mxu0 0.0
  %915 = vmatprep.subr.mxu0 0.0
  %916 = vmatpush1.msra.mxu0 0.0
  %917 = vmatprep.subr.mxu0 0.0
  %918 = vmatpush1.msra.mxu0 0.0
  %919 = vmatprep.subr.mxu0 0.0
  %920 = vmatpush1.msra.mxu0 0.0
  %921 = vmatprep.subr.mxu0 0.0
  %922 = vmatpush1.msra.mxu0 0.0
  %923 = vmatprep.subr.mxu0 0.0
  %924 = vmatpush1.msra.mxu0 0.0
  %925 = vmatprep.subr.mxu0 0.0
  %926 = vmatpush1.msra.mxu0 0.0
  %927 = vmatprep.subr.mxu0 0.0
  %928 = vmatpush1.msra.mxu0 0.0
  %929 = vmatprep.subr.mxu0 0.0
  %930 = vmatpush1.msra.mxu0 0.0
  %931 = vmatprep.mubr.f32.mxu0 0.0
  %932 = vmatmul.mubr.f32.gmra.mrb[0].mxu0 %v785
  %v933 = vpop.f32.mrb[0].mxu0
  %v934 = vadd.f32 0.0, %v933
  %v935 = vpop.f32.mrb[0].mxu0
  %v936 = vadd.f32 0.0, %v935
  %937 = vmatprep.mubr.f32.mxu0 0.0
  %938 = vmatmul.mubr.f32.gmra.mrb[0].mxu0 %v788
  %v939 = vpop.f32.mrb[0].mxu0
  %v940 = vadd.f32 0.0, %v939
  %v941 = vpop.f32.mrb[0].mxu0
  %v942 = vadd.f32 0.0, %v941
  %943 = vdwg.mxu0
  %v944 = vadd.f32 %v754, %v857
  %v945 = vadd.f32 %v755, %v859
  %v946 = vadd.f32 %v756, %v934
  %v947 = vadd.f32 %v757, %v936
  %v948 = vadd.f32 %v758, %v863
  %v949 = vadd.f32 %v759, %v865
  %v950 = vadd.f32 %v760, %v940
  %v951 = vadd.f32 %v761, %v942
  %s952 = scalar_lea.vmem %s1, 80
  %v953 = vld [vmem:[%s952] sm:$0xff]
  %v954 = vld [vmem:[%s952 + $0x8] sm:$0xff]
  %955 = vrot.lane.b32.xlu0 %v32, 104
  %v956 = vpop.permute.xlu0 %955
  %957 = vrot.lane.b32.xlu0 %v33, 104
  %v958 = vpop.permute.xlu0 %957
  %959 = vrot.lane.b32.xlu0 %v34, 104
  %v960 = vpop.permute.xlu0 %959
  %961 = vrot.lane.b32.xlu0 %v35, 104
  %v962 = vpop.permute.xlu0 %961
  %963 = vrot.lane.b32.xlu0 %v36, 104
  %v964 = vpop.permute.xlu0 %963
  %vm965 = vcmask 850944
  %v966 = vsel %vm965, %v956, %v958
  %v967 = vsel %vm965, %v958, %v960
  %v968 = vsel %vm965, %v960, %v962
  %v969 = vsel %vm965, %v962, %v964
  %v975 = vsel %vm61, %v953, 0
  %v978 = vsel %vm61, %v954, 0
  %980 = vmatprep.subr.mxu0 %v967
  %981 = vmatpush1.msra.mxu0 %v966
  %982 = vmatprep.subr.mxu0 0.0
  %983 = vmatpush1.msra.mxu0 0.0
  %984 = vmatprep.subr.mxu0 0.0
  %985 = vmatpush1.msra.mxu0 0.0
  %986 = vmatprep.subr.mxu0 0.0
  %987 = vmatpush1.msra.mxu0 0.0
  %988 = vmatprep.subr.mxu0 0.0
  %989 = vmatpush1.msra.mxu0 0.0
  %990 = vmatprep.subr.mxu0 0.0
  %991 = vmatpush1.msra.mxu0 0.0
  %992 = vmatprep.subr.mxu0 0.0
  %993 = vmatpush1.msra.mxu0 0.0
  %994 = vmatprep.subr.mxu0 0.0
  %995 = vmatpush1.msra.mxu0 0.0
  %996 = vmatprep.subr.mxu0 0.0
  %997 = vmatpush1.msra.mxu0 0.0
  %998 = vmatprep.subr.mxu0 0.0
  %999 = vmatpush1.msra.mxu0 0.0
  %1000 = vmatprep.subr.mxu0 0.0
  %1001 = vmatpush1.msra.mxu0 0.0
  %1002 = vmatprep.subr.mxu0 0.0
  %1003 = vmatpush1.msra.mxu0 0.0
  %1004 = vmatprep.subr.mxu0 0.0
  %1005 = vmatpush1.msra.mxu0 0.0
  %1006 = vmatprep.subr.mxu0 0.0
  %1007 = vmatpush1.msra.mxu0 0.0
  %1008 = vmatprep.subr.mxu0 0.0
  %1009 = vmatpush1.msra.mxu0 0.0
  %1010 = vmatprep.subr.mxu0 0.0
  %1011 = vmatpush1.msra.mxu0 0.0
  %1012 = vmatprep.subr.mxu0 0.0
  %1013 = vmatpush1.msra.mxu0 0.0
  %1014 = vmatprep.subr.mxu0 0.0
  %1015 = vmatpush1.msra.mxu0 0.0
  %1016 = vmatprep.subr.mxu0 0.0
  %1017 = vmatpush1.msra.mxu0 0.0
  %1018 = vmatprep.subr.mxu0 0.0
  %1019 = vmatpush1.msra.mxu0 0.0
  %1020 = vmatprep.subr.mxu0 0.0
  %1021 = vmatpush1.msra.mxu0 0.0
  %1022 = vmatprep.subr.mxu0 0.0
  %1023 = vmatpush1.msra.mxu0 0.0
  %1024 = vmatprep.subr.mxu0 0.0
  %1025 = vmatpush1.msra.mxu0 0.0
  %1026 = vmatprep.subr.mxu0 0.0
  %1027 = vmatpush1.msra.mxu0 0.0
  %1028 = vmatprep.subr.mxu0 0.0
  %1029 = vmatpush1.msra.mxu0 0.0
  %1030 = vmatprep.subr.mxu0 0.0
  %1031 = vmatpush1.msra.mxu0 0.0
  %1032 = vmatprep.subr.mxu0 0.0
  %1033 = vmatpush1.msra.mxu0 0.0
  %1034 = vmatprep.subr.mxu0 0.0
  %1035 = vmatpush1.msra.mxu0 0.0
  %1036 = vmatprep.subr.mxu0 0.0
  %1037 = vmatpush1.msra.mxu0 0.0
  %1038 = vmatprep.subr.mxu0 0.0
  %1039 = vmatpush1.msra.mxu0 0.0
  %1040 = vmatprep.subr.mxu0 0.0
  %1041 = vmatpush1.msra.mxu0 0.0
  %1042 = vmatprep.subr.mxu0 0.0
  %1043 = vmatpush1.msra.mxu0 0.0
  %1044 = vmatprep.mubr.f32.mxu0 0.0
  %1045 = vmatmul.mubr.f32.gmra.mrb[0].mxu0 %v975
  %v1046 = vpop.f32.mrb[0].mxu0
  %v1047 = vadd.f32 0.0, %v1046
  %v1048 = vpop.f32.mrb[0].mxu0
  %v1049 = vadd.f32 0.0, %v1048
  %1050 = vmatprep.mubr.f32.mxu0 0.0
  %1051 = vmatmul.mubr.f32.gmra.mrb[0].mxu0 %v978
  %v1052 = vpop.f32.mrb[0].mxu0
  %v1053 = vadd.f32 0.0, %v1052
  %v1054 = vpop.f32.mrb[0].mxu0
  %v1055 = vadd.f32 0.0, %v1054
  %1056 = vdwg.mxu0
  %1057 = vmatprep.subr.mxu0 %v969
  %1058 = vmatpush1.msra.mxu0 %v968
  %1059 = vmatprep.subr.mxu0 0.0
  %1060 = vmatpush1.msra.mxu0 0.0
  %1061 = vmatprep.subr.mxu0 0.0
  %1062 = vmatpush1.msra.mxu0 0.0
  %1063 = vmatprep.subr.mxu0 0.0
  %1064 = vmatpush1.msra.mxu0 0.0
  %1065 = vmatprep.subr.mxu0 0.0
  %1066 = vmatpush1.msra.mxu0 0.0
  %1067 = vmatprep.subr.mxu0 0.0
  %1068 = vmatpush1.msra.mxu0 0.0
  %1069 = vmatprep.subr.mxu0 0.0
  %1070 = vmatpush1.msra.mxu0 0.0
  %1071 = vmatprep.subr.mxu0 0.0
  %1072 = vmatpush1.msra.mxu0 0.0
  %1073 = vmatprep.subr.mxu0 0.0
  %1074 = vmatpush1.msra.mxu0 0.0
  %1075 = vmatprep.subr.mxu0 0.0
  %1076 = vmatpush1.msra.mxu0 0.0
  %1077 = vmatprep.subr.mxu0 0.0
  %1078 = vmatpush1.msra.mxu0 0.0
  %1079 = vmatprep.subr.mxu0 0.0
  %1080 = vmatpush1.msra.mxu0 0.0
  %1081 = vmatprep.subr.mxu0 0.0
  %1082 = vmatpush1.msra.mxu0 0.0
  %1083 = vmatprep.subr.mxu0 0.0
  %1084 = vmatpush1.msra.mxu0 0.0
  %1085 = vmatprep.subr.mxu0 0.0
  %1086 = vmatpush1.msra.mxu0 0.0
  %1087 = vmatprep.subr.mxu0 0.0
  %1088 = vmatpush1.msra.mxu0 0.0
  %1089 = vmatprep.subr.mxu0 0.0
  %1090 = vmatpush1.msra.mxu0 0.0
  %1091 = vmatprep.subr.mxu0 0.0
  %1092 = vmatpush1.msra.mxu0 0.0
  %1093 = vmatprep.subr.mxu0 0.0
  %1094 = vmatpush1.msra.mxu0 0.0
  %1095 = vmatprep.subr.mxu0 0.0
  %1096 = vmatpush1.msra.mxu0 0.0
  %1097 = vmatprep.subr.mxu0 0.0
  %1098 = vmatpush1.msra.mxu0 0.0
  %1099 = vmatprep.subr.mxu0 0.0
  %1100 = vmatpush1.msra.mxu0 0.0
  %1101 = vmatprep.subr.mxu0 0.0
  %1102 = vmatpush1.msra.mxu0 0.0
  %1103 = vmatprep.subr.mxu0 0.0
  %1104 = vmatpush1.msra.mxu0 0.0
  %1105 = vmatprep.subr.mxu0 0.0
  %1106 = vmatpush1.msra.mxu0 0.0
  %1107 = vmatprep.subr.mxu0 0.0
  %1108 = vmatpush1.msra.mxu0 0.0
  %1109 = vmatprep.subr.mxu0 0.0
  %1110 = vmatpush1.msra.mxu0 0.0
  %1111 = vmatprep.subr.mxu0 0.0
  %1112 = vmatpush1.msra.mxu0 0.0
  %1113 = vmatprep.subr.mxu0 0.0
  %1114 = vmatpush1.msra.mxu0 0.0
  %1115 = vmatprep.subr.mxu0 0.0
  %1116 = vmatpush1.msra.mxu0 0.0
  %1117 = vmatprep.subr.mxu0 0.0
  %1118 = vmatpush1.msra.mxu0 0.0
  %1119 = vmatprep.subr.mxu0 0.0
  %1120 = vmatpush1.msra.mxu0 0.0
  %1121 = vmatprep.mubr.f32.mxu0 0.0
  %1122 = vmatmul.mubr.f32.gmra.mrb[0].mxu0 %v975
  %v1123 = vpop.f32.mrb[0].mxu0
  %v1124 = vadd.f32 0.0, %v1123
  %v1125 = vpop.f32.mrb[0].mxu0
  %v1126 = vadd.f32 0.0, %v1125
  %1127 = vmatprep.mubr.f32.mxu0 0.0
  %1128 = vmatmul.mubr.f32.gmra.mrb[0].mxu0 %v978
  %v1129 = vpop.f32.mrb[0].mxu0
  %v1130 = vadd.f32 0.0, %v1129
  %v1131 = vpop.f32.mrb[0].mxu0
  %v1132 = vadd.f32 0.0, %v1131
  %1133 = vdwg.mxu0
  %v1134 = vadd.f32 %v944, %v1047
  %v1135 = vadd.f32 %v945, %v1049
  %v1136 = vadd.f32 %v946, %v1124
  %v1137 = vadd.f32 %v947, %v1126
  %v1138 = vadd.f32 %v948, %v1053
  %v1139 = vadd.f32 %v949, %v1055
  %v1140 = vadd.f32 %v950, %v1130
  %v1141 = vadd.f32 %v951, %v1132
  %s1142 = scalar_lea.vmem %s1, 96
  %v1143 = vld [vmem:[%s1142] sm:$0xff]
  %v1144 = vld [vmem:[%s1142 + $0x8] sm:$0xff]
  %1145 = vrot.lane.b32.xlu0 %v32, 103
  %v1146 = vpop.permute.xlu0 %1145
  %1147 = vrot.lane.b32.xlu0 %v33, 103
  %v1148 = vpop.permute.xlu0 %1147
  %1149 = vrot.lane.b32.xlu0 %v34, 103
  %v1150 = vpop.permute.xlu0 %1149
  %1151 = vrot.lane.b32.xlu0 %v35, 103
  %v1152 = vpop.permute.xlu0 %1151
  %1153 = vrot.lane.b32.xlu0 %v36, 103
  %v1154 = vpop.permute.xlu0 %1153
  %vm1155 = vcmask 842752
  %v1156 = vsel %vm1155, %v1146, %v1148
  %v1157 = vsel %vm1155, %v1148, %v1150
  %v1158 = vsel %vm1155, %v1150, %v1152
  %v1159 = vsel %vm1155, %v1152, %v1154
  %v1165 = vsel %vm61, %v1143, 0
  %v1168 = vsel %vm61, %v1144, 0
  %1170 = vmatprep.subr.mxu0 %v1157
  %1171 = vmatpush1.msra.mxu0 %v1156
  %1172 = vmatprep.subr.mxu0 0.0
  %1173 = vmatpush1.msra.mxu0 0.0
  %1174 = vmatprep.subr.mxu0 0.0
  %1175 = vmatpush1.msra.mxu0 0.0
  %1176 = vmatprep.subr.mxu0 0.0
  %1177 = vmatpush1.msra.mxu0 0.0
  %1178 = vmatprep.subr.mxu0 0.0
  %1179 = vmatpush1.msra.mxu0 0.0
  %1180 = vmatprep.subr.mxu0 0.0
  %1181 = vmatpush1.msra.mxu0 0.0
  %1182 = vmatprep.subr.mxu0 0.0
  %1183 = vmatpush1.msra.mxu0 0.0
  %1184 = vmatprep.subr.mxu0 0.0
  %1185 = vmatpush1.msra.mxu0 0.0
  %1186 = vmatprep.subr.mxu0 0.0
  %1187 = vmatpush1.msra.mxu0 0.0
  %1188 = vmatprep.subr.mxu0 0.0
  %1189 = vmatpush1.msra.mxu0 0.0
  %1190 = vmatprep.subr.mxu0 0.0
  %1191 = vmatpush1.msra.mxu0 0.0
  %1192 = vmatprep.subr.mxu0 0.0
  %1193 = vmatpush1.msra.mxu0 0.0
  %1194 = vmatprep.subr.mxu0 0.0
  %1195 = vmatpush1.msra.mxu0 0.0
  %1196 = vmatprep.subr.mxu0 0.0
  %1197 = vmatpush1.msra.mxu0 0.0
  %1198 = vmatprep.subr.mxu0 0.0
  %1199 = vmatpush1.msra.mxu0 0.0
  %1200 = vmatprep.subr.mxu0 0.0
  %1201 = vmatpush1.msra.mxu0 0.0
  %1202 = vmatprep.subr.mxu0 0.0
  %1203 = vmatpush1.msra.mxu0 0.0
  %1204 = vmatprep.subr.mxu0 0.0
  %1205 = vmatpush1.msra.mxu0 0.0
  %1206 = vmatprep.subr.mxu0 0.0
  %1207 = vmatpush1.msra.mxu0 0.0
  %1208 = vmatprep.subr.mxu0 0.0
  %1209 = vmatpush1.msra.mxu0 0.0
  %1210 = vmatprep.subr.mxu0 0.0
  %1211 = vmatpush1.msra.mxu0 0.0
  %1212 = vmatprep.subr.mxu0 0.0
  %1213 = vmatpush1.msra.mxu0 0.0
  %1214 = vmatprep.subr.mxu0 0.0
  %1215 = vmatpush1.msra.mxu0 0.0
  %1216 = vmatprep.subr.mxu0 0.0
  %1217 = vmatpush1.msra.mxu0 0.0
  %1218 = vmatprep.subr.mxu0 0.0
  %1219 = vmatpush1.msra.mxu0 0.0
  %1220 = vmatprep.subr.mxu0 0.0
  %1221 = vmatpush1.msra.mxu0 0.0
  %1222 = vmatprep.subr.mxu0 0.0
  %1223 = vmatpush1.msra.mxu0 0.0
  %1224 = vmatprep.subr.mxu0 0.0
  %1225 = vmatpush1.msra.mxu0 0.0
  %1226 = vmatprep.subr.mxu0 0.0
  %1227 = vmatpush1.msra.mxu0 0.0
  %1228 = vmatprep.subr.mxu0 0.0
  %1229 = vmatpush1.msra.mxu0 0.0
  %1230 = vmatprep.subr.mxu0 0.0
  %1231 = vmatpush1.msra.mxu0 0.0
  %1232 = vmatprep.subr.mxu0 0.0
  %1233 = vmatpush1.msra.mxu0 0.0
  %1234 = vmatprep.mubr.f32.mxu0 0.0
  %1235 = vmatmul.mubr.f32.gmra.mrb[0].mxu0 %v1165
  %v1236 = vpop.f32.mrb[0].mxu0
  %v1237 = vadd.f32 0.0, %v1236
  %v1238 = vpop.f32.mrb[0].mxu0
  %v1239 = vadd.f32 0.0, %v1238
  %1240 = vmatprep.mubr.f32.mxu0 0.0
  %1241 = vmatmul.mubr.f32.gmra.mrb[0].mxu0 %v1168
  %v1242 = vpop.f32.mrb[0].mxu0
  %v1243 = vadd.f32 0.0, %v1242
  %v1244 = vpop.f32.mrb[0].mxu0
  %v1245 = vadd.f32 0.0, %v1244
  %1246 = vdwg.mxu0
  %1247 = vmatprep.subr.mxu0 %v1159
  %1248 = vmatpush1.msra.mxu0 %v1158
  %1249 = vmatprep.subr.mxu0 0.0
  %1250 = vmatpush1.msra.mxu0 0.0
  %1251 = vmatprep.subr.mxu0 0.0
  %1252 = vmatpush1.msra.mxu0 0.0
  %1253 = vmatprep.subr.mxu0 0.0
  %1254 = vmatpush1.msra.mxu0 0.0
  %1255 = vmatprep.subr.mxu0 0.0
  %1256 = vmatpush1.msra.mxu0 0.0
  %1257 = vmatprep.subr.mxu0 0.0
  %1258 = vmatpush1.msra.mxu0 0.0
  %1259 = vmatprep.subr.mxu0 0.0
  %1260 = vmatpush1.msra.mxu0 0.0
  %1261 = vmatprep.subr.mxu0 0.0
  %1262 = vmatpush1.msra.mxu0 0.0
  %1263 = vmatprep.subr.mxu0 0.0
  %1264 = vmatpush1.msra.mxu0 0.0
  %1265 = vmatprep.subr.mxu0 0.0
  %1266 = vmatpush1.msra.mxu0 0.0
  %1267 = vmatprep.subr.mxu0 0.0
  %1268 = vmatpush1.msra.mxu0 0.0
  %1269 = vmatprep.subr.mxu0 0.0
  %1270 = vmatpush1.msra.mxu0 0.0
  %1271 = vmatprep.subr.mxu0 0.0
  %1272 = vmatpush1.msra.mxu0 0.0
  %1273 = vmatprep.subr.mxu0 0.0
  %1274 = vmatpush1.msra.mxu0 0.0
  %1275 = vmatprep.subr.mxu0 0.0
  %1276 = vmatpush1.msra.mxu0 0.0
  %1277 = vmatprep.subr.mxu0 0.0
  %1278 = vmatpush1.msra.mxu0 0.0
  %1279 = vmatprep.subr.mxu0 0.0
  %1280 = vmatpush1.msra.mxu0 0.0
  %1281 = vmatprep.subr.mxu0 0.0
  %1282 = vmatpush1.msra.mxu0 0.0
  %1283 = vmatprep.subr.mxu0 0.0
  %1284 = vmatpush1.msra.mxu0 0.0
  %1285 = vmatprep.subr.mxu0 0.0
  %1286 = vmatpush1.msra.mxu0 0.0
  %1287 = vmatprep.subr.mxu0 0.0
  %1288 = vmatpush1.msra.mxu0 0.0
  %1289 = vmatprep.subr.mxu0 0.0
  %1290 = vmatpush1.msra.mxu0 0.0
  %1291 = vmatprep.subr.mxu0 0.0
  %1292 = vmatpush1.msra.mxu0 0.0
  %1293 = vmatprep.subr.mxu0 0.0
  %1294 = vmatpush1.msra.mxu0 0.0
  %1295 = vmatprep.subr.mxu0 0.0
  %1296 = vmatpush1.msra.mxu0 0.0
  %1297 = vmatprep.subr.mxu0 0.0
  %1298 = vmatpush1.msra.mxu0 0.0
  %1299 = vmatprep.subr.mxu0 0.0
  %1300 = vmatpush1.msra.mxu0 0.0
  %1301 = vmatprep.subr.mxu0 0.0
  %1302 = vmatpush1.msra.mxu0 0.0
  %1303 = vmatprep.subr.mxu0 0.0
  %1304 = vmatpush1.msra.mxu0 0.0
  %1305 = vmatprep.subr.mxu0 0.0
  %1306 = vmatpush1.msra.mxu0 0.0
  %1307 = vmatprep.subr.mxu0 0.0
  %1308 = vmatpush1.msra.mxu0 0.0
  %1309 = vmatprep.subr.mxu0 0.0
  %1310 = vmatpush1.msra.mxu0 0.0
  %1311 = vmatprep.mubr.f32.mxu0 0.0
  %1312 = vmatmul.mubr.f32.gmra.mrb[0].mxu0 %v1165
  %v1313 = vpop.f32.mrb[0].mxu0
  %v1314 = vadd.f32 0.0, %v1313
  %v1315 = vpop.f32.mrb[0].mxu0
  %v1316 = vadd.f32 0.0, %v1315
  %1317 = vmatprep.mubr.f32.mxu0 0.0
  %1318 = vmatmul.mubr.f32.gmra.mrb[0].mxu0 %v1168
  %v1319 = vpop.f32.mrb[0].mxu0
  %v1320 = vadd.f32 0.0, %v1319
  %v1321 = vpop.f32.mrb[0].mxu0
  %v1322 = vadd.f32 0.0, %v1321
  %1323 = vdwg.mxu0
  %v1324 = vadd.f32 %v1134, %v1237
  %v1325 = vadd.f32 %v1135, %v1239
  %v1326 = vadd.f32 %v1136, %v1314
  %v1327 = vadd.f32 %v1137, %v1316
  %v1328 = vadd.f32 %v1138, %v1243
  %v1329 = vadd.f32 %v1139, %v1245
  %v1330 = vadd.f32 %v1140, %v1320
  %v1331 = vadd.f32 %v1141, %v1322
  %s1332 = scalar_lea.vmem %s1, 112
  %v1333 = vld [vmem:[%s1332] sm:$0xff]
  %v1334 = vld [vmem:[%s1332 + $0x8] sm:$0xff]
  %1335 = vrot.lane.b32.xlu0 %v32, 102
  %v1336 = vpop.permute.xlu0 %1335
  %1337 = vrot.lane.b32.xlu0 %v33, 102
  %v1338 = vpop.permute.xlu0 %1337
  %1339 = vrot.lane.b32.xlu0 %v34, 102
  %v1340 = vpop.permute.xlu0 %1339
  %1341 = vrot.lane.b32.xlu0 %v35, 102
  %v1342 = vpop.permute.xlu0 %1341
  %1343 = vrot.lane.b32.xlu0 %v36, 102
  %v1344 = vpop.permute.xlu0 %1343
  %vm1345 = vcmask 834560
  %v1346 = vsel %vm1345, %v1336, %v1338
  %v1347 = vsel %vm1345, %v1338, %v1340
  %v1348 = vsel %vm1345, %v1340, %v1342
  %v1349 = vsel %vm1345, %v1342, %v1344
  %v1355 = vsel %vm61, %v1333, 0
  %v1358 = vsel %vm61, %v1334, 0
  %1360 = vmatprep.subr.mxu0 %v1347
  %1361 = vmatpush1.msra.mxu0 %v1346
  %1362 = vmatprep.subr.mxu0 0.0
  %1363 = vmatpush1.msra.mxu0 0.0
  %1364 = vmatprep.subr.mxu0 0.0
  %1365 = vmatpush1.msra.mxu0 0.0
  %1366 = vmatprep.subr.mxu0 0.0
  %1367 = vmatpush1.msra.mxu0 0.0
  %1368 = vmatprep.subr.mxu0 0.0
  %1369 = vmatpush1.msra.mxu0 0.0
  %1370 = vmatprep.subr.mxu0 0.0
  %1371 = vmatpush1.msra.mxu0 0.0
  %1372 = vmatprep.subr.mxu0 0.0
  %1373 = vmatpush1.msra.mxu0 0.0
  %1374 = vmatprep.subr.mxu0 0.0
  %1375 = vmatpush1.msra.mxu0 0.0
  %1376 = vmatprep.subr.mxu0 0.0
  %1377 = vmatpush1.msra.mxu0 0.0
  %1378 = vmatprep.subr.mxu0 0.0
  %1379 = vmatpush1.msra.mxu0 0.0
  %1380 = vmatprep.subr.mxu0 0.0
  %1381 = vmatpush1.msra.mxu0 0.0
  %1382 = vmatprep.subr.mxu0 0.0
  %1383 = vmatpush1.msra.mxu0 0.0
  %1384 = vmatprep.subr.mxu0 0.0
  %1385 = vmatpush1.msra.mxu0 0.0
  %1386 = vmatprep.subr.mxu0 0.0
  %1387 = vmatpush1.msra.mxu0 0.0
  %1388 = vmatprep.subr.mxu0 0.0
  %1389 = vmatpush1.msra.mxu0 0.0
  %1390 = vmatprep.subr.mxu0 0.0
  %1391 = vmatpush1.msra.mxu0 0.0
  %1392 = vmatprep.subr.mxu0 0.0
  %1393 = vmatpush1.msra.mxu0 0.0
  %1394 = vmatprep.subr.mxu0 0.0
  %1395 = vmatpush1.msra.mxu0 0.0
  %1396 = vmatprep.subr.mxu0 0.0
  %1397 = vmatpush1.msra.mxu0 0.0
  %1398 = vmatprep.subr.mxu0 0.0
  %1399 = vmatpush1.msra.mxu0 0.0
  %1400 = vmatprep.subr.mxu0 0.0
  %1401 = vmatpush1.msra.mxu0 0.0
  %1402 = vmatprep.subr.mxu0 0.0
  %1403 = vmatpush1.msra.mxu0 0.0
  %1404 = vmatprep.subr.mxu0 0.0
  %1405 = vmatpush1.msra.mxu0 0.0
  %1406 = vmatprep.subr.mxu0 0.0
  %1407 = vmatpush1.msra.mxu0 0.0
  %1408 = vmatprep.subr.mxu0 0.0
  %1409 = vmatpush1.msra.mxu0 0.0
  %1410 = vmatprep.subr.mxu0 0.0
  %1411 = vmatpush1.msra.mxu0 0.0
  %1412 = vmatprep.subr.mxu0 0.0
  %1413 = vmatpush1.msra.mxu0 0.0
  %1414 = vmatprep.subr.mxu0 0.0
  %1415 = vmatpush1.msra.mxu0 0.0
  %1416 = vmatprep.subr.mxu0 0.0
  %1417 = vmatpush1.msra.mxu0 0.0
  %1418 = vmatprep.subr.mxu0 0.0
  %1419 = vmatpush1.msra.mxu0 0.0
  %1420 = vmatprep.subr.mxu0 0.0
  %1421 = vmatpush1.msra.mxu0 0.0
  %1422 = vmatprep.subr.mxu0 0.0
  %1423 = vmatpush1.msra.mxu0 0.0
  %1424 = vmatprep.mubr.f32.mxu0 0.0
  %1425 = vmatmul.mubr.f32.gmra.mrb[0].mxu0 %v1355
  %v1426 = vpop.f32.mrb[0].mxu0
  %v1427 = vadd.f32 0.0, %v1426
  %v1428 = vpop.f32.mrb[0].mxu0
  %v1429 = vadd.f32 0.0, %v1428
  %1430 = vmatprep.mubr.f32.mxu0 0.0
  %1431 = vmatmul.mubr.f32.gmra.mrb[0].mxu0 %v1358
  %v1432 = vpop.f32.mrb[0].mxu0
  %v1433 = vadd.f32 0.0, %v1432
  %v1434 = vpop.f32.mrb[0].mxu0
  %v1435 = vadd.f32 0.0, %v1434
  %1436 = vdwg.mxu0
  %1437 = vmatprep.subr.mxu0 %v1349
  %1438 = vmatpush1.msra.mxu0 %v1348
  %1439 = vmatprep.subr.mxu0 0.0
  %1440 = vmatpush1.msra.mxu0 0.0
  %1441 = vmatprep.subr.mxu0 0.0
  %1442 = vmatpush1.msra.mxu0 0.0
  %1443 = vmatprep.subr.mxu0 0.0
  %1444 = vmatpush1.msra.mxu0 0.0
  %1445 = vmatprep.subr.mxu0 0.0
  %1446 = vmatpush1.msra.mxu0 0.0
  %1447 = vmatprep.subr.mxu0 0.0
  %1448 = vmatpush1.msra.mxu0 0.0
  %1449 = vmatprep.subr.mxu0 0.0
  %1450 = vmatpush1.msra.mxu0 0.0
  %1451 = vmatprep.subr.mxu0 0.0
  %1452 = vmatpush1.msra.mxu0 0.0
  %1453 = vmatprep.subr.mxu0 0.0
  %1454 = vmatpush1.msra.mxu0 0.0
  %1455 = vmatprep.subr.mxu0 0.0
  %1456 = vmatpush1.msra.mxu0 0.0
  %1457 = vmatprep.subr.mxu0 0.0
  %1458 = vmatpush1.msra.mxu0 0.0
  %1459 = vmatprep.subr.mxu0 0.0
  %1460 = vmatpush1.msra.mxu0 0.0
  %1461 = vmatprep.subr.mxu0 0.0
  %1462 = vmatpush1.msra.mxu0 0.0
  %1463 = vmatprep.subr.mxu0 0.0
  %1464 = vmatpush1.msra.mxu0 0.0
  %1465 = vmatprep.subr.mxu0 0.0
  %1466 = vmatpush1.msra.mxu0 0.0
  %1467 = vmatprep.subr.mxu0 0.0
  %1468 = vmatpush1.msra.mxu0 0.0
  %1469 = vmatprep.subr.mxu0 0.0
  %1470 = vmatpush1.msra.mxu0 0.0
  %1471 = vmatprep.subr.mxu0 0.0
  %1472 = vmatpush1.msra.mxu0 0.0
  %1473 = vmatprep.subr.mxu0 0.0
  %1474 = vmatpush1.msra.mxu0 0.0
  %1475 = vmatprep.subr.mxu0 0.0
  %1476 = vmatpush1.msra.mxu0 0.0
  %1477 = vmatprep.subr.mxu0 0.0
  %1478 = vmatpush1.msra.mxu0 0.0
  %1479 = vmatprep.subr.mxu0 0.0
  %1480 = vmatpush1.msra.mxu0 0.0
  %1481 = vmatprep.subr.mxu0 0.0
  %1482 = vmatpush1.msra.mxu0 0.0
  %1483 = vmatprep.subr.mxu0 0.0
  %1484 = vmatpush1.msra.mxu0 0.0
  %1485 = vmatprep.subr.mxu0 0.0
  %1486 = vmatpush1.msra.mxu0 0.0
  %1487 = vmatprep.subr.mxu0 0.0
  %1488 = vmatpush1.msra.mxu0 0.0
  %1489 = vmatprep.subr.mxu0 0.0
  %1490 = vmatpush1.msra.mxu0 0.0
  %1491 = vmatprep.subr.mxu0 0.0
  %1492 = vmatpush1.msra.mxu0 0.0
  %1493 = vmatprep.subr.mxu0 0.0
  %1494 = vmatpush1.msra.mxu0 0.0
  %1495 = vmatprep.subr.mxu0 0.0
  %1496 = vmatpush1.msra.mxu0 0.0
  %1497 = vmatprep.subr.mxu0 0.0
  %1498 = vmatpush1.msra.mxu0 0.0
  %1499 = vmatprep.subr.mxu0 0.0
  %1500 = vmatpush1.msra.mxu0 0.0
  %1501 = vmatprep.mubr.f32.mxu0 0.0
  %1502 = vmatmul.mubr.f32.gmra.mrb[0].mxu0 %v1355
  %v1503 = vpop.f32.mrb[0].mxu0
  %v1504 = vadd.f32 0.0, %v1503
  %v1505 = vpop.f32.mrb[0].mxu0
  %v1506 = vadd.f32 0.0, %v1505
  %1507 = vmatprep.mubr.f32.mxu0 0.0
  %1508 = vmatmul.mubr.f32.gmra.mrb[0].mxu0 %v1358
  %v1509 = vpop.f32.mrb[0].mxu0
  %v1510 = vadd.f32 0.0, %v1509
  %v1511 = vpop.f32.mrb[0].mxu0
  %v1512 = vadd.f32 0.0, %v1511
  %1513 = vdwg.mxu0
  %v1514 = vadd.f32 %v1324, %v1427
  %v1515 = vadd.f32 %v1325, %v1429
  %v1516 = vadd.f32 %v1326, %v1504
  %v1517 = vadd.f32 %v1327, %v1506
  %v1518 = vadd.f32 %v1328, %v1433
  %v1519 = vadd.f32 %v1329, %v1435
  %v1520 = vadd.f32 %v1330, %v1510
  %v1521 = vadd.f32 %v1331, %v1512
  %s1522 = scalar_lea.vmem %s1, 128
  %v1523 = vld [vmem:[%s1522] sm:$0xff]
  %v1524 = vld [vmem:[%s1522 + $0x8] sm:$0xff]
  %1525 = vrot.lane.b32.xlu0 %v32, 101
  %v1526 = vpop.permute.xlu0 %1525
  %1527 = vrot.lane.b32.xlu0 %v33, 101
  %v1528 = vpop.permute.xlu0 %1527
  %1529 = vrot.lane.b32.xlu0 %v34, 101
  %v1530 = vpop.permute.xlu0 %1529
  %1531 = vrot.lane.b32.xlu0 %v35, 101
  %v1532 = vpop.permute.xlu0 %1531
  %1533 = vrot.lane.b32.xlu0 %v36, 101
  %v1534 = vpop.permute.xlu0 %1533
  %vm1535 = vcmask 826368
  %v1536 = vsel %vm1535, %v1526, %v1528
  %v1537 = vsel %vm1535, %v1528, %v1530
  %v1538 = vsel %vm1535, %v1530, %v1532
  %v1539 = vsel %vm1535, %v1532, %v1534
  %v1545 = vsel %vm61, %v1523, 0
  %v1548 = vsel %vm61, %v1524, 0
  %1550 = vmatprep.subr.mxu0 %v1537
  %1551 = vmatpush1.msra.mxu0 %v1536
  %1552 = vmatprep.subr.mxu0 0.0
  %1553 = vmatpush1.msra.mxu0 0.0
  %1554 = vmatprep.subr.mxu0 0.0
  %1555 = vmatpush1.msra.mxu0 0.0
  %1556 = vmatprep.subr.mxu0 0.0
  %1557 = vmatpush1.msra.mxu0 0.0
  %1558 = vmatprep.subr.mxu0 0.0
  %1559 = vmatpush1.msra.mxu0 0.0
  %1560 = vmatprep.subr.mxu0 0.0
  %1561 = vmatpush1.msra.mxu0 0.0
  %1562 = vmatprep.subr.mxu0 0.0
  %1563 = vmatpush1.msra.mxu0 0.0
  %1564 = vmatprep.subr.mxu0 0.0
  %1565 = vmatpush1.msra.mxu0 0.0
  %1566 = vmatprep.subr.mxu0 0.0
  %1567 = vmatpush1.msra.mxu0 0.0
  %1568 = vmatprep.subr.mxu0 0.0
  %1569 = vmatpush1.msra.mxu0 0.0
  %1570 = vmatprep.subr.mxu0 0.0
  %1571 = vmatpush1.msra.mxu0 0.0
  %1572 = vmatprep.subr.mxu0 0.0
  %1573 = vmatpush1.msra.mxu0 0.0
  %1574 = vmatprep.subr.mxu0 0.0
  %1575 = vmatpush1.msra.mxu0 0.0
  %1576 = vmatprep.subr.mxu0 0.0
  %1577 = vmatpush1.msra.mxu0 0.0
  %1578 = vmatprep.subr.mxu0 0.0
  %1579 = vmatpush1.msra.mxu0 0.0
  %1580 = vmatprep.subr.mxu0 0.0
  %1581 = vmatpush1.msra.mxu0 0.0
  %1582 = vmatprep.subr.mxu0 0.0
  %1583 = vmatpush1.msra.mxu0 0.0
  %1584 = vmatprep.subr.mxu0 0.0
  %1585 = vmatpush1.msra.mxu0 0.0
  %1586 = vmatprep.subr.mxu0 0.0
  %1587 = vmatpush1.msra.mxu0 0.0
  %1588 = vmatprep.subr.mxu0 0.0
  %1589 = vmatpush1.msra.mxu0 0.0
  %1590 = vmatprep.subr.mxu0 0.0
  %1591 = vmatpush1.msra.mxu0 0.0
  %1592 = vmatprep.subr.mxu0 0.0
  %1593 = vmatpush1.msra.mxu0 0.0
  %1594 = vmatprep.subr.mxu0 0.0
  %1595 = vmatpush1.msra.mxu0 0.0
  %1596 = vmatprep.subr.mxu0 0.0
  %1597 = vmatpush1.msra.mxu0 0.0
  %1598 = vmatprep.subr.mxu0 0.0
  %1599 = vmatpush1.msra.mxu0 0.0
  %1600 = vmatprep.subr.mxu0 0.0
  %1601 = vmatpush1.msra.mxu0 0.0
  %1602 = vmatprep.subr.mxu0 0.0
  %1603 = vmatpush1.msra.mxu0 0.0
  %1604 = vmatprep.subr.mxu0 0.0
  %1605 = vmatpush1.msra.mxu0 0.0
  %1606 = vmatprep.subr.mxu0 0.0
  %1607 = vmatpush1.msra.mxu0 0.0
  %1608 = vmatprep.subr.mxu0 0.0
  %1609 = vmatpush1.msra.mxu0 0.0
  %1610 = vmatprep.subr.mxu0 0.0
  %1611 = vmatpush1.msra.mxu0 0.0
  %1612 = vmatprep.subr.mxu0 0.0
  %1613 = vmatpush1.msra.mxu0 0.0
  %1614 = vmatprep.mubr.f32.mxu0 0.0
  %1615 = vmatmul.mubr.f32.gmra.mrb[0].mxu0 %v1545
  %v1616 = vpop.f32.mrb[0].mxu0
  %v1617 = vadd.f32 0.0, %v1616
  %v1618 = vpop.f32.mrb[0].mxu0
  %v1619 = vadd.f32 0.0, %v1618
  %1620 = vmatprep.mubr.f32.mxu0 0.0
  %1621 = vmatmul.mubr.f32.gmra.mrb[0].mxu0 %v1548
  %v1622 = vpop.f32.mrb[0].mxu0
  %v1623 = vadd.f32 0.0, %v1622
  %v1624 = vpop.f32.mrb[0].mxu0
  %v1625 = vadd.f32 0.0, %v1624
  %1626 = vdwg.mxu0
  %1627 = vmatprep.subr.mxu0 %v1539
  %1628 = vmatpush1.msra.mxu0 %v1538
  %1629 = vmatprep.subr.mxu0 0.0
  %1630 = vmatpush1.msra.mxu0 0.0
  %1631 = vmatprep.subr.mxu0 0.0
  %1632 = vmatpush1.msra.mxu0 0.0
  %1633 = vmatprep.subr.mxu0 0.0
  %1634 = vmatpush1.msra.mxu0 0.0
  %1635 = vmatprep.subr.mxu0 0.0
  %1636 = vmatpush1.msra.mxu0 0.0
  %1637 = vmatprep.subr.mxu0 0.0
  %1638 = vmatpush1.msra.mxu0 0.0
  %1639 = vmatprep.subr.mxu0 0.0
  %1640 = vmatpush1.msra.mxu0 0.0
  %1641 = vmatprep.subr.mxu0 0.0
  %1642 = vmatpush1.msra.mxu0 0.0
  %1643 = vmatprep.subr.mxu0 0.0
  %1644 = vmatpush1.msra.mxu0 0.0
  %1645 = vmatprep.subr.mxu0 0.0
  %1646 = vmatpush1.msra.mxu0 0.0
  %1647 = vmatprep.subr.mxu0 0.0
  %1648 = vmatpush1.msra.mxu0 0.0
  %1649 = vmatprep.subr.mxu0 0.0
  %1650 = vmatpush1.msra.mxu0 0.0
  %1651 = vmatprep.subr.mxu0 0.0
  %1652 = vmatpush1.msra.mxu0 0.0
  %1653 = vmatprep.subr.mxu0 0.0
  %1654 = vmatpush1.msra.mxu0 0.0
  %1655 = vmatprep.subr.mxu0 0.0
  %1656 = vmatpush1.msra.mxu0 0.0
  %1657 = vmatprep.subr.mxu0 0.0
  %1658 = vmatpush1.msra.mxu0 0.0
  %1659 = vmatprep.subr.mxu0 0.0
  %1660 = vmatpush1.msra.mxu0 0.0
  %1661 = vmatprep.subr.mxu0 0.0
  %1662 = vmatpush1.msra.mxu0 0.0
  %1663 = vmatprep.subr.mxu0 0.0
  %1664 = vmatpush1.msra.mxu0 0.0
  %1665 = vmatprep.subr.mxu0 0.0
  %1666 = vmatpush1.msra.mxu0 0.0
  %1667 = vmatprep.subr.mxu0 0.0
  %1668 = vmatpush1.msra.mxu0 0.0
  %1669 = vmatprep.subr.mxu0 0.0
  %1670 = vmatpush1.msra.mxu0 0.0
  %1671 = vmatprep.subr.mxu0 0.0
  %1672 = vmatpush1.msra.mxu0 0.0
  %1673 = vmatprep.subr.mxu0 0.0
  %1674 = vmatpush1.msra.mxu0 0.0
  %1675 = vmatprep.subr.mxu0 0.0
  %1676 = vmatpush1.msra.mxu0 0.0
  %1677 = vmatprep.subr.mxu0 0.0
  %1678 = vmatpush1.msra.mxu0 0.0
  %1679 = vmatprep.subr.mxu0 0.0
  %1680 = vmatpush1.msra.mxu0 0.0
  %1681 = vmatprep.subr.mxu0 0.0
  %1682 = vmatpush1.msra.mxu0 0.0
  %1683 = vmatprep.subr.mxu0 0.0
  %1684 = vmatpush1.msra.mxu0 0.0
  %1685 = vmatprep.subr.mxu0 0.0
  %1686 = vmatpush1.msra.mxu0 0.0
  %1687 = vmatprep.subr.mxu0 0.0
  %1688 = vmatpush1.msra.mxu0 0.0
  %1689 = vmatprep.subr.mxu0 0.0
  %1690 = vmatpush1.msra.mxu0 0.0
  %1691 = vmatprep.mubr.f32.mxu0 0.0
  %1692 = vmatmul.mubr.f32.gmra.mrb[0].mxu0 %v1545
  %v1693 = vpop.f32.mrb[0].mxu0
  %v1694 = vadd.f32 0.0, %v1693
  %v1695 = vpop.f32.mrb[0].mxu0
  %v1696 = vadd.f32 0.0, %v1695
  %1697 = vmatprep.mubr.f32.mxu0 0.0
  %1698 = vmatmul.mubr.f32.gmra.mrb[0].mxu0 %v1548
  %v1699 = vpop.f32.mrb[0].mxu0
  %v1700 = vadd.f32 0.0, %v1699
  %v1701 = vpop.f32.mrb[0].mxu0
  %v1702 = vadd.f32 0.0, %v1701
  %1703 = vdwg.mxu0
  %v1704 = vadd.f32 %v1514, %v1617
  %v1705 = vadd.f32 %v1515, %v1619
  %v1706 = vadd.f32 %v1516, %v1694
  %v1707 = vadd.f32 %v1517, %v1696
  %v1708 = vadd.f32 %v1518, %v1623
  %v1709 = vadd.f32 %v1519, %v1625
  %v1710 = vadd.f32 %v1520, %v1700
  %v1711 = vadd.f32 %v1521, %v1702
  %s1712 = scalar_lea.vmem %s1, 144
  %v1713 = vld [vmem:[%s1712] sm:$0xff]
  %v1714 = vld [vmem:[%s1712 + $0x8] sm:$0xff]
  %1715 = vrot.lane.b32.xlu0 %v32, 100
  %v1716 = vpop.permute.xlu0 %1715
  %1717 = vrot.lane.b32.xlu0 %v33, 100
  %v1718 = vpop.permute.xlu0 %1717
  %1719 = vrot.lane.b32.xlu0 %v34, 100
  %v1720 = vpop.permute.xlu0 %1719
  %1721 = vrot.lane.b32.xlu0 %v35, 100
  %v1722 = vpop.permute.xlu0 %1721
  %1723 = vrot.lane.b32.xlu0 %v36, 100
  %v1724 = vpop.permute.xlu0 %1723
  %vm1725 = vcmask 818176
  %v1726 = vsel %vm1725, %v1716, %v1718
  %v1727 = vsel %vm1725, %v1718, %v1720
  %v1728 = vsel %vm1725, %v1720, %v1722
  %v1729 = vsel %vm1725, %v1722, %v1724
  %v1735 = vsel %vm61, %v1713, 0
  %v1738 = vsel %vm61, %v1714, 0
  %1740 = vmatprep.subr.mxu0 %v1727
  %1741 = vmatpush1.msra.mxu0 %v1726
  %1742 = vmatprep.subr.mxu0 0.0
  %1743 = vmatpush1.msra.mxu0 0.0
  %1744 = vmatprep.subr.mxu0 0.0
  %1745 = vmatpush1.msra.mxu0 0.0
  %1746 = vmatprep.subr.mxu0 0.0
  %1747 = vmatpush1.msra.mxu0 0.0
  %1748 = vmatprep.subr.mxu0 0.0
  %1749 = vmatpush1.msra.mxu0 0.0
  %1750 = vmatprep.subr.mxu0 0.0
  %1751 = vmatpush1.msra.mxu0 0.0
  %1752 = vmatprep.subr.mxu0 0.0
  %1753 = vmatpush1.msra.mxu0 0.0
  %1754 = vmatprep.subr.mxu0 0.0
  %1755 = vmatpush1.msra.mxu0 0.0
  %1756 = vmatprep.subr.mxu0 0.0
  %1757 = vmatpush1.msra.mxu0 0.0
  %1758 = vmatprep.subr.mxu0 0.0
  %1759 = vmatpush1.msra.mxu0 0.0
  %1760 = vmatprep.subr.mxu0 0.0
  %1761 = vmatpush1.msra.mxu0 0.0
  %1762 = vmatprep.subr.mxu0 0.0
  %1763 = vmatpush1.msra.mxu0 0.0
  %1764 = vmatprep.subr.mxu0 0.0
  %1765 = vmatpush1.msra.mxu0 0.0
  %1766 = vmatprep.subr.mxu0 0.0
  %1767 = vmatpush1.msra.mxu0 0.0
  %1768 = vmatprep.subr.mxu0 0.0
  %1769 = vmatpush1.msra.mxu0 0.0
  %1770 = vmatprep.subr.mxu0 0.0
  %1771 = vmatpush1.msra.mxu0 0.0
  %1772 = vmatprep.subr.mxu0 0.0
  %1773 = vmatpush1.msra.mxu0 0.0
  %1774 = vmatprep.subr.mxu0 0.0
  %1775 = vmatpush1.msra.mxu0 0.0
  %1776 = vmatprep.subr.mxu0 0.0
  %1777 = vmatpush1.msra.mxu0 0.0
  %1778 = vmatprep.subr.mxu0 0.0
  %1779 = vmatpush1.msra.mxu0 0.0
  %1780 = vmatprep.subr.mxu0 0.0
  %1781 = vmatpush1.msra.mxu0 0.0
  %1782 = vmatprep.subr.mxu0 0.0
  %1783 = vmatpush1.msra.mxu0 0.0
  %1784 = vmatprep.subr.mxu0 0.0
  %1785 = vmatpush1.msra.mxu0 0.0
  %1786 = vmatprep.subr.mxu0 0.0
  %1787 = vmatpush1.msra.mxu0 0.0
  %1788 = vmatprep.subr.mxu0 0.0
  %1789 = vmatpush1.msra.mxu0 0.0
  %1790 = vmatprep.subr.mxu0 0.0
  %1791 = vmatpush1.msra.mxu0 0.0
  %1792 = vmatprep.subr.mxu0 0.0
  %1793 = vmatpush1.msra.mxu0 0.0
  %1794 = vmatprep.subr.mxu0 0.0
  %1795 = vmatpush1.msra.mxu0 0.0
  %1796 = vmatprep.subr.mxu0 0.0
  %1797 = vmatpush1.msra.mxu0 0.0
  %1798 = vmatprep.subr.mxu0 0.0
  %1799 = vmatpush1.msra.mxu0 0.0
  %1800 = vmatprep.subr.mxu0 0.0
  %1801 = vmatpush1.msra.mxu0 0.0
  %1802 = vmatprep.subr.mxu0 0.0
  %1803 = vmatpush1.msra.mxu0 0.0
  %1804 = vmatprep.mubr.f32.mxu0 0.0
  %1805 = vmatmul.mubr.f32.gmra.mrb[0].mxu0 %v1735
  %v1806 = vpop.f32.mrb[0].mxu0
  %v1807 = vadd.f32 0.0, %v1806
  %v1808 = vpop.f32.mrb[0].mxu0
  %v1809 = vadd.f32 0.0, %v1808
  %1810 = vmatprep.mubr.f32.mxu0 0.0
  %1811 = vmatmul.mubr.f32.gmra.mrb[0].mxu0 %v1738
  %v1812 = vpop.f32.mrb[0].mxu0
  %v1813 = vadd.f32 0.0, %v1812
  %v1814 = vpop.f32.mrb[0].mxu0
  %v1815 = vadd.f32 0.0, %v1814
  %1816 = vdwg.mxu0
  %1817 = vmatprep.subr.mxu0 %v1729
  %1818 = vmatpush1.msra.mxu0 %v1728
  %1819 = vmatprep.subr.mxu0 0.0
  %1820 = vmatpush1.msra.mxu0 0.0
  %1821 = vmatprep.subr.mxu0 0.0
  %1822 = vmatpush1.msra.mxu0 0.0
  %1823 = vmatprep.subr.mxu0 0.0
  %1824 = vmatpush1.msra.mxu0 0.0
  %1825 = vmatprep.subr.mxu0 0.0
  %1826 = vmatpush1.msra.mxu0 0.0
  %1827 = vmatprep.subr.mxu0 0.0
  %1828 = vmatpush1.msra.mxu0 0.0
  %1829 = vmatprep.subr.mxu0 0.0
  %1830 = vmatpush1.msra.mxu0 0.0
  %1831 = vmatprep.subr.mxu0 0.0
  %1832 = vmatpush1.msra.mxu0 0.0
  %1833 = vmatprep.subr.mxu0 0.0
  %1834 = vmatpush1.msra.mxu0 0.0
  %1835 = vmatprep.subr.mxu0 0.0
  %1836 = vmatpush1.msra.mxu0 0.0
  %1837 = vmatprep.subr.mxu0 0.0
  %1838 = vmatpush1.msra.mxu0 0.0
  %1839 = vmatprep.subr.mxu0 0.0
  %1840 = vmatpush1.msra.mxu0 0.0
  %1841 = vmatprep.subr.mxu0 0.0
  %1842 = vmatpush1.msra.mxu0 0.0
  %1843 = vmatprep.subr.mxu0 0.0
  %1844 = vmatpush1.msra.mxu0 0.0
  %1845 = vmatprep.subr.mxu0 0.0
  %1846 = vmatpush1.msra.mxu0 0.0
  %1847 = vmatprep.subr.mxu0 0.0
  %1848 = vmatpush1.msra.mxu0 0.0
  %1849 = vmatprep.subr.mxu0 0.0
  %1850 = vmatpush1.msra.mxu0 0.0
  %1851 = vmatprep.subr.mxu0 0.0
  %1852 = vmatpush1.msra.mxu0 0.0
  %1853 = vmatprep.subr.mxu0 0.0
  %1854 = vmatpush1.msra.mxu0 0.0
  %1855 = vmatprep.subr.mxu0 0.0
  %1856 = vmatpush1.msra.mxu0 0.0
  %1857 = vmatprep.subr.mxu0 0.0
  %1858 = vmatpush1.msra.mxu0 0.0
  %1859 = vmatprep.subr.mxu0 0.0
  %1860 = vmatpush1.msra.mxu0 0.0
  %1861 = vmatprep.subr.mxu0 0.0
  %1862 = vmatpush1.msra.mxu0 0.0
  %1863 = vmatprep.subr.mxu0 0.0
  %1864 = vmatpush1.msra.mxu0 0.0
  %1865 = vmatprep.subr.mxu0 0.0
  %1866 = vmatpush1.msra.mxu0 0.0
  %1867 = vmatprep.subr.mxu0 0.0
  %1868 = vmatpush1.msra.mxu0 0.0
  %1869 = vmatprep.subr.mxu0 0.0
  %1870 = vmatpush1.msra.mxu0 0.0
  %1871 = vmatprep.subr.mxu0 0.0
  %1872 = vmatpush1.msra.mxu0 0.0
  %1873 = vmatprep.subr.mxu0 0.0
  %1874 = vmatpush1.msra.mxu0 0.0
  %1875 = vmatprep.subr.mxu0 0.0
  %1876 = vmatpush1.msra.mxu0 0.0
  %1877 = vmatprep.subr.mxu0 0.0
  %1878 = vmatpush1.msra.mxu0 0.0
  %1879 = vmatprep.subr.mxu0 0.0
  %1880 = vmatpush1.msra.mxu0 0.0
  %1881 = vmatprep.mubr.f32.mxu0 0.0
  %1882 = vmatmul.mubr.f32.gmra.mrb[0].mxu0 %v1735
  %v1883 = vpop.f32.mrb[0].mxu0
  %v1884 = vadd.f32 0.0, %v1883
  %v1885 = vpop.f32.mrb[0].mxu0
  %v1886 = vadd.f32 0.0, %v1885
  %1887 = vmatprep.mubr.f32.mxu0 0.0
  %1888 = vmatmul.mubr.f32.gmra.mrb[0].mxu0 %v1738
  %v1889 = vpop.f32.mrb[0].mxu0
  %v1890 = vadd.f32 0.0, %v1889
  %v1891 = vpop.f32.mrb[0].mxu0
  %v1892 = vadd.f32 0.0, %v1891
  %1893 = vdwg.mxu0
  %v1894 = vadd.f32 %v1704, %v1807
  %v1895 = vadd.f32 %v1705, %v1809
  %v1896 = vadd.f32 %v1706, %v1884
  %v1897 = vadd.f32 %v1707, %v1886
  %v1898 = vadd.f32 %v1708, %v1813
  %v1899 = vadd.f32 %v1709, %v1815
  %v1900 = vadd.f32 %v1710, %v1890
  %v1901 = vadd.f32 %v1711, %v1892
  %s1902 = scalar_lea.vmem %s1, 160
  %v1903 = vld [vmem:[%s1902] sm:$0xff]
  %v1904 = vld [vmem:[%s1902 + $0x8] sm:$0xff]
  %1905 = vrot.lane.b32.xlu0 %v32, 80
  %v1906 = vpop.permute.xlu0 %1905
  %1907 = vrot.lane.b32.xlu0 %v33, 80
  %v1908 = vpop.permute.xlu0 %1907
  %1909 = vrot.lane.b32.xlu0 %v34, 80
  %v1910 = vpop.permute.xlu0 %1909
  %1911 = vrot.lane.b32.xlu0 %v35, 80
  %v1912 = vpop.permute.xlu0 %1911
  %1913 = vrot.lane.b32.xlu0 %v36, 80
  %v1914 = vpop.permute.xlu0 %1913
  %vm1915 = vcmask 654336
  %v1916 = vsel %vm1915, %v1906, %v1908
  %v1917 = vsel %vm1915, %v1908, %v1910
  %v1918 = vsel %vm1915, %v1910, %v1912
  %v1919 = vsel %vm1915, %v1912, %v1914
  %v1925 = vsel %vm61, %v1903, 0
  %v1928 = vsel %vm61, %v1904, 0
  %1930 = vmatprep.subr.mxu0 %v1917
  %1931 = vmatpush1.msra.mxu0 %v1916
  %1932 = vmatprep.subr.mxu0 0.0
  %1933 = vmatpush1.msra.mxu0 0.0
  %1934 = vmatprep.subr.mxu0 0.0
  %1935 = vmatpush1.msra.mxu0 0.0
  %1936 = vmatprep.subr.mxu0 0.0
  %1937 = vmatpush1.msra.mxu0 0.0
  %1938 = vmatprep.subr.mxu0 0.0
  %1939 = vmatpush1.msra.mxu0 0.0
  %1940 = vmatprep.subr.mxu0 0.0
  %1941 = vmatpush1.msra.mxu0 0.0
  %1942 = vmatprep.subr.mxu0 0.0
  %1943 = vmatpush1.msra.mxu0 0.0
  %1944 = vmatprep.subr.mxu0 0.0
  %1945 = vmatpush1.msra.mxu0 0.0
  %1946 = vmatprep.subr.mxu0 0.0
  %1947 = vmatpush1.msra.mxu0 0.0
  %1948 = vmatprep.subr.mxu0 0.0
  %1949 = vmatpush1.msra.mxu0 0.0
  %1950 = vmatprep.subr.mxu0 0.0
  %1951 = vmatpush1.msra.mxu0 0.0
  %1952 = vmatprep.subr.mxu0 0.0
  %1953 = vmatpush1.msra.mxu0 0.0
  %1954 = vmatprep.subr.mxu0 0.0
  %1955 = vmatpush1.msra.mxu0 0.0
  %1956 = vmatprep.subr.mxu0 0.0
  %1957 = vmatpush1.msra.mxu0 0.0
  %1958 = vmatprep.subr.mxu0 0.0
  %1959 = vmatpush1.msra.mxu0 0.0
  %1960 = vmatprep.subr.mxu0 0.0
  %1961 = vmatpush1.msra.mxu0 0.0
  %1962 = vmatprep.subr.mxu0 0.0
  %1963 = vmatpush1.msra.mxu0 0.0
  %1964 = vmatprep.subr.mxu0 0.0
  %1965 = vmatpush1.msra.mxu0 0.0
  %1966 = vmatprep.subr.mxu0 0.0
  %1967 = vmatpush1.msra.mxu0 0.0
  %1968 = vmatprep.subr.mxu0 0.0
  %1969 = vmatpush1.msra.mxu0 0.0
  %1970 = vmatprep.subr.mxu0 0.0
  %1971 = vmatpush1.msra.mxu0 0.0
  %1972 = vmatprep.subr.mxu0 0.0
  %1973 = vmatpush1.msra.mxu0 0.0
  %1974 = vmatprep.subr.mxu0 0.0
  %1975 = vmatpush1.msra.mxu0 0.0
  %1976 = vmatprep.subr.mxu0 0.0
  %1977 = vmatpush1.msra.mxu0 0.0
  %1978 = vmatprep.subr.mxu0 0.0
  %1979 = vmatpush1.msra.mxu0 0.0
  %1980 = vmatprep.subr.mxu0 0.0
  %1981 = vmatpush1.msra.mxu0 0.0
  %1982 = vmatprep.subr.mxu0 0.0
  %1983 = vmatpush1.msra.mxu0 0.0
  %1984 = vmatprep.subr.mxu0 0.0
  %1985 = vmatpush1.msra.mxu0 0.0
  %1986 = vmatprep.subr.mxu0 0.0
  %1987 = vmatpush1.msra.mxu0 0.0
  %1988 = vmatprep.subr.mxu0 0.0
  %1989 = vmatpush1.msra.mxu0 0.0
  %1990 = vmatprep.subr.mxu0 0.0
  %1991 = vmatpush1.msra.mxu0 0.0
  %1992 = vmatprep.subr.mxu0 0.0
  %1993 = vmatpush1.msra.mxu0 0.0
  %1994 = vmatprep.mubr.f32.mxu0 0.0
  %1995 = vmatmul.mubr.f32.gmra.mrb[0].mxu0 %v1925
  %v1996 = vpop.f32.mrb[0].mxu0
  %v1997 = vadd.f32 0.0, %v1996
  %v1998 = vpop.f32.mrb[0].mxu0
  %v1999 = vadd.f32 0.0, %v1998
  %2000 = vmatprep.mubr.f32.mxu0 0.0
  %2001 = vmatmul.mubr.f32.gmra.mrb[0].mxu0 %v1928
  %v2002 = vpop.f32.mrb[0].mxu0
  %v2003 = vadd.f32 0.0, %v2002
  %v2004 = vpop.f32.mrb[0].mxu0
  %v2005 = vadd.f32 0.0, %v2004
  %2006 = vdwg.mxu0
  %2007 = vmatprep.subr.mxu0 %v1919
  %2008 = vmatpush1.msra.mxu0 %v1918
  %2009 = vmatprep.subr.mxu0 0.0
  %2010 = vmatpush1.msra.mxu0 0.0
  %2011 = vmatprep.subr.mxu0 0.0
  %2012 = vmatpush1.msra.mxu0 0.0
  %2013 = vmatprep.subr.mxu0 0.0
  %2014 = vmatpush1.msra.mxu0 0.0
  %2015 = vmatprep.subr.mxu0 0.0
  %2016 = vmatpush1.msra.mxu0 0.0
  %2017 = vmatprep.subr.mxu0 0.0
  %2018 = vmatpush1.msra.mxu0 0.0
  %2019 = vmatprep.subr.mxu0 0.0
  %2020 = vmatpush1.msra.mxu0 0.0
  %2021 = vmatprep.subr.mxu0 0.0
  %2022 = vmatpush1.msra.mxu0 0.0
  %2023 = vmatprep.subr.mxu0 0.0
  %2024 = vmatpush1.msra.mxu0 0.0
  %2025 = vmatprep.subr.mxu0 0.0
  %2026 = vmatpush1.msra.mxu0 0.0
  %2027 = vmatprep.subr.mxu0 0.0
  %2028 = vmatpush1.msra.mxu0 0.0
  %2029 = vmatprep.subr.mxu0 0.0
  %2030 = vmatpush1.msra.mxu0 0.0
  %2031 = vmatprep.subr.mxu0 0.0
  %2032 = vmatpush1.msra.mxu0 0.0
  %2033 = vmatprep.subr.mxu0 0.0
  %2034 = vmatpush1.msra.mxu0 0.0
  %2035 = vmatprep.subr.mxu0 0.0
  %2036 = vmatpush1.msra.mxu0 0.0
  %2037 = vmatprep.subr.mxu0 0.0
  %2038 = vmatpush1.msra.mxu0 0.0
  %2039 = vmatprep.subr.mxu0 0.0
  %2040 = vmatpush1.msra.mxu0 0.0
  %2041 = vmatprep.subr.mxu0 0.0
  %2042 = vmatpush1.msra.mxu0 0.0
  %2043 = vmatprep.subr.mxu0 0.0
  %2044 = vmatpush1.msra.mxu0 0.0
  %2045 = vmatprep.subr.mxu0 0.0
  %2046 = vmatpush1.msra.mxu0 0.0
  %2047 = vmatprep.subr.mxu0 0.0
  %2048 = vmatpush1.msra.mxu0 0.0
  %2049 = vmatprep.subr.mxu0 0.0
  %2050 = vmatpush1.msra.mxu0 0.0
  %2051 = vmatprep.subr.mxu0 0.0
  %2052 = vmatpush1.msra.mxu0 0.0
  %2053 = vmatprep.subr.mxu0 0.0
  %2054 = vmatpush1.msra.mxu0 0.0
  %2055 = vmatprep.subr.mxu0 0.0
  %2056 = vmatpush1.msra.mxu0 0.0
  %2057 = vmatprep.subr.mxu0 0.0
  %2058 = vmatpush1.msra.mxu0 0.0
  %2059 = vmatprep.subr.mxu0 0.0
  %2060 = vmatpush1.msra.mxu0 0.0
  %2061 = vmatprep.subr.mxu0 0.0
  %2062 = vmatpush1.msra.mxu0 0.0
  %2063 = vmatprep.subr.mxu0 0.0
  %2064 = vmatpush1.msra.mxu0 0.0
  %2065 = vmatprep.subr.mxu0 0.0
  %2066 = vmatpush1.msra.mxu0 0.0
  %2067 = vmatprep.subr.mxu0 0.0
  %2068 = vmatpush1.msra.mxu0 0.0
  %2069 = vmatprep.subr.mxu0 0.0
  %2070 = vmatpush1.msra.mxu0 0.0
  %2071 = vmatprep.mubr.f32.mxu0 0.0
  %2072 = vmatmul.mubr.f32.gmra.mrb[0].mxu0 %v1925
  %v2073 = vpop.f32.mrb[0].mxu0
  %v2074 = vadd.f32 0.0, %v2073
  %v2075 = vpop.f32.mrb[0].mxu0
  %v2076 = vadd.f32 0.0, %v2075
  %2077 = vmatprep.mubr.f32.mxu0 0.0
  %2078 = vmatmul.mubr.f32.gmra.mrb[0].mxu0 %v1928
  %v2079 = vpop.f32.mrb[0].mxu0
  %v2080 = vadd.f32 0.0, %v2079
  %v2081 = vpop.f32.mrb[0].mxu0
  %v2082 = vadd.f32 0.0, %v2081
  %2083 = vdwg.mxu0
  %v2084 = vadd.f32 %v1894, %v1997
  %v2085 = vadd.f32 %v1895, %v1999
  %v2086 = vadd.f32 %v1896, %v2074
  %v2087 = vadd.f32 %v1897, %v2076
  %v2088 = vadd.f32 %v1898, %v2003
  %v2089 = vadd.f32 %v1899, %v2005
  %v2090 = vadd.f32 %v1900, %v2080
  %v2091 = vadd.f32 %v1901, %v2082
  %s2092 = scalar_lea.vmem %s1, 176
  %v2093 = vld [vmem:[%s2092] sm:$0xff]
  %v2094 = vld [vmem:[%s2092 + $0x8] sm:$0xff]
  %2095 = vrot.lane.b32.xlu0 %v32, 79
  %v2096 = vpop.permute.xlu0 %2095
  %2097 = vrot.lane.b32.xlu0 %v33, 79
  %v2098 = vpop.permute.xlu0 %2097
  %2099 = vrot.lane.b32.xlu0 %v34, 79
  %v2100 = vpop.permute.xlu0 %2099
  %2101 = vrot.lane.b32.xlu0 %v35, 79
  %v2102 = vpop.permute.xlu0 %2101
  %2103 = vrot.lane.b32.xlu0 %v36, 79
  %v2104 = vpop.permute.xlu0 %2103
  %vm2105 = vcmask 646144
  %v2106 = vsel %vm2105, %v2096, %v2098
  %v2107 = vsel %vm2105, %v2098, %v2100
  %v2108 = vsel %vm2105, %v2100, %v2102
  %v2109 = vsel %vm2105, %v2102, %v2104
  %v2115 = vsel %vm61, %v2093, 0
  %v2118 = vsel %vm61, %v2094, 0
  %2120 = vmatprep.subr.mxu0 %v2107
  %2121 = vmatpush1.msra.mxu0 %v2106
  %2122 = vmatprep.subr.mxu0 0.0
  %2123 = vmatpush1.msra.mxu0 0.0
  %2124 = vmatprep.subr.mxu0 0.0
  %2125 = vmatpush1.msra.mxu0 0.0
  %2126 = vmatprep.subr.mxu0 0.0
  %2127 = vmatpush1.msra.mxu0 0.0
  %2128 = vmatprep.subr.mxu0 0.0
  %2129 = vmatpush1.msra.mxu0 0.0
  %2130 = vmatprep.subr.mxu0 0.0
  %2131 = vmatpush1.msra.mxu0 0.0
  %2132 = vmatprep.subr.mxu0 0.0
  %2133 = vmatpush1.msra.mxu0 0.0
  %2134 = vmatprep.subr.mxu0 0.0
  %2135 = vmatpush1.msra.mxu0 0.0
  %2136 = vmatprep.subr.mxu0 0.0
  %2137 = vmatpush1.msra.mxu0 0.0
  %2138 = vmatprep.subr.mxu0 0.0
  %2139 = vmatpush1.msra.mxu0 0.0
  %2140 = vmatprep.subr.mxu0 0.0
  %2141 = vmatpush1.msra.mxu0 0.0
  %2142 = vmatprep.subr.mxu0 0.0
  %2143 = vmatpush1.msra.mxu0 0.0
  %2144 = vmatprep.subr.mxu0 0.0
  %2145 = vmatpush1.msra.mxu0 0.0
  %2146 = vmatprep.subr.mxu0 0.0
  %2147 = vmatpush1.msra.mxu0 0.0
  %2148 = vmatprep.subr.mxu0 0.0
  %2149 = vmatpush1.msra.mxu0 0.0
  %2150 = vmatprep.subr.mxu0 0.0
  %2151 = vmatpush1.msra.mxu0 0.0
  %2152 = vmatprep.subr.mxu0 0.0
  %2153 = vmatpush1.msra.mxu0 0.0
  %2154 = vmatprep.subr.mxu0 0.0
  %2155 = vmatpush1.msra.mxu0 0.0
  %2156 = vmatprep.subr.mxu0 0.0
  %2157 = vmatpush1.msra.mxu0 0.0
  %2158 = vmatprep.subr.mxu0 0.0
  %2159 = vmatpush1.msra.mxu0 0.0
  %2160 = vmatprep.subr.mxu0 0.0
  %2161 = vmatpush1.msra.mxu0 0.0
  %2162 = vmatprep.subr.mxu0 0.0
  %2163 = vmatpush1.msra.mxu0 0.0
  %2164 = vmatprep.subr.mxu0 0.0
  %2165 = vmatpush1.msra.mxu0 0.0
  %2166 = vmatprep.subr.mxu0 0.0
  %2167 = vmatpush1.msra.mxu0 0.0
  %2168 = vmatprep.subr.mxu0 0.0
  %2169 = vmatpush1.msra.mxu0 0.0
  %2170 = vmatprep.subr.mxu0 0.0
  %2171 = vmatpush1.msra.mxu0 0.0
  %2172 = vmatprep.subr.mxu0 0.0
  %2173 = vmatpush1.msra.mxu0 0.0
  %2174 = vmatprep.subr.mxu0 0.0
  %2175 = vmatpush1.msra.mxu0 0.0
  %2176 = vmatprep.subr.mxu0 0.0
  %2177 = vmatpush1.msra.mxu0 0.0
  %2178 = vmatprep.subr.mxu0 0.0
  %2179 = vmatpush1.msra.mxu0 0.0
  %2180 = vmatprep.subr.mxu0 0.0
  %2181 = vmatpush1.msra.mxu0 0.0
  %2182 = vmatprep.subr.mxu0 0.0
  %2183 = vmatpush1.msra.mxu0 0.0
  %2184 = vmatprep.mubr.f32.mxu0 0.0
  %2185 = vmatmul.mubr.f32.gmra.mrb[0].mxu0 %v2115
  %v2186 = vpop.f32.mrb[0].mxu0
  %v2187 = vadd.f32 0.0, %v2186
  %v2188 = vpop.f32.mrb[0].mxu0
  %v2189 = vadd.f32 0.0, %v2188
  %2190 = vmatprep.mubr.f32.mxu0 0.0
  %2191 = vmatmul.mubr.f32.gmra.mrb[0].mxu0 %v2118
  %v2192 = vpop.f32.mrb[0].mxu0
  %v2193 = vadd.f32 0.0, %v2192
  %v2194 = vpop.f32.mrb[0].mxu0
  %v2195 = vadd.f32 0.0, %v2194
  %2196 = vdwg.mxu0
  %2197 = vmatprep.subr.mxu0 %v2109
  %2198 = vmatpush1.msra.mxu0 %v2108
  %2199 = vmatprep.subr.mxu0 0.0
  %2200 = vmatpush1.msra.mxu0 0.0
  %2201 = vmatprep.subr.mxu0 0.0
  %2202 = vmatpush1.msra.mxu0 0.0
  %2203 = vmatprep.subr.mxu0 0.0
  %2204 = vmatpush1.msra.mxu0 0.0
  %2205 = vmatprep.subr.mxu0 0.0
  %2206 = vmatpush1.msra.mxu0 0.0
  %2207 = vmatprep.subr.mxu0 0.0
  %2208 = vmatpush1.msra.mxu0 0.0
  %2209 = vmatprep.subr.mxu0 0.0
  %2210 = vmatpush1.msra.mxu0 0.0
  %2211 = vmatprep.subr.mxu0 0.0
  %2212 = vmatpush1.msra.mxu0 0.0
  %2213 = vmatprep.subr.mxu0 0.0
  %2214 = vmatpush1.msra.mxu0 0.0
  %2215 = vmatprep.subr.mxu0 0.0
  %2216 = vmatpush1.msra.mxu0 0.0
  %2217 = vmatprep.subr.mxu0 0.0
  %2218 = vmatpush1.msra.mxu0 0.0
  %2219 = vmatprep.subr.mxu0 0.0
  %2220 = vmatpush1.msra.mxu0 0.0
  %2221 = vmatprep.subr.mxu0 0.0
  %2222 = vmatpush1.msra.mxu0 0.0
  %2223 = vmatprep.subr.mxu0 0.0
  %2224 = vmatpush1.msra.mxu0 0.0
  %2225 = vmatprep.subr.mxu0 0.0
  %2226 = vmatpush1.msra.mxu0 0.0
  %2227 = vmatprep.subr.mxu0 0.0
  %2228 = vmatpush1.msra.mxu0 0.0
  %2229 = vmatprep.subr.mxu0 0.0
  %2230 = vmatpush1.msra.mxu0 0.0
  %2231 = vmatprep.subr.mxu0 0.0
  %2232 = vmatpush1.msra.mxu0 0.0
  %2233 = vmatprep.subr.mxu0 0.0
  %2234 = vmatpush1.msra.mxu0 0.0
  %2235 = vmatprep.subr.mxu0 0.0
  %2236 = vmatpush1.msra.mxu0 0.0
  %2237 = vmatprep.subr.mxu0 0.0
  %2238 = vmatpush1.msra.mxu0 0.0
  %2239 = vmatprep.subr.mxu0 0.0
  %2240 = vmatpush1.msra.mxu0 0.0
  %2241 = vmatprep.subr.mxu0 0.0
  %2242 = vmatpush1.msra.mxu0 0.0
  %2243 = vmatprep.subr.mxu0 0.0
  %2244 = vmatpush1.msra.mxu0 0.0
  %2245 = vmatprep.subr.mxu0 0.0
  %2246 = vmatpush1.msra.mxu0 0.0
  %2247 = vmatprep.subr.mxu0 0.0
  %2248 = vmatpush1.msra.mxu0 0.0
  %2249 = vmatprep.subr.mxu0 0.0
  %2250 = vmatpush1.msra.mxu0 0.0
  %2251 = vmatprep.subr.mxu0 0.0
  %2252 = vmatpush1.msra.mxu0 0.0
  %2253 = vmatprep.subr.mxu0 0.0
  %2254 = vmatpush1.msra.mxu0 0.0
  %2255 = vmatprep.subr.mxu0 0.0
  %2256 = vmatpush1.msra.mxu0 0.0
  %2257 = vmatprep.subr.mxu0 0.0
  %2258 = vmatpush1.msra.mxu0 0.0
  %2259 = vmatprep.subr.mxu0 0.0
  %2260 = vmatpush1.msra.mxu0 0.0
  %2261 = vmatprep.mubr.f32.mxu0 0.0
  %2262 = vmatmul.mubr.f32.gmra.mrb[0].mxu0 %v2115
  %v2263 = vpop.f32.mrb[0].mxu0
  %v2264 = vadd.f32 0.0, %v2263
  %v2265 = vpop.f32.mrb[0].mxu0
  %v2266 = vadd.f32 0.0, %v2265
  %2267 = vmatprep.mubr.f32.mxu0 0.0
  %2268 = vmatmul.mubr.f32.gmra.mrb[0].mxu0 %v2118
  %v2269 = vpop.f32.mrb[0].mxu0
  %v2270 = vadd.f32 0.0, %v2269
  %v2271 = vpop.f32.mrb[0].mxu0
  %v2272 = vadd.f32 0.0, %v2271
  %2273 = vdwg.mxu0
  %v2274 = vadd.f32 %v2084, %v2187
  %v2275 = vadd.f32 %v2085, %v2189
  %v2276 = vadd.f32 %v2086, %v2264
  %v2277 = vadd.f32 %v2087, %v2266
  %v2278 = vadd.f32 %v2088, %v2193
  %v2279 = vadd.f32 %v2089, %v2195
  %v2280 = vadd.f32 %v2090, %v2270
  %v2281 = vadd.f32 %v2091, %v2272
  %s2282 = scalar_lea.vmem %s1, 192
  %v2283 = vld [vmem:[%s2282] sm:$0xff]
  %v2284 = vld [vmem:[%s2282 + $0x8] sm:$0xff]
  %2285 = vrot.lane.b32.xlu0 %v32, 78
  %v2286 = vpop.permute.xlu0 %2285
  %2287 = vrot.lane.b32.xlu0 %v33, 78
  %v2288 = vpop.permute.xlu0 %2287
  %2289 = vrot.lane.b32.xlu0 %v34, 78
  %v2290 = vpop.permute.xlu0 %2289
  %2291 = vrot.lane.b32.xlu0 %v35, 78
  %v2292 = vpop.permute.xlu0 %2291
  %2293 = vrot.lane.b32.xlu0 %v36, 78
  %v2294 = vpop.permute.xlu0 %2293
  %vm2295 = vcmask 637952
  %v2296 = vsel %vm2295, %v2286, %v2288
  %v2297 = vsel %vm2295, %v2288, %v2290
  %v2298 = vsel %vm2295, %v2290, %v2292
  %v2299 = vsel %vm2295, %v2292, %v2294
  %v2305 = vsel %vm61, %v2283, 0
  %v2308 = vsel %vm61, %v2284, 0
  %2310 = vmatprep.subr.mxu0 %v2297
  %2311 = vmatpush1.msra.mxu0 %v2296
  %2312 = vmatprep.subr.mxu0 0.0
  %2313 = vmatpush1.msra.mxu0 0.0
  %2314 = vmatprep.subr.mxu0 0.0
  %2315 = vmatpush1.msra.mxu0 0.0
  %2316 = vmatprep.subr.mxu0 0.0
  %2317 = vmatpush1.msra.mxu0 0.0
  %2318 = vmatprep.subr.mxu0 0.0
  %2319 = vmatpush1.msra.mxu0 0.0
  %2320 = vmatprep.subr.mxu0 0.0
  %2321 = vmatpush1.msra.mxu0 0.0
  %2322 = vmatprep.subr.mxu0 0.0
  %2323 = vmatpush1.msra.mxu0 0.0
  %2324 = vmatprep.subr.mxu0 0.0
  %2325 = vmatpush1.msra.mxu0 0.0
  %2326 = vmatprep.subr.mxu0 0.0
  %2327 = vmatpush1.msra.mxu0 0.0
  %2328 = vmatprep.subr.mxu0 0.0
  %2329 = vmatpush1.msra.mxu0 0.0
  %2330 = vmatprep.subr.mxu0 0.0
  %2331 = vmatpush1.msra.mxu0 0.0
  %2332 = vmatprep.subr.mxu0 0.0
  %2333 = vmatpush1.msra.mxu0 0.0
  %2334 = vmatprep.subr.mxu0 0.0
  %2335 = vmatpush1.msra.mxu0 0.0
  %2336 = vmatprep.subr.mxu0 0.0
  %2337 = vmatpush1.msra.mxu0 0.0
  %2338 = vmatprep.subr.mxu0 0.0
  %2339 = vmatpush1.msra.mxu0 0.0
  %2340 = vmatprep.subr.mxu0 0.0
  %2341 = vmatpush1.msra.mxu0 0.0
  %2342 = vmatprep.subr.mxu0 0.0
  %2343 = vmatpush1.msra.mxu0 0.0
  %2344 = vmatprep.subr.mxu0 0.0
  %2345 = vmatpush1.msra.mxu0 0.0
  %2346 = vmatprep.subr.mxu0 0.0
  %2347 = vmatpush1.msra.mxu0 0.0
  %2348 = vmatprep.subr.mxu0 0.0
  %2349 = vmatpush1.msra.mxu0 0.0
  %2350 = vmatprep.subr.mxu0 0.0
  %2351 = vmatpush1.msra.mxu0 0.0
  %2352 = vmatprep.subr.mxu0 0.0
  %2353 = vmatpush1.msra.mxu0 0.0
  %2354 = vmatprep.subr.mxu0 0.0
  %2355 = vmatpush1.msra.mxu0 0.0
  %2356 = vmatprep.subr.mxu0 0.0
  %2357 = vmatpush1.msra.mxu0 0.0
  %2358 = vmatprep.subr.mxu0 0.0
  %2359 = vmatpush1.msra.mxu0 0.0
  %2360 = vmatprep.subr.mxu0 0.0
  %2361 = vmatpush1.msra.mxu0 0.0
  %2362 = vmatprep.subr.mxu0 0.0
  %2363 = vmatpush1.msra.mxu0 0.0
  %2364 = vmatprep.subr.mxu0 0.0
  %2365 = vmatpush1.msra.mxu0 0.0
  %2366 = vmatprep.subr.mxu0 0.0
  %2367 = vmatpush1.msra.mxu0 0.0
  %2368 = vmatprep.subr.mxu0 0.0
  %2369 = vmatpush1.msra.mxu0 0.0
  %2370 = vmatprep.subr.mxu0 0.0
  %2371 = vmatpush1.msra.mxu0 0.0
  %2372 = vmatprep.subr.mxu0 0.0
  %2373 = vmatpush1.msra.mxu0 0.0
  %2374 = vmatprep.mubr.f32.mxu0 0.0
  %2375 = vmatmul.mubr.f32.gmra.mrb[0].mxu0 %v2305
  %v2376 = vpop.f32.mrb[0].mxu0
  %v2377 = vadd.f32 0.0, %v2376
  %v2378 = vpop.f32.mrb[0].mxu0
  %v2379 = vadd.f32 0.0, %v2378
  %2380 = vmatprep.mubr.f32.mxu0 0.0
  %2381 = vmatmul.mubr.f32.gmra.mrb[0].mxu0 %v2308
  %v2382 = vpop.f32.mrb[0].mxu0
  %v2383 = vadd.f32 0.0, %v2382
  %v2384 = vpop.f32.mrb[0].mxu0
  %v2385 = vadd.f32 0.0, %v2384
  %2386 = vdwg.mxu0
  %2387 = vmatprep.subr.mxu0 %v2299
  %2388 = vmatpush1.msra.mxu0 %v2298
  %2389 = vmatprep.subr.mxu0 0.0
  %2390 = vmatpush1.msra.mxu0 0.0
  %2391 = vmatprep.subr.mxu0 0.0
  %2392 = vmatpush1.msra.mxu0 0.0
  %2393 = vmatprep.subr.mxu0 0.0
  %2394 = vmatpush1.msra.mxu0 0.0
  %2395 = vmatprep.subr.mxu0 0.0
  %2396 = vmatpush1.msra.mxu0 0.0
  %2397 = vmatprep.subr.mxu0 0.0
  %2398 = vmatpush1.msra.mxu0 0.0
  %2399 = vmatprep.subr.mxu0 0.0
  %2400 = vmatpush1.msra.mxu0 0.0
  %2401 = vmatprep.subr.mxu0 0.0
  %2402 = vmatpush1.msra.mxu0 0.0
  %2403 = vmatprep.subr.mxu0 0.0
  %2404 = vmatpush1.msra.mxu0 0.0
  %2405 = vmatprep.subr.mxu0 0.0
  %2406 = vmatpush1.msra.mxu0 0.0
  %2407 = vmatprep.subr.mxu0 0.0
  %2408 = vmatpush1.msra.mxu0 0.0
  %2409 = vmatprep.subr.mxu0 0.0
  %2410 = vmatpush1.msra.mxu0 0.0
  %2411 = vmatprep.subr.mxu0 0.0
  %2412 = vmatpush1.msra.mxu0 0.0
  %2413 = vmatprep.subr.mxu0 0.0
  %2414 = vmatpush1.msra.mxu0 0.0
  %2415 = vmatprep.subr.mxu0 0.0
  %2416 = vmatpush1.msra.mxu0 0.0
  %2417 = vmatprep.subr.mxu0 0.0
  %2418 = vmatpush1.msra.mxu0 0.0
  %2419 = vmatprep.subr.mxu0 0.0
  %2420 = vmatpush1.msra.mxu0 0.0
  %2421 = vmatprep.subr.mxu0 0.0
  %2422 = vmatpush1.msra.mxu0 0.0
  %2423 = vmatprep.subr.mxu0 0.0
  %2424 = vmatpush1.msra.mxu0 0.0
  %2425 = vmatprep.subr.mxu0 0.0
  %2426 = vmatpush1.msra.mxu0 0.0
  %2427 = vmatprep.subr.mxu0 0.0
  %2428 = vmatpush1.msra.mxu0 0.0
  %2429 = vmatprep.subr.mxu0 0.0
  %2430 = vmatpush1.msra.mxu0 0.0
  %2431 = vmatprep.subr.mxu0 0.0
  %2432 = vmatpush1.msra.mxu0 0.0
  %2433 = vmatprep.subr.mxu0 0.0
  %2434 = vmatpush1.msra.mxu0 0.0
  %2435 = vmatprep.subr.mxu0 0.0
  %2436 = vmatpush1.msra.mxu0 0.0
  %2437 = vmatprep.subr.mxu0 0.0
  %2438 = vmatpush1.msra.mxu0 0.0
  %2439 = vmatprep.subr.mxu0 0.0
  %2440 = vmatpush1.msra.mxu0 0.0
  %2441 = vmatprep.subr.mxu0 0.0
  %2442 = vmatpush1.msra.mxu0 0.0
  %2443 = vmatprep.subr.mxu0 0.0
  %2444 = vmatpush1.msra.mxu0 0.0
  %2445 = vmatprep.subr.mxu0 0.0
  %2446 = vmatpush1.msra.mxu0 0.0
  %2447 = vmatprep.subr.mxu0 0.0
  %2448 = vmatpush1.msra.mxu0 0.0
  %2449 = vmatprep.subr.mxu0 0.0
  %2450 = vmatpush1.msra.mxu0 0.0
  %2451 = vmatprep.mubr.f32.mxu0 0.0
  %2452 = vmatmul.mubr.f32.gmra.mrb[0].mxu0 %v2305
  %v2453 = vpop.f32.mrb[0].mxu0
  %v2454 = vadd.f32 0.0, %v2453
  %v2455 = vpop.f32.mrb[0].mxu0
  %v2456 = vadd.f32 0.0, %v2455
  %2457 = vmatprep.mubr.f32.mxu0 0.0
  %2458 = vmatmul.mubr.f32.gmra.mrb[0].mxu0 %v2308
  %v2459 = vpop.f32.mrb[0].mxu0
  %v2460 = vadd.f32 0.0, %v2459
  %v2461 = vpop.f32.mrb[0].mxu0
  %v2462 = vadd.f32 0.0, %v2461
  %2463 = vdwg.mxu0
  %v2464 = vadd.f32 %v2274, %v2377
  %v2465 = vadd.f32 %v2275, %v2379
  %v2466 = vadd.f32 %v2276, %v2454
  %v2467 = vadd.f32 %v2277, %v2456
  %v2468 = vadd.f32 %v2278, %v2383
  %v2469 = vadd.f32 %v2279, %v2385
  %v2470 = vadd.f32 %v2280, %v2460
  %v2471 = vadd.f32 %v2281, %v2462
  %s2472 = scalar_lea.vmem %s1, 208
  %v2473 = vld [vmem:[%s2472] sm:$0xff]
  %v2474 = vld [vmem:[%s2472 + $0x8] sm:$0xff]
  %2475 = vrot.lane.b32.xlu0 %v32, 77
  %v2476 = vpop.permute.xlu0 %2475
  %2477 = vrot.lane.b32.xlu0 %v33, 77
  %v2478 = vpop.permute.xlu0 %2477
  %2479 = vrot.lane.b32.xlu0 %v34, 77
  %v2480 = vpop.permute.xlu0 %2479
  %2481 = vrot.lane.b32.xlu0 %v35, 77
  %v2482 = vpop.permute.xlu0 %2481
  %2483 = vrot.lane.b32.xlu0 %v36, 77
  %v2484 = vpop.permute.xlu0 %2483
  %vm2485 = vcmask 629760
  %v2486 = vsel %vm2485, %v2476, %v2478
  %v2487 = vsel %vm2485, %v2478, %v2480
  %v2488 = vsel %vm2485, %v2480, %v2482
  %v2489 = vsel %vm2485, %v2482, %v2484
  %v2495 = vsel %vm61, %v2473, 0
  %v2498 = vsel %vm61, %v2474, 0
  %2500 = vmatprep.subr.mxu0 %v2487
  %2501 = vmatpush1.msra.mxu0 %v2486
  %2502 = vmatprep.subr.mxu0 0.0
  %2503 = vmatpush1.msra.mxu0 0.0
  %2504 = vmatprep.subr.mxu0 0.0
  %2505 = vmatpush1.msra.mxu0 0.0
  %2506 = vmatprep.subr.mxu0 0.0
  %2507 = vmatpush1.msra.mxu0 0.0
  %2508 = vmatprep.subr.mxu0 0.0
  %2509 = vmatpush1.msra.mxu0 0.0
  %2510 = vmatprep.subr.mxu0 0.0
  %2511 = vmatpush1.msra.mxu0 0.0
  %2512 = vmatprep.subr.mxu0 0.0
  %2513 = vmatpush1.msra.mxu0 0.0
  %2514 = vmatprep.subr.mxu0 0.0
  %2515 = vmatpush1.msra.mxu0 0.0
  %2516 = vmatprep.subr.mxu0 0.0
  %2517 = vmatpush1.msra.mxu0 0.0
  %2518 = vmatprep.subr.mxu0 0.0
  %2519 = vmatpush1.msra.mxu0 0.0
  %2520 = vmatprep.subr.mxu0 0.0
  %2521 = vmatpush1.msra.mxu0 0.0
  %2522 = vmatprep.subr.mxu0 0.0
  %2523 = vmatpush1.msra.mxu0 0.0
  %2524 = vmatprep.subr.mxu0 0.0
  %2525 = vmatpush1.msra.mxu0 0.0
  %2526 = vmatprep.subr.mxu0 0.0
  %2527 = vmatpush1.msra.mxu0 0.0
  %2528 = vmatprep.subr.mxu0 0.0
  %2529 = vmatpush1.msra.mxu0 0.0
  %2530 = vmatprep.subr.mxu0 0.0
  %2531 = vmatpush1.msra.mxu0 0.0
  %2532 = vmatprep.subr.mxu0 0.0
  %2533 = vmatpush1.msra.mxu0 0.0
  %2534 = vmatprep.subr.mxu0 0.0
  %2535 = vmatpush1.msra.mxu0 0.0
  %2536 = vmatprep.subr.mxu0 0.0
  %2537 = vmatpush1.msra.mxu0 0.0
  %2538 = vmatprep.subr.mxu0 0.0
  %2539 = vmatpush1.msra.mxu0 0.0
  %2540 = vmatprep.subr.mxu0 0.0
  %2541 = vmatpush1.msra.mxu0 0.0
  %2542 = vmatprep.subr.mxu0 0.0
  %2543 = vmatpush1.msra.mxu0 0.0
  %2544 = vmatprep.subr.mxu0 0.0
  %2545 = vmatpush1.msra.mxu0 0.0
  %2546 = vmatprep.subr.mxu0 0.0
  %2547 = vmatpush1.msra.mxu0 0.0
  %2548 = vmatprep.subr.mxu0 0.0
  %2549 = vmatpush1.msra.mxu0 0.0
  %2550 = vmatprep.subr.mxu0 0.0
  %2551 = vmatpush1.msra.mxu0 0.0
  %2552 = vmatprep.subr.mxu0 0.0
  %2553 = vmatpush1.msra.mxu0 0.0
  %2554 = vmatprep.subr.mxu0 0.0
  %2555 = vmatpush1.msra.mxu0 0.0
  %2556 = vmatprep.subr.mxu0 0.0
  %2557 = vmatpush1.msra.mxu0 0.0
  %2558 = vmatprep.subr.mxu0 0.0
  %2559 = vmatpush1.msra.mxu0 0.0
  %2560 = vmatprep.subr.mxu0 0.0
  %2561 = vmatpush1.msra.mxu0 0.0
  %2562 = vmatprep.subr.mxu0 0.0
  %2563 = vmatpush1.msra.mxu0 0.0
  %2564 = vmatprep.mubr.f32.mxu0 0.0
  %2565 = vmatmul.mubr.f32.gmra.mrb[0].mxu0 %v2495
  %v2566 = vpop.f32.mrb[0].mxu0
  %v2567 = vadd.f32 0.0, %v2566
  %v2568 = vpop.f32.mrb[0].mxu0
  %v2569 = vadd.f32 0.0, %v2568
  %2570 = vmatprep.mubr.f32.mxu0 0.0
  %2571 = vmatmul.mubr.f32.gmra.mrb[0].mxu0 %v2498
  %v2572 = vpop.f32.mrb[0].mxu0
  %v2573 = vadd.f32 0.0, %v2572
  %v2574 = vpop.f32.mrb[0].mxu0
  %v2575 = vadd.f32 0.0, %v2574
  %2576 = vdwg.mxu0
  %2577 = vmatprep.subr.mxu0 %v2489
  %2578 = vmatpush1.msra.mxu0 %v2488
  %2579 = vmatprep.subr.mxu0 0.0
  %2580 = vmatpush1.msra.mxu0 0.0
  %2581 = vmatprep.subr.mxu0 0.0
  %2582 = vmatpush1.msra.mxu0 0.0
  %2583 = vmatprep.subr.mxu0 0.0
  %2584 = vmatpush1.msra.mxu0 0.0
  %2585 = vmatprep.subr.mxu0 0.0
  %2586 = vmatpush1.msra.mxu0 0.0
  %2587 = vmatprep.subr.mxu0 0.0
  %2588 = vmatpush1.msra.mxu0 0.0
  %2589 = vmatprep.subr.mxu0 0.0
  %2590 = vmatpush1.msra.mxu0 0.0
  %2591 = vmatprep.subr.mxu0 0.0
  %2592 = vmatpush1.msra.mxu0 0.0
  %2593 = vmatprep.subr.mxu0 0.0
  %2594 = vmatpush1.msra.mxu0 0.0
  %2595 = vmatprep.subr.mxu0 0.0
  %2596 = vmatpush1.msra.mxu0 0.0
  %2597 = vmatprep.subr.mxu0 0.0
  %2598 = vmatpush1.msra.mxu0 0.0
  %2599 = vmatprep.subr.mxu0 0.0
  %2600 = vmatpush1.msra.mxu0 0.0
  %2601 = vmatprep.subr.mxu0 0.0
  %2602 = vmatpush1.msra.mxu0 0.0
  %2603 = vmatprep.subr.mxu0 0.0
  %2604 = vmatpush1.msra.mxu0 0.0
  %2605 = vmatprep.subr.mxu0 0.0
  %2606 = vmatpush1.msra.mxu0 0.0
  %2607 = vmatprep.subr.mxu0 0.0
  %2608 = vmatpush1.msra.mxu0 0.0
  %2609 = vmatprep.subr.mxu0 0.0
  %2610 = vmatpush1.msra.mxu0 0.0
  %2611 = vmatprep.subr.mxu0 0.0
  %2612 = vmatpush1.msra.mxu0 0.0
  %2613 = vmatprep.subr.mxu0 0.0
  %2614 = vmatpush1.msra.mxu0 0.0
  %2615 = vmatprep.subr.mxu0 0.0
  %2616 = vmatpush1.msra.mxu0 0.0
  %2617 = vmatprep.subr.mxu0 0.0
  %2618 = vmatpush1.msra.mxu0 0.0
  %2619 = vmatprep.subr.mxu0 0.0
  %2620 = vmatpush1.msra.mxu0 0.0
  %2621 = vmatprep.subr.mxu0 0.0
  %2622 = vmatpush1.msra.mxu0 0.0
  %2623 = vmatprep.subr.mxu0 0.0
  %2624 = vmatpush1.msra.mxu0 0.0
  %2625 = vmatprep.subr.mxu0 0.0
  %2626 = vmatpush1.msra.mxu0 0.0
  %2627 = vmatprep.subr.mxu0 0.0
  %2628 = vmatpush1.msra.mxu0 0.0
  %2629 = vmatprep.subr.mxu0 0.0
  %2630 = vmatpush1.msra.mxu0 0.0
  %2631 = vmatprep.subr.mxu0 0.0
  %2632 = vmatpush1.msra.mxu0 0.0
  %2633 = vmatprep.subr.mxu0 0.0
  %2634 = vmatpush1.msra.mxu0 0.0
  %2635 = vmatprep.subr.mxu0 0.0
  %2636 = vmatpush1.msra.mxu0 0.0
  %2637 = vmatprep.subr.mxu0 0.0
  %2638 = vmatpush1.msra.mxu0 0.0
  %2639 = vmatprep.subr.mxu0 0.0
  %2640 = vmatpush1.msra.mxu0 0.0
  %2641 = vmatprep.mubr.f32.mxu0 0.0
  %2642 = vmatmul.mubr.f32.gmra.mrb[0].mxu0 %v2495
  %v2643 = vpop.f32.mrb[0].mxu0
  %v2644 = vadd.f32 0.0, %v2643
  %v2645 = vpop.f32.mrb[0].mxu0
  %v2646 = vadd.f32 0.0, %v2645
  %2647 = vmatprep.mubr.f32.mxu0 0.0
  %2648 = vmatmul.mubr.f32.gmra.mrb[0].mxu0 %v2498
  %v2649 = vpop.f32.mrb[0].mxu0
  %v2650 = vadd.f32 0.0, %v2649
  %v2651 = vpop.f32.mrb[0].mxu0
  %v2652 = vadd.f32 0.0, %v2651
  %2653 = vdwg.mxu0
  %v2654 = vadd.f32 %v2464, %v2567
  %v2655 = vadd.f32 %v2465, %v2569
  %v2656 = vadd.f32 %v2466, %v2644
  %v2657 = vadd.f32 %v2467, %v2646
  %v2658 = vadd.f32 %v2468, %v2573
  %v2659 = vadd.f32 %v2469, %v2575
  %v2660 = vadd.f32 %v2470, %v2650
  %v2661 = vadd.f32 %v2471, %v2652
  %s2662 = scalar_lea.vmem %s1, 224
  %v2663 = vld [vmem:[%s2662] sm:$0xff]
  %v2664 = vld [vmem:[%s2662 + $0x8] sm:$0xff]
  %2665 = vrot.lane.b32.xlu0 %v32, 76
  %v2666 = vpop.permute.xlu0 %2665
  %2667 = vrot.lane.b32.xlu0 %v33, 76
  %v2668 = vpop.permute.xlu0 %2667
  %2669 = vrot.lane.b32.xlu0 %v34, 76
  %v2670 = vpop.permute.xlu0 %2669
  %2671 = vrot.lane.b32.xlu0 %v35, 76
  %v2672 = vpop.permute.xlu0 %2671
  %2673 = vrot.lane.b32.xlu0 %v36, 76
  %v2674 = vpop.permute.xlu0 %2673
  %vm2675 = vcmask 621568
  %v2676 = vsel %vm2675, %v2666, %v2668
  %v2677 = vsel %vm2675, %v2668, %v2670
  %v2678 = vsel %vm2675, %v2670, %v2672
  %v2679 = vsel %vm2675, %v2672, %v2674
  %v2685 = vsel %vm61, %v2663, 0
  %v2688 = vsel %vm61, %v2664, 0
  %2690 = vmatprep.subr.mxu0 %v2677
  %2691 = vmatpush1.msra.mxu0 %v2676
  %2692 = vmatprep.subr.mxu0 0.0
  %2693 = vmatpush1.msra.mxu0 0.0
  %2694 = vmatprep.subr.mxu0 0.0
  %2695 = vmatpush1.msra.mxu0 0.0
  %2696 = vmatprep.subr.mxu0 0.0
  %2697 = vmatpush1.msra.mxu0 0.0
  %2698 = vmatprep.subr.mxu0 0.0
  %2699 = vmatpush1.msra.mxu0 0.0
  %2700 = vmatprep.subr.mxu0 0.0
  %2701 = vmatpush1.msra.mxu0 0.0
  %2702 = vmatprep.subr.mxu0 0.0
  %2703 = vmatpush1.msra.mxu0 0.0
  %2704 = vmatprep.subr.mxu0 0.0
  %2705 = vmatpush1.msra.mxu0 0.0
  %2706 = vmatprep.subr.mxu0 0.0
  %2707 = vmatpush1.msra.mxu0 0.0
  %2708 = vmatprep.subr.mxu0 0.0
  %2709 = vmatpush1.msra.mxu0 0.0
  %2710 = vmatprep.subr.mxu0 0.0
  %2711 = vmatpush1.msra.mxu0 0.0
  %2712 = vmatprep.subr.mxu0 0.0
  %2713 = vmatpush1.msra.mxu0 0.0
  %2714 = vmatprep.subr.mxu0 0.0
  %2715 = vmatpush1.msra.mxu0 0.0
  %2716 = vmatprep.subr.mxu0 0.0
  %2717 = vmatpush1.msra.mxu0 0.0
  %2718 = vmatprep.subr.mxu0 0.0
  %2719 = vmatpush1.msra.mxu0 0.0
  %2720 = vmatprep.subr.mxu0 0.0
  %2721 = vmatpush1.msra.mxu0 0.0
  %2722 = vmatprep.subr.mxu0 0.0
  %2723 = vmatpush1.msra.mxu0 0.0
  %2724 = vmatprep.subr.mxu0 0.0
  %2725 = vmatpush1.msra.mxu0 0.0
  %2726 = vmatprep.subr.mxu0 0.0
  %2727 = vmatpush1.msra.mxu0 0.0
  %2728 = vmatprep.subr.mxu0 0.0
  %2729 = vmatpush1.msra.mxu0 0.0
  %2730 = vmatprep.subr.mxu0 0.0
  %2731 = vmatpush1.msra.mxu0 0.0
  %2732 = vmatprep.subr.mxu0 0.0
  %2733 = vmatpush1.msra.mxu0 0.0
  %2734 = vmatprep.subr.mxu0 0.0
  %2735 = vmatpush1.msra.mxu0 0.0
  %2736 = vmatprep.subr.mxu0 0.0
  %2737 = vmatpush1.msra.mxu0 0.0
  %2738 = vmatprep.subr.mxu0 0.0
  %2739 = vmatpush1.msra.mxu0 0.0
  %2740 = vmatprep.subr.mxu0 0.0
  %2741 = vmatpush1.msra.mxu0 0.0
  %2742 = vmatprep.subr.mxu0 0.0
  %2743 = vmatpush1.msra.mxu0 0.0
  %2744 = vmatprep.subr.mxu0 0.0
  %2745 = vmatpush1.msra.mxu0 0.0
  %2746 = vmatprep.subr.mxu0 0.0
  %2747 = vmatpush1.msra.mxu0 0.0
  %2748 = vmatprep.subr.mxu0 0.0
  %2749 = vmatpush1.msra.mxu0 0.0
  %2750 = vmatprep.subr.mxu0 0.0
  %2751 = vmatpush1.msra.mxu0 0.0
  %2752 = vmatprep.subr.mxu0 0.0
  %2753 = vmatpush1.msra.mxu0 0.0
  %2754 = vmatprep.mubr.f32.mxu0 0.0
  %2755 = vmatmul.mubr.f32.gmra.mrb[0].mxu0 %v2685
  %v2756 = vpop.f32.mrb[0].mxu0
  %v2757 = vadd.f32 0.0, %v2756
  %v2758 = vpop.f32.mrb[0].mxu0
  %v2759 = vadd.f32 0.0, %v2758
  %2760 = vmatprep.mubr.f32.mxu0 0.0
  %2761 = vmatmul.mubr.f32.gmra.mrb[0].mxu0 %v2688
  %v2762 = vpop.f32.mrb[0].mxu0
  %v2763 = vadd.f32 0.0, %v2762
  %v2764 = vpop.f32.mrb[0].mxu0
  %v2765 = vadd.f32 0.0, %v2764
  %2766 = vdwg.mxu0
  %2767 = vmatprep.subr.mxu0 %v2679
  %2768 = vmatpush1.msra.mxu0 %v2678
  %2769 = vmatprep.subr.mxu0 0.0
  %2770 = vmatpush1.msra.mxu0 0.0
  %2771 = vmatprep.subr.mxu0 0.0
  %2772 = vmatpush1.msra.mxu0 0.0
  %2773 = vmatprep.subr.mxu0 0.0
  %2774 = vmatpush1.msra.mxu0 0.0
  %2775 = vmatprep.subr.mxu0 0.0
  %2776 = vmatpush1.msra.mxu0 0.0
  %2777 = vmatprep.subr.mxu0 0.0
  %2778 = vmatpush1.msra.mxu0 0.0
  %2779 = vmatprep.subr.mxu0 0.0
  %2780 = vmatpush1.msra.mxu0 0.0
  %2781 = vmatprep.subr.mxu0 0.0
  %2782 = vmatpush1.msra.mxu0 0.0
  %2783 = vmatprep.subr.mxu0 0.0
  %2784 = vmatpush1.msra.mxu0 0.0
  %2785 = vmatprep.subr.mxu0 0.0
  %2786 = vmatpush1.msra.mxu0 0.0
  %2787 = vmatprep.subr.mxu0 0.0
  %2788 = vmatpush1.msra.mxu0 0.0
  %2789 = vmatprep.subr.mxu0 0.0
  %2790 = vmatpush1.msra.mxu0 0.0
  %2791 = vmatprep.subr.mxu0 0.0
  %2792 = vmatpush1.msra.mxu0 0.0
  %2793 = vmatprep.subr.mxu0 0.0
  %2794 = vmatpush1.msra.mxu0 0.0
  %2795 = vmatprep.subr.mxu0 0.0
  %2796 = vmatpush1.msra.mxu0 0.0
  %2797 = vmatprep.subr.mxu0 0.0
  %2798 = vmatpush1.msra.mxu0 0.0
  %2799 = vmatprep.subr.mxu0 0.0
  %2800 = vmatpush1.msra.mxu0 0.0
  %2801 = vmatprep.subr.mxu0 0.0
  %2802 = vmatpush1.msra.mxu0 0.0
  %2803 = vmatprep.subr.mxu0 0.0
  %2804 = vmatpush1.msra.mxu0 0.0
  %2805 = vmatprep.subr.mxu0 0.0
  %2806 = vmatpush1.msra.mxu0 0.0
  %2807 = vmatprep.subr.mxu0 0.0
  %2808 = vmatpush1.msra.mxu0 0.0
  %2809 = vmatprep.subr.mxu0 0.0
  %2810 = vmatpush1.msra.mxu0 0.0
  %2811 = vmatprep.subr.mxu0 0.0
  %2812 = vmatpush1.msra.mxu0 0.0
  %2813 = vmatprep.subr.mxu0 0.0
  %2814 = vmatpush1.msra.mxu0 0.0
  %2815 = vmatprep.subr.mxu0 0.0
  %2816 = vmatpush1.msra.mxu0 0.0
  %2817 = vmatprep.subr.mxu0 0.0
  %2818 = vmatpush1.msra.mxu0 0.0
  %2819 = vmatprep.subr.mxu0 0.0
  %2820 = vmatpush1.msra.mxu0 0.0
  %2821 = vmatprep.subr.mxu0 0.0
  %2822 = vmatpush1.msra.mxu0 0.0
  %2823 = vmatprep.subr.mxu0 0.0
  %2824 = vmatpush1.msra.mxu0 0.0
  %2825 = vmatprep.subr.mxu0 0.0
  %2826 = vmatpush1.msra.mxu0 0.0
  %2827 = vmatprep.subr.mxu0 0.0
  %2828 = vmatpush1.msra.mxu0 0.0
  %2829 = vmatprep.subr.mxu0 0.0
  %2830 = vmatpush1.msra.mxu0 0.0
  %2831 = vmatprep.mubr.f32.mxu0 0.0
  %2832 = vmatmul.mubr.f32.gmra.mrb[0].mxu0 %v2685
  %v2833 = vpop.f32.mrb[0].mxu0
  %v2834 = vadd.f32 0.0, %v2833
  %v2835 = vpop.f32.mrb[0].mxu0
  %v2836 = vadd.f32 0.0, %v2835
  %2837 = vmatprep.mubr.f32.mxu0 0.0
  %2838 = vmatmul.mubr.f32.gmra.mrb[0].mxu0 %v2688
  %v2839 = vpop.f32.mrb[0].mxu0
  %v2840 = vadd.f32 0.0, %v2839
  %v2841 = vpop.f32.mrb[0].mxu0
  %v2842 = vadd.f32 0.0, %v2841
  %2843 = vdwg.mxu0
  %v2844 = vadd.f32 %v2654, %v2757
  %v2845 = vadd.f32 %v2655, %v2759
  %v2846 = vadd.f32 %v2656, %v2834
  %v2847 = vadd.f32 %v2657, %v2836
  %v2848 = vadd.f32 %v2658, %v2763
  %v2849 = vadd.f32 %v2659, %v2765
  %v2850 = vadd.f32 %v2660, %v2840
  %v2851 = vadd.f32 %v2661, %v2842
  %s2852 = scalar_lea.vmem %s1, 240
  %v2853 = vld [vmem:[%s2852] sm:$0xff]
  %v2854 = vld [vmem:[%s2852 + $0x8] sm:$0xff]
  %2855 = vrot.lane.b32.xlu0 %v32, 56
  %v2856 = vpop.permute.xlu0 %2855
  %2857 = vrot.lane.b32.xlu0 %v33, 56
  %v2858 = vpop.permute.xlu0 %2857
  %2859 = vrot.lane.b32.xlu0 %v34, 56
  %v2860 = vpop.permute.xlu0 %2859
  %2861 = vrot.lane.b32.xlu0 %v35, 56
  %v2862 = vpop.permute.xlu0 %2861
  %2863 = vrot.lane.b32.xlu0 %v36, 56
  %v2864 = vpop.permute.xlu0 %2863
  %vm2865 = vcmask 457728
  %v2866 = vsel %vm2865, %v2856, %v2858
  %v2867 = vsel %vm2865, %v2858, %v2860
  %v2868 = vsel %vm2865, %v2860, %v2862
  %v2869 = vsel %vm2865, %v2862, %v2864
  %v2875 = vsel %vm61, %v2853, 0
  %v2878 = vsel %vm61, %v2854, 0
  %2880 = vmatprep.subr.mxu0 %v2867
  %2881 = vmatpush1.msra.mxu0 %v2866
  %2882 = vmatprep.subr.mxu0 0.0
  %2883 = vmatpush1.msra.mxu0 0.0
  %2884 = vmatprep.subr.mxu0 0.0
  %2885 = vmatpush1.msra.mxu0 0.0
  %2886 = vmatprep.subr.mxu0 0.0
  %2887 = vmatpush1.msra.mxu0 0.0
  %2888 = vmatprep.subr.mxu0 0.0
  %2889 = vmatpush1.msra.mxu0 0.0
  %2890 = vmatprep.subr.mxu0 0.0
  %2891 = vmatpush1.msra.mxu0 0.0
  %2892 = vmatprep.subr.mxu0 0.0
  %2893 = vmatpush1.msra.mxu0 0.0
  %2894 = vmatprep.subr.mxu0 0.0
  %2895 = vmatpush1.msra.mxu0 0.0
  %2896 = vmatprep.subr.mxu0 0.0
  %2897 = vmatpush1.msra.mxu0 0.0
  %2898 = vmatprep.subr.mxu0 0.0
  %2899 = vmatpush1.msra.mxu0 0.0
  %2900 = vmatprep.subr.mxu0 0.0
  %2901 = vmatpush1.msra.mxu0 0.0
  %2902 = vmatprep.subr.mxu0 0.0
  %2903 = vmatpush1.msra.mxu0 0.0
  %2904 = vmatprep.subr.mxu0 0.0
  %2905 = vmatpush1.msra.mxu0 0.0
  %2906 = vmatprep.subr.mxu0 0.0
  %2907 = vmatpush1.msra.mxu0 0.0
  %2908 = vmatprep.subr.mxu0 0.0
  %2909 = vmatpush1.msra.mxu0 0.0
  %2910 = vmatprep.subr.mxu0 0.0
  %2911 = vmatpush1.msra.mxu0 0.0
  %2912 = vmatprep.subr.mxu0 0.0
  %2913 = vmatpush1.msra.mxu0 0.0
  %2914 = vmatprep.subr.mxu0 0.0
  %2915 = vmatpush1.msra.mxu0 0.0
  %2916 = vmatprep.subr.mxu0 0.0
  %2917 = vmatpush1.msra.mxu0 0.0
  %2918 = vmatprep.subr.mxu0 0.0
  %2919 = vmatpush1.msra.mxu0 0.0
  %2920 = vmatprep.subr.mxu0 0.0
  %2921 = vmatpush1.msra.mxu0 0.0
  %2922 = vmatprep.subr.mxu0 0.0
  %2923 = vmatpush1.msra.mxu0 0.0
  %2924 = vmatprep.subr.mxu0 0.0
  %2925 = vmatpush1.msra.mxu0 0.0
  %2926 = vmatprep.subr.mxu0 0.0
  %2927 = vmatpush1.msra.mxu0 0.0
  %2928 = vmatprep.subr.mxu0 0.0
  %2929 = vmatpush1.msra.mxu0 0.0
  %2930 = vmatprep.subr.mxu0 0.0
  %2931 = vmatpush1.msra.mxu0 0.0
  %2932 = vmatprep.subr.mxu0 0.0
  %2933 = vmatpush1.msra.mxu0 0.0
  %2934 = vmatprep.subr.mxu0 0.0
  %2935 = vmatpush1.msra.mxu0 0.0
  %2936 = vmatprep.subr.mxu0 0.0
  %2937 = vmatpush1.msra.mxu0 0.0
  %2938 = vmatprep.subr.mxu0 0.0
  %2939 = vmatpush1.msra.mxu0 0.0
  %2940 = vmatprep.subr.mxu0 0.0
  %2941 = vmatpush1.msra.mxu0 0.0
  %2942 = vmatprep.subr.mxu0 0.0
  %2943 = vmatpush1.msra.mxu0 0.0
  %2944 = vmatprep.mubr.f32.mxu0 0.0
  %2945 = vmatmul.mubr.f32.gmra.mrb[0].mxu0 %v2875
  %v2946 = vpop.f32.mrb[0].mxu0
  %v2947 = vadd.f32 0.0, %v2946
  %v2948 = vpop.f32.mrb[0].mxu0
  %v2949 = vadd.f32 0.0, %v2948
  %2950 = vmatprep.mubr.f32.mxu0 0.0
  %2951 = vmatmul.mubr.f32.gmra.mrb[0].mxu0 %v2878
  %v2952 = vpop.f32.mrb[0].mxu0
  %v2953 = vadd.f32 0.0, %v2952
  %v2954 = vpop.f32.mrb[0].mxu0
  %v2955 = vadd.f32 0.0, %v2954
  %2956 = vdwg.mxu0
  %2957 = vmatprep.subr.mxu0 %v2869
  %2958 = vmatpush1.msra.mxu0 %v2868
  %2959 = vmatprep.subr.mxu0 0.0
  %2960 = vmatpush1.msra.mxu0 0.0
  %2961 = vmatprep.subr.mxu0 0.0
  %2962 = vmatpush1.msra.mxu0 0.0
  %2963 = vmatprep.subr.mxu0 0.0
  %2964 = vmatpush1.msra.mxu0 0.0
  %2965 = vmatprep.subr.mxu0 0.0
  %2966 = vmatpush1.msra.mxu0 0.0
  %2967 = vmatprep.subr.mxu0 0.0
  %2968 = vmatpush1.msra.mxu0 0.0
  %2969 = vmatprep.subr.mxu0 0.0
  %2970 = vmatpush1.msra.mxu0 0.0
  %2971 = vmatprep.subr.mxu0 0.0
  %2972 = vmatpush1.msra.mxu0 0.0
  %2973 = vmatprep.subr.mxu0 0.0
  %2974 = vmatpush1.msra.mxu0 0.0
  %2975 = vmatprep.subr.mxu0 0.0
  %2976 = vmatpush1.msra.mxu0 0.0
  %2977 = vmatprep.subr.mxu0 0.0
  %2978 = vmatpush1.msra.mxu0 0.0
  %2979 = vmatprep.subr.mxu0 0.0
  %2980 = vmatpush1.msra.mxu0 0.0
  %2981 = vmatprep.subr.mxu0 0.0
  %2982 = vmatpush1.msra.mxu0 0.0
  %2983 = vmatprep.subr.mxu0 0.0
  %2984 = vmatpush1.msra.mxu0 0.0
  %2985 = vmatprep.subr.mxu0 0.0
  %2986 = vmatpush1.msra.mxu0 0.0
  %2987 = vmatprep.subr.mxu0 0.0
  %2988 = vmatpush1.msra.mxu0 0.0
  %2989 = vmatprep.subr.mxu0 0.0
  %2990 = vmatpush1.msra.mxu0 0.0
  %2991 = vmatprep.subr.mxu0 0.0
  %2992 = vmatpush1.msra.mxu0 0.0
  %2993 = vmatprep.subr.mxu0 0.0
  %2994 = vmatpush1.msra.mxu0 0.0
  %2995 = vmatprep.subr.mxu0 0.0
  %2996 = vmatpush1.msra.mxu0 0.0
  %2997 = vmatprep.subr.mxu0 0.0
  %2998 = vmatpush1.msra.mxu0 0.0
  %2999 = vmatprep.subr.mxu0 0.0
  %3000 = vmatpush1.msra.mxu0 0.0
  %3001 = vmatprep.subr.mxu0 0.0
  %3002 = vmatpush1.msra.mxu0 0.0
  %3003 = vmatprep.subr.mxu0 0.0
  %3004 = vmatpush1.msra.mxu0 0.0
  %3005 = vmatprep.subr.mxu0 0.0
  %3006 = vmatpush1.msra.mxu0 0.0
  %3007 = vmatprep.subr.mxu0 0.0
  %3008 = vmatpush1.msra.mxu0 0.0
  %3009 = vmatprep.subr.mxu0 0.0
  %3010 = vmatpush1.msra.mxu0 0.0
  %3011 = vmatprep.subr.mxu0 0.0
  %3012 = vmatpush1.msra.mxu0 0.0
  %3013 = vmatprep.subr.mxu0 0.0
  %3014 = vmatpush1.msra.mxu0 0.0
  %3015 = vmatprep.subr.mxu0 0.0
  %3016 = vmatpush1.msra.mxu0 0.0
  %3017 = vmatprep.subr.mxu0 0.0
  %3018 = vmatpush1.msra.mxu0 0.0
  %3019 = vmatprep.subr.mxu0 0.0
  %3020 = vmatpush1.msra.mxu0 0.0
  %3021 = vmatprep.mubr.f32.mxu0 0.0
  %3022 = vmatmul.mubr.f32.gmra.mrb[0].mxu0 %v2875
  %v3023 = vpop.f32.mrb[0].mxu0
  %v3024 = vadd.f32 0.0, %v3023
  %v3025 = vpop.f32.mrb[0].mxu0
  %v3026 = vadd.f32 0.0, %v3025
  %3027 = vmatprep.mubr.f32.mxu0 0.0
  %3028 = vmatmul.mubr.f32.gmra.mrb[0].mxu0 %v2878
  %v3029 = vpop.f32.mrb[0].mxu0
  %v3030 = vadd.f32 0.0, %v3029
  %v3031 = vpop.f32.mrb[0].mxu0
  %v3032 = vadd.f32 0.0, %v3031
  %3033 = vdwg.mxu0
  %v3034 = vadd.f32 %v2844, %v2947
  %v3035 = vadd.f32 %v2845, %v2949
  %v3036 = vadd.f32 %v2846, %v3024
  %v3037 = vadd.f32 %v2847, %v3026
  %v3038 = vadd.f32 %v2848, %v2953
  %v3039 = vadd.f32 %v2849, %v2955
  %v3040 = vadd.f32 %v2850, %v3030
  %v3041 = vadd.f32 %v2851, %v3032
  %s3042 = scalar_lea.vmem %s1, 256
  %v3043 = vld [vmem:[%s3042] sm:$0xff]
  %v3044 = vld [vmem:[%s3042 + $0x8] sm:$0xff]
  %3045 = vrot.lane.b32.xlu0 %v32, 55
  %v3046 = vpop.permute.xlu0 %3045
  %3047 = vrot.lane.b32.xlu0 %v33, 55
  %v3048 = vpop.permute.xlu0 %3047
  %3049 = vrot.lane.b32.xlu0 %v34, 55
  %v3050 = vpop.permute.xlu0 %3049
  %3051 = vrot.lane.b32.xlu0 %v35, 55
  %v3052 = vpop.permute.xlu0 %3051
  %3053 = vrot.lane.b32.xlu0 %v36, 55
  %v3054 = vpop.permute.xlu0 %3053
  %vm3055 = vcmask 449536
  %v3056 = vsel %vm3055, %v3046, %v3048
  %v3057 = vsel %vm3055, %v3048, %v3050
  %v3058 = vsel %vm3055, %v3050, %v3052
  %v3059 = vsel %vm3055, %v3052, %v3054
  %v3065 = vsel %vm61, %v3043, 0
  %v3068 = vsel %vm61, %v3044, 0
  %3070 = vmatprep.subr.mxu0 %v3057
  %3071 = vmatpush1.msra.mxu0 %v3056
  %3072 = vmatprep.subr.mxu0 0.0
  %3073 = vmatpush1.msra.mxu0 0.0
  %3074 = vmatprep.subr.mxu0 0.0
  %3075 = vmatpush1.msra.mxu0 0.0
  %3076 = vmatprep.subr.mxu0 0.0
  %3077 = vmatpush1.msra.mxu0 0.0
  %3078 = vmatprep.subr.mxu0 0.0
  %3079 = vmatpush1.msra.mxu0 0.0
  %3080 = vmatprep.subr.mxu0 0.0
  %3081 = vmatpush1.msra.mxu0 0.0
  %3082 = vmatprep.subr.mxu0 0.0
  %3083 = vmatpush1.msra.mxu0 0.0
  %3084 = vmatprep.subr.mxu0 0.0
  %3085 = vmatpush1.msra.mxu0 0.0
  %3086 = vmatprep.subr.mxu0 0.0
  %3087 = vmatpush1.msra.mxu0 0.0
  %3088 = vmatprep.subr.mxu0 0.0
  %3089 = vmatpush1.msra.mxu0 0.0
  %3090 = vmatprep.subr.mxu0 0.0
  %3091 = vmatpush1.msra.mxu0 0.0
  %3092 = vmatprep.subr.mxu0 0.0
  %3093 = vmatpush1.msra.mxu0 0.0
  %3094 = vmatprep.subr.mxu0 0.0
  %3095 = vmatpush1.msra.mxu0 0.0
  %3096 = vmatprep.subr.mxu0 0.0
  %3097 = vmatpush1.msra.mxu0 0.0
  %3098 = vmatprep.subr.mxu0 0.0
  %3099 = vmatpush1.msra.mxu0 0.0
  %3100 = vmatprep.subr.mxu0 0.0
  %3101 = vmatpush1.msra.mxu0 0.0
  %3102 = vmatprep.subr.mxu0 0.0
  %3103 = vmatpush1.msra.mxu0 0.0
  %3104 = vmatprep.subr.mxu0 0.0
  %3105 = vmatpush1.msra.mxu0 0.0
  %3106 = vmatprep.subr.mxu0 0.0
  %3107 = vmatpush1.msra.mxu0 0.0
  %3108 = vmatprep.subr.mxu0 0.0
  %3109 = vmatpush1.msra.mxu0 0.0
  %3110 = vmatprep.subr.mxu0 0.0
  %3111 = vmatpush1.msra.mxu0 0.0
  %3112 = vmatprep.subr.mxu0 0.0
  %3113 = vmatpush1.msra.mxu0 0.0
  %3114 = vmatprep.subr.mxu0 0.0
  %3115 = vmatpush1.msra.mxu0 0.0
  %3116 = vmatprep.subr.mxu0 0.0
  %3117 = vmatpush1.msra.mxu0 0.0
  %3118 = vmatprep.subr.mxu0 0.0
  %3119 = vmatpush1.msra.mxu0 0.0
  %3120 = vmatprep.subr.mxu0 0.0
  %3121 = vmatpush1.msra.mxu0 0.0
  %3122 = vmatprep.subr.mxu0 0.0
  %3123 = vmatpush1.msra.mxu0 0.0
  %3124 = vmatprep.subr.mxu0 0.0
  %3125 = vmatpush1.msra.mxu0 0.0
  %3126 = vmatprep.subr.mxu0 0.0
  %3127 = vmatpush1.msra.mxu0 0.0
  %3128 = vmatprep.subr.mxu0 0.0
  %3129 = vmatpush1.msra.mxu0 0.0
  %3130 = vmatprep.subr.mxu0 0.0
  %3131 = vmatpush1.msra.mxu0 0.0
  %3132 = vmatprep.subr.mxu0 0.0
  %3133 = vmatpush1.msra.mxu0 0.0
  %3134 = vmatprep.mubr.f32.mxu0 0.0
  %3135 = vmatmul.mubr.f32.gmra.mrb[0].mxu0 %v3065
  %v3136 = vpop.f32.mrb[0].mxu0
  %v3137 = vadd.f32 0.0, %v3136
  %v3138 = vpop.f32.mrb[0].mxu0
  %v3139 = vadd.f32 0.0, %v3138
  %3140 = vmatprep.mubr.f32.mxu0 0.0
  %3141 = vmatmul.mubr.f32.gmra.mrb[0].mxu0 %v3068
  %v3142 = vpop.f32.mrb[0].mxu0
  %v3143 = vadd.f32 0.0, %v3142
  %v3144 = vpop.f32.mrb[0].mxu0
  %v3145 = vadd.f32 0.0, %v3144
  %3146 = vdwg.mxu0
  %3147 = vmatprep.subr.mxu0 %v3059
  %3148 = vmatpush1.msra.mxu0 %v3058
  %3149 = vmatprep.subr.mxu0 0.0
  %3150 = vmatpush1.msra.mxu0 0.0
  %3151 = vmatprep.subr.mxu0 0.0
  %3152 = vmatpush1.msra.mxu0 0.0
  %3153 = vmatprep.subr.mxu0 0.0
  %3154 = vmatpush1.msra.mxu0 0.0
  %3155 = vmatprep.subr.mxu0 0.0
  %3156 = vmatpush1.msra.mxu0 0.0
  %3157 = vmatprep.subr.mxu0 0.0
  %3158 = vmatpush1.msra.mxu0 0.0
  %3159 = vmatprep.subr.mxu0 0.0
  %3160 = vmatpush1.msra.mxu0 0.0
  %3161 = vmatprep.subr.mxu0 0.0
  %3162 = vmatpush1.msra.mxu0 0.0
  %3163 = vmatprep.subr.mxu0 0.0
  %3164 = vmatpush1.msra.mxu0 0.0
  %3165 = vmatprep.subr.mxu0 0.0
  %3166 = vmatpush1.msra.mxu0 0.0
  %3167 = vmatprep.subr.mxu0 0.0
  %3168 = vmatpush1.msra.mxu0 0.0
  %3169 = vmatprep.subr.mxu0 0.0
  %3170 = vmatpush1.msra.mxu0 0.0
  %3171 = vmatprep.subr.mxu0 0.0
  %3172 = vmatpush1.msra.mxu0 0.0
  %3173 = vmatprep.subr.mxu0 0.0
  %3174 = vmatpush1.msra.mxu0 0.0
  %3175 = vmatprep.subr.mxu0 0.0
  %3176 = vmatpush1.msra.mxu0 0.0
  %3177 = vmatprep.subr.mxu0 0.0
  %3178 = vmatpush1.msra.mxu0 0.0
  %3179 = vmatprep.subr.mxu0 0.0
  %3180 = vmatpush1.msra.mxu0 0.0
  %3181 = vmatprep.subr.mxu0 0.0
  %3182 = vmatpush1.msra.mxu0 0.0
  %3183 = vmatprep.subr.mxu0 0.0
  %3184 = vmatpush1.msra.mxu0 0.0
  %3185 = vmatprep.subr.mxu0 0.0
  %3186 = vmatpush1.msra.mxu0 0.0
  %3187 = vmatprep.subr.mxu0 0.0
  %3188 = vmatpush1.msra.mxu0 0.0
  %3189 = vmatprep.subr.mxu0 0.0
  %3190 = vmatpush1.msra.mxu0 0.0
  %3191 = vmatprep.subr.mxu0 0.0
  %3192 = vmatpush1.msra.mxu0 0.0
  %3193 = vmatprep.subr.mxu0 0.0
  %3194 = vmatpush1.msra.mxu0 0.0
  %3195 = vmatprep.subr.mxu0 0.0
  %3196 = vmatpush1.msra.mxu0 0.0
  %3197 = vmatprep.subr.mxu0 0.0
  %3198 = vmatpush1.msra.mxu0 0.0
  %3199 = vmatprep.subr.mxu0 0.0
  %3200 = vmatpush1.msra.mxu0 0.0
  %3201 = vmatprep.subr.mxu0 0.0
  %3202 = vmatpush1.msra.mxu0 0.0
  %3203 = vmatprep.subr.mxu0 0.0
  %3204 = vmatpush1.msra.mxu0 0.0
  %3205 = vmatprep.subr.mxu0 0.0
  %3206 = vmatpush1.msra.mxu0 0.0
  %3207 = vmatprep.subr.mxu0 0.0
  %3208 = vmatpush1.msra.mxu0 0.0
  %3209 = vmatprep.subr.mxu0 0.0
  %3210 = vmatpush1.msra.mxu0 0.0
  %3211 = vmatprep.mubr.f32.mxu0 0.0
  %3212 = vmatmul.mubr.f32.gmra.mrb[0].mxu0 %v3065
  %v3213 = vpop.f32.mrb[0].mxu0
  %v3214 = vadd.f32 0.0, %v3213
  %v3215 = vpop.f32.mrb[0].mxu0
  %v3216 = vadd.f32 0.0, %v3215
  %3217 = vmatprep.mubr.f32.mxu0 0.0
  %3218 = vmatmul.mubr.f32.gmra.mrb[0].mxu0 %v3068
  %v3219 = vpop.f32.mrb[0].mxu0
  %v3220 = vadd.f32 0.0, %v3219
  %v3221 = vpop.f32.mrb[0].mxu0
  %v3222 = vadd.f32 0.0, %v3221
  %3223 = vdwg.mxu0
  %v3224 = vadd.f32 %v3034, %v3137
  %v3225 = vadd.f32 %v3035, %v3139
  %v3226 = vadd.f32 %v3036, %v3214
  %v3227 = vadd.f32 %v3037, %v3216
  %v3228 = vadd.f32 %v3038, %v3143
  %v3229 = vadd.f32 %v3039, %v3145
  %v3230 = vadd.f32 %v3040, %v3220
  %v3231 = vadd.f32 %v3041, %v3222
  %s3232 = scalar_lea.vmem %s1, 272
  %v3233 = vld [vmem:[%s3232] sm:$0xff]
  %v3234 = vld [vmem:[%s3232 + $0x8] sm:$0xff]
  %3235 = vrot.lane.b32.xlu0 %v32, 54
  %v3236 = vpop.permute.xlu0 %3235
  %3237 = vrot.lane.b32.xlu0 %v33, 54
  %v3238 = vpop.permute.xlu0 %3237
  %3239 = vrot.lane.b32.xlu0 %v34, 54
  %v3240 = vpop.permute.xlu0 %3239
  %3241 = vrot.lane.b32.xlu0 %v35, 54
  %v3242 = vpop.permute.xlu0 %3241
  %3243 = vrot.lane.b32.xlu0 %v36, 54
  %v3244 = vpop.permute.xlu0 %3243
  %vm3245 = vcmask 441344
  %v3246 = vsel %vm3245, %v3236, %v3238
  %v3247 = vsel %vm3245, %v3238, %v3240
  %v3248 = vsel %vm3245, %v3240, %v3242
  %v3249 = vsel %vm3245, %v3242, %v3244
  %v3255 = vsel %vm61, %v3233, 0
  %v3258 = vsel %vm61, %v3234, 0
  %3260 = vmatprep.subr.mxu0 %v3247
  %3261 = vmatpush1.msra.mxu0 %v3246
  %3262 = vmatprep.subr.mxu0 0.0
  %3263 = vmatpush1.msra.mxu0 0.0
  %3264 = vmatprep.subr.mxu0 0.0
  %3265 = vmatpush1.msra.mxu0 0.0
  %3266 = vmatprep.subr.mxu0 0.0
  %3267 = vmatpush1.msra.mxu0 0.0
  %3268 = vmatprep.subr.mxu0 0.0
  %3269 = vmatpush1.msra.mxu0 0.0
  %3270 = vmatprep.subr.mxu0 0.0
  %3271 = vmatpush1.msra.mxu0 0.0
  %3272 = vmatprep.subr.mxu0 0.0
  %3273 = vmatpush1.msra.mxu0 0.0
  %3274 = vmatprep.subr.mxu0 0.0
  %3275 = vmatpush1.msra.mxu0 0.0
  %3276 = vmatprep.subr.mxu0 0.0
  %3277 = vmatpush1.msra.mxu0 0.0
  %3278 = vmatprep.subr.mxu0 0.0
  %3279 = vmatpush1.msra.mxu0 0.0
  %3280 = vmatprep.subr.mxu0 0.0
  %3281 = vmatpush1.msra.mxu0 0.0
  %3282 = vmatprep.subr.mxu0 0.0
  %3283 = vmatpush1.msra.mxu0 0.0
  %3284 = vmatprep.subr.mxu0 0.0
  %3285 = vmatpush1.msra.mxu0 0.0
  %3286 = vmatprep.subr.mxu0 0.0
  %3287 = vmatpush1.msra.mxu0 0.0
  %3288 = vmatprep.subr.mxu0 0.0
  %3289 = vmatpush1.msra.mxu0 0.0
  %3290 = vmatprep.subr.mxu0 0.0
  %3291 = vmatpush1.msra.mxu0 0.0
  %3292 = vmatprep.subr.mxu0 0.0
  %3293 = vmatpush1.msra.mxu0 0.0
  %3294 = vmatprep.subr.mxu0 0.0
  %3295 = vmatpush1.msra.mxu0 0.0
  %3296 = vmatprep.subr.mxu0 0.0
  %3297 = vmatpush1.msra.mxu0 0.0
  %3298 = vmatprep.subr.mxu0 0.0
  %3299 = vmatpush1.msra.mxu0 0.0
  %3300 = vmatprep.subr.mxu0 0.0
  %3301 = vmatpush1.msra.mxu0 0.0
  %3302 = vmatprep.subr.mxu0 0.0
  %3303 = vmatpush1.msra.mxu0 0.0
  %3304 = vmatprep.subr.mxu0 0.0
  %3305 = vmatpush1.msra.mxu0 0.0
  %3306 = vmatprep.subr.mxu0 0.0
  %3307 = vmatpush1.msra.mxu0 0.0
  %3308 = vmatprep.subr.mxu0 0.0
  %3309 = vmatpush1.msra.mxu0 0.0
  %3310 = vmatprep.subr.mxu0 0.0
  %3311 = vmatpush1.msra.mxu0 0.0
  %3312 = vmatprep.subr.mxu0 0.0
  %3313 = vmatpush1.msra.mxu0 0.0
  %3314 = vmatprep.subr.mxu0 0.0
  %3315 = vmatpush1.msra.mxu0 0.0
  %3316 = vmatprep.subr.mxu0 0.0
  %3317 = vmatpush1.msra.mxu0 0.0
  %3318 = vmatprep.subr.mxu0 0.0
  %3319 = vmatpush1.msra.mxu0 0.0
  %3320 = vmatprep.subr.mxu0 0.0
  %3321 = vmatpush1.msra.mxu0 0.0
  %3322 = vmatprep.subr.mxu0 0.0
  %3323 = vmatpush1.msra.mxu0 0.0
  %3324 = vmatprep.mubr.f32.mxu0 0.0
  %3325 = vmatmul.mubr.f32.gmra.mrb[0].mxu0 %v3255
  %v3326 = vpop.f32.mrb[0].mxu0
  %v3327 = vadd.f32 0.0, %v3326
  %v3328 = vpop.f32.mrb[0].mxu0
  %v3329 = vadd.f32 0.0, %v3328
  %3330 = vmatprep.mubr.f32.mxu0 0.0
  %3331 = vmatmul.mubr.f32.gmra.mrb[0].mxu0 %v3258
  %v3332 = vpop.f32.mrb[0].mxu0
  %v3333 = vadd.f32 0.0, %v3332
  %v3334 = vpop.f32.mrb[0].mxu0
  %v3335 = vadd.f32 0.0, %v3334
  %3336 = vdwg.mxu0
  %3337 = vmatprep.subr.mxu0 %v3249
  %3338 = vmatpush1.msra.mxu0 %v3248
  %3339 = vmatprep.subr.mxu0 0.0
  %3340 = vmatpush1.msra.mxu0 0.0
  %3341 = vmatprep.subr.mxu0 0.0
  %3342 = vmatpush1.msra.mxu0 0.0
  %3343 = vmatprep.subr.mxu0 0.0
  %3344 = vmatpush1.msra.mxu0 0.0
  %3345 = vmatprep.subr.mxu0 0.0
  %3346 = vmatpush1.msra.mxu0 0.0
  %3347 = vmatprep.subr.mxu0 0.0
  %3348 = vmatpush1.msra.mxu0 0.0
  %3349 = vmatprep.subr.mxu0 0.0
  %3350 = vmatpush1.msra.mxu0 0.0
  %3351 = vmatprep.subr.mxu0 0.0
  %3352 = vmatpush1.msra.mxu0 0.0
  %3353 = vmatprep.subr.mxu0 0.0
  %3354 = vmatpush1.msra.mxu0 0.0
  %3355 = vmatprep.subr.mxu0 0.0
  %3356 = vmatpush1.msra.mxu0 0.0
  %3357 = vmatprep.subr.mxu0 0.0
  %3358 = vmatpush1.msra.mxu0 0.0
  %3359 = vmatprep.subr.mxu0 0.0
  %3360 = vmatpush1.msra.mxu0 0.0
  %3361 = vmatprep.subr.mxu0 0.0
  %3362 = vmatpush1.msra.mxu0 0.0
  %3363 = vmatprep.subr.mxu0 0.0
  %3364 = vmatpush1.msra.mxu0 0.0
  %3365 = vmatprep.subr.mxu0 0.0
  %3366 = vmatpush1.msra.mxu0 0.0
  %3367 = vmatprep.subr.mxu0 0.0
  %3368 = vmatpush1.msra.mxu0 0.0
  %3369 = vmatprep.subr.mxu0 0.0
  %3370 = vmatpush1.msra.mxu0 0.0
  %3371 = vmatprep.subr.mxu0 0.0
  %3372 = vmatpush1.msra.mxu0 0.0
  %3373 = vmatprep.subr.mxu0 0.0
  %3374 = vmatpush1.msra.mxu0 0.0
  %3375 = vmatprep.subr.mxu0 0.0
  %3376 = vmatpush1.msra.mxu0 0.0
  %3377 = vmatprep.subr.mxu0 0.0
  %3378 = vmatpush1.msra.mxu0 0.0
  %3379 = vmatprep.subr.mxu0 0.0
  %3380 = vmatpush1.msra.mxu0 0.0
  %3381 = vmatprep.subr.mxu0 0.0
  %3382 = vmatpush1.msra.mxu0 0.0
  %3383 = vmatprep.subr.mxu0 0.0
  %3384 = vmatpush1.msra.mxu0 0.0
  %3385 = vmatprep.subr.mxu0 0.0
  %3386 = vmatpush1.msra.mxu0 0.0
  %3387 = vmatprep.subr.mxu0 0.0
  %3388 = vmatpush1.msra.mxu0 0.0
  %3389 = vmatprep.subr.mxu0 0.0
  %3390 = vmatpush1.msra.mxu0 0.0
  %3391 = vmatprep.subr.mxu0 0.0
  %3392 = vmatpush1.msra.mxu0 0.0
  %3393 = vmatprep.subr.mxu0 0.0
  %3394 = vmatpush1.msra.mxu0 0.0
  %3395 = vmatprep.subr.mxu0 0.0
  %3396 = vmatpush1.msra.mxu0 0.0
  %3397 = vmatprep.subr.mxu0 0.0
  %3398 = vmatpush1.msra.mxu0 0.0
  %3399 = vmatprep.subr.mxu0 0.0
  %3400 = vmatpush1.msra.mxu0 0.0
  %3401 = vmatprep.mubr.f32.mxu0 0.0
  %3402 = vmatmul.mubr.f32.gmra.mrb[0].mxu0 %v3255
  %v3403 = vpop.f32.mrb[0].mxu0
  %v3404 = vadd.f32 0.0, %v3403
  %v3405 = vpop.f32.mrb[0].mxu0
  %v3406 = vadd.f32 0.0, %v3405
  %3407 = vmatprep.mubr.f32.mxu0 0.0
  %3408 = vmatmul.mubr.f32.gmra.mrb[0].mxu0 %v3258
  %v3409 = vpop.f32.mrb[0].mxu0
  %v3410 = vadd.f32 0.0, %v3409
  %v3411 = vpop.f32.mrb[0].mxu0
  %v3412 = vadd.f32 0.0, %v3411
  %3413 = vdwg.mxu0
  %v3414 = vadd.f32 %v3224, %v3327
  %v3415 = vadd.f32 %v3225, %v3329
  %v3416 = vadd.f32 %v3226, %v3404
  %v3417 = vadd.f32 %v3227, %v3406
  %v3418 = vadd.f32 %v3228, %v3333
  %v3419 = vadd.f32 %v3229, %v3335
  %v3420 = vadd.f32 %v3230, %v3410
  %v3421 = vadd.f32 %v3231, %v3412
  %s3422 = scalar_lea.vmem %s1, 288
  %v3423 = vld [vmem:[%s3422] sm:$0xff]
  %v3424 = vld [vmem:[%s3422 + $0x8] sm:$0xff]
  %3425 = vrot.lane.b32.xlu0 %v32, 53
  %v3426 = vpop.permute.xlu0 %3425
  %3427 = vrot.lane.b32.xlu0 %v33, 53
  %v3428 = vpop.permute.xlu0 %3427
  %3429 = vrot.lane.b32.xlu0 %v34, 53
  %v3430 = vpop.permute.xlu0 %3429
  %3431 = vrot.lane.b32.xlu0 %v35, 53
  %v3432 = vpop.permute.xlu0 %3431
  %3433 = vrot.lane.b32.xlu0 %v36, 53
  %v3434 = vpop.permute.xlu0 %3433
  %vm3435 = vcmask 433152
  %v3436 = vsel %vm3435, %v3426, %v3428
  %v3437 = vsel %vm3435, %v3428, %v3430
  %v3438 = vsel %vm3435, %v3430, %v3432
  %v3439 = vsel %vm3435, %v3432, %v3434
  %v3445 = vsel %vm61, %v3423, 0
  %v3448 = vsel %vm61, %v3424, 0
  %3450 = vmatprep.subr.mxu0 %v3437
  %3451 = vmatpush1.msra.mxu0 %v3436
  %3452 = vmatprep.subr.mxu0 0.0
  %3453 = vmatpush1.msra.mxu0 0.0
  %3454 = vmatprep.subr.mxu0 0.0
  %3455 = vmatpush1.msra.mxu0 0.0
  %3456 = vmatprep.subr.mxu0 0.0
  %3457 = vmatpush1.msra.mxu0 0.0
  %3458 = vmatprep.subr.mxu0 0.0
  %3459 = vmatpush1.msra.mxu0 0.0
  %3460 = vmatprep.subr.mxu0 0.0
  %3461 = vmatpush1.msra.mxu0 0.0
  %3462 = vmatprep.subr.mxu0 0.0
  %3463 = vmatpush1.msra.mxu0 0.0
  %3464 = vmatprep.subr.mxu0 0.0
  %3465 = vmatpush1.msra.mxu0 0.0
  %3466 = vmatprep.subr.mxu0 0.0
  %3467 = vmatpush1.msra.mxu0 0.0
  %3468 = vmatprep.subr.mxu0 0.0
  %3469 = vmatpush1.msra.mxu0 0.0
  %3470 = vmatprep.subr.mxu0 0.0
  %3471 = vmatpush1.msra.mxu0 0.0
  %3472 = vmatprep.subr.mxu0 0.0
  %3473 = vmatpush1.msra.mxu0 0.0
  %3474 = vmatprep.subr.mxu0 0.0
  %3475 = vmatpush1.msra.mxu0 0.0
  %3476 = vmatprep.subr.mxu0 0.0
  %3477 = vmatpush1.msra.mxu0 0.0
  %3478 = vmatprep.subr.mxu0 0.0
  %3479 = vmatpush1.msra.mxu0 0.0
  %3480 = vmatprep.subr.mxu0 0.0
  %3481 = vmatpush1.msra.mxu0 0.0
  %3482 = vmatprep.subr.mxu0 0.0
  %3483 = vmatpush1.msra.mxu0 0.0
  %3484 = vmatprep.subr.mxu0 0.0
  %3485 = vmatpush1.msra.mxu0 0.0
  %3486 = vmatprep.subr.mxu0 0.0
  %3487 = vmatpush1.msra.mxu0 0.0
  %3488 = vmatprep.subr.mxu0 0.0
  %3489 = vmatpush1.msra.mxu0 0.0
  %3490 = vmatprep.subr.mxu0 0.0
  %3491 = vmatpush1.msra.mxu0 0.0
  %3492 = vmatprep.subr.mxu0 0.0
  %3493 = vmatpush1.msra.mxu0 0.0
  %3494 = vmatprep.subr.mxu0 0.0
  %3495 = vmatpush1.msra.mxu0 0.0
  %3496 = vmatprep.subr.mxu0 0.0
  %3497 = vmatpush1.msra.mxu0 0.0
  %3498 = vmatprep.subr.mxu0 0.0
  %3499 = vmatpush1.msra.mxu0 0.0
  %3500 = vmatprep.subr.mxu0 0.0
  %3501 = vmatpush1.msra.mxu0 0.0
  %3502 = vmatprep.subr.mxu0 0.0
  %3503 = vmatpush1.msra.mxu0 0.0
  %3504 = vmatprep.subr.mxu0 0.0
  %3505 = vmatpush1.msra.mxu0 0.0
  %3506 = vmatprep.subr.mxu0 0.0
  %3507 = vmatpush1.msra.mxu0 0.0
  %3508 = vmatprep.subr.mxu0 0.0
  %3509 = vmatpush1.msra.mxu0 0.0
  %3510 = vmatprep.subr.mxu0 0.0
  %3511 = vmatpush1.msra.mxu0 0.0
  %3512 = vmatprep.subr.mxu0 0.0
  %3513 = vmatpush1.msra.mxu0 0.0
  %3514 = vmatprep.mubr.f32.mxu0 0.0
  %3515 = vmatmul.mubr.f32.gmra.mrb[0].mxu0 %v3445
  %v3516 = vpop.f32.mrb[0].mxu0
  %v3517 = vadd.f32 0.0, %v3516
  %v3518 = vpop.f32.mrb[0].mxu0
  %v3519 = vadd.f32 0.0, %v3518
  %3520 = vmatprep.mubr.f32.mxu0 0.0
  %3521 = vmatmul.mubr.f32.gmra.mrb[0].mxu0 %v3448
  %v3522 = vpop.f32.mrb[0].mxu0
  %v3523 = vadd.f32 0.0, %v3522
  %v3524 = vpop.f32.mrb[0].mxu0
  %v3525 = vadd.f32 0.0, %v3524
  %3526 = vdwg.mxu0
  %3527 = vmatprep.subr.mxu0 %v3439
  %3528 = vmatpush1.msra.mxu0 %v3438
  %3529 = vmatprep.subr.mxu0 0.0
  %3530 = vmatpush1.msra.mxu0 0.0
  %3531 = vmatprep.subr.mxu0 0.0
  %3532 = vmatpush1.msra.mxu0 0.0
  %3533 = vmatprep.subr.mxu0 0.0
  %3534 = vmatpush1.msra.mxu0 0.0
  %3535 = vmatprep.subr.mxu0 0.0
  %3536 = vmatpush1.msra.mxu0 0.0
  %3537 = vmatprep.subr.mxu0 0.0
  %3538 = vmatpush1.msra.mxu0 0.0
  %3539 = vmatprep.subr.mxu0 0.0
  %3540 = vmatpush1.msra.mxu0 0.0
  %3541 = vmatprep.subr.mxu0 0.0
  %3542 = vmatpush1.msra.mxu0 0.0
  %3543 = vmatprep.subr.mxu0 0.0
  %3544 = vmatpush1.msra.mxu0 0.0
  %3545 = vmatprep.subr.mxu0 0.0
  %3546 = vmatpush1.msra.mxu0 0.0
  %3547 = vmatprep.subr.mxu0 0.0
  %3548 = vmatpush1.msra.mxu0 0.0
  %3549 = vmatprep.subr.mxu0 0.0
  %3550 = vmatpush1.msra.mxu0 0.0
  %3551 = vmatprep.subr.mxu0 0.0
  %3552 = vmatpush1.msra.mxu0 0.0
  %3553 = vmatprep.subr.mxu0 0.0
  %3554 = vmatpush1.msra.mxu0 0.0
  %3555 = vmatprep.subr.mxu0 0.0
  %3556 = vmatpush1.msra.mxu0 0.0
  %3557 = vmatprep.subr.mxu0 0.0
  %3558 = vmatpush1.msra.mxu0 0.0
  %3559 = vmatprep.subr.mxu0 0.0
  %3560 = vmatpush1.msra.mxu0 0.0
  %3561 = vmatprep.subr.mxu0 0.0
  %3562 = vmatpush1.msra.mxu0 0.0
  %3563 = vmatprep.subr.mxu0 0.0
  %3564 = vmatpush1.msra.mxu0 0.0
  %3565 = vmatprep.subr.mxu0 0.0
  %3566 = vmatpush1.msra.mxu0 0.0
  %3567 = vmatprep.subr.mxu0 0.0
  %3568 = vmatpush1.msra.mxu0 0.0
  %3569 = vmatprep.subr.mxu0 0.0
  %3570 = vmatpush1.msra.mxu0 0.0
  %3571 = vmatprep.subr.mxu0 0.0
  %3572 = vmatpush1.msra.mxu0 0.0
  %3573 = vmatprep.subr.mxu0 0.0
  %3574 = vmatpush1.msra.mxu0 0.0
  %3575 = vmatprep.subr.mxu0 0.0
  %3576 = vmatpush1.msra.mxu0 0.0
  %3577 = vmatprep.subr.mxu0 0.0
  %3578 = vmatpush1.msra.mxu0 0.0
  %3579 = vmatprep.subr.mxu0 0.0
  %3580 = vmatpush1.msra.mxu0 0.0
  %3581 = vmatprep.subr.mxu0 0.0
  %3582 = vmatpush1.msra.mxu0 0.0
  %3583 = vmatprep.subr.mxu0 0.0
  %3584 = vmatpush1.msra.mxu0 0.0
  %3585 = vmatprep.subr.mxu0 0.0
  %3586 = vmatpush1.msra.mxu0 0.0
  %3587 = vmatprep.subr.mxu0 0.0
  %3588 = vmatpush1.msra.mxu0 0.0
  %3589 = vmatprep.subr.mxu0 0.0
  %3590 = vmatpush1.msra.mxu0 0.0
  %3591 = vmatprep.mubr.f32.mxu0 0.0
  %3592 = vmatmul.mubr.f32.gmra.mrb[0].mxu0 %v3445
  %v3593 = vpop.f32.mrb[0].mxu0
  %v3594 = vadd.f32 0.0, %v3593
  %v3595 = vpop.f32.mrb[0].mxu0
  %v3596 = vadd.f32 0.0, %v3595
  %3597 = vmatprep.mubr.f32.mxu0 0.0
  %3598 = vmatmul.mubr.f32.gmra.mrb[0].mxu0 %v3448
  %v3599 = vpop.f32.mrb[0].mxu0
  %v3600 = vadd.f32 0.0, %v3599
  %v3601 = vpop.f32.mrb[0].mxu0
  %v3602 = vadd.f32 0.0, %v3601
  %3603 = vdwg.mxu0
  %v3604 = vadd.f32 %v3414, %v3517
  %v3605 = vadd.f32 %v3415, %v3519
  %v3606 = vadd.f32 %v3416, %v3594
  %v3607 = vadd.f32 %v3417, %v3596
  %v3608 = vadd.f32 %v3418, %v3523
  %v3609 = vadd.f32 %v3419, %v3525
  %v3610 = vadd.f32 %v3420, %v3600
  %v3611 = vadd.f32 %v3421, %v3602
  %s3612 = scalar_lea.vmem %s1, 304
  %v3613 = vld [vmem:[%s3612] sm:$0xff]
  %v3614 = vld [vmem:[%s3612 + $0x8] sm:$0xff]
  %3615 = vrot.lane.b32.xlu0 %v32, 52
  %v3616 = vpop.permute.xlu0 %3615
  %3617 = vrot.lane.b32.xlu0 %v33, 52
  %v3618 = vpop.permute.xlu0 %3617
  %3619 = vrot.lane.b32.xlu0 %v34, 52
  %v3620 = vpop.permute.xlu0 %3619
  %3621 = vrot.lane.b32.xlu0 %v35, 52
  %v3622 = vpop.permute.xlu0 %3621
  %3623 = vrot.lane.b32.xlu0 %v36, 52
  %v3624 = vpop.permute.xlu0 %3623
  %vm3625 = vcmask 424960
  %v3626 = vsel %vm3625, %v3616, %v3618
  %v3627 = vsel %vm3625, %v3618, %v3620
  %v3628 = vsel %vm3625, %v3620, %v3622
  %v3629 = vsel %vm3625, %v3622, %v3624
  %v3635 = vsel %vm61, %v3613, 0
  %v3638 = vsel %vm61, %v3614, 0
  %3640 = vmatprep.subr.mxu0 %v3627
  %3641 = vmatpush1.msra.mxu0 %v3626
  %3642 = vmatprep.subr.mxu0 0.0
  %3643 = vmatpush1.msra.mxu0 0.0
  %3644 = vmatprep.subr.mxu0 0.0
  %3645 = vmatpush1.msra.mxu0 0.0
  %3646 = vmatprep.subr.mxu0 0.0
  %3647 = vmatpush1.msra.mxu0 0.0
  %3648 = vmatprep.subr.mxu0 0.0
  %3649 = vmatpush1.msra.mxu0 0.0
  %3650 = vmatprep.subr.mxu0 0.0
  %3651 = vmatpush1.msra.mxu0 0.0
  %3652 = vmatprep.subr.mxu0 0.0
  %3653 = vmatpush1.msra.mxu0 0.0
  %3654 = vmatprep.subr.mxu0 0.0
  %3655 = vmatpush1.msra.mxu0 0.0
  %3656 = vmatprep.subr.mxu0 0.0
  %3657 = vmatpush1.msra.mxu0 0.0
  %3658 = vmatprep.subr.mxu0 0.0
  %3659 = vmatpush1.msra.mxu0 0.0
  %3660 = vmatprep.subr.mxu0 0.0
  %3661 = vmatpush1.msra.mxu0 0.0
  %3662 = vmatprep.subr.mxu0 0.0
  %3663 = vmatpush1.msra.mxu0 0.0
  %3664 = vmatprep.subr.mxu0 0.0
  %3665 = vmatpush1.msra.mxu0 0.0
  %3666 = vmatprep.subr.mxu0 0.0
  %3667 = vmatpush1.msra.mxu0 0.0
  %3668 = vmatprep.subr.mxu0 0.0
  %3669 = vmatpush1.msra.mxu0 0.0
  %3670 = vmatprep.subr.mxu0 0.0
  %3671 = vmatpush1.msra.mxu0 0.0
  %3672 = vmatprep.subr.mxu0 0.0
  %3673 = vmatpush1.msra.mxu0 0.0
  %3674 = vmatprep.subr.mxu0 0.0
  %3675 = vmatpush1.msra.mxu0 0.0
  %3676 = vmatprep.subr.mxu0 0.0
  %3677 = vmatpush1.msra.mxu0 0.0
  %3678 = vmatprep.subr.mxu0 0.0
  %3679 = vmatpush1.msra.mxu0 0.0
  %3680 = vmatprep.subr.mxu0 0.0
  %3681 = vmatpush1.msra.mxu0 0.0
  %3682 = vmatprep.subr.mxu0 0.0
  %3683 = vmatpush1.msra.mxu0 0.0
  %3684 = vmatprep.subr.mxu0 0.0
  %3685 = vmatpush1.msra.mxu0 0.0
  %3686 = vmatprep.subr.mxu0 0.0
  %3687 = vmatpush1.msra.mxu0 0.0
  %3688 = vmatprep.subr.mxu0 0.0
  %3689 = vmatpush1.msra.mxu0 0.0
  %3690 = vmatprep.subr.mxu0 0.0
  %3691 = vmatpush1.msra.mxu0 0.0
  %3692 = vmatprep.subr.mxu0 0.0
  %3693 = vmatpush1.msra.mxu0 0.0
  %3694 = vmatprep.subr.mxu0 0.0
  %3695 = vmatpush1.msra.mxu0 0.0
  %3696 = vmatprep.subr.mxu0 0.0
  %3697 = vmatpush1.msra.mxu0 0.0
  %3698 = vmatprep.subr.mxu0 0.0
  %3699 = vmatpush1.msra.mxu0 0.0
  %3700 = vmatprep.subr.mxu0 0.0
  %3701 = vmatpush1.msra.mxu0 0.0
  %3702 = vmatprep.subr.mxu0 0.0
  %3703 = vmatpush1.msra.mxu0 0.0
  %3704 = vmatprep.mubr.f32.mxu0 0.0
  %3705 = vmatmul.mubr.f32.gmra.mrb[0].mxu0 %v3635
  %v3706 = vpop.f32.mrb[0].mxu0
  %v3707 = vadd.f32 0.0, %v3706
  %v3708 = vpop.f32.mrb[0].mxu0
  %v3709 = vadd.f32 0.0, %v3708
  %3710 = vmatprep.mubr.f32.mxu0 0.0
  %3711 = vmatmul.mubr.f32.gmra.mrb[0].mxu0 %v3638
  %v3712 = vpop.f32.mrb[0].mxu0
  %v3713 = vadd.f32 0.0, %v3712
  %v3714 = vpop.f32.mrb[0].mxu0
  %v3715 = vadd.f32 0.0, %v3714
  %3716 = vdwg.mxu0
  %3717 = vmatprep.subr.mxu0 %v3629
  %3718 = vmatpush1.msra.mxu0 %v3628
  %3719 = vmatprep.subr.mxu0 0.0
  %3720 = vmatpush1.msra.mxu0 0.0
  %3721 = vmatprep.subr.mxu0 0.0
  %3722 = vmatpush1.msra.mxu0 0.0
  %3723 = vmatprep.subr.mxu0 0.0
  %3724 = vmatpush1.msra.mxu0 0.0
  %3725 = vmatprep.subr.mxu0 0.0
  %3726 = vmatpush1.msra.mxu0 0.0
  %3727 = vmatprep.subr.mxu0 0.0
  %3728 = vmatpush1.msra.mxu0 0.0
  %3729 = vmatprep.subr.mxu0 0.0
  %3730 = vmatpush1.msra.mxu0 0.0
  %3731 = vmatprep.subr.mxu0 0.0
  %3732 = vmatpush1.msra.mxu0 0.0
  %3733 = vmatprep.subr.mxu0 0.0
  %3734 = vmatpush1.msra.mxu0 0.0
  %3735 = vmatprep.subr.mxu0 0.0
  %3736 = vmatpush1.msra.mxu0 0.0
  %3737 = vmatprep.subr.mxu0 0.0
  %3738 = vmatpush1.msra.mxu0 0.0
  %3739 = vmatprep.subr.mxu0 0.0
  %3740 = vmatpush1.msra.mxu0 0.0
  %3741 = vmatprep.subr.mxu0 0.0
  %3742 = vmatpush1.msra.mxu0 0.0
  %3743 = vmatprep.subr.mxu0 0.0
  %3744 = vmatpush1.msra.mxu0 0.0
  %3745 = vmatprep.subr.mxu0 0.0
  %3746 = vmatpush1.msra.mxu0 0.0
  %3747 = vmatprep.subr.mxu0 0.0
  %3748 = vmatpush1.msra.mxu0 0.0
  %3749 = vmatprep.subr.mxu0 0.0
  %3750 = vmatpush1.msra.mxu0 0.0
  %3751 = vmatprep.subr.mxu0 0.0
  %3752 = vmatpush1.msra.mxu0 0.0
  %3753 = vmatprep.subr.mxu0 0.0
  %3754 = vmatpush1.msra.mxu0 0.0
  %3755 = vmatprep.subr.mxu0 0.0
  %3756 = vmatpush1.msra.mxu0 0.0
  %3757 = vmatprep.subr.mxu0 0.0
  %3758 = vmatpush1.msra.mxu0 0.0
  %3759 = vmatprep.subr.mxu0 0.0
  %3760 = vmatpush1.msra.mxu0 0.0
  %3761 = vmatprep.subr.mxu0 0.0
  %3762 = vmatpush1.msra.mxu0 0.0
  %3763 = vmatprep.subr.mxu0 0.0
  %3764 = vmatpush1.msra.mxu0 0.0
  %3765 = vmatprep.subr.mxu0 0.0
  %3766 = vmatpush1.msra.mxu0 0.0
  %3767 = vmatprep.subr.mxu0 0.0
  %3768 = vmatpush1.msra.mxu0 0.0
  %3769 = vmatprep.subr.mxu0 0.0
  %3770 = vmatpush1.msra.mxu0 0.0
  %3771 = vmatprep.subr.mxu0 0.0
  %3772 = vmatpush1.msra.mxu0 0.0
  %3773 = vmatprep.subr.mxu0 0.0
  %3774 = vmatpush1.msra.mxu0 0.0
  %3775 = vmatprep.subr.mxu0 0.0
  %3776 = vmatpush1.msra.mxu0 0.0
  %3777 = vmatprep.subr.mxu0 0.0
  %3778 = vmatpush1.msra.mxu0 0.0
  %3779 = vmatprep.subr.mxu0 0.0
  %3780 = vmatpush1.msra.mxu0 0.0
  %3781 = vmatprep.mubr.f32.mxu0 0.0
  %3782 = vmatmul.mubr.f32.gmra.mrb[0].mxu0 %v3635
  %v3783 = vpop.f32.mrb[0].mxu0
  %v3784 = vadd.f32 0.0, %v3783
  %v3785 = vpop.f32.mrb[0].mxu0
  %v3786 = vadd.f32 0.0, %v3785
  %3787 = vmatprep.mubr.f32.mxu0 0.0
  %3788 = vmatmul.mubr.f32.gmra.mrb[0].mxu0 %v3638
  %v3789 = vpop.f32.mrb[0].mxu0
  %v3790 = vadd.f32 0.0, %v3789
  %v3791 = vpop.f32.mrb[0].mxu0
  %v3792 = vadd.f32 0.0, %v3791
  %3793 = vdwg.mxu0
  %v3794 = vadd.f32 %v3604, %v3707
  %v3795 = vadd.f32 %v3605, %v3709
  %v3796 = vadd.f32 %v3606, %v3784
  %v3797 = vadd.f32 %v3607, %v3786
  %v3798 = vadd.f32 %v3608, %v3713
  %v3799 = vadd.f32 %v3609, %v3715
  %v3800 = vadd.f32 %v3610, %v3790
  %v3801 = vadd.f32 %v3611, %v3792
  %s3802 = scalar_lea.vmem %s1, 320
  %v3803 = vld [vmem:[%s3802] sm:$0xff]
  %v3804 = vld [vmem:[%s3802 + $0x8] sm:$0xff]
  %3805 = vrot.lane.b32.xlu0 %v32, 32
  %v3806 = vpop.permute.xlu0 %3805
  %3807 = vrot.lane.b32.xlu0 %v33, 32
  %v3808 = vpop.permute.xlu0 %3807
  %3809 = vrot.lane.b32.xlu0 %v34, 32
  %v3810 = vpop.permute.xlu0 %3809
  %3811 = vrot.lane.b32.xlu0 %v35, 32
  %v3812 = vpop.permute.xlu0 %3811
  %3813 = vrot.lane.b32.xlu0 %v36, 32
  %v3814 = vpop.permute.xlu0 %3813
  %vm3815 = vcmask 261120
  %v3816 = vsel %vm3815, %v3806, %v3808
  %v3817 = vsel %vm3815, %v3808, %v3810
  %v3818 = vsel %vm3815, %v3810, %v3812
  %v3819 = vsel %vm3815, %v3812, %v3814
  %v3825 = vsel %vm61, %v3803, 0
  %v3828 = vsel %vm61, %v3804, 0
  %3830 = vmatprep.subr.mxu0 %v3817
  %3831 = vmatpush1.msra.mxu0 %v3816
  %3832 = vmatprep.subr.mxu0 0.0
  %3833 = vmatpush1.msra.mxu0 0.0
  %3834 = vmatprep.subr.mxu0 0.0
  %3835 = vmatpush1.msra.mxu0 0.0
  %3836 = vmatprep.subr.mxu0 0.0
  %3837 = vmatpush1.msra.mxu0 0.0
  %3838 = vmatprep.subr.mxu0 0.0
  %3839 = vmatpush1.msra.mxu0 0.0
  %3840 = vmatprep.subr.mxu0 0.0
  %3841 = vmatpush1.msra.mxu0 0.0
  %3842 = vmatprep.subr.mxu0 0.0
  %3843 = vmatpush1.msra.mxu0 0.0
  %3844 = vmatprep.subr.mxu0 0.0
  %3845 = vmatpush1.msra.mxu0 0.0
  %3846 = vmatprep.subr.mxu0 0.0
  %3847 = vmatpush1.msra.mxu0 0.0
  %3848 = vmatprep.subr.mxu0 0.0
  %3849 = vmatpush1.msra.mxu0 0.0
  %3850 = vmatprep.subr.mxu0 0.0
  %3851 = vmatpush1.msra.mxu0 0.0
  %3852 = vmatprep.subr.mxu0 0.0
  %3853 = vmatpush1.msra.mxu0 0.0
  %3854 = vmatprep.subr.mxu0 0.0
  %3855 = vmatpush1.msra.mxu0 0.0
  %3856 = vmatprep.subr.mxu0 0.0
  %3857 = vmatpush1.msra.mxu0 0.0
  %3858 = vmatprep.subr.mxu0 0.0
  %3859 = vmatpush1.msra.mxu0 0.0
  %3860 = vmatprep.subr.mxu0 0.0
  %3861 = vmatpush1.msra.mxu0 0.0
  %3862 = vmatprep.subr.mxu0 0.0
  %3863 = vmatpush1.msra.mxu0 0.0
  %3864 = vmatprep.subr.mxu0 0.0
  %3865 = vmatpush1.msra.mxu0 0.0
  %3866 = vmatprep.subr.mxu0 0.0
  %3867 = vmatpush1.msra.mxu0 0.0
  %3868 = vmatprep.subr.mxu0 0.0
  %3869 = vmatpush1.msra.mxu0 0.0
  %3870 = vmatprep.subr.mxu0 0.0
  %3871 = vmatpush1.msra.mxu0 0.0
  %3872 = vmatprep.subr.mxu0 0.0
  %3873 = vmatpush1.msra.mxu0 0.0
  %3874 = vmatprep.subr.mxu0 0.0
  %3875 = vmatpush1.msra.mxu0 0.0
  %3876 = vmatprep.subr.mxu0 0.0
  %3877 = vmatpush1.msra.mxu0 0.0
  %3878 = vmatprep.subr.mxu0 0.0
  %3879 = vmatpush1.msra.mxu0 0.0
  %3880 = vmatprep.subr.mxu0 0.0
  %3881 = vmatpush1.msra.mxu0 0.0
  %3882 = vmatprep.subr.mxu0 0.0
  %3883 = vmatpush1.msra.mxu0 0.0
  %3884 = vmatprep.subr.mxu0 0.0
  %3885 = vmatpush1.msra.mxu0 0.0
  %3886 = vmatprep.subr.mxu0 0.0
  %3887 = vmatpush1.msra.mxu0 0.0
  %3888 = vmatprep.subr.mxu0 0.0
  %3889 = vmatpush1.msra.mxu0 0.0
  %3890 = vmatprep.subr.mxu0 0.0
  %3891 = vmatpush1.msra.mxu0 0.0
  %3892 = vmatprep.subr.mxu0 0.0
  %3893 = vmatpush1.msra.mxu0 0.0
  %3894 = vmatprep.mubr.f32.mxu0 0.0
  %3895 = vmatmul.mubr.f32.gmra.mrb[0].mxu0 %v3825
  %v3896 = vpop.f32.mrb[0].mxu0
  %v3897 = vadd.f32 0.0, %v3896
  %v3898 = vpop.f32.mrb[0].mxu0
  %v3899 = vadd.f32 0.0, %v3898
  %3900 = vmatprep.mubr.f32.mxu0 0.0
  %3901 = vmatmul.mubr.f32.gmra.mrb[0].mxu0 %v3828
  %v3902 = vpop.f32.mrb[0].mxu0
  %v3903 = vadd.f32 0.0, %v3902
  %v3904 = vpop.f32.mrb[0].mxu0
  %v3905 = vadd.f32 0.0, %v3904
  %3906 = vdwg.mxu0
  %3907 = vmatprep.subr.mxu0 %v3819
  %3908 = vmatpush1.msra.mxu0 %v3818
  %3909 = vmatprep.subr.mxu0 0.0
  %3910 = vmatpush1.msra.mxu0 0.0
  %3911 = vmatprep.subr.mxu0 0.0
  %3912 = vmatpush1.msra.mxu0 0.0
  %3913 = vmatprep.subr.mxu0 0.0
  %3914 = vmatpush1.msra.mxu0 0.0
  %3915 = vmatprep.subr.mxu0 0.0
  %3916 = vmatpush1.msra.mxu0 0.0
  %3917 = vmatprep.subr.mxu0 0.0
  %3918 = vmatpush1.msra.mxu0 0.0
  %3919 = vmatprep.subr.mxu0 0.0
  %3920 = vmatpush1.msra.mxu0 0.0
  %3921 = vmatprep.subr.mxu0 0.0
  %3922 = vmatpush1.msra.mxu0 0.0
  %3923 = vmatprep.subr.mxu0 0.0
  %3924 = vmatpush1.msra.mxu0 0.0
  %3925 = vmatprep.subr.mxu0 0.0
  %3926 = vmatpush1.msra.mxu0 0.0
  %3927 = vmatprep.subr.mxu0 0.0
  %3928 = vmatpush1.msra.mxu0 0.0
  %3929 = vmatprep.subr.mxu0 0.0
  %3930 = vmatpush1.msra.mxu0 0.0
  %3931 = vmatprep.subr.mxu0 0.0
  %3932 = vmatpush1.msra.mxu0 0.0
  %3933 = vmatprep.subr.mxu0 0.0
  %3934 = vmatpush1.msra.mxu0 0.0
  %3935 = vmatprep.subr.mxu0 0.0
  %3936 = vmatpush1.msra.mxu0 0.0
  %3937 = vmatprep.subr.mxu0 0.0
  %3938 = vmatpush1.msra.mxu0 0.0
  %3939 = vmatprep.subr.mxu0 0.0
  %3940 = vmatpush1.msra.mxu0 0.0
  %3941 = vmatprep.subr.mxu0 0.0
  %3942 = vmatpush1.msra.mxu0 0.0
  %3943 = vmatprep.subr.mxu0 0.0
  %3944 = vmatpush1.msra.mxu0 0.0
  %3945 = vmatprep.subr.mxu0 0.0
  %3946 = vmatpush1.msra.mxu0 0.0
  %3947 = vmatprep.subr.mxu0 0.0
  %3948 = vmatpush1.msra.mxu0 0.0
  %3949 = vmatprep.subr.mxu0 0.0
  %3950 = vmatpush1.msra.mxu0 0.0
  %3951 = vmatprep.subr.mxu0 0.0
  %3952 = vmatpush1.msra.mxu0 0.0
  %3953 = vmatprep.subr.mxu0 0.0
  %3954 = vmatpush1.msra.mxu0 0.0
  %3955 = vmatprep.subr.mxu0 0.0
  %3956 = vmatpush1.msra.mxu0 0.0
  %3957 = vmatprep.subr.mxu0 0.0
  %3958 = vmatpush1.msra.mxu0 0.0
  %3959 = vmatprep.subr.mxu0 0.0
  %3960 = vmatpush1.msra.mxu0 0.0
  %3961 = vmatprep.subr.mxu0 0.0
  %3962 = vmatpush1.msra.mxu0 0.0
  %3963 = vmatprep.subr.mxu0 0.0
  %3964 = vmatpush1.msra.mxu0 0.0
  %3965 = vmatprep.subr.mxu0 0.0
  %3966 = vmatpush1.msra.mxu0 0.0
  %3967 = vmatprep.subr.mxu0 0.0
  %3968 = vmatpush1.msra.mxu0 0.0
  %3969 = vmatprep.subr.mxu0 0.0
  %3970 = vmatpush1.msra.mxu0 0.0
  %3971 = vmatprep.mubr.f32.mxu0 0.0
  %3972 = vmatmul.mubr.f32.gmra.mrb[0].mxu0 %v3825
  %v3973 = vpop.f32.mrb[0].mxu0
  %v3974 = vadd.f32 0.0, %v3973
  %v3975 = vpop.f32.mrb[0].mxu0
  %v3976 = vadd.f32 0.0, %v3975
  %3977 = vmatprep.mubr.f32.mxu0 0.0
  %3978 = vmatmul.mubr.f32.gmra.mrb[0].mxu0 %v3828
  %v3979 = vpop.f32.mrb[0].mxu0
  %v3980 = vadd.f32 0.0, %v3979
  %v3981 = vpop.f32.mrb[0].mxu0
  %v3982 = vadd.f32 0.0, %v3981
  %3983 = vdwg.mxu0
  %v3984 = vadd.f32 %v3794, %v3897
  %v3985 = vadd.f32 %v3795, %v3899
  %v3986 = vadd.f32 %v3796, %v3974
  %v3987 = vadd.f32 %v3797, %v3976
  %v3988 = vadd.f32 %v3798, %v3903
  %v3989 = vadd.f32 %v3799, %v3905
  %v3990 = vadd.f32 %v3800, %v3980
  %v3991 = vadd.f32 %v3801, %v3982
  %s3992 = scalar_lea.vmem %s1, 336
  %v3993 = vld [vmem:[%s3992] sm:$0xff]
  %v3994 = vld [vmem:[%s3992 + $0x8] sm:$0xff]
  %3995 = vrot.lane.b32.xlu0 %v32, 31
  %v3996 = vpop.permute.xlu0 %3995
  %3997 = vrot.lane.b32.xlu0 %v33, 31
  %v3998 = vpop.permute.xlu0 %3997
  %3999 = vrot.lane.b32.xlu0 %v34, 31
  %v4000 = vpop.permute.xlu0 %3999
  %4001 = vrot.lane.b32.xlu0 %v35, 31
  %v4002 = vpop.permute.xlu0 %4001
  %4003 = vrot.lane.b32.xlu0 %v36, 31
  %v4004 = vpop.permute.xlu0 %4003
  %vm4005 = vcmask 252928
  %v4006 = vsel %vm4005, %v3996, %v3998
  %v4007 = vsel %vm4005, %v3998, %v4000
  %v4008 = vsel %vm4005, %v4000, %v4002
  %v4009 = vsel %vm4005, %v4002, %v4004
  %v4015 = vsel %vm61, %v3993, 0
  %v4018 = vsel %vm61, %v3994, 0
  %4020 = vmatprep.subr.mxu0 %v4007
  %4021 = vmatpush1.msra.mxu0 %v4006
  %4022 = vmatprep.subr.mxu0 0.0
  %4023 = vmatpush1.msra.mxu0 0.0
  %4024 = vmatprep.subr.mxu0 0.0
  %4025 = vmatpush1.msra.mxu0 0.0
  %4026 = vmatprep.subr.mxu0 0.0
  %4027 = vmatpush1.msra.mxu0 0.0
  %4028 = vmatprep.subr.mxu0 0.0
  %4029 = vmatpush1.msra.mxu0 0.0
  %4030 = vmatprep.subr.mxu0 0.0
  %4031 = vmatpush1.msra.mxu0 0.0
  %4032 = vmatprep.subr.mxu0 0.0
  %4033 = vmatpush1.msra.mxu0 0.0
  %4034 = vmatprep.subr.mxu0 0.0
  %4035 = vmatpush1.msra.mxu0 0.0
  %4036 = vmatprep.subr.mxu0 0.0
  %4037 = vmatpush1.msra.mxu0 0.0
  %4038 = vmatprep.subr.mxu0 0.0
  %4039 = vmatpush1.msra.mxu0 0.0
  %4040 = vmatprep.subr.mxu0 0.0
  %4041 = vmatpush1.msra.mxu0 0.0
  %4042 = vmatprep.subr.mxu0 0.0
  %4043 = vmatpush1.msra.mxu0 0.0
  %4044 = vmatprep.subr.mxu0 0.0
  %4045 = vmatpush1.msra.mxu0 0.0
  %4046 = vmatprep.subr.mxu0 0.0
  %4047 = vmatpush1.msra.mxu0 0.0
  %4048 = vmatprep.subr.mxu0 0.0
  %4049 = vmatpush1.msra.mxu0 0.0
  %4050 = vmatprep.subr.mxu0 0.0
  %4051 = vmatpush1.msra.mxu0 0.0
  %4052 = vmatprep.subr.mxu0 0.0
  %4053 = vmatpush1.msra.mxu0 0.0
  %4054 = vmatprep.subr.mxu0 0.0
  %4055 = vmatpush1.msra.mxu0 0.0
  %4056 = vmatprep.subr.mxu0 0.0
  %4057 = vmatpush1.msra.mxu0 0.0
  %4058 = vmatprep.subr.mxu0 0.0
  %4059 = vmatpush1.msra.mxu0 0.0
  %4060 = vmatprep.subr.mxu0 0.0
  %4061 = vmatpush1.msra.mxu0 0.0
  %4062 = vmatprep.subr.mxu0 0.0
  %4063 = vmatpush1.msra.mxu0 0.0
  %4064 = vmatprep.subr.mxu0 0.0
  %4065 = vmatpush1.msra.mxu0 0.0
  %4066 = vmatprep.subr.mxu0 0.0
  %4067 = vmatpush1.msra.mxu0 0.0
  %4068 = vmatprep.subr.mxu0 0.0
  %4069 = vmatpush1.msra.mxu0 0.0
  %4070 = vmatprep.subr.mxu0 0.0
  %4071 = vmatpush1.msra.mxu0 0.0
  %4072 = vmatprep.subr.mxu0 0.0
  %4073 = vmatpush1.msra.mxu0 0.0
  %4074 = vmatprep.subr.mxu0 0.0
  %4075 = vmatpush1.msra.mxu0 0.0
  %4076 = vmatprep.subr.mxu0 0.0
  %4077 = vmatpush1.msra.mxu0 0.0
  %4078 = vmatprep.subr.mxu0 0.0
  %4079 = vmatpush1.msra.mxu0 0.0
  %4080 = vmatprep.subr.mxu0 0.0
  %4081 = vmatpush1.msra.mxu0 0.0
  %4082 = vmatprep.subr.mxu0 0.0
  %4083 = vmatpush1.msra.mxu0 0.0
  %4084 = vmatprep.mubr.f32.mxu0 0.0
  %4085 = vmatmul.mubr.f32.gmra.mrb[0].mxu0 %v4015
  %v4086 = vpop.f32.mrb[0].mxu0
  %v4087 = vadd.f32 0.0, %v4086
  %v4088 = vpop.f32.mrb[0].mxu0
  %v4089 = vadd.f32 0.0, %v4088
  %4090 = vmatprep.mubr.f32.mxu0 0.0
  %4091 = vmatmul.mubr.f32.gmra.mrb[0].mxu0 %v4018
  %v4092 = vpop.f32.mrb[0].mxu0
  %v4093 = vadd.f32 0.0, %v4092
  %v4094 = vpop.f32.mrb[0].mxu0
  %v4095 = vadd.f32 0.0, %v4094
  %4096 = vdwg.mxu0
  %4097 = vmatprep.subr.mxu0 %v4009
  %4098 = vmatpush1.msra.mxu0 %v4008
  %4099 = vmatprep.subr.mxu0 0.0
  %4100 = vmatpush1.msra.mxu0 0.0
  %4101 = vmatprep.subr.mxu0 0.0
  %4102 = vmatpush1.msra.mxu0 0.0
  %4103 = vmatprep.subr.mxu0 0.0
  %4104 = vmatpush1.msra.mxu0 0.0
  %4105 = vmatprep.subr.mxu0 0.0
  %4106 = vmatpush1.msra.mxu0 0.0
  %4107 = vmatprep.subr.mxu0 0.0
  %4108 = vmatpush1.msra.mxu0 0.0
  %4109 = vmatprep.subr.mxu0 0.0
  %4110 = vmatpush1.msra.mxu0 0.0
  %4111 = vmatprep.subr.mxu0 0.0
  %4112 = vmatpush1.msra.mxu0 0.0
  %4113 = vmatprep.subr.mxu0 0.0
  %4114 = vmatpush1.msra.mxu0 0.0
  %4115 = vmatprep.subr.mxu0 0.0
  %4116 = vmatpush1.msra.mxu0 0.0
  %4117 = vmatprep.subr.mxu0 0.0
  %4118 = vmatpush1.msra.mxu0 0.0
  %4119 = vmatprep.subr.mxu0 0.0
  %4120 = vmatpush1.msra.mxu0 0.0
  %4121 = vmatprep.subr.mxu0 0.0
  %4122 = vmatpush1.msra.mxu0 0.0
  %4123 = vmatprep.subr.mxu0 0.0
  %4124 = vmatpush1.msra.mxu0 0.0
  %4125 = vmatprep.subr.mxu0 0.0
  %4126 = vmatpush1.msra.mxu0 0.0
  %4127 = vmatprep.subr.mxu0 0.0
  %4128 = vmatpush1.msra.mxu0 0.0
  %4129 = vmatprep.subr.mxu0 0.0
  %4130 = vmatpush1.msra.mxu0 0.0
  %4131 = vmatprep.subr.mxu0 0.0
  %4132 = vmatpush1.msra.mxu0 0.0
  %4133 = vmatprep.subr.mxu0 0.0
  %4134 = vmatpush1.msra.mxu0 0.0
  %4135 = vmatprep.subr.mxu0 0.0
  %4136 = vmatpush1.msra.mxu0 0.0
  %4137 = vmatprep.subr.mxu0 0.0
  %4138 = vmatpush1.msra.mxu0 0.0
  %4139 = vmatprep.subr.mxu0 0.0
  %4140 = vmatpush1.msra.mxu0 0.0
  %4141 = vmatprep.subr.mxu0 0.0
  %4142 = vmatpush1.msra.mxu0 0.0
  %4143 = vmatprep.subr.mxu0 0.0
  %4144 = vmatpush1.msra.mxu0 0.0
  %4145 = vmatprep.subr.mxu0 0.0
  %4146 = vmatpush1.msra.mxu0 0.0
  %4147 = vmatprep.subr.mxu0 0.0
  %4148 = vmatpush1.msra.mxu0 0.0
  %4149 = vmatprep.subr.mxu0 0.0
  %4150 = vmatpush1.msra.mxu0 0.0
  %4151 = vmatprep.subr.mxu0 0.0
  %4152 = vmatpush1.msra.mxu0 0.0
  %4153 = vmatprep.subr.mxu0 0.0
  %4154 = vmatpush1.msra.mxu0 0.0
  %4155 = vmatprep.subr.mxu0 0.0
  %4156 = vmatpush1.msra.mxu0 0.0
  %4157 = vmatprep.subr.mxu0 0.0
  %4158 = vmatpush1.msra.mxu0 0.0
  %4159 = vmatprep.subr.mxu0 0.0
  %4160 = vmatpush1.msra.mxu0 0.0
  %4161 = vmatprep.mubr.f32.mxu0 0.0
  %4162 = vmatmul.mubr.f32.gmra.mrb[0].mxu0 %v4015
  %v4163 = vpop.f32.mrb[0].mxu0
  %v4164 = vadd.f32 0.0, %v4163
  %v4165 = vpop.f32.mrb[0].mxu0
  %v4166 = vadd.f32 0.0, %v4165
  %4167 = vmatprep.mubr.f32.mxu0 0.0
  %4168 = vmatmul.mubr.f32.gmra.mrb[0].mxu0 %v4018
  %v4169 = vpop.f32.mrb[0].mxu0
  %v4170 = vadd.f32 0.0, %v4169
  %v4171 = vpop.f32.mrb[0].mxu0
  %v4172 = vadd.f32 0.0, %v4171
  %4173 = vdwg.mxu0
  %v4174 = vadd.f32 %v3984, %v4087
  %v4175 = vadd.f32 %v3985, %v4089
  %v4176 = vadd.f32 %v3986, %v4164
  %v4177 = vadd.f32 %v3987, %v4166
  %v4178 = vadd.f32 %v3988, %v4093
  %v4179 = vadd.f32 %v3989, %v4095
  %v4180 = vadd.f32 %v3990, %v4170
  %v4181 = vadd.f32 %v3991, %v4172
  %s4182 = scalar_lea.vmem %s1, 352
  %v4183 = vld [vmem:[%s4182] sm:$0xff]
  %v4184 = vld [vmem:[%s4182 + $0x8] sm:$0xff]
  %4185 = vrot.lane.b32.xlu0 %v32, 30
  %v4186 = vpop.permute.xlu0 %4185
  %4187 = vrot.lane.b32.xlu0 %v33, 30
  %v4188 = vpop.permute.xlu0 %4187
  %4189 = vrot.lane.b32.xlu0 %v34, 30
  %v4190 = vpop.permute.xlu0 %4189
  %4191 = vrot.lane.b32.xlu0 %v35, 30
  %v4192 = vpop.permute.xlu0 %4191
  %4193 = vrot.lane.b32.xlu0 %v36, 30
  %v4194 = vpop.permute.xlu0 %4193
  %vm4195 = vcmask 244736
  %v4196 = vsel %vm4195, %v4186, %v4188
  %v4197 = vsel %vm4195, %v4188, %v4190
  %v4198 = vsel %vm4195, %v4190, %v4192
  %v4199 = vsel %vm4195, %v4192, %v4194
  %v4205 = vsel %vm61, %v4183, 0
  %v4208 = vsel %vm61, %v4184, 0
  %4210 = vmatprep.subr.mxu0 %v4197
  %4211 = vmatpush1.msra.mxu0 %v4196
  %4212 = vmatprep.subr.mxu0 0.0
  %4213 = vmatpush1.msra.mxu0 0.0
  %4214 = vmatprep.subr.mxu0 0.0
  %4215 = vmatpush1.msra.mxu0 0.0
  %4216 = vmatprep.subr.mxu0 0.0
  %4217 = vmatpush1.msra.mxu0 0.0
  %4218 = vmatprep.subr.mxu0 0.0
  %4219 = vmatpush1.msra.mxu0 0.0
  %4220 = vmatprep.subr.mxu0 0.0
  %4221 = vmatpush1.msra.mxu0 0.0
  %4222 = vmatprep.subr.mxu0 0.0
  %4223 = vmatpush1.msra.mxu0 0.0
  %4224 = vmatprep.subr.mxu0 0.0
  %4225 = vmatpush1.msra.mxu0 0.0
  %4226 = vmatprep.subr.mxu0 0.0
  %4227 = vmatpush1.msra.mxu0 0.0
  %4228 = vmatprep.subr.mxu0 0.0
  %4229 = vmatpush1.msra.mxu0 0.0
  %4230 = vmatprep.subr.mxu0 0.0
  %4231 = vmatpush1.msra.mxu0 0.0
  %4232 = vmatprep.subr.mxu0 0.0
  %4233 = vmatpush1.msra.mxu0 0.0
  %4234 = vmatprep.subr.mxu0 0.0
  %4235 = vmatpush1.msra.mxu0 0.0
  %4236 = vmatprep.subr.mxu0 0.0
  %4237 = vmatpush1.msra.mxu0 0.0
  %4238 = vmatprep.subr.mxu0 0.0
  %4239 = vmatpush1.msra.mxu0 0.0
  %4240 = vmatprep.subr.mxu0 0.0
  %4241 = vmatpush1.msra.mxu0 0.0
  %4242 = vmatprep.subr.mxu0 0.0
  %4243 = vmatpush1.msra.mxu0 0.0
  %4244 = vmatprep.subr.mxu0 0.0
  %4245 = vmatpush1.msra.mxu0 0.0
  %4246 = vmatprep.subr.mxu0 0.0
  %4247 = vmatpush1.msra.mxu0 0.0
  %4248 = vmatprep.subr.mxu0 0.0
  %4249 = vmatpush1.msra.mxu0 0.0
  %4250 = vmatprep.subr.mxu0 0.0
  %4251 = vmatpush1.msra.mxu0 0.0
  %4252 = vmatprep.subr.mxu0 0.0
  %4253 = vmatpush1.msra.mxu0 0.0
  %4254 = vmatprep.subr.mxu0 0.0
  %4255 = vmatpush1.msra.mxu0 0.0
  %4256 = vmatprep.subr.mxu0 0.0
  %4257 = vmatpush1.msra.mxu0 0.0
  %4258 = vmatprep.subr.mxu0 0.0
  %4259 = vmatpush1.msra.mxu0 0.0
  %4260 = vmatprep.subr.mxu0 0.0
  %4261 = vmatpush1.msra.mxu0 0.0
  %4262 = vmatprep.subr.mxu0 0.0
  %4263 = vmatpush1.msra.mxu0 0.0
  %4264 = vmatprep.subr.mxu0 0.0
  %4265 = vmatpush1.msra.mxu0 0.0
  %4266 = vmatprep.subr.mxu0 0.0
  %4267 = vmatpush1.msra.mxu0 0.0
  %4268 = vmatprep.subr.mxu0 0.0
  %4269 = vmatpush1.msra.mxu0 0.0
  %4270 = vmatprep.subr.mxu0 0.0
  %4271 = vmatpush1.msra.mxu0 0.0
  %4272 = vmatprep.subr.mxu0 0.0
  %4273 = vmatpush1.msra.mxu0 0.0
  %4274 = vmatprep.mubr.f32.mxu0 0.0
  %4275 = vmatmul.mubr.f32.gmra.mrb[0].mxu0 %v4205
  %v4276 = vpop.f32.mrb[0].mxu0
  %v4277 = vadd.f32 0.0, %v4276
  %v4278 = vpop.f32.mrb[0].mxu0
  %v4279 = vadd.f32 0.0, %v4278
  %4280 = vmatprep.mubr.f32.mxu0 0.0
  %4281 = vmatmul.mubr.f32.gmra.mrb[0].mxu0 %v4208
  %v4282 = vpop.f32.mrb[0].mxu0
  %v4283 = vadd.f32 0.0, %v4282
  %v4284 = vpop.f32.mrb[0].mxu0
  %v4285 = vadd.f32 0.0, %v4284
  %4286 = vdwg.mxu0
  %4287 = vmatprep.subr.mxu0 %v4199
  %4288 = vmatpush1.msra.mxu0 %v4198
  %4289 = vmatprep.subr.mxu0 0.0
  %4290 = vmatpush1.msra.mxu0 0.0
  %4291 = vmatprep.subr.mxu0 0.0
  %4292 = vmatpush1.msra.mxu0 0.0
  %4293 = vmatprep.subr.mxu0 0.0
  %4294 = vmatpush1.msra.mxu0 0.0
  %4295 = vmatprep.subr.mxu0 0.0
  %4296 = vmatpush1.msra.mxu0 0.0
  %4297 = vmatprep.subr.mxu0 0.0
  %4298 = vmatpush1.msra.mxu0 0.0
  %4299 = vmatprep.subr.mxu0 0.0
  %4300 = vmatpush1.msra.mxu0 0.0
  %4301 = vmatprep.subr.mxu0 0.0
  %4302 = vmatpush1.msra.mxu0 0.0
  %4303 = vmatprep.subr.mxu0 0.0
  %4304 = vmatpush1.msra.mxu0 0.0
  %4305 = vmatprep.subr.mxu0 0.0
  %4306 = vmatpush1.msra.mxu0 0.0
  %4307 = vmatprep.subr.mxu0 0.0
  %4308 = vmatpush1.msra.mxu0 0.0
  %4309 = vmatprep.subr.mxu0 0.0
  %4310 = vmatpush1.msra.mxu0 0.0
  %4311 = vmatprep.subr.mxu0 0.0
  %4312 = vmatpush1.msra.mxu0 0.0
  %4313 = vmatprep.subr.mxu0 0.0
  %4314 = vmatpush1.msra.mxu0 0.0
  %4315 = vmatprep.subr.mxu0 0.0
  %4316 = vmatpush1.msra.mxu0 0.0
  %4317 = vmatprep.subr.mxu0 0.0
  %4318 = vmatpush1.msra.mxu0 0.0
  %4319 = vmatprep.subr.mxu0 0.0
  %4320 = vmatpush1.msra.mxu0 0.0
  %4321 = vmatprep.subr.mxu0 0.0
  %4322 = vmatpush1.msra.mxu0 0.0
  %4323 = vmatprep.subr.mxu0 0.0
  %4324 = vmatpush1.msra.mxu0 0.0
  %4325 = vmatprep.subr.mxu0 0.0
  %4326 = vmatpush1.msra.mxu0 0.0
  %4327 = vmatprep.subr.mxu0 0.0
  %4328 = vmatpush1.msra.mxu0 0.0
  %4329 = vmatprep.subr.mxu0 0.0
  %4330 = vmatpush1.msra.mxu0 0.0
  %4331 = vmatprep.subr.mxu0 0.0
  %4332 = vmatpush1.msra.mxu0 0.0
  %4333 = vmatprep.subr.mxu0 0.0
  %4334 = vmatpush1.msra.mxu0 0.0
  %4335 = vmatprep.subr.mxu0 0.0
  %4336 = vmatpush1.msra.mxu0 0.0
  %4337 = vmatprep.subr.mxu0 0.0
  %4338 = vmatpush1.msra.mxu0 0.0
  %4339 = vmatprep.subr.mxu0 0.0
  %4340 = vmatpush1.msra.mxu0 0.0
  %4341 = vmatprep.subr.mxu0 0.0
  %4342 = vmatpush1.msra.mxu0 0.0
  %4343 = vmatprep.subr.mxu0 0.0
  %4344 = vmatpush1.msra.mxu0 0.0
  %4345 = vmatprep.subr.mxu0 0.0
  %4346 = vmatpush1.msra.mxu0 0.0
  %4347 = vmatprep.subr.mxu0 0.0
  %4348 = vmatpush1.msra.mxu0 0.0
  %4349 = vmatprep.subr.mxu0 0.0
  %4350 = vmatpush1.msra.mxu0 0.0
  %4351 = vmatprep.mubr.f32.mxu0 0.0
  %4352 = vmatmul.mubr.f32.gmra.mrb[0].mxu0 %v4205
  %v4353 = vpop.f32.mrb[0].mxu0
  %v4354 = vadd.f32 0.0, %v4353
  %v4355 = vpop.f32.mrb[0].mxu0
  %v4356 = vadd.f32 0.0, %v4355
  %4357 = vmatprep.mubr.f32.mxu0 0.0
  %4358 = vmatmul.mubr.f32.gmra.mrb[0].mxu0 %v4208
  %v4359 = vpop.f32.mrb[0].mxu0
  %v4360 = vadd.f32 0.0, %v4359
  %v4361 = vpop.f32.mrb[0].mxu0
  %v4362 = vadd.f32 0.0, %v4361
  %4363 = vdwg.mxu0
  %v4364 = vadd.f32 %v4174, %v4277
  %v4365 = vadd.f32 %v4175, %v4279
  %v4366 = vadd.f32 %v4176, %v4354
  %v4367 = vadd.f32 %v4177, %v4356
  %v4368 = vadd.f32 %v4178, %v4283
  %v4369 = vadd.f32 %v4179, %v4285
  %v4370 = vadd.f32 %v4180, %v4360
  %v4371 = vadd.f32 %v4181, %v4362
  %s4372 = scalar_lea.vmem %s1, 368
  %v4373 = vld [vmem:[%s4372] sm:$0xff]
  %v4374 = vld [vmem:[%s4372 + $0x8] sm:$0xff]
  %4375 = vrot.lane.b32.xlu0 %v32, 29
  %v4376 = vpop.permute.xlu0 %4375
  %4377 = vrot.lane.b32.xlu0 %v33, 29
  %v4378 = vpop.permute.xlu0 %4377
  %4379 = vrot.lane.b32.xlu0 %v34, 29
  %v4380 = vpop.permute.xlu0 %4379
  %4381 = vrot.lane.b32.xlu0 %v35, 29
  %v4382 = vpop.permute.xlu0 %4381
  %4383 = vrot.lane.b32.xlu0 %v36, 29
  %v4384 = vpop.permute.xlu0 %4383
  %vm4385 = vcmask 236544
  %v4386 = vsel %vm4385, %v4376, %v4378
  %v4387 = vsel %vm4385, %v4378, %v4380
  %v4388 = vsel %vm4385, %v4380, %v4382
  %v4389 = vsel %vm4385, %v4382, %v4384
  %v4395 = vsel %vm61, %v4373, 0
  %v4398 = vsel %vm61, %v4374, 0
  %4400 = vmatprep.subr.mxu0 %v4387
  %4401 = vmatpush1.msra.mxu0 %v4386
  %4402 = vmatprep.subr.mxu0 0.0
  %4403 = vmatpush1.msra.mxu0 0.0
  %4404 = vmatprep.subr.mxu0 0.0
  %4405 = vmatpush1.msra.mxu0 0.0
  %4406 = vmatprep.subr.mxu0 0.0
  %4407 = vmatpush1.msra.mxu0 0.0
  %4408 = vmatprep.subr.mxu0 0.0
  %4409 = vmatpush1.msra.mxu0 0.0
  %4410 = vmatprep.subr.mxu0 0.0
  %4411 = vmatpush1.msra.mxu0 0.0
  %4412 = vmatprep.subr.mxu0 0.0
  %4413 = vmatpush1.msra.mxu0 0.0
  %4414 = vmatprep.subr.mxu0 0.0
  %4415 = vmatpush1.msra.mxu0 0.0
  %4416 = vmatprep.subr.mxu0 0.0
  %4417 = vmatpush1.msra.mxu0 0.0
  %4418 = vmatprep.subr.mxu0 0.0
  %4419 = vmatpush1.msra.mxu0 0.0
  %4420 = vmatprep.subr.mxu0 0.0
  %4421 = vmatpush1.msra.mxu0 0.0
  %4422 = vmatprep.subr.mxu0 0.0
  %4423 = vmatpush1.msra.mxu0 0.0
  %4424 = vmatprep.subr.mxu0 0.0
  %4425 = vmatpush1.msra.mxu0 0.0
  %4426 = vmatprep.subr.mxu0 0.0
  %4427 = vmatpush1.msra.mxu0 0.0
  %4428 = vmatprep.subr.mxu0 0.0
  %4429 = vmatpush1.msra.mxu0 0.0
  %4430 = vmatprep.subr.mxu0 0.0
  %4431 = vmatpush1.msra.mxu0 0.0
  %4432 = vmatprep.subr.mxu0 0.0
  %4433 = vmatpush1.msra.mxu0 0.0
  %4434 = vmatprep.subr.mxu0 0.0
  %4435 = vmatpush1.msra.mxu0 0.0
  %4436 = vmatprep.subr.mxu0 0.0
  %4437 = vmatpush1.msra.mxu0 0.0
  %4438 = vmatprep.subr.mxu0 0.0
  %4439 = vmatpush1.msra.mxu0 0.0
  %4440 = vmatprep.subr.mxu0 0.0
  %4441 = vmatpush1.msra.mxu0 0.0
  %4442 = vmatprep.subr.mxu0 0.0
  %4443 = vmatpush1.msra.mxu0 0.0
  %4444 = vmatprep.subr.mxu0 0.0
  %4445 = vmatpush1.msra.mxu0 0.0
  %4446 = vmatprep.subr.mxu0 0.0
  %4447 = vmatpush1.msra.mxu0 0.0
  %4448 = vmatprep.subr.mxu0 0.0
  %4449 = vmatpush1.msra.mxu0 0.0
  %4450 = vmatprep.subr.mxu0 0.0
  %4451 = vmatpush1.msra.mxu0 0.0
  %4452 = vmatprep.subr.mxu0 0.0
  %4453 = vmatpush1.msra.mxu0 0.0
  %4454 = vmatprep.subr.mxu0 0.0
  %4455 = vmatpush1.msra.mxu0 0.0
  %4456 = vmatprep.subr.mxu0 0.0
  %4457 = vmatpush1.msra.mxu0 0.0
  %4458 = vmatprep.subr.mxu0 0.0
  %4459 = vmatpush1.msra.mxu0 0.0
  %4460 = vmatprep.subr.mxu0 0.0
  %4461 = vmatpush1.msra.mxu0 0.0
  %4462 = vmatprep.subr.mxu0 0.0
  %4463 = vmatpush1.msra.mxu0 0.0
  %4464 = vmatprep.mubr.f32.mxu0 0.0
  %4465 = vmatmul.mubr.f32.gmra.mrb[0].mxu0 %v4395
  %v4466 = vpop.f32.mrb[0].mxu0
  %v4467 = vadd.f32 0.0, %v4466
  %v4468 = vpop.f32.mrb[0].mxu0
  %v4469 = vadd.f32 0.0, %v4468
  %4470 = vmatprep.mubr.f32.mxu0 0.0
  %4471 = vmatmul.mubr.f32.gmra.mrb[0].mxu0 %v4398
  %v4472 = vpop.f32.mrb[0].mxu0
  %v4473 = vadd.f32 0.0, %v4472
  %v4474 = vpop.f32.mrb[0].mxu0
  %v4475 = vadd.f32 0.0, %v4474
  %4476 = vdwg.mxu0
  %4477 = vmatprep.subr.mxu0 %v4389
  %4478 = vmatpush1.msra.mxu0 %v4388
  %4479 = vmatprep.subr.mxu0 0.0
  %4480 = vmatpush1.msra.mxu0 0.0
  %4481 = vmatprep.subr.mxu0 0.0
  %4482 = vmatpush1.msra.mxu0 0.0
  %4483 = vmatprep.subr.mxu0 0.0
  %4484 = vmatpush1.msra.mxu0 0.0
  %4485 = vmatprep.subr.mxu0 0.0
  %4486 = vmatpush1.msra.mxu0 0.0
  %4487 = vmatprep.subr.mxu0 0.0
  %4488 = vmatpush1.msra.mxu0 0.0
  %4489 = vmatprep.subr.mxu0 0.0
  %4490 = vmatpush1.msra.mxu0 0.0
  %4491 = vmatprep.subr.mxu0 0.0
  %4492 = vmatpush1.msra.mxu0 0.0
  %4493 = vmatprep.subr.mxu0 0.0
  %4494 = vmatpush1.msra.mxu0 0.0
  %4495 = vmatprep.subr.mxu0 0.0
  %4496 = vmatpush1.msra.mxu0 0.0
  %4497 = vmatprep.subr.mxu0 0.0
  %4498 = vmatpush1.msra.mxu0 0.0
  %4499 = vmatprep.subr.mxu0 0.0
  %4500 = vmatpush1.msra.mxu0 0.0
  %4501 = vmatprep.subr.mxu0 0.0
  %4502 = vmatpush1.msra.mxu0 0.0
  %4503 = vmatprep.subr.mxu0 0.0
  %4504 = vmatpush1.msra.mxu0 0.0
  %4505 = vmatprep.subr.mxu0 0.0
  %4506 = vmatpush1.msra.mxu0 0.0
  %4507 = vmatprep.subr.mxu0 0.0
  %4508 = vmatpush1.msra.mxu0 0.0
  %4509 = vmatprep.subr.mxu0 0.0
  %4510 = vmatpush1.msra.mxu0 0.0
  %4511 = vmatprep.subr.mxu0 0.0
  %4512 = vmatpush1.msra.mxu0 0.0
  %4513 = vmatprep.subr.mxu0 0.0
  %4514 = vmatpush1.msra.mxu0 0.0
  %4515 = vmatprep.subr.mxu0 0.0
  %4516 = vmatpush1.msra.mxu0 0.0
  %4517 = vmatprep.subr.mxu0 0.0
  %4518 = vmatpush1.msra.mxu0 0.0
  %4519 = vmatprep.subr.mxu0 0.0
  %4520 = vmatpush1.msra.mxu0 0.0
  %4521 = vmatprep.subr.mxu0 0.0
  %4522 = vmatpush1.msra.mxu0 0.0
  %4523 = vmatprep.subr.mxu0 0.0
  %4524 = vmatpush1.msra.mxu0 0.0
  %4525 = vmatprep.subr.mxu0 0.0
  %4526 = vmatpush1.msra.mxu0 0.0
  %4527 = vmatprep.subr.mxu0 0.0
  %4528 = vmatpush1.msra.mxu0 0.0
  %4529 = vmatprep.subr.mxu0 0.0
  %4530 = vmatpush1.msra.mxu0 0.0
  %4531 = vmatprep.subr.mxu0 0.0
  %4532 = vmatpush1.msra.mxu0 0.0
  %4533 = vmatprep.subr.mxu0 0.0
  %4534 = vmatpush1.msra.mxu0 0.0
  %4535 = vmatprep.subr.mxu0 0.0
  %4536 = vmatpush1.msra.mxu0 0.0
  %4537 = vmatprep.subr.mxu0 0.0
  %4538 = vmatpush1.msra.mxu0 0.0
  %4539 = vmatprep.subr.mxu0 0.0
  %4540 = vmatpush1.msra.mxu0 0.0
  %4541 = vmatprep.mubr.f32.mxu0 0.0
  %4542 = vmatmul.mubr.f32.gmra.mrb[0].mxu0 %v4395
  %v4543 = vpop.f32.mrb[0].mxu0
  %v4544 = vadd.f32 0.0, %v4543
  %v4545 = vpop.f32.mrb[0].mxu0
  %v4546 = vadd.f32 0.0, %v4545
  %4547 = vmatprep.mubr.f32.mxu0 0.0
  %4548 = vmatmul.mubr.f32.gmra.mrb[0].mxu0 %v4398
  %v4549 = vpop.f32.mrb[0].mxu0
  %v4550 = vadd.f32 0.0, %v4549
  %v4551 = vpop.f32.mrb[0].mxu0
  %v4552 = vadd.f32 0.0, %v4551
  %4553 = vdwg.mxu0
  %v4554 = vadd.f32 %v4364, %v4467
  %v4555 = vadd.f32 %v4365, %v4469
  %v4556 = vadd.f32 %v4366, %v4544
  %v4557 = vadd.f32 %v4367, %v4546
  %v4558 = vadd.f32 %v4368, %v4473
  %v4559 = vadd.f32 %v4369, %v4475
  %v4560 = vadd.f32 %v4370, %v4550
  %v4561 = vadd.f32 %v4371, %v4552
  %s4562 = scalar_lea.vmem %s1, 384
  %v4563 = vld [vmem:[%s4562] sm:$0xff]
  %v4564 = vld [vmem:[%s4562 + $0x8] sm:$0xff]
  %4565 = vrot.lane.b32.xlu0 %v32, 28
  %v4566 = vpop.permute.xlu0 %4565
  %4567 = vrot.lane.b32.xlu0 %v33, 28
  %v4568 = vpop.permute.xlu0 %4567
  %4569 = vrot.lane.b32.xlu0 %v34, 28
  %v4570 = vpop.permute.xlu0 %4569
  %4571 = vrot.lane.b32.xlu0 %v35, 28
  %v4572 = vpop.permute.xlu0 %4571
  %4573 = vrot.lane.b32.xlu0 %v36, 28
  %v4574 = vpop.permute.xlu0 %4573
  %vm4575 = vcmask 228352
  %v4576 = vsel %vm4575, %v4566, %v4568
  %v4577 = vsel %vm4575, %v4568, %v4570
  %v4578 = vsel %vm4575, %v4570, %v4572
  %v4579 = vsel %vm4575, %v4572, %v4574
  %v4585 = vsel %vm61, %v4563, 0
  %v4588 = vsel %vm61, %v4564, 0
  %4590 = vmatprep.subr.mxu0 %v4577
  %4591 = vmatpush1.msra.mxu0 %v4576
  %4592 = vmatprep.subr.mxu0 0.0
  %4593 = vmatpush1.msra.mxu0 0.0
  %4594 = vmatprep.subr.mxu0 0.0
  %4595 = vmatpush1.msra.mxu0 0.0
  %4596 = vmatprep.subr.mxu0 0.0
  %4597 = vmatpush1.msra.mxu0 0.0
  %4598 = vmatprep.subr.mxu0 0.0
  %4599 = vmatpush1.msra.mxu0 0.0
  %4600 = vmatprep.subr.mxu0 0.0
  %4601 = vmatpush1.msra.mxu0 0.0
  %4602 = vmatprep.subr.mxu0 0.0
  %4603 = vmatpush1.msra.mxu0 0.0
  %4604 = vmatprep.subr.mxu0 0.0
  %4605 = vmatpush1.msra.mxu0 0.0
  %4606 = vmatprep.subr.mxu0 0.0
  %4607 = vmatpush1.msra.mxu0 0.0
  %4608 = vmatprep.subr.mxu0 0.0
  %4609 = vmatpush1.msra.mxu0 0.0
  %4610 = vmatprep.subr.mxu0 0.0
  %4611 = vmatpush1.msra.mxu0 0.0
  %4612 = vmatprep.subr.mxu0 0.0
  %4613 = vmatpush1.msra.mxu0 0.0
  %4614 = vmatprep.subr.mxu0 0.0
  %4615 = vmatpush1.msra.mxu0 0.0
  %4616 = vmatprep.subr.mxu0 0.0
  %4617 = vmatpush1.msra.mxu0 0.0
  %4618 = vmatprep.subr.mxu0 0.0
  %4619 = vmatpush1.msra.mxu0 0.0
  %4620 = vmatprep.subr.mxu0 0.0
  %4621 = vmatpush1.msra.mxu0 0.0
  %4622 = vmatprep.subr.mxu0 0.0
  %4623 = vmatpush1.msra.mxu0 0.0
  %4624 = vmatprep.subr.mxu0 0.0
  %4625 = vmatpush1.msra.mxu0 0.0
  %4626 = vmatprep.subr.mxu0 0.0
  %4627 = vmatpush1.msra.mxu0 0.0
  %4628 = vmatprep.subr.mxu0 0.0
  %4629 = vmatpush1.msra.mxu0 0.0
  %4630 = vmatprep.subr.mxu0 0.0
  %4631 = vmatpush1.msra.mxu0 0.0
  %4632 = vmatprep.subr.mxu0 0.0
  %4633 = vmatpush1.msra.mxu0 0.0
  %4634 = vmatprep.subr.mxu0 0.0
  %4635 = vmatpush1.msra.mxu0 0.0
  %4636 = vmatprep.subr.mxu0 0.0
  %4637 = vmatpush1.msra.mxu0 0.0
  %4638 = vmatprep.subr.mxu0 0.0
  %4639 = vmatpush1.msra.mxu0 0.0
  %4640 = vmatprep.subr.mxu0 0.0
  %4641 = vmatpush1.msra.mxu0 0.0
  %4642 = vmatprep.subr.mxu0 0.0
  %4643 = vmatpush1.msra.mxu0 0.0
  %4644 = vmatprep.subr.mxu0 0.0
  %4645 = vmatpush1.msra.mxu0 0.0
  %4646 = vmatprep.subr.mxu0 0.0
  %4647 = vmatpush1.msra.mxu0 0.0
  %4648 = vmatprep.subr.mxu0 0.0
  %4649 = vmatpush1.msra.mxu0 0.0
  %4650 = vmatprep.subr.mxu0 0.0
  %4651 = vmatpush1.msra.mxu0 0.0
  %4652 = vmatprep.subr.mxu0 0.0
  %4653 = vmatpush1.msra.mxu0 0.0
  %4654 = vmatprep.mubr.f32.mxu0 0.0
  %4655 = vmatmul.mubr.f32.gmra.mrb[0].mxu0 %v4585
  %v4656 = vpop.f32.mrb[0].mxu0
  %v4657 = vadd.f32 0.0, %v4656
  %v4658 = vpop.f32.mrb[0].mxu0
  %v4659 = vadd.f32 0.0, %v4658
  %4660 = vmatprep.mubr.f32.mxu0 0.0
  %4661 = vmatmul.mubr.f32.gmra.mrb[0].mxu0 %v4588
  %v4662 = vpop.f32.mrb[0].mxu0
  %v4663 = vadd.f32 0.0, %v4662
  %v4664 = vpop.f32.mrb[0].mxu0
  %v4665 = vadd.f32 0.0, %v4664
  %4666 = vdwg.mxu0
  %4667 = vmatprep.subr.mxu0 %v4579
  %4668 = vmatpush1.msra.mxu0 %v4578
  %4669 = vmatprep.subr.mxu0 0.0
  %4670 = vmatpush1.msra.mxu0 0.0
  %4671 = vmatprep.subr.mxu0 0.0
  %4672 = vmatpush1.msra.mxu0 0.0
  %4673 = vmatprep.subr.mxu0 0.0
  %4674 = vmatpush1.msra.mxu0 0.0
  %4675 = vmatprep.subr.mxu0 0.0
  %4676 = vmatpush1.msra.mxu0 0.0
  %4677 = vmatprep.subr.mxu0 0.0
  %4678 = vmatpush1.msra.mxu0 0.0
  %4679 = vmatprep.subr.mxu0 0.0
  %4680 = vmatpush1.msra.mxu0 0.0
  %4681 = vmatprep.subr.mxu0 0.0
  %4682 = vmatpush1.msra.mxu0 0.0
  %4683 = vmatprep.subr.mxu0 0.0
  %4684 = vmatpush1.msra.mxu0 0.0
  %4685 = vmatprep.subr.mxu0 0.0
  %4686 = vmatpush1.msra.mxu0 0.0
  %4687 = vmatprep.subr.mxu0 0.0
  %4688 = vmatpush1.msra.mxu0 0.0
  %4689 = vmatprep.subr.mxu0 0.0
  %4690 = vmatpush1.msra.mxu0 0.0
  %4691 = vmatprep.subr.mxu0 0.0
  %4692 = vmatpush1.msra.mxu0 0.0
  %4693 = vmatprep.subr.mxu0 0.0
  %4694 = vmatpush1.msra.mxu0 0.0
  %4695 = vmatprep.subr.mxu0 0.0
  %4696 = vmatpush1.msra.mxu0 0.0
  %4697 = vmatprep.subr.mxu0 0.0
  %4698 = vmatpush1.msra.mxu0 0.0
  %4699 = vmatprep.subr.mxu0 0.0
  %4700 = vmatpush1.msra.mxu0 0.0
  %4701 = vmatprep.subr.mxu0 0.0
  %4702 = vmatpush1.msra.mxu0 0.0
  %4703 = vmatprep.subr.mxu0 0.0
  %4704 = vmatpush1.msra.mxu0 0.0
  %4705 = vmatprep.subr.mxu0 0.0
  %4706 = vmatpush1.msra.mxu0 0.0
  %4707 = vmatprep.subr.mxu0 0.0
  %4708 = vmatpush1.msra.mxu0 0.0
  %4709 = vmatprep.subr.mxu0 0.0
  %4710 = vmatpush1.msra.mxu0 0.0
  %4711 = vmatprep.subr.mxu0 0.0
  %4712 = vmatpush1.msra.mxu0 0.0
  %4713 = vmatprep.subr.mxu0 0.0
  %4714 = vmatpush1.msra.mxu0 0.0
  %4715 = vmatprep.subr.mxu0 0.0
  %4716 = vmatpush1.msra.mxu0 0.0
  %4717 = vmatprep.subr.mxu0 0.0
  %4718 = vmatpush1.msra.mxu0 0.0
  %4719 = vmatprep.subr.mxu0 0.0
  %4720 = vmatpush1.msra.mxu0 0.0
  %4721 = vmatprep.subr.mxu0 0.0
  %4722 = vmatpush1.msra.mxu0 0.0
  %4723 = vmatprep.subr.mxu0 0.0
  %4724 = vmatpush1.msra.mxu0 0.0
  %4725 = vmatprep.subr.mxu0 0.0
  %4726 = vmatpush1.msra.mxu0 0.0
  %4727 = vmatprep.subr.mxu0 0.0
  %4728 = vmatpush1.msra.mxu0 0.0
  %4729 = vmatprep.subr.mxu0 0.0
  %4730 = vmatpush1.msra.mxu0 0.0
  %4731 = vmatprep.mubr.f32.mxu0 0.0
  %4732 = vmatmul.mubr.f32.gmra.mrb[0].mxu0 %v4585
  %v4733 = vpop.f32.mrb[0].mxu0
  %v4734 = vadd.f32 0.0, %v4733
  %v4735 = vpop.f32.mrb[0].mxu0
  %v4736 = vadd.f32 0.0, %v4735
  %4737 = vmatprep.mubr.f32.mxu0 0.0
  %4738 = vmatmul.mubr.f32.gmra.mrb[0].mxu0 %v4588
  %v4739 = vpop.f32.mrb[0].mxu0
  %v4740 = vadd.f32 0.0, %v4739
  %v4741 = vpop.f32.mrb[0].mxu0
  %v4742 = vadd.f32 0.0, %v4741
  %4743 = vdwg.mxu0
  %v4744 = vadd.f32 %v4554, %v4657
  %v4745 = vadd.f32 %v4555, %v4659
  %v4746 = vadd.f32 %v4556, %v4734
  %v4747 = vadd.f32 %v4557, %v4736
  %v4748 = vadd.f32 %v4558, %v4663
  %v4749 = vadd.f32 %v4559, %v4665
  %v4750 = vadd.f32 %v4560, %v4740
  %v4751 = vadd.f32 %v4561, %v4742
  %v4752 = vld [vmem:[%s2] sm:$0xff]
  %v4753 = vld [vmem:[%s2 + $0x8] sm:$0xff]
  %4755 = vset.pattern.permute.xlu0 0
  %4756 = vperm.xlu0 %4755, %v4752
  %v4757 = vpop.permute.xlu0 %4756
  %4760 = vset.pattern.permute.xlu0 0
  %4761 = vperm.xlu0 %4760, %v4753
  %v4762 = vpop.permute.xlu0 %4761
  %v4764 = vadd.f32 %v4744, %v4757
  %v4765 = vadd.f32 %v4745, %v4757
  %v4766 = vadd.f32 %v4746, %v4757
  %v4767 = vadd.f32 %v4747, %v4757
  %v4768 = vadd.f32 %v4748, %v4762
  %v4769 = vadd.f32 %v4749, %v4762
  %v4770 = vadd.f32 %v4750, %v4762
  %v4771 = vadd.f32 %v4751, %v4762
  %v4772 = vld [vmem:[%s5] sm:$0xf]
  %v4774 = vlaneseq
  %v4775 = vshrl.u32 %v4774, 7
  %v4776 = vsub.s32 0, %v4775
  %v4777 = vrot.slane %v4772, %v4776
  %v4778 = vlaneseq
  %v4779 = vshrl.u32 %v4778, 7
  %v4780 = vsub.s32 1, %v4779
  %v4781 = vrot.slane %v4772, %v4780
  %v4782 = vlaneseq
  %v4783 = vshrl.u32 %v4782, 7
  %v4784 = vsub.s32 2, %v4783
  %v4785 = vrot.slane %v4772, %v4784
  %v4786 = vlaneseq
  %v4787 = vshrl.u32 %v4786, 7
  %v4788 = vsub.s32 3, %v4787
  %v4789 = vrot.slane %v4772, %v4788
  %v4794 = vmul.f32 %v4764, %v4777
  %v4795 = vmul.f32 %v4765, %v4781
  %v4796 = vmul.f32 %v4766, %v4785
  %v4797 = vmul.f32 %v4767, %v4789
  %v4798 = vmul.f32 %v4768, %v4777
  %v4799 = vmul.f32 %v4769, %v4781
  %v4800 = vmul.f32 %v4770, %v4785
  %v4801 = vmul.f32 %v4771, %v4789
  %4802 = vst [vmem:[#allocation2] sm:$0xff] 0.0
  %4803 = vst [vmem:[#allocation2 + $0x8] sm:$0xff] 0.0
  %4804 = vst [vmem:[#allocation2 + $0x10] sm:$0xff] 0.0
  %4805 = vst [vmem:[#allocation2 + $0x18] sm:$0xff] 0.0
  %4806 = vst [vmem:[#allocation2 + $0x20] sm:$0xff] 0.0
  %4807 = vst [vmem:[#allocation2 + $0x28] sm:$0xff] 0.0
  %4808 = vst [vmem:[#allocation2 + $0x30] sm:$0xff] 0.0
  %4809 = vst [vmem:[#allocation2 + $0x38] sm:$0xff] 0.0
  %4810 = vst [vmem:[#allocation2 + $0x40] sm:$0xff] 0.0
  %4811 = vst [vmem:[#allocation2 + $0x48] sm:$0xff] 0.0
  %4820 = vrot.lane.b32.xlu0 %v4794, 50
  %v4821 = vpop.permute.xlu0 %4820
  %4822 = vrot.lane.b32.xlu0 %v4795, 50
  %v4823 = vpop.permute.xlu0 %4822
  %4824 = vrot.lane.b32.xlu0 %v4796, 50
  %v4825 = vpop.permute.xlu0 %4824
  %4826 = vrot.lane.b32.xlu0 %v4797, 50
  %v4827 = vpop.permute.xlu0 %4826
  %4828 = vrot.lane.b32.xlu0 %v4798, 50
  %v4829 = vpop.permute.xlu0 %4828
  %4830 = vrot.lane.b32.xlu0 %v4799, 50
  %v4831 = vpop.permute.xlu0 %4830
  %4832 = vrot.lane.b32.xlu0 %v4800, 50
  %v4833 = vpop.permute.xlu0 %4832
  %4834 = vrot.lane.b32.xlu0 %v4801, 50
  %v4835 = vpop.permute.xlu0 %4834
  %vm4836 = vcmask 408576
  %v4837 = vsel %vm4836, %v4821, %v4823
  %v4838 = vsel %vm4836, %v4823, %v4825
  %v4839 = vsel %vm4836, %v4825, %v4827
  %v4840 = vsel %vm4836, %v4829, %v4831
  %v4841 = vsel %vm4836, %v4831, %v4833
  %v4842 = vsel %vm4836, %v4833, %v4835
  %vm4853 = vcmask 1047952
  %4854 = vst.msk [vmem:[#allocation2] sm:$0xff] %vm4853, %v4821
  %4855 = vst [vmem:[#allocation2 + $0x8] sm:$0xff] %v4837
  %4856 = vst [vmem:[#allocation2 + $0x10] sm:$0xff] %v4838
  %4857 = vst [vmem:[#allocation2 + $0x18] sm:$0xff] %v4839
  %4858 = vst.msk [vmem:[#allocation2 + $0x20] sm:$0xff] %vm4836, %v4827
  %4859 = vst.msk [vmem:[#allocation2 + $0x28] sm:$0xff] %vm4853, %v4829
  %4860 = vst [vmem:[#allocation2 + $0x30] sm:$0xff] %v4840
  %4861 = vst [vmem:[#allocation2 + $0x38] sm:$0xff] %v4841
  %4862 = vst [vmem:[#allocation2 + $0x40] sm:$0xff] %v4842
  %4863 = vst.msk [vmem:[#allocation2 + $0x48] sm:$0xff] %vm4836, %v4835
  %v4864 = vld [vmem:[%s3] sm:$0xff]
  %v4865 = vld [vmem:[#allocation2] sm:$0xff]
  %v4866 = vld [vmem:[#allocation2 + $0x8] sm:$0xff]
  %v4867 = vld [vmem:[#allocation2 + $0x10] sm:$0xff]
  %v4868 = vld [vmem:[#allocation2 + $0x18] sm:$0xff]
  %v4869 = vld [vmem:[#allocation2 + $0x28] sm:$0xff]
  %v4870 = vld [vmem:[#allocation2 + $0x30] sm:$0xff]
  %v4871 = vld [vmem:[#allocation2 + $0x38] sm:$0xff]
  %v4872 = vld [vmem:[#allocation2 + $0x40] sm:$0xff]
  %s4873 = scalar_lea.vmem %s3, 8
  %v4874 = vld [vmem:[%s4873] sm:$0xff]
  %v4875 = vld [vmem:[#allocation2] sm:$0xff]
  %v4876 = vld [vmem:[#allocation2 + $0x8] sm:$0xff]
  %v4877 = vld [vmem:[#allocation2 + $0x10] sm:$0xff]
  %v4878 = vld [vmem:[#allocation2 + $0x18] sm:$0xff]
  %v4879 = vld [vmem:[#allocation2 + $0x20] sm:$0xff]
  %v4880 = vld [vmem:[#allocation2 + $0x28] sm:$0xff]
  %v4881 = vld [vmem:[#allocation2 + $0x30] sm:$0xff]
  %v4882 = vld [vmem:[#allocation2 + $0x38] sm:$0xff]
  %v4883 = vld [vmem:[#allocation2 + $0x40] sm:$0xff]
  %v4884 = vld [vmem:[#allocation2 + $0x48] sm:$0xff]
  %4895 = vrot.lane.b32.xlu0 %v4875, 127
  %v4896 = vpop.permute.xlu0 %4895
  %4897 = vrot.lane.b32.xlu0 %v4876, 127
  %v4898 = vpop.permute.xlu0 %4897
  %4899 = vrot.lane.b32.xlu0 %v4877, 127
  %v4900 = vpop.permute.xlu0 %4899
  %4901 = vrot.lane.b32.xlu0 %v4878, 127
  %v4902 = vpop.permute.xlu0 %4901
  %4903 = vrot.lane.b32.xlu0 %v4879, 127
  %v4904 = vpop.permute.xlu0 %4903
  %4905 = vrot.lane.b32.xlu0 %v4880, 127
  %v4906 = vpop.permute.xlu0 %4905
  %4907 = vrot.lane.b32.xlu0 %v4881, 127
  %v4908 = vpop.permute.xlu0 %4907
  %4909 = vrot.lane.b32.xlu0 %v4882, 127
  %v4910 = vpop.permute.xlu0 %4909
  %4911 = vrot.lane.b32.xlu0 %v4883, 127
  %v4912 = vpop.permute.xlu0 %4911
  %4913 = vrot.lane.b32.xlu0 %v4884, 127
  %v4914 = vpop.permute.xlu0 %4913
  %v4915 = vsel %vm52, %v4896, %v4898
  %v4916 = vsel %vm52, %v4898, %v4900
  %v4917 = vsel %vm52, %v4900, %v4902
  %v4918 = vsel %vm52, %v4902, %v4904
  %v4919 = vsel %vm52, %v4906, %v4908
  %v4920 = vsel %vm52, %v4908, %v4910
  %v4921 = vsel %vm52, %v4910, %v4912
  %v4922 = vsel %vm52, %v4912, %v4914
  %vm4931 = vcmask 130048
  %v4933 = vsel %vm4931, %v4874, 0
  %4935 = vmatprep.subr.mxu0 %v4916
  %4936 = vmatpush1.msra.mxu0 %v4915
  %4937 = vmatprep.subr.mxu0 %v4920
  %4938 = vmatpush1.msra.mxu0 %v4919
  %4939 = vmatprep.subr.mxu0 0.0
  %4940 = vmatpush1.msra.mxu0 0.0
  %4941 = vmatprep.subr.mxu0 0.0
  %4942 = vmatpush1.msra.mxu0 0.0
  %4943 = vmatprep.subr.mxu0 0.0
  %4944 = vmatpush1.msra.mxu0 0.0
  %4945 = vmatprep.subr.mxu0 0.0
  %4946 = vmatpush1.msra.mxu0 0.0
  %4947 = vmatprep.subr.mxu0 0.0
  %4948 = vmatpush1.msra.mxu0 0.0
  %4949 = vmatprep.subr.mxu0 0.0
  %4950 = vmatpush1.msra.mxu0 0.0
  %4951 = vmatprep.subr.mxu0 0.0
  %4952 = vmatpush1.msra.mxu0 0.0
  %4953 = vmatprep.subr.mxu0 0.0
  %4954 = vmatpush1.msra.mxu0 0.0
  %4955 = vmatprep.subr.mxu0 0.0
  %4956 = vmatpush1.msra.mxu0 0.0
  %4957 = vmatprep.subr.mxu0 0.0
  %4958 = vmatpush1.msra.mxu0 0.0
  %4959 = vmatprep.subr.mxu0 0.0
  %4960 = vmatpush1.msra.mxu0 0.0
  %4961 = vmatprep.subr.mxu0 0.0
  %4962 = vmatpush1.msra.mxu0 0.0
  %4963 = vmatprep.subr.mxu0 0.0
  %4964 = vmatpush1.msra.mxu0 0.0
  %4965 = vmatprep.subr.mxu0 0.0
  %4966 = vmatpush1.msra.mxu0 0.0
  %4967 = vmatprep.subr.mxu0 0.0
  %4968 = vmatpush1.msra.mxu0 0.0
  %4969 = vmatprep.subr.mxu0 0.0
  %4970 = vmatpush1.msra.mxu0 0.0
  %4971 = vmatprep.subr.mxu0 0.0
  %4972 = vmatpush1.msra.mxu0 0.0
  %4973 = vmatprep.subr.mxu0 0.0
  %4974 = vmatpush1.msra.mxu0 0.0
  %4975 = vmatprep.subr.mxu0 0.0
  %4976 = vmatpush1.msra.mxu0 0.0
  %4977 = vmatprep.subr.mxu0 0.0
  %4978 = vmatpush1.msra.mxu0 0.0
  %4979 = vmatprep.subr.mxu0 0.0
  %4980 = vmatpush1.msra.mxu0 0.0
  %4981 = vmatprep.subr.mxu0 0.0
  %4982 = vmatpush1.msra.mxu0 0.0
  %4983 = vmatprep.subr.mxu0 0.0
  %4984 = vmatpush1.msra.mxu0 0.0
  %4985 = vmatprep.subr.mxu0 0.0
  %4986 = vmatpush1.msra.mxu0 0.0
  %4987 = vmatprep.subr.mxu0 0.0
  %4988 = vmatpush1.msra.mxu0 0.0
  %4989 = vmatprep.subr.mxu0 0.0
  %4990 = vmatpush1.msra.mxu0 0.0
  %4991 = vmatprep.subr.mxu0 0.0
  %4992 = vmatpush1.msra.mxu0 0.0
  %4993 = vmatprep.subr.mxu0 0.0
  %4994 = vmatpush1.msra.mxu0 0.0
  %4995 = vmatprep.subr.mxu0 0.0
  %4996 = vmatpush1.msra.mxu0 0.0
  %4997 = vmatprep.subr.mxu0 0.0
  %4998 = vmatpush1.msra.mxu0 0.0
  %4999 = vmatprep.mubr.f32.mxu0 0.0
  %5000 = vmatmul.mubr.f32.gmra.mrb[0].mxu0 %v4933
  %v5001 = vpop.f32.mrb[0].mxu0
  %v5002 = vadd.f32 0.0, %v5001
  %v5003 = vpop.f32.mrb[0].mxu0
  %v5004 = vadd.f32 0.0, %v5003
  %5005 = vdwg.mxu0
  %5006 = vmatprep.subr.mxu0 %v4918
  %5007 = vmatpush1.msra.mxu0 %v4917
  %5008 = vmatprep.subr.mxu0 %v4922
  %5009 = vmatpush1.msra.mxu0 %v4921
  %5010 = vmatprep.subr.mxu0 0.0
  %5011 = vmatpush1.msra.mxu0 0.0
  %5012 = vmatprep.subr.mxu0 0.0
  %5013 = vmatpush1.msra.mxu0 0.0
  %5014 = vmatprep.subr.mxu0 0.0
  %5015 = vmatpush1.msra.mxu0 0.0
  %5016 = vmatprep.subr.mxu0 0.0
  %5017 = vmatpush1.msra.mxu0 0.0
  %5018 = vmatprep.subr.mxu0 0.0
  %5019 = vmatpush1.msra.mxu0 0.0
  %5020 = vmatprep.subr.mxu0 0.0
  %5021 = vmatpush1.msra.mxu0 0.0
  %5022 = vmatprep.subr.mxu0 0.0
  %5023 = vmatpush1.msra.mxu0 0.0
  %5024 = vmatprep.subr.mxu0 0.0
  %5025 = vmatpush1.msra.mxu0 0.0
  %5026 = vmatprep.subr.mxu0 0.0
  %5027 = vmatpush1.msra.mxu0 0.0
  %5028 = vmatprep.subr.mxu0 0.0
  %5029 = vmatpush1.msra.mxu0 0.0
  %5030 = vmatprep.subr.mxu0 0.0
  %5031 = vmatpush1.msra.mxu0 0.0
  %5032 = vmatprep.subr.mxu0 0.0
  %5033 = vmatpush1.msra.mxu0 0.0
  %5034 = vmatprep.subr.mxu0 0.0
  %5035 = vmatpush1.msra.mxu0 0.0
  %5036 = vmatprep.subr.mxu0 0.0
  %5037 = vmatpush1.msra.mxu0 0.0
  %5038 = vmatprep.subr.mxu0 0.0
  %5039 = vmatpush1.msra.mxu0 0.0
  %5040 = vmatprep.subr.mxu0 0.0
  %5041 = vmatpush1.msra.mxu0 0.0
  %5042 = vmatprep.subr.mxu0 0.0
  %5043 = vmatpush1.msra.mxu0 0.0
  %5044 = vmatprep.subr.mxu0 0.0
  %5045 = vmatpush1.msra.mxu0 0.0
  %5046 = vmatprep.subr.mxu0 0.0
  %5047 = vmatpush1.msra.mxu0 0.0
  %5048 = vmatprep.subr.mxu0 0.0
  %5049 = vmatpush1.msra.mxu0 0.0
  %5050 = vmatprep.subr.mxu0 0.0
  %5051 = vmatpush1.msra.mxu0 0.0
  %5052 = vmatprep.subr.mxu0 0.0
  %5053 = vmatpush1.msra.mxu0 0.0
  %5054 = vmatprep.subr.mxu0 0.0
  %5055 = vmatpush1.msra.mxu0 0.0
  %5056 = vmatprep.subr.mxu0 0.0
  %5057 = vmatpush1.msra.mxu0 0.0
  %5058 = vmatprep.subr.mxu0 0.0
  %5059 = vmatpush1.msra.mxu0 0.0
  %5060 = vmatprep.subr.mxu0 0.0
  %5061 = vmatpush1.msra.mxu0 0.0
  %5062 = vmatprep.subr.mxu0 0.0
  %5063 = vmatpush1.msra.mxu0 0.0
  %5064 = vmatprep.subr.mxu0 0.0
  %5065 = vmatpush1.msra.mxu0 0.0
  %5066 = vmatprep.subr.mxu0 0.0
  %5067 = vmatpush1.msra.mxu0 0.0
  %5068 = vmatprep.subr.mxu0 0.0
  %5069 = vmatpush1.msra.mxu0 0.0
  %5070 = vmatprep.mubr.f32.mxu0 0.0
  %5071 = vmatmul.mubr.f32.gmra.mrb[0].mxu0 %v4933
  %v5072 = vpop.f32.mrb[0].mxu0
  %v5073 = vadd.f32 0.0, %v5072
  %v5074 = vpop.f32.mrb[0].mxu0
  %v5075 = vadd.f32 0.0, %v5074
  %5076 = vdwg.mxu0
  %v5078 = vsel %vm4931, %v4864, 0
  %5080 = vmatprep.subr.mxu0 %v4866
  %5081 = vmatpush1.msra.mxu0 %v4865
  %5082 = vmatprep.subr.mxu0 %v4870
  %5083 = vmatpush1.msra.mxu0 %v4869
  %5084 = vmatprep.subr.mxu0 0.0
  %5085 = vmatpush1.msra.mxu0 0.0
  %5086 = vmatprep.subr.mxu0 0.0
  %5087 = vmatpush1.msra.mxu0 0.0
  %5088 = vmatprep.subr.mxu0 0.0
  %5089 = vmatpush1.msra.mxu0 0.0
  %5090 = vmatprep.subr.mxu0 0.0
  %5091 = vmatpush1.msra.mxu0 0.0
  %5092 = vmatprep.subr.mxu0 0.0
  %5093 = vmatpush1.msra.mxu0 0.0
  %5094 = vmatprep.subr.mxu0 0.0
  %5095 = vmatpush1.msra.mxu0 0.0
  %5096 = vmatprep.subr.mxu0 0.0
  %5097 = vmatpush1.msra.mxu0 0.0
  %5098 = vmatprep.subr.mxu0 0.0
  %5099 = vmatpush1.msra.mxu0 0.0
  %5100 = vmatprep.subr.mxu0 0.0
  %5101 = vmatpush1.msra.mxu0 0.0
  %5102 = vmatprep.subr.mxu0 0.0
  %5103 = vmatpush1.msra.mxu0 0.0
  %5104 = vmatprep.subr.mxu0 0.0
  %5105 = vmatpush1.msra.mxu0 0.0
  %5106 = vmatprep.subr.mxu0 0.0
  %5107 = vmatpush1.msra.mxu0 0.0
  %5108 = vmatprep.subr.mxu0 0.0
  %5109 = vmatpush1.msra.mxu0 0.0
  %5110 = vmatprep.subr.mxu0 0.0
  %5111 = vmatpush1.msra.mxu0 0.0
  %5112 = vmatprep.subr.mxu0 0.0
  %5113 = vmatpush1.msra.mxu0 0.0
  %5114 = vmatprep.subr.mxu0 0.0
  %5115 = vmatpush1.msra.mxu0 0.0
  %5116 = vmatprep.subr.mxu0 0.0
  %5117 = vmatpush1.msra.mxu0 0.0
  %5118 = vmatprep.subr.mxu0 0.0
  %5119 = vmatpush1.msra.mxu0 0.0
  %5120 = vmatprep.subr.mxu0 0.0
  %5121 = vmatpush1.msra.mxu0 0.0
  %5122 = vmatprep.subr.mxu0 0.0
  %5123 = vmatpush1.msra.mxu0 0.0
  %5124 = vmatprep.subr.mxu0 0.0
  %5125 = vmatpush1.msra.mxu0 0.0
  %5126 = vmatprep.subr.mxu0 0.0
  %5127 = vmatpush1.msra.mxu0 0.0
  %5128 = vmatprep.subr.mxu0 0.0
  %5129 = vmatpush1.msra.mxu0 0.0
  %5130 = vmatprep.subr.mxu0 0.0
  %5131 = vmatpush1.msra.mxu0 0.0
  %5132 = vmatprep.subr.mxu0 0.0
  %5133 = vmatpush1.msra.mxu0 0.0
  %5134 = vmatprep.subr.mxu0 0.0
  %5135 = vmatpush1.msra.mxu0 0.0
  %5136 = vmatprep.subr.mxu0 0.0
  %5137 = vmatpush1.msra.mxu0 0.0
  %5138 = vmatprep.subr.mxu0 0.0
  %5139 = vmatpush1.msra.mxu0 0.0
  %5140 = vmatprep.subr.mxu0 0.0
  %5141 = vmatpush1.msra.mxu0 0.0
  %5142 = vmatprep.subr.mxu0 0.0
  %5143 = vmatpush1.msra.mxu0 0.0
  %5144 = vmatprep.mubr.f32.mxu0 0.0
  %5145 = vmatmul.mubr.f32.gmra.mrb[0].mxu0 %v5078
  %v5146 = vpop.f32.mrb[0].mxu0
  %v5147 = vadd.f32 %v5002, %v5146
  %v5148 = vpop.f32.mrb[0].mxu0
  %v5149 = vadd.f32 %v5004, %v5148
  %5150 = vdwg.mxu0
  %5151 = vmatprep.subr.mxu0 %v4868
  %5152 = vmatpush1.msra.mxu0 %v4867
  %5153 = vmatprep.subr.mxu0 %v4872
  %5154 = vmatpush1.msra.mxu0 %v4871
  %5155 = vmatprep.subr.mxu0 0.0
  %5156 = vmatpush1.msra.mxu0 0.0
  %5157 = vmatprep.subr.mxu0 0.0
  %5158 = vmatpush1.msra.mxu0 0.0
  %5159 = vmatprep.subr.mxu0 0.0
  %5160 = vmatpush1.msra.mxu0 0.0
  %5161 = vmatprep.subr.mxu0 0.0
  %5162 = vmatpush1.msra.mxu0 0.0
  %5163 = vmatprep.subr.mxu0 0.0
  %5164 = vmatpush1.msra.mxu0 0.0
  %5165 = vmatprep.subr.mxu0 0.0
  %5166 = vmatpush1.msra.mxu0 0.0
  %5167 = vmatprep.subr.mxu0 0.0
  %5168 = vmatpush1.msra.mxu0 0.0
  %5169 = vmatprep.subr.mxu0 0.0
  %5170 = vmatpush1.msra.mxu0 0.0
  %5171 = vmatprep.subr.mxu0 0.0
  %5172 = vmatpush1.msra.mxu0 0.0
  %5173 = vmatprep.subr.mxu0 0.0
  %5174 = vmatpush1.msra.mxu0 0.0
  %5175 = vmatprep.subr.mxu0 0.0
  %5176 = vmatpush1.msra.mxu0 0.0
  %5177 = vmatprep.subr.mxu0 0.0
  %5178 = vmatpush1.msra.mxu0 0.0
  %5179 = vmatprep.subr.mxu0 0.0
  %5180 = vmatpush1.msra.mxu0 0.0
  %5181 = vmatprep.subr.mxu0 0.0
  %5182 = vmatpush1.msra.mxu0 0.0
  %5183 = vmatprep.subr.mxu0 0.0
  %5184 = vmatpush1.msra.mxu0 0.0
  %5185 = vmatprep.subr.mxu0 0.0
  %5186 = vmatpush1.msra.mxu0 0.0
  %5187 = vmatprep.subr.mxu0 0.0
  %5188 = vmatpush1.msra.mxu0 0.0
  %5189 = vmatprep.subr.mxu0 0.0
  %5190 = vmatpush1.msra.mxu0 0.0
  %5191 = vmatprep.subr.mxu0 0.0
  %5192 = vmatpush1.msra.mxu0 0.0
  %5193 = vmatprep.subr.mxu0 0.0
  %5194 = vmatpush1.msra.mxu0 0.0
  %5195 = vmatprep.subr.mxu0 0.0
  %5196 = vmatpush1.msra.mxu0 0.0
  %5197 = vmatprep.subr.mxu0 0.0
  %5198 = vmatpush1.msra.mxu0 0.0
  %5199 = vmatprep.subr.mxu0 0.0
  %5200 = vmatpush1.msra.mxu0 0.0
  %5201 = vmatprep.subr.mxu0 0.0
  %5202 = vmatpush1.msra.mxu0 0.0
  %5203 = vmatprep.subr.mxu0 0.0
  %5204 = vmatpush1.msra.mxu0 0.0
  %5205 = vmatprep.subr.mxu0 0.0
  %5206 = vmatpush1.msra.mxu0 0.0
  %5207 = vmatprep.subr.mxu0 0.0
  %5208 = vmatpush1.msra.mxu0 0.0
  %5209 = vmatprep.subr.mxu0 0.0
  %5210 = vmatpush1.msra.mxu0 0.0
  %5211 = vmatprep.subr.mxu0 0.0
  %5212 = vmatpush1.msra.mxu0 0.0
  %5213 = vmatprep.subr.mxu0 0.0
  %5214 = vmatpush1.msra.mxu0 0.0
  %5215 = vmatprep.mubr.f32.mxu0 0.0
  %5216 = vmatmul.mubr.f32.gmra.mrb[0].mxu0 %v5078
  %v5217 = vpop.f32.mrb[0].mxu0
  %v5218 = vadd.f32 %v5073, %v5217
  %v5219 = vpop.f32.mrb[0].mxu0
  %v5220 = vadd.f32 %v5075, %v5219
  %5221 = vdwg.mxu0
  %s5222 = scalar_lea.vmem %s3, 16
  %v5223 = vld [vmem:[%s5222] sm:$0xff]
  %5224 = vrot.lane.b32.xlu0 %v4875, 126
  %v5225 = vpop.permute.xlu0 %5224
  %5226 = vrot.lane.b32.xlu0 %v4876, 126
  %v5227 = vpop.permute.xlu0 %5226
  %5228 = vrot.lane.b32.xlu0 %v4877, 126
  %v5229 = vpop.permute.xlu0 %5228
  %5230 = vrot.lane.b32.xlu0 %v4878, 126
  %v5231 = vpop.permute.xlu0 %5230
  %5232 = vrot.lane.b32.xlu0 %v4879, 126
  %v5233 = vpop.permute.xlu0 %5232
  %5234 = vrot.lane.b32.xlu0 %v4880, 126
  %v5235 = vpop.permute.xlu0 %5234
  %5236 = vrot.lane.b32.xlu0 %v4881, 126
  %v5237 = vpop.permute.xlu0 %5236
  %5238 = vrot.lane.b32.xlu0 %v4882, 126
  %v5239 = vpop.permute.xlu0 %5238
  %5240 = vrot.lane.b32.xlu0 %v4883, 126
  %v5241 = vpop.permute.xlu0 %5240
  %5242 = vrot.lane.b32.xlu0 %v4884, 126
  %v5243 = vpop.permute.xlu0 %5242
  %v5244 = vsel %vm395, %v5225, %v5227
  %v5245 = vsel %vm395, %v5227, %v5229
  %v5246 = vsel %vm395, %v5229, %v5231
  %v5247 = vsel %vm395, %v5231, %v5233
  %v5248 = vsel %vm395, %v5235, %v5237
  %v5249 = vsel %vm395, %v5237, %v5239
  %v5250 = vsel %vm395, %v5239, %v5241
  %v5251 = vsel %vm395, %v5241, %v5243
  %v5261 = vsel %vm4931, %v5223, 0
  %5263 = vmatprep.subr.mxu0 %v5245
  %5264 = vmatpush1.msra.mxu0 %v5244
  %5265 = vmatprep.subr.mxu0 %v5249
  %5266 = vmatpush1.msra.mxu0 %v5248
  %5267 = vmatprep.subr.mxu0 0.0
  %5268 = vmatpush1.msra.mxu0 0.0
  %5269 = vmatprep.subr.mxu0 0.0
  %5270 = vmatpush1.msra.mxu0 0.0
  %5271 = vmatprep.subr.mxu0 0.0
  %5272 = vmatpush1.msra.mxu0 0.0
  %5273 = vmatprep.subr.mxu0 0.0
  %5274 = vmatpush1.msra.mxu0 0.0
  %5275 = vmatprep.subr.mxu0 0.0
  %5276 = vmatpush1.msra.mxu0 0.0
  %5277 = vmatprep.subr.mxu0 0.0
  %5278 = vmatpush1.msra.mxu0 0.0
  %5279 = vmatprep.subr.mxu0 0.0
  %5280 = vmatpush1.msra.mxu0 0.0
  %5281 = vmatprep.subr.mxu0 0.0
  %5282 = vmatpush1.msra.mxu0 0.0
  %5283 = vmatprep.subr.mxu0 0.0
  %5284 = vmatpush1.msra.mxu0 0.0
  %5285 = vmatprep.subr.mxu0 0.0
  %5286 = vmatpush1.msra.mxu0 0.0
  %5287 = vmatprep.subr.mxu0 0.0
  %5288 = vmatpush1.msra.mxu0 0.0
  %5289 = vmatprep.subr.mxu0 0.0
  %5290 = vmatpush1.msra.mxu0 0.0
  %5291 = vmatprep.subr.mxu0 0.0
  %5292 = vmatpush1.msra.mxu0 0.0
  %5293 = vmatprep.subr.mxu0 0.0
  %5294 = vmatpush1.msra.mxu0 0.0
  %5295 = vmatprep.subr.mxu0 0.0
  %5296 = vmatpush1.msra.mxu0 0.0
  %5297 = vmatprep.subr.mxu0 0.0
  %5298 = vmatpush1.msra.mxu0 0.0
  %5299 = vmatprep.subr.mxu0 0.0
  %5300 = vmatpush1.msra.mxu0 0.0
  %5301 = vmatprep.subr.mxu0 0.0
  %5302 = vmatpush1.msra.mxu0 0.0
  %5303 = vmatprep.subr.mxu0 0.0
  %5304 = vmatpush1.msra.mxu0 0.0
  %5305 = vmatprep.subr.mxu0 0.0
  %5306 = vmatpush1.msra.mxu0 0.0
  %5307 = vmatprep.subr.mxu0 0.0
  %5308 = vmatpush1.msra.mxu0 0.0
  %5309 = vmatprep.subr.mxu0 0.0
  %5310 = vmatpush1.msra.mxu0 0.0
  %5311 = vmatprep.subr.mxu0 0.0
  %5312 = vmatpush1.msra.mxu0 0.0
  %5313 = vmatprep.subr.mxu0 0.0
  %5314 = vmatpush1.msra.mxu0 0.0
  %5315 = vmatprep.subr.mxu0 0.0
  %5316 = vmatpush1.msra.mxu0 0.0
  %5317 = vmatprep.subr.mxu0 0.0
  %5318 = vmatpush1.msra.mxu0 0.0
  %5319 = vmatprep.subr.mxu0 0.0
  %5320 = vmatpush1.msra.mxu0 0.0
  %5321 = vmatprep.subr.mxu0 0.0
  %5322 = vmatpush1.msra.mxu0 0.0
  %5323 = vmatprep.subr.mxu0 0.0
  %5324 = vmatpush1.msra.mxu0 0.0
  %5325 = vmatprep.subr.mxu0 0.0
  %5326 = vmatpush1.msra.mxu0 0.0
  %5327 = vmatprep.mubr.f32.mxu0 0.0
  %5328 = vmatmul.mubr.f32.gmra.mrb[0].mxu0 %v5261
  %v5329 = vpop.f32.mrb[0].mxu0
  %v5330 = vadd.f32 0.0, %v5329
  %v5331 = vpop.f32.mrb[0].mxu0
  %v5332 = vadd.f32 0.0, %v5331
  %5333 = vdwg.mxu0
  %5334 = vmatprep.subr.mxu0 %v5247
  %5335 = vmatpush1.msra.mxu0 %v5246
  %5336 = vmatprep.subr.mxu0 %v5251
  %5337 = vmatpush1.msra.mxu0 %v5250
  %5338 = vmatprep.subr.mxu0 0.0
  %5339 = vmatpush1.msra.mxu0 0.0
  %5340 = vmatprep.subr.mxu0 0.0
  %5341 = vmatpush1.msra.mxu0 0.0
  %5342 = vmatprep.subr.mxu0 0.0
  %5343 = vmatpush1.msra.mxu0 0.0
  %5344 = vmatprep.subr.mxu0 0.0
  %5345 = vmatpush1.msra.mxu0 0.0
  %5346 = vmatprep.subr.mxu0 0.0
  %5347 = vmatpush1.msra.mxu0 0.0
  %5348 = vmatprep.subr.mxu0 0.0
  %5349 = vmatpush1.msra.mxu0 0.0
  %5350 = vmatprep.subr.mxu0 0.0
  %5351 = vmatpush1.msra.mxu0 0.0
  %5352 = vmatprep.subr.mxu0 0.0
  %5353 = vmatpush1.msra.mxu0 0.0
  %5354 = vmatprep.subr.mxu0 0.0
  %5355 = vmatpush1.msra.mxu0 0.0
  %5356 = vmatprep.subr.mxu0 0.0
  %5357 = vmatpush1.msra.mxu0 0.0
  %5358 = vmatprep.subr.mxu0 0.0
  %5359 = vmatpush1.msra.mxu0 0.0
  %5360 = vmatprep.subr.mxu0 0.0
  %5361 = vmatpush1.msra.mxu0 0.0
  %5362 = vmatprep.subr.mxu0 0.0
  %5363 = vmatpush1.msra.mxu0 0.0
  %5364 = vmatprep.subr.mxu0 0.0
  %5365 = vmatpush1.msra.mxu0 0.0
  %5366 = vmatprep.subr.mxu0 0.0
  %5367 = vmatpush1.msra.mxu0 0.0
  %5368 = vmatprep.subr.mxu0 0.0
  %5369 = vmatpush1.msra.mxu0 0.0
  %5370 = vmatprep.subr.mxu0 0.0
  %5371 = vmatpush1.msra.mxu0 0.0
  %5372 = vmatprep.subr.mxu0 0.0
  %5373 = vmatpush1.msra.mxu0 0.0
  %5374 = vmatprep.subr.mxu0 0.0
  %5375 = vmatpush1.msra.mxu0 0.0
  %5376 = vmatprep.subr.mxu0 0.0
  %5377 = vmatpush1.msra.mxu0 0.0
  %5378 = vmatprep.subr.mxu0 0.0
  %5379 = vmatpush1.msra.mxu0 0.0
  %5380 = vmatprep.subr.mxu0 0.0
  %5381 = vmatpush1.msra.mxu0 0.0
  %5382 = vmatprep.subr.mxu0 0.0
  %5383 = vmatpush1.msra.mxu0 0.0
  %5384 = vmatprep.subr.mxu0 0.0
  %5385 = vmatpush1.msra.mxu0 0.0
  %5386 = vmatprep.subr.mxu0 0.0
  %5387 = vmatpush1.msra.mxu0 0.0
  %5388 = vmatprep.subr.mxu0 0.0
  %5389 = vmatpush1.msra.mxu0 0.0
  %5390 = vmatprep.subr.mxu0 0.0
  %5391 = vmatpush1.msra.mxu0 0.0
  %5392 = vmatprep.subr.mxu0 0.0
  %5393 = vmatpush1.msra.mxu0 0.0
  %5394 = vmatprep.subr.mxu0 0.0
  %5395 = vmatpush1.msra.mxu0 0.0
  %5396 = vmatprep.subr.mxu0 0.0
  %5397 = vmatpush1.msra.mxu0 0.0
  %5398 = vmatprep.mubr.f32.mxu0 0.0
  %5399 = vmatmul.mubr.f32.gmra.mrb[0].mxu0 %v5261
  %v5400 = vpop.f32.mrb[0].mxu0
  %v5401 = vadd.f32 0.0, %v5400
  %v5402 = vpop.f32.mrb[0].mxu0
  %v5403 = vadd.f32 0.0, %v5402
  %5404 = vdwg.mxu0
  %v5405 = vadd.f32 %v5147, %v5330
  %v5406 = vadd.f32 %v5149, %v5332
  %v5407 = vadd.f32 %v5218, %v5401
  %v5408 = vadd.f32 %v5220, %v5403
  %s5409 = scalar_lea.vmem %s3, 24
  %v5410 = vld [vmem:[%s5409] sm:$0xff]
  %5411 = vrot.lane.b32.xlu0 %v4875, 125
  %v5412 = vpop.permute.xlu0 %5411
  %5413 = vrot.lane.b32.xlu0 %v4876, 125
  %v5414 = vpop.permute.xlu0 %5413
  %5415 = vrot.lane.b32.xlu0 %v4877, 125
  %v5416 = vpop.permute.xlu0 %5415
  %5417 = vrot.lane.b32.xlu0 %v4878, 125
  %v5418 = vpop.permute.xlu0 %5417
  %5419 = vrot.lane.b32.xlu0 %v4879, 125
  %v5420 = vpop.permute.xlu0 %5419
  %5421 = vrot.lane.b32.xlu0 %v4880, 125
  %v5422 = vpop.permute.xlu0 %5421
  %5423 = vrot.lane.b32.xlu0 %v4881, 125
  %v5424 = vpop.permute.xlu0 %5423
  %5425 = vrot.lane.b32.xlu0 %v4882, 125
  %v5426 = vpop.permute.xlu0 %5425
  %5427 = vrot.lane.b32.xlu0 %v4883, 125
  %v5428 = vpop.permute.xlu0 %5427
  %5429 = vrot.lane.b32.xlu0 %v4884, 125
  %v5430 = vpop.permute.xlu0 %5429
  %v5431 = vsel %vm585, %v5412, %v5414
  %v5432 = vsel %vm585, %v5414, %v5416
  %v5433 = vsel %vm585, %v5416, %v5418
  %v5434 = vsel %vm585, %v5418, %v5420
  %v5435 = vsel %vm585, %v5422, %v5424
  %v5436 = vsel %vm585, %v5424, %v5426
  %v5437 = vsel %vm585, %v5426, %v5428
  %v5438 = vsel %vm585, %v5428, %v5430
  %v5448 = vsel %vm4931, %v5410, 0
  %5450 = vmatprep.subr.mxu0 %v5432
  %5451 = vmatpush1.msra.mxu0 %v5431
  %5452 = vmatprep.subr.mxu0 %v5436
  %5453 = vmatpush1.msra.mxu0 %v5435
  %5454 = vmatprep.subr.mxu0 0.0
  %5455 = vmatpush1.msra.mxu0 0.0
  %5456 = vmatprep.subr.mxu0 0.0
  %5457 = vmatpush1.msra.mxu0 0.0
  %5458 = vmatprep.subr.mxu0 0.0
  %5459 = vmatpush1.msra.mxu0 0.0
  %5460 = vmatprep.subr.mxu0 0.0
  %5461 = vmatpush1.msra.mxu0 0.0
  %5462 = vmatprep.subr.mxu0 0.0
  %5463 = vmatpush1.msra.mxu0 0.0
  %5464 = vmatprep.subr.mxu0 0.0
  %5465 = vmatpush1.msra.mxu0 0.0
  %5466 = vmatprep.subr.mxu0 0.0
  %5467 = vmatpush1.msra.mxu0 0.0
  %5468 = vmatprep.subr.mxu0 0.0
  %5469 = vmatpush1.msra.mxu0 0.0
  %5470 = vmatprep.subr.mxu0 0.0
  %5471 = vmatpush1.msra.mxu0 0.0
  %5472 = vmatprep.subr.mxu0 0.0
  %5473 = vmatpush1.msra.mxu0 0.0
  %5474 = vmatprep.subr.mxu0 0.0
  %5475 = vmatpush1.msra.mxu0 0.0
  %5476 = vmatprep.subr.mxu0 0.0
  %5477 = vmatpush1.msra.mxu0 0.0
  %5478 = vmatprep.subr.mxu0 0.0
  %5479 = vmatpush1.msra.mxu0 0.0
  %5480 = vmatprep.subr.mxu0 0.0
  %5481 = vmatpush1.msra.mxu0 0.0
  %5482 = vmatprep.subr.mxu0 0.0
  %5483 = vmatpush1.msra.mxu0 0.0
  %5484 = vmatprep.subr.mxu0 0.0
  %5485 = vmatpush1.msra.mxu0 0.0
  %5486 = vmatprep.subr.mxu0 0.0
  %5487 = vmatpush1.msra.mxu0 0.0
  %5488 = vmatprep.subr.mxu0 0.0
  %5489 = vmatpush1.msra.mxu0 0.0
  %5490 = vmatprep.subr.mxu0 0.0
  %5491 = vmatpush1.msra.mxu0 0.0
  %5492 = vmatprep.subr.mxu0 0.0
  %5493 = vmatpush1.msra.mxu0 0.0
  %5494 = vmatprep.subr.mxu0 0.0
  %5495 = vmatpush1.msra.mxu0 0.0
  %5496 = vmatprep.subr.mxu0 0.0
  %5497 = vmatpush1.msra.mxu0 0.0
  %5498 = vmatprep.subr.mxu0 0.0
  %5499 = vmatpush1.msra.mxu0 0.0
  %5500 = vmatprep.subr.mxu0 0.0
  %5501 = vmatpush1.msra.mxu0 0.0
  %5502 = vmatprep.subr.mxu0 0.0
  %5503 = vmatpush1.msra.mxu0 0.0
  %5504 = vmatprep.subr.mxu0 0.0
  %5505 = vmatpush1.msra.mxu0 0.0
  %5506 = vmatprep.subr.mxu0 0.0
  %5507 = vmatpush1.msra.mxu0 0.0
  %5508 = vmatprep.subr.mxu0 0.0
  %5509 = vmatpush1.msra.mxu0 0.0
  %5510 = vmatprep.subr.mxu0 0.0
  %5511 = vmatpush1.msra.mxu0 0.0
  %5512 = vmatprep.subr.mxu0 0.0
  %5513 = vmatpush1.msra.mxu0 0.0
  %5514 = vmatprep.mubr.f32.mxu0 0.0
  %5515 = vmatmul.mubr.f32.gmra.mrb[0].mxu0 %v5448
  %v5516 = vpop.f32.mrb[0].mxu0
  %v5517 = vadd.f32 0.0, %v5516
  %v5518 = vpop.f32.mrb[0].mxu0
  %v5519 = vadd.f32 0.0, %v5518
  %5520 = vdwg.mxu0
  %5521 = vmatprep.subr.mxu0 %v5434
  %5522 = vmatpush1.msra.mxu0 %v5433
  %5523 = vmatprep.subr.mxu0 %v5438
  %5524 = vmatpush1.msra.mxu0 %v5437
  %5525 = vmatprep.subr.mxu0 0.0
  %5526 = vmatpush1.msra.mxu0 0.0
  %5527 = vmatprep.subr.mxu0 0.0
  %5528 = vmatpush1.msra.mxu0 0.0
  %5529 = vmatprep.subr.mxu0 0.0
  %5530 = vmatpush1.msra.mxu0 0.0
  %5531 = vmatprep.subr.mxu0 0.0
  %5532 = vmatpush1.msra.mxu0 0.0
  %5533 = vmatprep.subr.mxu0 0.0
  %5534 = vmatpush1.msra.mxu0 0.0
  %5535 = vmatprep.subr.mxu0 0.0
  %5536 = vmatpush1.msra.mxu0 0.0
  %5537 = vmatprep.subr.mxu0 0.0
  %5538 = vmatpush1.msra.mxu0 0.0
  %5539 = vmatprep.subr.mxu0 0.0
  %5540 = vmatpush1.msra.mxu0 0.0
  %5541 = vmatprep.subr.mxu0 0.0
  %5542 = vmatpush1.msra.mxu0 0.0
  %5543 = vmatprep.subr.mxu0 0.0
  %5544 = vmatpush1.msra.mxu0 0.0
  %5545 = vmatprep.subr.mxu0 0.0
  %5546 = vmatpush1.msra.mxu0 0.0
  %5547 = vmatprep.subr.mxu0 0.0
  %5548 = vmatpush1.msra.mxu0 0.0
  %5549 = vmatprep.subr.mxu0 0.0
  %5550 = vmatpush1.msra.mxu0 0.0
  %5551 = vmatprep.subr.mxu0 0.0
  %5552 = vmatpush1.msra.mxu0 0.0
  %5553 = vmatprep.subr.mxu0 0.0
  %5554 = vmatpush1.msra.mxu0 0.0
  %5555 = vmatprep.subr.mxu0 0.0
  %5556 = vmatpush1.msra.mxu0 0.0
  %5557 = vmatprep.subr.mxu0 0.0
  %5558 = vmatpush1.msra.mxu0 0.0
  %5559 = vmatprep.subr.mxu0 0.0
  %5560 = vmatpush1.msra.mxu0 0.0
  %5561 = vmatprep.subr.mxu0 0.0
  %5562 = vmatpush1.msra.mxu0 0.0
  %5563 = vmatprep.subr.mxu0 0.0
  %5564 = vmatpush1.msra.mxu0 0.0
  %5565 = vmatprep.subr.mxu0 0.0
  %5566 = vmatpush1.msra.mxu0 0.0
  %5567 = vmatprep.subr.mxu0 0.0
  %5568 = vmatpush1.msra.mxu0 0.0
  %5569 = vmatprep.subr.mxu0 0.0
  %5570 = vmatpush1.msra.mxu0 0.0
  %5571 = vmatprep.subr.mxu0 0.0
  %5572 = vmatpush1.msra.mxu0 0.0
  %5573 = vmatprep.subr.mxu0 0.0
  %5574 = vmatpush1.msra.mxu0 0.0
  %5575 = vmatprep.subr.mxu0 0.0
  %5576 = vmatpush1.msra.mxu0 0.0
  %5577 = vmatprep.subr.mxu0 0.0
  %5578 = vmatpush1.msra.mxu0 0.0
  %5579 = vmatprep.subr.mxu0 0.0
  %5580 = vmatpush1.msra.mxu0 0.0
  %5581 = vmatprep.subr.mxu0 0.0
  %5582 = vmatpush1.msra.mxu0 0.0
  %5583 = vmatprep.subr.mxu0 0.0
  %5584 = vmatpush1.msra.mxu0 0.0
  %5585 = vmatprep.mubr.f32.mxu0 0.0
  %5586 = vmatmul.mubr.f32.gmra.mrb[0].mxu0 %v5448
  %v5587 = vpop.f32.mrb[0].mxu0
  %v5588 = vadd.f32 0.0, %v5587
  %v5589 = vpop.f32.mrb[0].mxu0
  %v5590 = vadd.f32 0.0, %v5589
  %5591 = vdwg.mxu0
  %v5592 = vadd.f32 %v5405, %v5517
  %v5593 = vadd.f32 %v5406, %v5519
  %v5594 = vadd.f32 %v5407, %v5588
  %v5595 = vadd.f32 %v5408, %v5590
  %s5596 = scalar_lea.vmem %s3, 32
  %v5597 = vld [vmem:[%s5596] sm:$0xff]
  %5598 = vrot.lane.b32.xlu0 %v4875, 124
  %v5599 = vpop.permute.xlu0 %5598
  %5600 = vrot.lane.b32.xlu0 %v4876, 124
  %v5601 = vpop.permute.xlu0 %5600
  %5602 = vrot.lane.b32.xlu0 %v4877, 124
  %v5603 = vpop.permute.xlu0 %5602
  %5604 = vrot.lane.b32.xlu0 %v4878, 124
  %v5605 = vpop.permute.xlu0 %5604
  %5606 = vrot.lane.b32.xlu0 %v4879, 124
  %v5607 = vpop.permute.xlu0 %5606
  %5608 = vrot.lane.b32.xlu0 %v4880, 124
  %v5609 = vpop.permute.xlu0 %5608
  %5610 = vrot.lane.b32.xlu0 %v4881, 124
  %v5611 = vpop.permute.xlu0 %5610
  %5612 = vrot.lane.b32.xlu0 %v4882, 124
  %v5613 = vpop.permute.xlu0 %5612
  %5614 = vrot.lane.b32.xlu0 %v4883, 124
  %v5615 = vpop.permute.xlu0 %5614
  %5616 = vrot.lane.b32.xlu0 %v4884, 124
  %v5617 = vpop.permute.xlu0 %5616
  %v5618 = vsel %vm775, %v5599, %v5601
  %v5619 = vsel %vm775, %v5601, %v5603
  %v5620 = vsel %vm775, %v5603, %v5605
  %v5621 = vsel %vm775, %v5605, %v5607
  %v5622 = vsel %vm775, %v5609, %v5611
  %v5623 = vsel %vm775, %v5611, %v5613
  %v5624 = vsel %vm775, %v5613, %v5615
  %v5625 = vsel %vm775, %v5615, %v5617
  %v5635 = vsel %vm4931, %v5597, 0
  %5637 = vmatprep.subr.mxu0 %v5619
  %5638 = vmatpush1.msra.mxu0 %v5618
  %5639 = vmatprep.subr.mxu0 %v5623
  %5640 = vmatpush1.msra.mxu0 %v5622
  %5641 = vmatprep.subr.mxu0 0.0
  %5642 = vmatpush1.msra.mxu0 0.0
  %5643 = vmatprep.subr.mxu0 0.0
  %5644 = vmatpush1.msra.mxu0 0.0
  %5645 = vmatprep.subr.mxu0 0.0
  %5646 = vmatpush1.msra.mxu0 0.0
  %5647 = vmatprep.subr.mxu0 0.0
  %5648 = vmatpush1.msra.mxu0 0.0
  %5649 = vmatprep.subr.mxu0 0.0
  %5650 = vmatpush1.msra.mxu0 0.0
  %5651 = vmatprep.subr.mxu0 0.0
  %5652 = vmatpush1.msra.mxu0 0.0
  %5653 = vmatprep.subr.mxu0 0.0
  %5654 = vmatpush1.msra.mxu0 0.0
  %5655 = vmatprep.subr.mxu0 0.0
  %5656 = vmatpush1.msra.mxu0 0.0
  %5657 = vmatprep.subr.mxu0 0.0
  %5658 = vmatpush1.msra.mxu0 0.0
  %5659 = vmatprep.subr.mxu0 0.0
  %5660 = vmatpush1.msra.mxu0 0.0
  %5661 = vmatprep.subr.mxu0 0.0
  %5662 = vmatpush1.msra.mxu0 0.0
  %5663 = vmatprep.subr.mxu0 0.0
  %5664 = vmatpush1.msra.mxu0 0.0
  %5665 = vmatprep.subr.mxu0 0.0
  %5666 = vmatpush1.msra.mxu0 0.0
  %5667 = vmatprep.subr.mxu0 0.0
  %5668 = vmatpush1.msra.mxu0 0.0
  %5669 = vmatprep.subr.mxu0 0.0
  %5670 = vmatpush1.msra.mxu0 0.0
  %5671 = vmatprep.subr.mxu0 0.0
  %5672 = vmatpush1.msra.mxu0 0.0
  %5673 = vmatprep.subr.mxu0 0.0
  %5674 = vmatpush1.msra.mxu0 0.0
  %5675 = vmatprep.subr.mxu0 0.0
  %5676 = vmatpush1.msra.mxu0 0.0
  %5677 = vmatprep.subr.mxu0 0.0
  %5678 = vmatpush1.msra.mxu0 0.0
  %5679 = vmatprep.subr.mxu0 0.0
  %5680 = vmatpush1.msra.mxu0 0.0
  %5681 = vmatprep.subr.mxu0 0.0
  %5682 = vmatpush1.msra.mxu0 0.0
  %5683 = vmatprep.subr.mxu0 0.0
  %5684 = vmatpush1.msra.mxu0 0.0
  %5685 = vmatprep.subr.mxu0 0.0
  %5686 = vmatpush1.msra.mxu0 0.0
  %5687 = vmatprep.subr.mxu0 0.0
  %5688 = vmatpush1.msra.mxu0 0.0
  %5689 = vmatprep.subr.mxu0 0.0
  %5690 = vmatpush1.msra.mxu0 0.0
  %5691 = vmatprep.subr.mxu0 0.0
  %5692 = vmatpush1.msra.mxu0 0.0
  %5693 = vmatprep.subr.mxu0 0.0
  %5694 = vmatpush1.msra.mxu0 0.0
  %5695 = vmatprep.subr.mxu0 0.0
  %5696 = vmatpush1.msra.mxu0 0.0
  %5697 = vmatprep.subr.mxu0 0.0
  %5698 = vmatpush1.msra.mxu0 0.0
  %5699 = vmatprep.subr.mxu0 0.0
  %5700 = vmatpush1.msra.mxu0 0.0
  %5701 = vmatprep.mubr.f32.mxu0 0.0
  %5702 = vmatmul.mubr.f32.gmra.mrb[0].mxu0 %v5635
  %v5703 = vpop.f32.mrb[0].mxu0
  %v5704 = vadd.f32 0.0, %v5703
  %v5705 = vpop.f32.mrb[0].mxu0
  %v5706 = vadd.f32 0.0, %v5705
  %5707 = vdwg.mxu0
  %5708 = vmatprep.subr.mxu0 %v5621
  %5709 = vmatpush1.msra.mxu0 %v5620
  %5710 = vmatprep.subr.mxu0 %v5625
  %5711 = vmatpush1.msra.mxu0 %v5624
  %5712 = vmatprep.subr.mxu0 0.0
  %5713 = vmatpush1.msra.mxu0 0.0
  %5714 = vmatprep.subr.mxu0 0.0
  %5715 = vmatpush1.msra.mxu0 0.0
  %5716 = vmatprep.subr.mxu0 0.0
  %5717 = vmatpush1.msra.mxu0 0.0
  %5718 = vmatprep.subr.mxu0 0.0
  %5719 = vmatpush1.msra.mxu0 0.0
  %5720 = vmatprep.subr.mxu0 0.0
  %5721 = vmatpush1.msra.mxu0 0.0
  %5722 = vmatprep.subr.mxu0 0.0
  %5723 = vmatpush1.msra.mxu0 0.0
  %5724 = vmatprep.subr.mxu0 0.0
  %5725 = vmatpush1.msra.mxu0 0.0
  %5726 = vmatprep.subr.mxu0 0.0
  %5727 = vmatpush1.msra.mxu0 0.0
  %5728 = vmatprep.subr.mxu0 0.0
  %5729 = vmatpush1.msra.mxu0 0.0
  %5730 = vmatprep.subr.mxu0 0.0
  %5731 = vmatpush1.msra.mxu0 0.0
  %5732 = vmatprep.subr.mxu0 0.0
  %5733 = vmatpush1.msra.mxu0 0.0
  %5734 = vmatprep.subr.mxu0 0.0
  %5735 = vmatpush1.msra.mxu0 0.0
  %5736 = vmatprep.subr.mxu0 0.0
  %5737 = vmatpush1.msra.mxu0 0.0
  %5738 = vmatprep.subr.mxu0 0.0
  %5739 = vmatpush1.msra.mxu0 0.0
  %5740 = vmatprep.subr.mxu0 0.0
  %5741 = vmatpush1.msra.mxu0 0.0
  %5742 = vmatprep.subr.mxu0 0.0
  %5743 = vmatpush1.msra.mxu0 0.0
  %5744 = vmatprep.subr.mxu0 0.0
  %5745 = vmatpush1.msra.mxu0 0.0
  %5746 = vmatprep.subr.mxu0 0.0
  %5747 = vmatpush1.msra.mxu0 0.0
  %5748 = vmatprep.subr.mxu0 0.0
  %5749 = vmatpush1.msra.mxu0 0.0
  %5750 = vmatprep.subr.mxu0 0.0
  %5751 = vmatpush1.msra.mxu0 0.0
  %5752 = vmatprep.subr.mxu0 0.0
  %5753 = vmatpush1.msra.mxu0 0.0
  %5754 = vmatprep.subr.mxu0 0.0
  %5755 = vmatpush1.msra.mxu0 0.0
  %5756 = vmatprep.subr.mxu0 0.0
  %5757 = vmatpush1.msra.mxu0 0.0
  %5758 = vmatprep.subr.mxu0 0.0
  %5759 = vmatpush1.msra.mxu0 0.0
  %5760 = vmatprep.subr.mxu0 0.0
  %5761 = vmatpush1.msra.mxu0 0.0
  %5762 = vmatprep.subr.mxu0 0.0
  %5763 = vmatpush1.msra.mxu0 0.0
  %5764 = vmatprep.subr.mxu0 0.0
  %5765 = vmatpush1.msra.mxu0 0.0
  %5766 = vmatprep.subr.mxu0 0.0
  %5767 = vmatpush1.msra.mxu0 0.0
  %5768 = vmatprep.subr.mxu0 0.0
  %5769 = vmatpush1.msra.mxu0 0.0
  %5770 = vmatprep.subr.mxu0 0.0
  %5771 = vmatpush1.msra.mxu0 0.0
  %5772 = vmatprep.mubr.f32.mxu0 0.0
  %5773 = vmatmul.mubr.f32.gmra.mrb[0].mxu0 %v5635
  %v5774 = vpop.f32.mrb[0].mxu0
  %v5775 = vadd.f32 0.0, %v5774
  %v5776 = vpop.f32.mrb[0].mxu0
  %v5777 = vadd.f32 0.0, %v5776
  %5778 = vdwg.mxu0
  %v5779 = vadd.f32 %v5592, %v5704
  %v5780 = vadd.f32 %v5593, %v5706
  %v5781 = vadd.f32 %v5594, %v5775
  %v5782 = vadd.f32 %v5595, %v5777
  %s5783 = scalar_lea.vmem %s3, 40
  %v5784 = vld [vmem:[%s5783] sm:$0xff]
  %5785 = vrot.lane.b32.xlu0 %v4875, 104
  %v5786 = vpop.permute.xlu0 %5785
  %5787 = vrot.lane.b32.xlu0 %v4876, 104
  %v5788 = vpop.permute.xlu0 %5787
  %5789 = vrot.lane.b32.xlu0 %v4877, 104
  %v5790 = vpop.permute.xlu0 %5789
  %5791 = vrot.lane.b32.xlu0 %v4878, 104
  %v5792 = vpop.permute.xlu0 %5791
  %5793 = vrot.lane.b32.xlu0 %v4879, 104
  %v5794 = vpop.permute.xlu0 %5793
  %5795 = vrot.lane.b32.xlu0 %v4880, 104
  %v5796 = vpop.permute.xlu0 %5795
  %5797 = vrot.lane.b32.xlu0 %v4881, 104
  %v5798 = vpop.permute.xlu0 %5797
  %5799 = vrot.lane.b32.xlu0 %v4882, 104
  %v5800 = vpop.permute.xlu0 %5799
  %5801 = vrot.lane.b32.xlu0 %v4883, 104
  %v5802 = vpop.permute.xlu0 %5801
  %5803 = vrot.lane.b32.xlu0 %v4884, 104
  %v5804 = vpop.permute.xlu0 %5803
  %v5805 = vsel %vm965, %v5786, %v5788
  %v5806 = vsel %vm965, %v5788, %v5790
  %v5807 = vsel %vm965, %v5790, %v5792
  %v5808 = vsel %vm965, %v5792, %v5794
  %v5809 = vsel %vm965, %v5796, %v5798
  %v5810 = vsel %vm965, %v5798, %v5800
  %v5811 = vsel %vm965, %v5800, %v5802
  %v5812 = vsel %vm965, %v5802, %v5804
  %v5822 = vsel %vm4931, %v5784, 0
  %5824 = vmatprep.subr.mxu0 %v5806
  %5825 = vmatpush1.msra.mxu0 %v5805
  %5826 = vmatprep.subr.mxu0 %v5810
  %5827 = vmatpush1.msra.mxu0 %v5809
  %5828 = vmatprep.subr.mxu0 0.0
  %5829 = vmatpush1.msra.mxu0 0.0
  %5830 = vmatprep.subr.mxu0 0.0
  %5831 = vmatpush1.msra.mxu0 0.0
  %5832 = vmatprep.subr.mxu0 0.0
  %5833 = vmatpush1.msra.mxu0 0.0
  %5834 = vmatprep.subr.mxu0 0.0
  %5835 = vmatpush1.msra.mxu0 0.0
  %5836 = vmatprep.subr.mxu0 0.0
  %5837 = vmatpush1.msra.mxu0 0.0
  %5838 = vmatprep.subr.mxu0 0.0
  %5839 = vmatpush1.msra.mxu0 0.0
  %5840 = vmatprep.subr.mxu0 0.0
  %5841 = vmatpush1.msra.mxu0 0.0
  %5842 = vmatprep.subr.mxu0 0.0
  %5843 = vmatpush1.msra.mxu0 0.0
  %5844 = vmatprep.subr.mxu0 0.0
  %5845 = vmatpush1.msra.mxu0 0.0
  %5846 = vmatprep.subr.mxu0 0.0
  %5847 = vmatpush1.msra.mxu0 0.0
  %5848 = vmatprep.subr.mxu0 0.0
  %5849 = vmatpush1.msra.mxu0 0.0
  %5850 = vmatprep.subr.mxu0 0.0
  %5851 = vmatpush1.msra.mxu0 0.0
  %5852 = vmatprep.subr.mxu0 0.0
  %5853 = vmatpush1.msra.mxu0 0.0
  %5854 = vmatprep.subr.mxu0 0.0
  %5855 = vmatpush1.msra.mxu0 0.0
  %5856 = vmatprep.subr.mxu0 0.0
  %5857 = vmatpush1.msra.mxu0 0.0
  %5858 = vmatprep.subr.mxu0 0.0
  %5859 = vmatpush1.msra.mxu0 0.0
  %5860 = vmatprep.subr.mxu0 0.0
  %5861 = vmatpush1.msra.mxu0 0.0
  %5862 = vmatprep.subr.mxu0 0.0
  %5863 = vmatpush1.msra.mxu0 0.0
  %5864 = vmatprep.subr.mxu0 0.0
  %5865 = vmatpush1.msra.mxu0 0.0
  %5866 = vmatprep.subr.mxu0 0.0
  %5867 = vmatpush1.msra.mxu0 0.0
  %5868 = vmatprep.subr.mxu0 0.0
  %5869 = vmatpush1.msra.mxu0 0.0
  %5870 = vmatprep.subr.mxu0 0.0
  %5871 = vmatpush1.msra.mxu0 0.0
  %5872 = vmatprep.subr.mxu0 0.0
  %5873 = vmatpush1.msra.mxu0 0.0
  %5874 = vmatprep.subr.mxu0 0.0
  %5875 = vmatpush1.msra.mxu0 0.0
  %5876 = vmatprep.subr.mxu0 0.0
  %5877 = vmatpush1.msra.mxu0 0.0
  %5878 = vmatprep.subr.mxu0 0.0
  %5879 = vmatpush1.msra.mxu0 0.0
  %5880 = vmatprep.subr.mxu0 0.0
  %5881 = vmatpush1.msra.mxu0 0.0
  %5882 = vmatprep.subr.mxu0 0.0
  %5883 = vmatpush1.msra.mxu0 0.0
  %5884 = vmatprep.subr.mxu0 0.0
  %5885 = vmatpush1.msra.mxu0 0.0
  %5886 = vmatprep.subr.mxu0 0.0
  %5887 = vmatpush1.msra.mxu0 0.0
  %5888 = vmatprep.mubr.f32.mxu0 0.0
  %5889 = vmatmul.mubr.f32.gmra.mrb[0].mxu0 %v5822
  %v5890 = vpop.f32.mrb[0].mxu0
  %v5891 = vadd.f32 0.0, %v5890
  %v5892 = vpop.f32.mrb[0].mxu0
  %v5893 = vadd.f32 0.0, %v5892
  %5894 = vdwg.mxu0
  %5895 = vmatprep.subr.mxu0 %v5808
  %5896 = vmatpush1.msra.mxu0 %v5807
  %5897 = vmatprep.subr.mxu0 %v5812
  %5898 = vmatpush1.msra.mxu0 %v5811
  %5899 = vmatprep.subr.mxu0 0.0
  %5900 = vmatpush1.msra.mxu0 0.0
  %5901 = vmatprep.subr.mxu0 0.0
  %5902 = vmatpush1.msra.mxu0 0.0
  %5903 = vmatprep.subr.mxu0 0.0
  %5904 = vmatpush1.msra.mxu0 0.0
  %5905 = vmatprep.subr.mxu0 0.0
  %5906 = vmatpush1.msra.mxu0 0.0
  %5907 = vmatprep.subr.mxu0 0.0
  %5908 = vmatpush1.msra.mxu0 0.0
  %5909 = vmatprep.subr.mxu0 0.0
  %5910 = vmatpush1.msra.mxu0 0.0
  %5911 = vmatprep.subr.mxu0 0.0
  %5912 = vmatpush1.msra.mxu0 0.0
  %5913 = vmatprep.subr.mxu0 0.0
  %5914 = vmatpush1.msra.mxu0 0.0
  %5915 = vmatprep.subr.mxu0 0.0
  %5916 = vmatpush1.msra.mxu0 0.0
  %5917 = vmatprep.subr.mxu0 0.0
  %5918 = vmatpush1.msra.mxu0 0.0
  %5919 = vmatprep.subr.mxu0 0.0
  %5920 = vmatpush1.msra.mxu0 0.0
  %5921 = vmatprep.subr.mxu0 0.0
  %5922 = vmatpush1.msra.mxu0 0.0
  %5923 = vmatprep.subr.mxu0 0.0
  %5924 = vmatpush1.msra.mxu0 0.0
  %5925 = vmatprep.subr.mxu0 0.0
  %5926 = vmatpush1.msra.mxu0 0.0
  %5927 = vmatprep.subr.mxu0 0.0
  %5928 = vmatpush1.msra.mxu0 0.0
  %5929 = vmatprep.subr.mxu0 0.0
  %5930 = vmatpush1.msra.mxu0 0.0
  %5931 = vmatprep.subr.mxu0 0.0
  %5932 = vmatpush1.msra.mxu0 0.0
  %5933 = vmatprep.subr.mxu0 0.0
  %5934 = vmatpush1.msra.mxu0 0.0
  %5935 = vmatprep.subr.mxu0 0.0
  %5936 = vmatpush1.msra.mxu0 0.0
  %5937 = vmatprep.subr.mxu0 0.0
  %5938 = vmatpush1.msra.mxu0 0.0
  %5939 = vmatprep.subr.mxu0 0.0
  %5940 = vmatpush1.msra.mxu0 0.0
  %5941 = vmatprep.subr.mxu0 0.0
  %5942 = vmatpush1.msra.mxu0 0.0
  %5943 = vmatprep.subr.mxu0 0.0
  %5944 = vmatpush1.msra.mxu0 0.0
  %5945 = vmatprep.subr.mxu0 0.0
  %5946 = vmatpush1.msra.mxu0 0.0
  %5947 = vmatprep.subr.mxu0 0.0
  %5948 = vmatpush1.msra.mxu0 0.0
  %5949 = vmatprep.subr.mxu0 0.0
  %5950 = vmatpush1.msra.mxu0 0.0
  %5951 = vmatprep.subr.mxu0 0.0
  %5952 = vmatpush1.msra.mxu0 0.0
  %5953 = vmatprep.subr.mxu0 0.0
  %5954 = vmatpush1.msra.mxu0 0.0
  %5955 = vmatprep.subr.mxu0 0.0
  %5956 = vmatpush1.msra.mxu0 0.0
  %5957 = vmatprep.subr.mxu0 0.0
  %5958 = vmatpush1.msra.mxu0 0.0
  %5959 = vmatprep.mubr.f32.mxu0 0.0
  %5960 = vmatmul.mubr.f32.gmra.mrb[0].mxu0 %v5822
  %v5961 = vpop.f32.mrb[0].mxu0
  %v5962 = vadd.f32 0.0, %v5961
  %v5963 = vpop.f32.mrb[0].mxu0
  %v5964 = vadd.f32 0.0, %v5963
  %5965 = vdwg.mxu0
  %v5966 = vadd.f32 %v5779, %v5891
  %v5967 = vadd.f32 %v5780, %v5893
  %v5968 = vadd.f32 %v5781, %v5962
  %v5969 = vadd.f32 %v5782, %v5964
  %s5970 = scalar_lea.vmem %s3, 48
  %v5971 = vld [vmem:[%s5970] sm:$0xff]
  %5972 = vrot.lane.b32.xlu0 %v4875, 103
  %v5973 = vpop.permute.xlu0 %5972
  %5974 = vrot.lane.b32.xlu0 %v4876, 103
  %v5975 = vpop.permute.xlu0 %5974
  %5976 = vrot.lane.b32.xlu0 %v4877, 103
  %v5977 = vpop.permute.xlu0 %5976
  %5978 = vrot.lane.b32.xlu0 %v4878, 103
  %v5979 = vpop.permute.xlu0 %5978
  %5980 = vrot.lane.b32.xlu0 %v4879, 103
  %v5981 = vpop.permute.xlu0 %5980
  %5982 = vrot.lane.b32.xlu0 %v4880, 103
  %v5983 = vpop.permute.xlu0 %5982
  %5984 = vrot.lane.b32.xlu0 %v4881, 103
  %v5985 = vpop.permute.xlu0 %5984
  %5986 = vrot.lane.b32.xlu0 %v4882, 103
  %v5987 = vpop.permute.xlu0 %5986
  %5988 = vrot.lane.b32.xlu0 %v4883, 103
  %v5989 = vpop.permute.xlu0 %5988
  %5990 = vrot.lane.b32.xlu0 %v4884, 103
  %v5991 = vpop.permute.xlu0 %5990
  %v5992 = vsel %vm1155, %v5973, %v5975
  %v5993 = vsel %vm1155, %v5975, %v5977
  %v5994 = vsel %vm1155, %v5977, %v5979
  %v5995 = vsel %vm1155, %v5979, %v5981
  %v5996 = vsel %vm1155, %v5983, %v5985
  %v5997 = vsel %vm1155, %v5985, %v5987
  %v5998 = vsel %vm1155, %v5987, %v5989
  %v5999 = vsel %vm1155, %v5989, %v5991
  %v6009 = vsel %vm4931, %v5971, 0
  %6011 = vmatprep.subr.mxu0 %v5993
  %6012 = vmatpush1.msra.mxu0 %v5992
  %6013 = vmatprep.subr.mxu0 %v5997
  %6014 = vmatpush1.msra.mxu0 %v5996
  %6015 = vmatprep.subr.mxu0 0.0
  %6016 = vmatpush1.msra.mxu0 0.0
  %6017 = vmatprep.subr.mxu0 0.0
  %6018 = vmatpush1.msra.mxu0 0.0
  %6019 = vmatprep.subr.mxu0 0.0
  %6020 = vmatpush1.msra.mxu0 0.0
  %6021 = vmatprep.subr.mxu0 0.0
  %6022 = vmatpush1.msra.mxu0 0.0
  %6023 = vmatprep.subr.mxu0 0.0
  %6024 = vmatpush1.msra.mxu0 0.0
  %6025 = vmatprep.subr.mxu0 0.0
  %6026 = vmatpush1.msra.mxu0 0.0
  %6027 = vmatprep.subr.mxu0 0.0
  %6028 = vmatpush1.msra.mxu0 0.0
  %6029 = vmatprep.subr.mxu0 0.0
  %6030 = vmatpush1.msra.mxu0 0.0
  %6031 = vmatprep.subr.mxu0 0.0
  %6032 = vmatpush1.msra.mxu0 0.0
  %6033 = vmatprep.subr.mxu0 0.0
  %6034 = vmatpush1.msra.mxu0 0.0
  %6035 = vmatprep.subr.mxu0 0.0
  %6036 = vmatpush1.msra.mxu0 0.0
  %6037 = vmatprep.subr.mxu0 0.0
  %6038 = vmatpush1.msra.mxu0 0.0
  %6039 = vmatprep.subr.mxu0 0.0
  %6040 = vmatpush1.msra.mxu0 0.0
  %6041 = vmatprep.subr.mxu0 0.0
  %6042 = vmatpush1.msra.mxu0 0.0
  %6043 = vmatprep.subr.mxu0 0.0
  %6044 = vmatpush1.msra.mxu0 0.0
  %6045 = vmatprep.subr.mxu0 0.0
  %6046 = vmatpush1.msra.mxu0 0.0
  %6047 = vmatprep.subr.mxu0 0.0
  %6048 = vmatpush1.msra.mxu0 0.0
  %6049 = vmatprep.subr.mxu0 0.0
  %6050 = vmatpush1.msra.mxu0 0.0
  %6051 = vmatprep.subr.mxu0 0.0
  %6052 = vmatpush1.msra.mxu0 0.0
  %6053 = vmatprep.subr.mxu0 0.0
  %6054 = vmatpush1.msra.mxu0 0.0
  %6055 = vmatprep.subr.mxu0 0.0
  %6056 = vmatpush1.msra.mxu0 0.0
  %6057 = vmatprep.subr.mxu0 0.0
  %6058 = vmatpush1.msra.mxu0 0.0
  %6059 = vmatprep.subr.mxu0 0.0
  %6060 = vmatpush1.msra.mxu0 0.0
  %6061 = vmatprep.subr.mxu0 0.0
  %6062 = vmatpush1.msra.mxu0 0.0
  %6063 = vmatprep.subr.mxu0 0.0
  %6064 = vmatpush1.msra.mxu0 0.0
  %6065 = vmatprep.subr.mxu0 0.0
  %6066 = vmatpush1.msra.mxu0 0.0
  %6067 = vmatprep.subr.mxu0 0.0
  %6068 = vmatpush1.msra.mxu0 0.0
  %6069 = vmatprep.subr.mxu0 0.0
  %6070 = vmatpush1.msra.mxu0 0.0
  %6071 = vmatprep.subr.mxu0 0.0
  %6072 = vmatpush1.msra.mxu0 0.0
  %6073 = vmatprep.subr.mxu0 0.0
  %6074 = vmatpush1.msra.mxu0 0.0
  %6075 = vmatprep.mubr.f32.mxu0 0.0
  %6076 = vmatmul.mubr.f32.gmra.mrb[0].mxu0 %v6009
  %v6077 = vpop.f32.mrb[0].mxu0
  %v6078 = vadd.f32 0.0, %v6077
  %v6079 = vpop.f32.mrb[0].mxu0
  %v6080 = vadd.f32 0.0, %v6079
  %6081 = vdwg.mxu0
  %6082 = vmatprep.subr.mxu0 %v5995
  %6083 = vmatpush1.msra.mxu0 %v5994
  %6084 = vmatprep.subr.mxu0 %v5999
  %6085 = vmatpush1.msra.mxu0 %v5998
  %6086 = vmatprep.subr.mxu0 0.0
  %6087 = vmatpush1.msra.mxu0 0.0
  %6088 = vmatprep.subr.mxu0 0.0
  %6089 = vmatpush1.msra.mxu0 0.0
  %6090 = vmatprep.subr.mxu0 0.0
  %6091 = vmatpush1.msra.mxu0 0.0
  %6092 = vmatprep.subr.mxu0 0.0
  %6093 = vmatpush1.msra.mxu0 0.0
  %6094 = vmatprep.subr.mxu0 0.0
  %6095 = vmatpush1.msra.mxu0 0.0
  %6096 = vmatprep.subr.mxu0 0.0
  %6097 = vmatpush1.msra.mxu0 0.0
  %6098 = vmatprep.subr.mxu0 0.0
  %6099 = vmatpush1.msra.mxu0 0.0
  %6100 = vmatprep.subr.mxu0 0.0
  %6101 = vmatpush1.msra.mxu0 0.0
  %6102 = vmatprep.subr.mxu0 0.0
  %6103 = vmatpush1.msra.mxu0 0.0
  %6104 = vmatprep.subr.mxu0 0.0
  %6105 = vmatpush1.msra.mxu0 0.0
  %6106 = vmatprep.subr.mxu0 0.0
  %6107 = vmatpush1.msra.mxu0 0.0
  %6108 = vmatprep.subr.mxu0 0.0
  %6109 = vmatpush1.msra.mxu0 0.0
  %6110 = vmatprep.subr.mxu0 0.0
  %6111 = vmatpush1.msra.mxu0 0.0
  %6112 = vmatprep.subr.mxu0 0.0
  %6113 = vmatpush1.msra.mxu0 0.0
  %6114 = vmatprep.subr.mxu0 0.0
  %6115 = vmatpush1.msra.mxu0 0.0
  %6116 = vmatprep.subr.mxu0 0.0
  %6117 = vmatpush1.msra.mxu0 0.0
  %6118 = vmatprep.subr.mxu0 0.0
  %6119 = vmatpush1.msra.mxu0 0.0
  %6120 = vmatprep.subr.mxu0 0.0
  %6121 = vmatpush1.msra.mxu0 0.0
  %6122 = vmatprep.subr.mxu0 0.0
  %6123 = vmatpush1.msra.mxu0 0.0
  %6124 = vmatprep.subr.mxu0 0.0
  %6125 = vmatpush1.msra.mxu0 0.0
  %6126 = vmatprep.subr.mxu0 0.0
  %6127 = vmatpush1.msra.mxu0 0.0
  %6128 = vmatprep.subr.mxu0 0.0
  %6129 = vmatpush1.msra.mxu0 0.0
  %6130 = vmatprep.subr.mxu0 0.0
  %6131 = vmatpush1.msra.mxu0 0.0
  %6132 = vmatprep.subr.mxu0 0.0
  %6133 = vmatpush1.msra.mxu0 0.0
  %6134 = vmatprep.subr.mxu0 0.0
  %6135 = vmatpush1.msra.mxu0 0.0
  %6136 = vmatprep.subr.mxu0 0.0
  %6137 = vmatpush1.msra.mxu0 0.0
  %6138 = vmatprep.subr.mxu0 0.0
  %6139 = vmatpush1.msra.mxu0 0.0
  %6140 = vmatprep.subr.mxu0 0.0
  %6141 = vmatpush1.msra.mxu0 0.0
  %6142 = vmatprep.subr.mxu0 0.0
  %6143 = vmatpush1.msra.mxu0 0.0
  %6144 = vmatprep.subr.mxu0 0.0
  %6145 = vmatpush1.msra.mxu0 0.0
  %6146 = vmatprep.mubr.f32.mxu0 0.0
  %6147 = vmatmul.mubr.f32.gmra.mrb[0].mxu0 %v6009
  %v6148 = vpop.f32.mrb[0].mxu0
  %v6149 = vadd.f32 0.0, %v6148
  %v6150 = vpop.f32.mrb[0].mxu0
  %v6151 = vadd.f32 0.0, %v6150
  %6152 = vdwg.mxu0
  %v6153 = vadd.f32 %v5966, %v6078
  %v6154 = vadd.f32 %v5967, %v6080
  %v6155 = vadd.f32 %v5968, %v6149
  %v6156 = vadd.f32 %v5969, %v6151
  %s6157 = scalar_lea.vmem %s3, 56
  %v6158 = vld [vmem:[%s6157] sm:$0xff]
  %6159 = vrot.lane.b32.xlu0 %v4875, 102
  %v6160 = vpop.permute.xlu0 %6159
  %6161 = vrot.lane.b32.xlu0 %v4876, 102
  %v6162 = vpop.permute.xlu0 %6161
  %6163 = vrot.lane.b32.xlu0 %v4877, 102
  %v6164 = vpop.permute.xlu0 %6163
  %6165 = vrot.lane.b32.xlu0 %v4878, 102
  %v6166 = vpop.permute.xlu0 %6165
  %6167 = vrot.lane.b32.xlu0 %v4879, 102
  %v6168 = vpop.permute.xlu0 %6167
  %6169 = vrot.lane.b32.xlu0 %v4880, 102
  %v6170 = vpop.permute.xlu0 %6169
  %6171 = vrot.lane.b32.xlu0 %v4881, 102
  %v6172 = vpop.permute.xlu0 %6171
  %6173 = vrot.lane.b32.xlu0 %v4882, 102
  %v6174 = vpop.permute.xlu0 %6173
  %6175 = vrot.lane.b32.xlu0 %v4883, 102
  %v6176 = vpop.permute.xlu0 %6175
  %6177 = vrot.lane.b32.xlu0 %v4884, 102
  %v6178 = vpop.permute.xlu0 %6177
  %v6179 = vsel %vm1345, %v6160, %v6162
  %v6180 = vsel %vm1345, %v6162, %v6164
  %v6181 = vsel %vm1345, %v6164, %v6166
  %v6182 = vsel %vm1345, %v6166, %v6168
  %v6183 = vsel %vm1345, %v6170, %v6172
  %v6184 = vsel %vm1345, %v6172, %v6174
  %v6185 = vsel %vm1345, %v6174, %v6176
  %v6186 = vsel %vm1345, %v6176, %v6178
  %v6196 = vsel %vm4931, %v6158, 0
  %6198 = vmatprep.subr.mxu0 %v6180
  %6199 = vmatpush1.msra.mxu0 %v6179
  %6200 = vmatprep.subr.mxu0 %v6184
  %6201 = vmatpush1.msra.mxu0 %v6183
  %6202 = vmatprep.subr.mxu0 0.0
  %6203 = vmatpush1.msra.mxu0 0.0
  %6204 = vmatprep.subr.mxu0 0.0
  %6205 = vmatpush1.msra.mxu0 0.0
  %6206 = vmatprep.subr.mxu0 0.0
  %6207 = vmatpush1.msra.mxu0 0.0
  %6208 = vmatprep.subr.mxu0 0.0
  %6209 = vmatpush1.msra.mxu0 0.0
  %6210 = vmatprep.subr.mxu0 0.0
  %6211 = vmatpush1.msra.mxu0 0.0
  %6212 = vmatprep.subr.mxu0 0.0
  %6213 = vmatpush1.msra.mxu0 0.0
  %6214 = vmatprep.subr.mxu0 0.0
  %6215 = vmatpush1.msra.mxu0 0.0
  %6216 = vmatprep.subr.mxu0 0.0
  %6217 = vmatpush1.msra.mxu0 0.0
  %6218 = vmatprep.subr.mxu0 0.0
  %6219 = vmatpush1.msra.mxu0 0.0
  %6220 = vmatprep.subr.mxu0 0.0
  %6221 = vmatpush1.msra.mxu0 0.0
  %6222 = vmatprep.subr.mxu0 0.0
  %6223 = vmatpush1.msra.mxu0 0.0
  %6224 = vmatprep.subr.mxu0 0.0
  %6225 = vmatpush1.msra.mxu0 0.0
  %6226 = vmatprep.subr.mxu0 0.0
  %6227 = vmatpush1.msra.mxu0 0.0
  %6228 = vmatprep.subr.mxu0 0.0
  %6229 = vmatpush1.msra.mxu0 0.0
  %6230 = vmatprep.subr.mxu0 0.0
  %6231 = vmatpush1.msra.mxu0 0.0
  %6232 = vmatprep.subr.mxu0 0.0
  %6233 = vmatpush1.msra.mxu0 0.0
  %6234 = vmatprep.subr.mxu0 0.0
  %6235 = vmatpush1.msra.mxu0 0.0
  %6236 = vmatprep.subr.mxu0 0.0
  %6237 = vmatpush1.msra.mxu0 0.0
  %6238 = vmatprep.subr.mxu0 0.0
  %6239 = vmatpush1.msra.mxu0 0.0
  %6240 = vmatprep.subr.mxu0 0.0
  %6241 = vmatpush1.msra.mxu0 0.0
  %6242 = vmatprep.subr.mxu0 0.0
  %6243 = vmatpush1.msra.mxu0 0.0
  %6244 = vmatprep.subr.mxu0 0.0
  %6245 = vmatpush1.msra.mxu0 0.0
  %6246 = vmatprep.subr.mxu0 0.0
  %6247 = vmatpush1.msra.mxu0 0.0
  %6248 = vmatprep.subr.mxu0 0.0
  %6249 = vmatpush1.msra.mxu0 0.0
  %6250 = vmatprep.subr.mxu0 0.0
  %6251 = vmatpush1.msra.mxu0 0.0
  %6252 = vmatprep.subr.mxu0 0.0
  %6253 = vmatpush1.msra.mxu0 0.0
  %6254 = vmatprep.subr.mxu0 0.0
  %6255 = vmatpush1.msra.mxu0 0.0
  %6256 = vmatprep.subr.mxu0 0.0
  %6257 = vmatpush1.msra.mxu0 0.0
  %6258 = vmatprep.subr.mxu0 0.0
  %6259 = vmatpush1.msra.mxu0 0.0
  %6260 = vmatprep.subr.mxu0 0.0
  %6261 = vmatpush1.msra.mxu0 0.0
  %6262 = vmatprep.mubr.f32.mxu0 0.0
  %6263 = vmatmul.mubr.f32.gmra.mrb[0].mxu0 %v6196
  %v6264 = vpop.f32.mrb[0].mxu0
  %v6265 = vadd.f32 0.0, %v6264
  %v6266 = vpop.f32.mrb[0].mxu0
  %v6267 = vadd.f32 0.0, %v6266
  %6268 = vdwg.mxu0
  %6269 = vmatprep.subr.mxu0 %v6182
  %6270 = vmatpush1.msra.mxu0 %v6181
  %6271 = vmatprep.subr.mxu0 %v6186
  %6272 = vmatpush1.msra.mxu0 %v6185
  %6273 = vmatprep.subr.mxu0 0.0
  %6274 = vmatpush1.msra.mxu0 0.0
  %6275 = vmatprep.subr.mxu0 0.0
  %6276 = vmatpush1.msra.mxu0 0.0
  %6277 = vmatprep.subr.mxu0 0.0
  %6278 = vmatpush1.msra.mxu0 0.0
  %6279 = vmatprep.subr.mxu0 0.0
  %6280 = vmatpush1.msra.mxu0 0.0
  %6281 = vmatprep.subr.mxu0 0.0
  %6282 = vmatpush1.msra.mxu0 0.0
  %6283 = vmatprep.subr.mxu0 0.0
  %6284 = vmatpush1.msra.mxu0 0.0
  %6285 = vmatprep.subr.mxu0 0.0
  %6286 = vmatpush1.msra.mxu0 0.0
  %6287 = vmatprep.subr.mxu0 0.0
  %6288 = vmatpush1.msra.mxu0 0.0
  %6289 = vmatprep.subr.mxu0 0.0
  %6290 = vmatpush1.msra.mxu0 0.0
  %6291 = vmatprep.subr.mxu0 0.0
  %6292 = vmatpush1.msra.mxu0 0.0
  %6293 = vmatprep.subr.mxu0 0.0
  %6294 = vmatpush1.msra.mxu0 0.0
  %6295 = vmatprep.subr.mxu0 0.0
  %6296 = vmatpush1.msra.mxu0 0.0
  %6297 = vmatprep.subr.mxu0 0.0
  %6298 = vmatpush1.msra.mxu0 0.0
  %6299 = vmatprep.subr.mxu0 0.0
  %6300 = vmatpush1.msra.mxu0 0.0
  %6301 = vmatprep.subr.mxu0 0.0
  %6302 = vmatpush1.msra.mxu0 0.0
  %6303 = vmatprep.subr.mxu0 0.0
  %6304 = vmatpush1.msra.mxu0 0.0
  %6305 = vmatprep.subr.mxu0 0.0
  %6306 = vmatpush1.msra.mxu0 0.0
  %6307 = vmatprep.subr.mxu0 0.0
  %6308 = vmatpush1.msra.mxu0 0.0
  %6309 = vmatprep.subr.mxu0 0.0
  %6310 = vmatpush1.msra.mxu0 0.0
  %6311 = vmatprep.subr.mxu0 0.0
  %6312 = vmatpush1.msra.mxu0 0.0
  %6313 = vmatprep.subr.mxu0 0.0
  %6314 = vmatpush1.msra.mxu0 0.0
  %6315 = vmatprep.subr.mxu0 0.0
  %6316 = vmatpush1.msra.mxu0 0.0
  %6317 = vmatprep.subr.mxu0 0.0
  %6318 = vmatpush1.msra.mxu0 0.0
  %6319 = vmatprep.subr.mxu0 0.0
  %6320 = vmatpush1.msra.mxu0 0.0
  %6321 = vmatprep.subr.mxu0 0.0
  %6322 = vmatpush1.msra.mxu0 0.0
  %6323 = vmatprep.subr.mxu0 0.0
  %6324 = vmatpush1.msra.mxu0 0.0
  %6325 = vmatprep.subr.mxu0 0.0
  %6326 = vmatpush1.msra.mxu0 0.0
  %6327 = vmatprep.subr.mxu0 0.0
  %6328 = vmatpush1.msra.mxu0 0.0
  %6329 = vmatprep.subr.mxu0 0.0
  %6330 = vmatpush1.msra.mxu0 0.0
  %6331 = vmatprep.subr.mxu0 0.0
  %6332 = vmatpush1.msra.mxu0 0.0
  %6333 = vmatprep.mubr.f32.mxu0 0.0
  %6334 = vmatmul.mubr.f32.gmra.mrb[0].mxu0 %v6196
  %v6335 = vpop.f32.mrb[0].mxu0
  %v6336 = vadd.f32 0.0, %v6335
  %v6337 = vpop.f32.mrb[0].mxu0
  %v6338 = vadd.f32 0.0, %v6337
  %6339 = vdwg.mxu0
  %v6340 = vadd.f32 %v6153, %v6265
  %v6341 = vadd.f32 %v6154, %v6267
  %v6342 = vadd.f32 %v6155, %v6336
  %v6343 = vadd.f32 %v6156, %v6338
  %s6344 = scalar_lea.vmem %s3, 64
  %v6345 = vld [vmem:[%s6344] sm:$0xff]
  %6346 = vrot.lane.b32.xlu0 %v4875, 101
  %v6347 = vpop.permute.xlu0 %6346
  %6348 = vrot.lane.b32.xlu0 %v4876, 101
  %v6349 = vpop.permute.xlu0 %6348
  %6350 = vrot.lane.b32.xlu0 %v4877, 101
  %v6351 = vpop.permute.xlu0 %6350
  %6352 = vrot.lane.b32.xlu0 %v4878, 101
  %v6353 = vpop.permute.xlu0 %6352
  %6354 = vrot.lane.b32.xlu0 %v4879, 101
  %v6355 = vpop.permute.xlu0 %6354
  %6356 = vrot.lane.b32.xlu0 %v4880, 101
  %v6357 = vpop.permute.xlu0 %6356
  %6358 = vrot.lane.b32.xlu0 %v4881, 101
  %v6359 = vpop.permute.xlu0 %6358
  %6360 = vrot.lane.b32.xlu0 %v4882, 101
  %v6361 = vpop.permute.xlu0 %6360
  %6362 = vrot.lane.b32.xlu0 %v4883, 101
  %v6363 = vpop.permute.xlu0 %6362
  %6364 = vrot.lane.b32.xlu0 %v4884, 101
  %v6365 = vpop.permute.xlu0 %6364
  %v6366 = vsel %vm1535, %v6347, %v6349
  %v6367 = vsel %vm1535, %v6349, %v6351
  %v6368 = vsel %vm1535, %v6351, %v6353
  %v6369 = vsel %vm1535, %v6353, %v6355
  %v6370 = vsel %vm1535, %v6357, %v6359
  %v6371 = vsel %vm1535, %v6359, %v6361
  %v6372 = vsel %vm1535, %v6361, %v6363
  %v6373 = vsel %vm1535, %v6363, %v6365
  %v6383 = vsel %vm4931, %v6345, 0
  %6385 = vmatprep.subr.mxu0 %v6367
  %6386 = vmatpush1.msra.mxu0 %v6366
  %6387 = vmatprep.subr.mxu0 %v6371
  %6388 = vmatpush1.msra.mxu0 %v6370
  %6389 = vmatprep.subr.mxu0 0.0
  %6390 = vmatpush1.msra.mxu0 0.0
  %6391 = vmatprep.subr.mxu0 0.0
  %6392 = vmatpush1.msra.mxu0 0.0
  %6393 = vmatprep.subr.mxu0 0.0
  %6394 = vmatpush1.msra.mxu0 0.0
  %6395 = vmatprep.subr.mxu0 0.0
  %6396 = vmatpush1.msra.mxu0 0.0
  %6397 = vmatprep.subr.mxu0 0.0
  %6398 = vmatpush1.msra.mxu0 0.0
  %6399 = vmatprep.subr.mxu0 0.0
  %6400 = vmatpush1.msra.mxu0 0.0
  %6401 = vmatprep.subr.mxu0 0.0
  %6402 = vmatpush1.msra.mxu0 0.0
  %6403 = vmatprep.subr.mxu0 0.0
  %6404 = vmatpush1.msra.mxu0 0.0
  %6405 = vmatprep.subr.mxu0 0.0
  %6406 = vmatpush1.msra.mxu0 0.0
  %6407 = vmatprep.subr.mxu0 0.0
  %6408 = vmatpush1.msra.mxu0 0.0
  %6409 = vmatprep.subr.mxu0 0.0
  %6410 = vmatpush1.msra.mxu0 0.0
  %6411 = vmatprep.subr.mxu0 0.0
  %6412 = vmatpush1.msra.mxu0 0.0
  %6413 = vmatprep.subr.mxu0 0.0
  %6414 = vmatpush1.msra.mxu0 0.0
  %6415 = vmatprep.subr.mxu0 0.0
  %6416 = vmatpush1.msra.mxu0 0.0
  %6417 = vmatprep.subr.mxu0 0.0
  %6418 = vmatpush1.msra.mxu0 0.0
  %6419 = vmatprep.subr.mxu0 0.0
  %6420 = vmatpush1.msra.mxu0 0.0
  %6421 = vmatprep.subr.mxu0 0.0
  %6422 = vmatpush1.msra.mxu0 0.0
  %6423 = vmatprep.subr.mxu0 0.0
  %6424 = vmatpush1.msra.mxu0 0.0
  %6425 = vmatprep.subr.mxu0 0.0
  %6426 = vmatpush1.msra.mxu0 0.0
  %6427 = vmatprep.subr.mxu0 0.0
  %6428 = vmatpush1.msra.mxu0 0.0
  %6429 = vmatprep.subr.mxu0 0.0
  %6430 = vmatpush1.msra.mxu0 0.0
  %6431 = vmatprep.subr.mxu0 0.0
  %6432 = vmatpush1.msra.mxu0 0.0
  %6433 = vmatprep.subr.mxu0 0.0
  %6434 = vmatpush1.msra.mxu0 0.0
  %6435 = vmatprep.subr.mxu0 0.0
  %6436 = vmatpush1.msra.mxu0 0.0
  %6437 = vmatprep.subr.mxu0 0.0
  %6438 = vmatpush1.msra.mxu0 0.0
  %6439 = vmatprep.subr.mxu0 0.0
  %6440 = vmatpush1.msra.mxu0 0.0
  %6441 = vmatprep.subr.mxu0 0.0
  %6442 = vmatpush1.msra.mxu0 0.0
  %6443 = vmatprep.subr.mxu0 0.0
  %6444 = vmatpush1.msra.mxu0 0.0
  %6445 = vmatprep.subr.mxu0 0.0
  %6446 = vmatpush1.msra.mxu0 0.0
  %6447 = vmatprep.subr.mxu0 0.0
  %6448 = vmatpush1.msra.mxu0 0.0
  %6449 = vmatprep.mubr.f32.mxu0 0.0
  %6450 = vmatmul.mubr.f32.gmra.mrb[0].mxu0 %v6383
  %v6451 = vpop.f32.mrb[0].mxu0
  %v6452 = vadd.f32 0.0, %v6451
  %v6453 = vpop.f32.mrb[0].mxu0
  %v6454 = vadd.f32 0.0, %v6453
  %6455 = vdwg.mxu0
  %6456 = vmatprep.subr.mxu0 %v6369
  %6457 = vmatpush1.msra.mxu0 %v6368
  %6458 = vmatprep.subr.mxu0 %v6373
  %6459 = vmatpush1.msra.mxu0 %v6372
  %6460 = vmatprep.subr.mxu0 0.0
  %6461 = vmatpush1.msra.mxu0 0.0
  %6462 = vmatprep.subr.mxu0 0.0
  %6463 = vmatpush1.msra.mxu0 0.0
  %6464 = vmatprep.subr.mxu0 0.0
  %6465 = vmatpush1.msra.mxu0 0.0
  %6466 = vmatprep.subr.mxu0 0.0
  %6467 = vmatpush1.msra.mxu0 0.0
  %6468 = vmatprep.subr.mxu0 0.0
  %6469 = vmatpush1.msra.mxu0 0.0
  %6470 = vmatprep.subr.mxu0 0.0
  %6471 = vmatpush1.msra.mxu0 0.0
  %6472 = vmatprep.subr.mxu0 0.0
  %6473 = vmatpush1.msra.mxu0 0.0
  %6474 = vmatprep.subr.mxu0 0.0
  %6475 = vmatpush1.msra.mxu0 0.0
  %6476 = vmatprep.subr.mxu0 0.0
  %6477 = vmatpush1.msra.mxu0 0.0
  %6478 = vmatprep.subr.mxu0 0.0
  %6479 = vmatpush1.msra.mxu0 0.0
  %6480 = vmatprep.subr.mxu0 0.0
  %6481 = vmatpush1.msra.mxu0 0.0
  %6482 = vmatprep.subr.mxu0 0.0
  %6483 = vmatpush1.msra.mxu0 0.0
  %6484 = vmatprep.subr.mxu0 0.0
  %6485 = vmatpush1.msra.mxu0 0.0
  %6486 = vmatprep.subr.mxu0 0.0
  %6487 = vmatpush1.msra.mxu0 0.0
  %6488 = vmatprep.subr.mxu0 0.0
  %6489 = vmatpush1.msra.mxu0 0.0
  %6490 = vmatprep.subr.mxu0 0.0
  %6491 = vmatpush1.msra.mxu0 0.0
  %6492 = vmatprep.subr.mxu0 0.0
  %6493 = vmatpush1.msra.mxu0 0.0
  %6494 = vmatprep.subr.mxu0 0.0
  %6495 = vmatpush1.msra.mxu0 0.0
  %6496 = vmatprep.subr.mxu0 0.0
  %6497 = vmatpush1.msra.mxu0 0.0
  %6498 = vmatprep.subr.mxu0 0.0
  %6499 = vmatpush1.msra.mxu0 0.0
  %6500 = vmatprep.subr.mxu0 0.0
  %6501 = vmatpush1.msra.mxu0 0.0
  %6502 = vmatprep.subr.mxu0 0.0
  %6503 = vmatpush1.msra.mxu0 0.0
  %6504 = vmatprep.subr.mxu0 0.0
  %6505 = vmatpush1.msra.mxu0 0.0
  %6506 = vmatprep.subr.mxu0 0.0
  %6507 = vmatpush1.msra.mxu0 0.0
  %6508 = vmatprep.subr.mxu0 0.0
  %6509 = vmatpush1.msra.mxu0 0.0
  %6510 = vmatprep.subr.mxu0 0.0
  %6511 = vmatpush1.msra.mxu0 0.0
  %6512 = vmatprep.subr.mxu0 0.0
  %6513 = vmatpush1.msra.mxu0 0.0
  %6514 = vmatprep.subr.mxu0 0.0
  %6515 = vmatpush1.msra.mxu0 0.0
  %6516 = vmatprep.subr.mxu0 0.0
  %6517 = vmatpush1.msra.mxu0 0.0
  %6518 = vmatprep.subr.mxu0 0.0
  %6519 = vmatpush1.msra.mxu0 0.0
  %6520 = vmatprep.mubr.f32.mxu0 0.0
  %6521 = vmatmul.mubr.f32.gmra.mrb[0].mxu0 %v6383
  %v6522 = vpop.f32.mrb[0].mxu0
  %v6523 = vadd.f32 0.0, %v6522
  %v6524 = vpop.f32.mrb[0].mxu0
  %v6525 = vadd.f32 0.0, %v6524
  %6526 = vdwg.mxu0
  %v6527 = vadd.f32 %v6340, %v6452
  %v6528 = vadd.f32 %v6341, %v6454
  %v6529 = vadd.f32 %v6342, %v6523
  %v6530 = vadd.f32 %v6343, %v6525
  %s6531 = scalar_lea.vmem %s3, 72
  %v6532 = vld [vmem:[%s6531] sm:$0xff]
  %6533 = vrot.lane.b32.xlu0 %v4875, 100
  %v6534 = vpop.permute.xlu0 %6533
  %6535 = vrot.lane.b32.xlu0 %v4876, 100
  %v6536 = vpop.permute.xlu0 %6535
  %6537 = vrot.lane.b32.xlu0 %v4877, 100
  %v6538 = vpop.permute.xlu0 %6537
  %6539 = vrot.lane.b32.xlu0 %v4878, 100
  %v6540 = vpop.permute.xlu0 %6539
  %6541 = vrot.lane.b32.xlu0 %v4879, 100
  %v6542 = vpop.permute.xlu0 %6541
  %6543 = vrot.lane.b32.xlu0 %v4880, 100
  %v6544 = vpop.permute.xlu0 %6543
  %6545 = vrot.lane.b32.xlu0 %v4881, 100
  %v6546 = vpop.permute.xlu0 %6545
  %6547 = vrot.lane.b32.xlu0 %v4882, 100
  %v6548 = vpop.permute.xlu0 %6547
  %6549 = vrot.lane.b32.xlu0 %v4883, 100
  %v6550 = vpop.permute.xlu0 %6549
  %6551 = vrot.lane.b32.xlu0 %v4884, 100
  %v6552 = vpop.permute.xlu0 %6551
  %v6553 = vsel %vm1725, %v6534, %v6536
  %v6554 = vsel %vm1725, %v6536, %v6538
  %v6555 = vsel %vm1725, %v6538, %v6540
  %v6556 = vsel %vm1725, %v6540, %v6542
  %v6557 = vsel %vm1725, %v6544, %v6546
  %v6558 = vsel %vm1725, %v6546, %v6548
  %v6559 = vsel %vm1725, %v6548, %v6550
  %v6560 = vsel %vm1725, %v6550, %v6552
  %v6570 = vsel %vm4931, %v6532, 0
  %6572 = vmatprep.subr.mxu0 %v6554
  %6573 = vmatpush1.msra.mxu0 %v6553
  %6574 = vmatprep.subr.mxu0 %v6558
  %6575 = vmatpush1.msra.mxu0 %v6557
  %6576 = vmatprep.subr.mxu0 0.0
  %6577 = vmatpush1.msra.mxu0 0.0
  %6578 = vmatprep.subr.mxu0 0.0
  %6579 = vmatpush1.msra.mxu0 0.0
  %6580 = vmatprep.subr.mxu0 0.0
  %6581 = vmatpush1.msra.mxu0 0.0
  %6582 = vmatprep.subr.mxu0 0.0
  %6583 = vmatpush1.msra.mxu0 0.0
  %6584 = vmatprep.subr.mxu0 0.0
  %6585 = vmatpush1.msra.mxu0 0.0
  %6586 = vmatprep.subr.mxu0 0.0
  %6587 = vmatpush1.msra.mxu0 0.0
  %6588 = vmatprep.subr.mxu0 0.0
  %6589 = vmatpush1.msra.mxu0 0.0
  %6590 = vmatprep.subr.mxu0 0.0
  %6591 = vmatpush1.msra.mxu0 0.0
  %6592 = vmatprep.subr.mxu0 0.0
  %6593 = vmatpush1.msra.mxu0 0.0
  %6594 = vmatprep.subr.mxu0 0.0
  %6595 = vmatpush1.msra.mxu0 0.0
  %6596 = vmatprep.subr.mxu0 0.0
  %6597 = vmatpush1.msra.mxu0 0.0
  %6598 = vmatprep.subr.mxu0 0.0
  %6599 = vmatpush1.msra.mxu0 0.0
  %6600 = vmatprep.subr.mxu0 0.0
  %6601 = vmatpush1.msra.mxu0 0.0
  %6602 = vmatprep.subr.mxu0 0.0
  %6603 = vmatpush1.msra.mxu0 0.0
  %6604 = vmatprep.subr.mxu0 0.0
  %6605 = vmatpush1.msra.mxu0 0.0
  %6606 = vmatprep.subr.mxu0 0.0
  %6607 = vmatpush1.msra.mxu0 0.0
  %6608 = vmatprep.subr.mxu0 0.0
  %6609 = vmatpush1.msra.mxu0 0.0
  %6610 = vmatprep.subr.mxu0 0.0
  %6611 = vmatpush1.msra.mxu0 0.0
  %6612 = vmatprep.subr.mxu0 0.0
  %6613 = vmatpush1.msra.mxu0 0.0
  %6614 = vmatprep.subr.mxu0 0.0
  %6615 = vmatpush1.msra.mxu0 0.0
  %6616 = vmatprep.subr.mxu0 0.0
  %6617 = vmatpush1.msra.mxu0 0.0
  %6618 = vmatprep.subr.mxu0 0.0
  %6619 = vmatpush1.msra.mxu0 0.0
  %6620 = vmatprep.subr.mxu0 0.0
  %6621 = vmatpush1.msra.mxu0 0.0
  %6622 = vmatprep.subr.mxu0 0.0
  %6623 = vmatpush1.msra.mxu0 0.0
  %6624 = vmatprep.subr.mxu0 0.0
  %6625 = vmatpush1.msra.mxu0 0.0
  %6626 = vmatprep.subr.mxu0 0.0
  %6627 = vmatpush1.msra.mxu0 0.0
  %6628 = vmatprep.subr.mxu0 0.0
  %6629 = vmatpush1.msra.mxu0 0.0
  %6630 = vmatprep.subr.mxu0 0.0
  %6631 = vmatpush1.msra.mxu0 0.0
  %6632 = vmatprep.subr.mxu0 0.0
  %6633 = vmatpush1.msra.mxu0 0.0
  %6634 = vmatprep.subr.mxu0 0.0
  %6635 = vmatpush1.msra.mxu0 0.0
  %6636 = vmatprep.mubr.f32.mxu0 0.0
  %6637 = vmatmul.mubr.f32.gmra.mrb[0].mxu0 %v6570
  %v6638 = vpop.f32.mrb[0].mxu0
  %v6639 = vadd.f32 0.0, %v6638
  %v6640 = vpop.f32.mrb[0].mxu0
  %v6641 = vadd.f32 0.0, %v6640
  %6642 = vdwg.mxu0
  %6643 = vmatprep.subr.mxu0 %v6556
  %6644 = vmatpush1.msra.mxu0 %v6555
  %6645 = vmatprep.subr.mxu0 %v6560
  %6646 = vmatpush1.msra.mxu0 %v6559
  %6647 = vmatprep.subr.mxu0 0.0
  %6648 = vmatpush1.msra.mxu0 0.0
  %6649 = vmatprep.subr.mxu0 0.0
  %6650 = vmatpush1.msra.mxu0 0.0
  %6651 = vmatprep.subr.mxu0 0.0
  %6652 = vmatpush1.msra.mxu0 0.0
  %6653 = vmatprep.subr.mxu0 0.0
  %6654 = vmatpush1.msra.mxu0 0.0
  %6655 = vmatprep.subr.mxu0 0.0
  %6656 = vmatpush1.msra.mxu0 0.0
  %6657 = vmatprep.subr.mxu0 0.0
  %6658 = vmatpush1.msra.mxu0 0.0
  %6659 = vmatprep.subr.mxu0 0.0
  %6660 = vmatpush1.msra.mxu0 0.0
  %6661 = vmatprep.subr.mxu0 0.0
  %6662 = vmatpush1.msra.mxu0 0.0
  %6663 = vmatprep.subr.mxu0 0.0
  %6664 = vmatpush1.msra.mxu0 0.0
  %6665 = vmatprep.subr.mxu0 0.0
  %6666 = vmatpush1.msra.mxu0 0.0
  %6667 = vmatprep.subr.mxu0 0.0
  %6668 = vmatpush1.msra.mxu0 0.0
  %6669 = vmatprep.subr.mxu0 0.0
  %6670 = vmatpush1.msra.mxu0 0.0
  %6671 = vmatprep.subr.mxu0 0.0
  %6672 = vmatpush1.msra.mxu0 0.0
  %6673 = vmatprep.subr.mxu0 0.0
  %6674 = vmatpush1.msra.mxu0 0.0
  %6675 = vmatprep.subr.mxu0 0.0
  %6676 = vmatpush1.msra.mxu0 0.0
  %6677 = vmatprep.subr.mxu0 0.0
  %6678 = vmatpush1.msra.mxu0 0.0
  %6679 = vmatprep.subr.mxu0 0.0
  %6680 = vmatpush1.msra.mxu0 0.0
  %6681 = vmatprep.subr.mxu0 0.0
  %6682 = vmatpush1.msra.mxu0 0.0
  %6683 = vmatprep.subr.mxu0 0.0
  %6684 = vmatpush1.msra.mxu0 0.0
  %6685 = vmatprep.subr.mxu0 0.0
  %6686 = vmatpush1.msra.mxu0 0.0
  %6687 = vmatprep.subr.mxu0 0.0
  %6688 = vmatpush1.msra.mxu0 0.0
  %6689 = vmatprep.subr.mxu0 0.0
  %6690 = vmatpush1.msra.mxu0 0.0
  %6691 = vmatprep.subr.mxu0 0.0
  %6692 = vmatpush1.msra.mxu0 0.0
  %6693 = vmatprep.subr.mxu0 0.0
  %6694 = vmatpush1.msra.mxu0 0.0
  %6695 = vmatprep.subr.mxu0 0.0
  %6696 = vmatpush1.msra.mxu0 0.0
  %6697 = vmatprep.subr.mxu0 0.0
  %6698 = vmatpush1.msra.mxu0 0.0
  %6699 = vmatprep.subr.mxu0 0.0
  %6700 = vmatpush1.msra.mxu0 0.0
  %6701 = vmatprep.subr.mxu0 0.0
  %6702 = vmatpush1.msra.mxu0 0.0
  %6703 = vmatprep.subr.mxu0 0.0
  %6704 = vmatpush1.msra.mxu0 0.0
  %6705 = vmatprep.subr.mxu0 0.0
  %6706 = vmatpush1.msra.mxu0 0.0
  %6707 = vmatprep.mubr.f32.mxu0 0.0
  %6708 = vmatmul.mubr.f32.gmra.mrb[0].mxu0 %v6570
  %v6709 = vpop.f32.mrb[0].mxu0
  %v6710 = vadd.f32 0.0, %v6709
  %v6711 = vpop.f32.mrb[0].mxu0
  %v6712 = vadd.f32 0.0, %v6711
  %6713 = vdwg.mxu0
  %v6714 = vadd.f32 %v6527, %v6639
  %v6715 = vadd.f32 %v6528, %v6641
  %v6716 = vadd.f32 %v6529, %v6710
  %v6717 = vadd.f32 %v6530, %v6712
  %s6718 = scalar_lea.vmem %s3, 80
  %v6719 = vld [vmem:[%s6718] sm:$0xff]
  %6720 = vrot.lane.b32.xlu0 %v4875, 80
  %v6721 = vpop.permute.xlu0 %6720
  %6722 = vrot.lane.b32.xlu0 %v4876, 80
  %v6723 = vpop.permute.xlu0 %6722
  %6724 = vrot.lane.b32.xlu0 %v4877, 80
  %v6725 = vpop.permute.xlu0 %6724
  %6726 = vrot.lane.b32.xlu0 %v4878, 80
  %v6727 = vpop.permute.xlu0 %6726
  %6728 = vrot.lane.b32.xlu0 %v4879, 80
  %v6729 = vpop.permute.xlu0 %6728
  %6730 = vrot.lane.b32.xlu0 %v4880, 80
  %v6731 = vpop.permute.xlu0 %6730
  %6732 = vrot.lane.b32.xlu0 %v4881, 80
  %v6733 = vpop.permute.xlu0 %6732
  %6734 = vrot.lane.b32.xlu0 %v4882, 80
  %v6735 = vpop.permute.xlu0 %6734
  %6736 = vrot.lane.b32.xlu0 %v4883, 80
  %v6737 = vpop.permute.xlu0 %6736
  %6738 = vrot.lane.b32.xlu0 %v4884, 80
  %v6739 = vpop.permute.xlu0 %6738
  %v6740 = vsel %vm1915, %v6721, %v6723
  %v6741 = vsel %vm1915, %v6723, %v6725
  %v6742 = vsel %vm1915, %v6725, %v6727
  %v6743 = vsel %vm1915, %v6727, %v6729
  %v6744 = vsel %vm1915, %v6731, %v6733
  %v6745 = vsel %vm1915, %v6733, %v6735
  %v6746 = vsel %vm1915, %v6735, %v6737
  %v6747 = vsel %vm1915, %v6737, %v6739
  %v6757 = vsel %vm4931, %v6719, 0
  %6759 = vmatprep.subr.mxu0 %v6741
  %6760 = vmatpush1.msra.mxu0 %v6740
  %6761 = vmatprep.subr.mxu0 %v6745
  %6762 = vmatpush1.msra.mxu0 %v6744
  %6763 = vmatprep.subr.mxu0 0.0
  %6764 = vmatpush1.msra.mxu0 0.0
  %6765 = vmatprep.subr.mxu0 0.0
  %6766 = vmatpush1.msra.mxu0 0.0
  %6767 = vmatprep.subr.mxu0 0.0
  %6768 = vmatpush1.msra.mxu0 0.0
  %6769 = vmatprep.subr.mxu0 0.0
  %6770 = vmatpush1.msra.mxu0 0.0
  %6771 = vmatprep.subr.mxu0 0.0
  %6772 = vmatpush1.msra.mxu0 0.0
  %6773 = vmatprep.subr.mxu0 0.0
  %6774 = vmatpush1.msra.mxu0 0.0
  %6775 = vmatprep.subr.mxu0 0.0
  %6776 = vmatpush1.msra.mxu0 0.0
  %6777 = vmatprep.subr.mxu0 0.0
  %6778 = vmatpush1.msra.mxu0 0.0
  %6779 = vmatprep.subr.mxu0 0.0
  %6780 = vmatpush1.msra.mxu0 0.0
  %6781 = vmatprep.subr.mxu0 0.0
  %6782 = vmatpush1.msra.mxu0 0.0
  %6783 = vmatprep.subr.mxu0 0.0
  %6784 = vmatpush1.msra.mxu0 0.0
  %6785 = vmatprep.subr.mxu0 0.0
  %6786 = vmatpush1.msra.mxu0 0.0
  %6787 = vmatprep.subr.mxu0 0.0
  %6788 = vmatpush1.msra.mxu0 0.0
  %6789 = vmatprep.subr.mxu0 0.0
  %6790 = vmatpush1.msra.mxu0 0.0
  %6791 = vmatprep.subr.mxu0 0.0
  %6792 = vmatpush1.msra.mxu0 0.0
  %6793 = vmatprep.subr.mxu0 0.0
  %6794 = vmatpush1.msra.mxu0 0.0
  %6795 = vmatprep.subr.mxu0 0.0
  %6796 = vmatpush1.msra.mxu0 0.0
  %6797 = vmatprep.subr.mxu0 0.0
  %6798 = vmatpush1.msra.mxu0 0.0
  %6799 = vmatprep.subr.mxu0 0.0
  %6800 = vmatpush1.msra.mxu0 0.0
  %6801 = vmatprep.subr.mxu0 0.0
  %6802 = vmatpush1.msra.mxu0 0.0
  %6803 = vmatprep.subr.mxu0 0.0
  %6804 = vmatpush1.msra.mxu0 0.0
  %6805 = vmatprep.subr.mxu0 0.0
  %6806 = vmatpush1.msra.mxu0 0.0
  %6807 = vmatprep.subr.mxu0 0.0
  %6808 = vmatpush1.msra.mxu0 0.0
  %6809 = vmatprep.subr.mxu0 0.0
  %6810 = vmatpush1.msra.mxu0 0.0
  %6811 = vmatprep.subr.mxu0 0.0
  %6812 = vmatpush1.msra.mxu0 0.0
  %6813 = vmatprep.subr.mxu0 0.0
  %6814 = vmatpush1.msra.mxu0 0.0
  %6815 = vmatprep.subr.mxu0 0.0
  %6816 = vmatpush1.msra.mxu0 0.0
  %6817 = vmatprep.subr.mxu0 0.0
  %6818 = vmatpush1.msra.mxu0 0.0
  %6819 = vmatprep.subr.mxu0 0.0
  %6820 = vmatpush1.msra.mxu0 0.0
  %6821 = vmatprep.subr.mxu0 0.0
  %6822 = vmatpush1.msra.mxu0 0.0
  %6823 = vmatprep.mubr.f32.mxu0 0.0
  %6824 = vmatmul.mubr.f32.gmra.mrb[0].mxu0 %v6757
  %v6825 = vpop.f32.mrb[0].mxu0
  %v6826 = vadd.f32 0.0, %v6825
  %v6827 = vpop.f32.mrb[0].mxu0
  %v6828 = vadd.f32 0.0, %v6827
  %6829 = vdwg.mxu0
  %6830 = vmatprep.subr.mxu0 %v6743
  %6831 = vmatpush1.msra.mxu0 %v6742
  %6832 = vmatprep.subr.mxu0 %v6747
  %6833 = vmatpush1.msra.mxu0 %v6746
  %6834 = vmatprep.subr.mxu0 0.0
  %6835 = vmatpush1.msra.mxu0 0.0
  %6836 = vmatprep.subr.mxu0 0.0
  %6837 = vmatpush1.msra.mxu0 0.0
  %6838 = vmatprep.subr.mxu0 0.0
  %6839 = vmatpush1.msra.mxu0 0.0
  %6840 = vmatprep.subr.mxu0 0.0
  %6841 = vmatpush1.msra.mxu0 0.0
  %6842 = vmatprep.subr.mxu0 0.0
  %6843 = vmatpush1.msra.mxu0 0.0
  %6844 = vmatprep.subr.mxu0 0.0
  %6845 = vmatpush1.msra.mxu0 0.0
  %6846 = vmatprep.subr.mxu0 0.0
  %6847 = vmatpush1.msra.mxu0 0.0
  %6848 = vmatprep.subr.mxu0 0.0
  %6849 = vmatpush1.msra.mxu0 0.0
  %6850 = vmatprep.subr.mxu0 0.0
  %6851 = vmatpush1.msra.mxu0 0.0
  %6852 = vmatprep.subr.mxu0 0.0
  %6853 = vmatpush1.msra.mxu0 0.0
  %6854 = vmatprep.subr.mxu0 0.0
  %6855 = vmatpush1.msra.mxu0 0.0
  %6856 = vmatprep.subr.mxu0 0.0
  %6857 = vmatpush1.msra.mxu0 0.0
  %6858 = vmatprep.subr.mxu0 0.0
  %6859 = vmatpush1.msra.mxu0 0.0
  %6860 = vmatprep.subr.mxu0 0.0
  %6861 = vmatpush1.msra.mxu0 0.0
  %6862 = vmatprep.subr.mxu0 0.0
  %6863 = vmatpush1.msra.mxu0 0.0
  %6864 = vmatprep.subr.mxu0 0.0
  %6865 = vmatpush1.msra.mxu0 0.0
  %6866 = vmatprep.subr.mxu0 0.0
  %6867 = vmatpush1.msra.mxu0 0.0
  %6868 = vmatprep.subr.mxu0 0.0
  %6869 = vmatpush1.msra.mxu0 0.0
  %6870 = vmatprep.subr.mxu0 0.0
  %6871 = vmatpush1.msra.mxu0 0.0
  %6872 = vmatprep.subr.mxu0 0.0
  %6873 = vmatpush1.msra.mxu0 0.0
  %6874 = vmatprep.subr.mxu0 0.0
  %6875 = vmatpush1.msra.mxu0 0.0
  %6876 = vmatprep.subr.mxu0 0.0
  %6877 = vmatpush1.msra.mxu0 0.0
  %6878 = vmatprep.subr.mxu0 0.0
  %6879 = vmatpush1.msra.mxu0 0.0
  %6880 = vmatprep.subr.mxu0 0.0
  %6881 = vmatpush1.msra.mxu0 0.0
  %6882 = vmatprep.subr.mxu0 0.0
  %6883 = vmatpush1.msra.mxu0 0.0
  %6884 = vmatprep.subr.mxu0 0.0
  %6885 = vmatpush1.msra.mxu0 0.0
  %6886 = vmatprep.subr.mxu0 0.0
  %6887 = vmatpush1.msra.mxu0 0.0
  %6888 = vmatprep.subr.mxu0 0.0
  %6889 = vmatpush1.msra.mxu0 0.0
  %6890 = vmatprep.subr.mxu0 0.0
  %6891 = vmatpush1.msra.mxu0 0.0
  %6892 = vmatprep.subr.mxu0 0.0
  %6893 = vmatpush1.msra.mxu0 0.0
  %6894 = vmatprep.mubr.f32.mxu0 0.0
  %6895 = vmatmul.mubr.f32.gmra.mrb[0].mxu0 %v6757
  %v6896 = vpop.f32.mrb[0].mxu0
  %v6897 = vadd.f32 0.0, %v6896
  %v6898 = vpop.f32.mrb[0].mxu0
  %v6899 = vadd.f32 0.0, %v6898
  %6900 = vdwg.mxu0
  %v6901 = vadd.f32 %v6714, %v6826
  %v6902 = vadd.f32 %v6715, %v6828
  %v6903 = vadd.f32 %v6716, %v6897
  %v6904 = vadd.f32 %v6717, %v6899
  %s6905 = scalar_lea.vmem %s3, 88
  %v6906 = vld [vmem:[%s6905] sm:$0xff]
  %6907 = vrot.lane.b32.xlu0 %v4875, 79
  %v6908 = vpop.permute.xlu0 %6907
  %6909 = vrot.lane.b32.xlu0 %v4876, 79
  %v6910 = vpop.permute.xlu0 %6909
  %6911 = vrot.lane.b32.xlu0 %v4877, 79
  %v6912 = vpop.permute.xlu0 %6911
  %6913 = vrot.lane.b32.xlu0 %v4878, 79
  %v6914 = vpop.permute.xlu0 %6913
  %6915 = vrot.lane.b32.xlu0 %v4879, 79
  %v6916 = vpop.permute.xlu0 %6915
  %6917 = vrot.lane.b32.xlu0 %v4880, 79
  %v6918 = vpop.permute.xlu0 %6917
  %6919 = vrot.lane.b32.xlu0 %v4881, 79
  %v6920 = vpop.permute.xlu0 %6919
  %6921 = vrot.lane.b32.xlu0 %v4882, 79
  %v6922 = vpop.permute.xlu0 %6921
  %6923 = vrot.lane.b32.xlu0 %v4883, 79
  %v6924 = vpop.permute.xlu0 %6923
  %6925 = vrot.lane.b32.xlu0 %v4884, 79
  %v6926 = vpop.permute.xlu0 %6925
  %v6927 = vsel %vm2105, %v6908, %v6910
  %v6928 = vsel %vm2105, %v6910, %v6912
  %v6929 = vsel %vm2105, %v6912, %v6914
  %v6930 = vsel %vm2105, %v6914, %v6916
  %v6931 = vsel %vm2105, %v6918, %v6920
  %v6932 = vsel %vm2105, %v6920, %v6922
  %v6933 = vsel %vm2105, %v6922, %v6924
  %v6934 = vsel %vm2105, %v6924, %v6926
  %v6944 = vsel %vm4931, %v6906, 0
  %6946 = vmatprep.subr.mxu0 %v6928
  %6947 = vmatpush1.msra.mxu0 %v6927
  %6948 = vmatprep.subr.mxu0 %v6932
  %6949 = vmatpush1.msra.mxu0 %v6931
  %6950 = vmatprep.subr.mxu0 0.0
  %6951 = vmatpush1.msra.mxu0 0.0
  %6952 = vmatprep.subr.mxu0 0.0
  %6953 = vmatpush1.msra.mxu0 0.0
  %6954 = vmatprep.subr.mxu0 0.0
  %6955 = vmatpush1.msra.mxu0 0.0
  %6956 = vmatprep.subr.mxu0 0.0
  %6957 = vmatpush1.msra.mxu0 0.0
  %6958 = vmatprep.subr.mxu0 0.0
  %6959 = vmatpush1.msra.mxu0 0.0
  %6960 = vmatprep.subr.mxu0 0.0
  %6961 = vmatpush1.msra.mxu0 0.0
  %6962 = vmatprep.subr.mxu0 0.0
  %6963 = vmatpush1.msra.mxu0 0.0
  %6964 = vmatprep.subr.mxu0 0.0
  %6965 = vmatpush1.msra.mxu0 0.0
  %6966 = vmatprep.subr.mxu0 0.0
  %6967 = vmatpush1.msra.mxu0 0.0
  %6968 = vmatprep.subr.mxu0 0.0
  %6969 = vmatpush1.msra.mxu0 0.0
  %6970 = vmatprep.subr.mxu0 0.0
  %6971 = vmatpush1.msra.mxu0 0.0
  %6972 = vmatprep.subr.mxu0 0.0
  %6973 = vmatpush1.msra.mxu0 0.0
  %6974 = vmatprep.subr.mxu0 0.0
  %6975 = vmatpush1.msra.mxu0 0.0
  %6976 = vmatprep.subr.mxu0 0.0
  %6977 = vmatpush1.msra.mxu0 0.0
  %6978 = vmatprep.subr.mxu0 0.0
  %6979 = vmatpush1.msra.mxu0 0.0
  %6980 = vmatprep.subr.mxu0 0.0
  %6981 = vmatpush1.msra.mxu0 0.0
  %6982 = vmatprep.subr.mxu0 0.0
  %6983 = vmatpush1.msra.mxu0 0.0
  %6984 = vmatprep.subr.mxu0 0.0
  %6985 = vmatpush1.msra.mxu0 0.0
  %6986 = vmatprep.subr.mxu0 0.0
  %6987 = vmatpush1.msra.mxu0 0.0
  %6988 = vmatprep.subr.mxu0 0.0
  %6989 = vmatpush1.msra.mxu0 0.0
  %6990 = vmatprep.subr.mxu0 0.0
  %6991 = vmatpush1.msra.mxu0 0.0
  %6992 = vmatprep.subr.mxu0 0.0
  %6993 = vmatpush1.msra.mxu0 0.0
  %6994 = vmatprep.subr.mxu0 0.0
  %6995 = vmatpush1.msra.mxu0 0.0
  %6996 = vmatprep.subr.mxu0 0.0
  %6997 = vmatpush1.msra.mxu0 0.0
  %6998 = vmatprep.subr.mxu0 0.0
  %6999 = vmatpush1.msra.mxu0 0.0
  %7000 = vmatprep.subr.mxu0 0.0
  %7001 = vmatpush1.msra.mxu0 0.0
  %7002 = vmatprep.subr.mxu0 0.0
  %7003 = vmatpush1.msra.mxu0 0.0
  %7004 = vmatprep.subr.mxu0 0.0
  %7005 = vmatpush1.msra.mxu0 0.0
  %7006 = vmatprep.subr.mxu0 0.0
  %7007 = vmatpush1.msra.mxu0 0.0
  %7008 = vmatprep.subr.mxu0 0.0
  %7009 = vmatpush1.msra.mxu0 0.0
  %7010 = vmatprep.mubr.f32.mxu0 0.0
  %7011 = vmatmul.mubr.f32.gmra.mrb[0].mxu0 %v6944
  %v7012 = vpop.f32.mrb[0].mxu0
  %v7013 = vadd.f32 0.0, %v7012
  %v7014 = vpop.f32.mrb[0].mxu0
  %v7015 = vadd.f32 0.0, %v7014
  %7016 = vdwg.mxu0
  %7017 = vmatprep.subr.mxu0 %v6930
  %7018 = vmatpush1.msra.mxu0 %v6929
  %7019 = vmatprep.subr.mxu0 %v6934
  %7020 = vmatpush1.msra.mxu0 %v6933
  %7021 = vmatprep.subr.mxu0 0.0
  %7022 = vmatpush1.msra.mxu0 0.0
  %7023 = vmatprep.subr.mxu0 0.0
  %7024 = vmatpush1.msra.mxu0 0.0
  %7025 = vmatprep.subr.mxu0 0.0
  %7026 = vmatpush1.msra.mxu0 0.0
  %7027 = vmatprep.subr.mxu0 0.0
  %7028 = vmatpush1.msra.mxu0 0.0
  %7029 = vmatprep.subr.mxu0 0.0
  %7030 = vmatpush1.msra.mxu0 0.0
  %7031 = vmatprep.subr.mxu0 0.0
  %7032 = vmatpush1.msra.mxu0 0.0
  %7033 = vmatprep.subr.mxu0 0.0
  %7034 = vmatpush1.msra.mxu0 0.0
  %7035 = vmatprep.subr.mxu0 0.0
  %7036 = vmatpush1.msra.mxu0 0.0
  %7037 = vmatprep.subr.mxu0 0.0
  %7038 = vmatpush1.msra.mxu0 0.0
  %7039 = vmatprep.subr.mxu0 0.0
  %7040 = vmatpush1.msra.mxu0 0.0
  %7041 = vmatprep.subr.mxu0 0.0
  %7042 = vmatpush1.msra.mxu0 0.0
  %7043 = vmatprep.subr.mxu0 0.0
  %7044 = vmatpush1.msra.mxu0 0.0
  %7045 = vmatprep.subr.mxu0 0.0
  %7046 = vmatpush1.msra.mxu0 0.0
  %7047 = vmatprep.subr.mxu0 0.0
  %7048 = vmatpush1.msra.mxu0 0.0
  %7049 = vmatprep.subr.mxu0 0.0
  %7050 = vmatpush1.msra.mxu0 0.0
  %7051 = vmatprep.subr.mxu0 0.0
  %7052 = vmatpush1.msra.mxu0 0.0
  %7053 = vmatprep.subr.mxu0 0.0
  %7054 = vmatpush1.msra.mxu0 0.0
  %7055 = vmatprep.subr.mxu0 0.0
  %7056 = vmatpush1.msra.mxu0 0.0
  %7057 = vmatprep.subr.mxu0 0.0
  %7058 = vmatpush1.msra.mxu0 0.0
  %7059 = vmatprep.subr.mxu0 0.0
  %7060 = vmatpush1.msra.mxu0 0.0
  %7061 = vmatprep.subr.mxu0 0.0
  %7062 = vmatpush1.msra.mxu0 0.0
  %7063 = vmatprep.subr.mxu0 0.0
  %7064 = vmatpush1.msra.mxu0 0.0
  %7065 = vmatprep.subr.mxu0 0.0
  %7066 = vmatpush1.msra.mxu0 0.0
  %7067 = vmatprep.subr.mxu0 0.0
  %7068 = vmatpush1.msra.mxu0 0.0
  %7069 = vmatprep.subr.mxu0 0.0
  %7070 = vmatpush1.msra.mxu0 0.0
  %7071 = vmatprep.subr.mxu0 0.0
  %7072 = vmatpush1.msra.mxu0 0.0
  %7073 = vmatprep.subr.mxu0 0.0
  %7074 = vmatpush1.msra.mxu0 0.0
  %7075 = vmatprep.subr.mxu0 0.0
  %7076 = vmatpush1.msra.mxu0 0.0
  %7077 = vmatprep.subr.mxu0 0.0
  %7078 = vmatpush1.msra.mxu0 0.0
  %7079 = vmatprep.subr.mxu0 0.0
  %7080 = vmatpush1.msra.mxu0 0.0
  %7081 = vmatprep.mubr.f32.mxu0 0.0
  %7082 = vmatmul.mubr.f32.gmra.mrb[0].mxu0 %v6944
  %v7083 = vpop.f32.mrb[0].mxu0
  %v7084 = vadd.f32 0.0, %v7083
  %v7085 = vpop.f32.mrb[0].mxu0
  %v7086 = vadd.f32 0.0, %v7085
  %7087 = vdwg.mxu0
  %v7088 = vadd.f32 %v6901, %v7013
  %v7089 = vadd.f32 %v6902, %v7015
  %v7090 = vadd.f32 %v6903, %v7084
  %v7091 = vadd.f32 %v6904, %v7086
  %s7092 = scalar_lea.vmem %s3, 96
  %v7093 = vld [vmem:[%s7092] sm:$0xff]
  %7094 = vrot.lane.b32.xlu0 %v4875, 78
  %v7095 = vpop.permute.xlu0 %7094
  %7096 = vrot.lane.b32.xlu0 %v4876, 78
  %v7097 = vpop.permute.xlu0 %7096
  %7098 = vrot.lane.b32.xlu0 %v4877, 78
  %v7099 = vpop.permute.xlu0 %7098
  %7100 = vrot.lane.b32.xlu0 %v4878, 78
  %v7101 = vpop.permute.xlu0 %7100
  %7102 = vrot.lane.b32.xlu0 %v4879, 78
  %v7103 = vpop.permute.xlu0 %7102
  %7104 = vrot.lane.b32.xlu0 %v4880, 78
  %v7105 = vpop.permute.xlu0 %7104
  %7106 = vrot.lane.b32.xlu0 %v4881, 78
  %v7107 = vpop.permute.xlu0 %7106
  %7108 = vrot.lane.b32.xlu0 %v4882, 78
  %v7109 = vpop.permute.xlu0 %7108
  %7110 = vrot.lane.b32.xlu0 %v4883, 78
  %v7111 = vpop.permute.xlu0 %7110
  %7112 = vrot.lane.b32.xlu0 %v4884, 78
  %v7113 = vpop.permute.xlu0 %7112
  %v7114 = vsel %vm2295, %v7095, %v7097
  %v7115 = vsel %vm2295, %v7097, %v7099
  %v7116 = vsel %vm2295, %v7099, %v7101
  %v7117 = vsel %vm2295, %v7101, %v7103
  %v7118 = vsel %vm2295, %v7105, %v7107
  %v7119 = vsel %vm2295, %v7107, %v7109
  %v7120 = vsel %vm2295, %v7109, %v7111
  %v7121 = vsel %vm2295, %v7111, %v7113
  %v7131 = vsel %vm4931, %v7093, 0
  %7133 = vmatprep.subr.mxu0 %v7115
  %7134 = vmatpush1.msra.mxu0 %v7114
  %7135 = vmatprep.subr.mxu0 %v7119
  %7136 = vmatpush1.msra.mxu0 %v7118
  %7137 = vmatprep.subr.mxu0 0.0
  %7138 = vmatpush1.msra.mxu0 0.0
  %7139 = vmatprep.subr.mxu0 0.0
  %7140 = vmatpush1.msra.mxu0 0.0
  %7141 = vmatprep.subr.mxu0 0.0
  %7142 = vmatpush1.msra.mxu0 0.0
  %7143 = vmatprep.subr.mxu0 0.0
  %7144 = vmatpush1.msra.mxu0 0.0
  %7145 = vmatprep.subr.mxu0 0.0
  %7146 = vmatpush1.msra.mxu0 0.0
  %7147 = vmatprep.subr.mxu0 0.0
  %7148 = vmatpush1.msra.mxu0 0.0
  %7149 = vmatprep.subr.mxu0 0.0
  %7150 = vmatpush1.msra.mxu0 0.0
  %7151 = vmatprep.subr.mxu0 0.0
  %7152 = vmatpush1.msra.mxu0 0.0
  %7153 = vmatprep.subr.mxu0 0.0
  %7154 = vmatpush1.msra.mxu0 0.0
  %7155 = vmatprep.subr.mxu0 0.0
  %7156 = vmatpush1.msra.mxu0 0.0
  %7157 = vmatprep.subr.mxu0 0.0
  %7158 = vmatpush1.msra.mxu0 0.0
  %7159 = vmatprep.subr.mxu0 0.0
  %7160 = vmatpush1.msra.mxu0 0.0
  %7161 = vmatprep.subr.mxu0 0.0
  %7162 = vmatpush1.msra.mxu0 0.0
  %7163 = vmatprep.subr.mxu0 0.0
  %7164 = vmatpush1.msra.mxu0 0.0
  %7165 = vmatprep.subr.mxu0 0.0
  %7166 = vmatpush1.msra.mxu0 0.0
  %7167 = vmatprep.subr.mxu0 0.0
  %7168 = vmatpush1.msra.mxu0 0.0
  %7169 = vmatprep.subr.mxu0 0.0
  %7170 = vmatpush1.msra.mxu0 0.0
  %7171 = vmatprep.subr.mxu0 0.0
  %7172 = vmatpush1.msra.mxu0 0.0
  %7173 = vmatprep.subr.mxu0 0.0
  %7174 = vmatpush1.msra.mxu0 0.0
  %7175 = vmatprep.subr.mxu0 0.0
  %7176 = vmatpush1.msra.mxu0 0.0
  %7177 = vmatprep.subr.mxu0 0.0
  %7178 = vmatpush1.msra.mxu0 0.0
  %7179 = vmatprep.subr.mxu0 0.0
  %7180 = vmatpush1.msra.mxu0 0.0
  %7181 = vmatprep.subr.mxu0 0.0
  %7182 = vmatpush1.msra.mxu0 0.0
  %7183 = vmatprep.subr.mxu0 0.0
  %7184 = vmatpush1.msra.mxu0 0.0
  %7185 = vmatprep.subr.mxu0 0.0
  %7186 = vmatpush1.msra.mxu0 0.0
  %7187 = vmatprep.subr.mxu0 0.0
  %7188 = vmatpush1.msra.mxu0 0.0
  %7189 = vmatprep.subr.mxu0 0.0
  %7190 = vmatpush1.msra.mxu0 0.0
  %7191 = vmatprep.subr.mxu0 0.0
  %7192 = vmatpush1.msra.mxu0 0.0
  %7193 = vmatprep.subr.mxu0 0.0
  %7194 = vmatpush1.msra.mxu0 0.0
  %7195 = vmatprep.subr.mxu0 0.0
  %7196 = vmatpush1.msra.mxu0 0.0
  %7197 = vmatprep.mubr.f32.mxu0 0.0
  %7198 = vmatmul.mubr.f32.gmra.mrb[0].mxu0 %v7131
  %v7199 = vpop.f32.mrb[0].mxu0
  %v7200 = vadd.f32 0.0, %v7199
  %v7201 = vpop.f32.mrb[0].mxu0
  %v7202 = vadd.f32 0.0, %v7201
  %7203 = vdwg.mxu0
  %7204 = vmatprep.subr.mxu0 %v7117
  %7205 = vmatpush1.msra.mxu0 %v7116
  %7206 = vmatprep.subr.mxu0 %v7121
  %7207 = vmatpush1.msra.mxu0 %v7120
  %7208 = vmatprep.subr.mxu0 0.0
  %7209 = vmatpush1.msra.mxu0 0.0
  %7210 = vmatprep.subr.mxu0 0.0
  %7211 = vmatpush1.msra.mxu0 0.0
  %7212 = vmatprep.subr.mxu0 0.0
  %7213 = vmatpush1.msra.mxu0 0.0
  %7214 = vmatprep.subr.mxu0 0.0
  %7215 = vmatpush1.msra.mxu0 0.0
  %7216 = vmatprep.subr.mxu0 0.0
  %7217 = vmatpush1.msra.mxu0 0.0
  %7218 = vmatprep.subr.mxu0 0.0
  %7219 = vmatpush1.msra.mxu0 0.0
  %7220 = vmatprep.subr.mxu0 0.0
  %7221 = vmatpush1.msra.mxu0 0.0
  %7222 = vmatprep.subr.mxu0 0.0
  %7223 = vmatpush1.msra.mxu0 0.0
  %7224 = vmatprep.subr.mxu0 0.0
  %7225 = vmatpush1.msra.mxu0 0.0
  %7226 = vmatprep.subr.mxu0 0.0
  %7227 = vmatpush1.msra.mxu0 0.0
  %7228 = vmatprep.subr.mxu0 0.0
  %7229 = vmatpush1.msra.mxu0 0.0
  %7230 = vmatprep.subr.mxu0 0.0
  %7231 = vmatpush1.msra.mxu0 0.0
  %7232 = vmatprep.subr.mxu0 0.0
  %7233 = vmatpush1.msra.mxu0 0.0
  %7234 = vmatprep.subr.mxu0 0.0
  %7235 = vmatpush1.msra.mxu0 0.0
  %7236 = vmatprep.subr.mxu0 0.0
  %7237 = vmatpush1.msra.mxu0 0.0
  %7238 = vmatprep.subr.mxu0 0.0
  %7239 = vmatpush1.msra.mxu0 0.0
  %7240 = vmatprep.subr.mxu0 0.0
  %7241 = vmatpush1.msra.mxu0 0.0
  %7242 = vmatprep.subr.mxu0 0.0
  %7243 = vmatpush1.msra.mxu0 0.0
  %7244 = vmatprep.subr.mxu0 0.0
  %7245 = vmatpush1.msra.mxu0 0.0
  %7246 = vmatprep.subr.mxu0 0.0
  %7247 = vmatpush1.msra.mxu0 0.0
  %7248 = vmatprep.subr.mxu0 0.0
  %7249 = vmatpush1.msra.mxu0 0.0
  %7250 = vmatprep.subr.mxu0 0.0
  %7251 = vmatpush1.msra.mxu0 0.0
  %7252 = vmatprep.subr.mxu0 0.0
  %7253 = vmatpush1.msra.mxu0 0.0
  %7254 = vmatprep.subr.mxu0 0.0
  %7255 = vmatpush1.msra.mxu0 0.0
  %7256 = vmatprep.subr.mxu0 0.0
  %7257 = vmatpush1.msra.mxu0 0.0
  %7258 = vmatprep.subr.mxu0 0.0
  %7259 = vmatpush1.msra.mxu0 0.0
  %7260 = vmatprep.subr.mxu0 0.0
  %7261 = vmatpush1.msra.mxu0 0.0
  %7262 = vmatprep.subr.mxu0 0.0
  %7263 = vmatpush1.msra.mxu0 0.0
  %7264 = vmatprep.subr.mxu0 0.0
  %7265 = vmatpush1.msra.mxu0 0.0
  %7266 = vmatprep.subr.mxu0 0.0
  %7267 = vmatpush1.msra.mxu0 0.0
  %7268 = vmatprep.mubr.f32.mxu0 0.0
  %7269 = vmatmul.mubr.f32.gmra.mrb[0].mxu0 %v7131
  %v7270 = vpop.f32.mrb[0].mxu0
  %v7271 = vadd.f32 0.0, %v7270
  %v7272 = vpop.f32.mrb[0].mxu0
  %v7273 = vadd.f32 0.0, %v7272
  %7274 = vdwg.mxu0
  %v7275 = vadd.f32 %v7088, %v7200
  %v7276 = vadd.f32 %v7089, %v7202
  %v7277 = vadd.f32 %v7090, %v7271
  %v7278 = vadd.f32 %v7091, %v7273
  %s7279 = scalar_lea.vmem %s3, 104
  %v7280 = vld [vmem:[%s7279] sm:$0xff]
  %7281 = vrot.lane.b32.xlu0 %v4875, 77
  %v7282 = vpop.permute.xlu0 %7281
  %7283 = vrot.lane.b32.xlu0 %v4876, 77
  %v7284 = vpop.permute.xlu0 %7283
  %7285 = vrot.lane.b32.xlu0 %v4877, 77
  %v7286 = vpop.permute.xlu0 %7285
  %7287 = vrot.lane.b32.xlu0 %v4878, 77
  %v7288 = vpop.permute.xlu0 %7287
  %7289 = vrot.lane.b32.xlu0 %v4879, 77
  %v7290 = vpop.permute.xlu0 %7289
  %7291 = vrot.lane.b32.xlu0 %v4880, 77
  %v7292 = vpop.permute.xlu0 %7291
  %7293 = vrot.lane.b32.xlu0 %v4881, 77
  %v7294 = vpop.permute.xlu0 %7293
  %7295 = vrot.lane.b32.xlu0 %v4882, 77
  %v7296 = vpop.permute.xlu0 %7295
  %7297 = vrot.lane.b32.xlu0 %v4883, 77
  %v7298 = vpop.permute.xlu0 %7297
  %7299 = vrot.lane.b32.xlu0 %v4884, 77
  %v7300 = vpop.permute.xlu0 %7299
  %v7301 = vsel %vm2485, %v7282, %v7284
  %v7302 = vsel %vm2485, %v7284, %v7286
  %v7303 = vsel %vm2485, %v7286, %v7288
  %v7304 = vsel %vm2485, %v7288, %v7290
  %v7305 = vsel %vm2485, %v7292, %v7294
  %v7306 = vsel %vm2485, %v7294, %v7296
  %v7307 = vsel %vm2485, %v7296, %v7298
  %v7308 = vsel %vm2485, %v7298, %v7300
  %v7318 = vsel %vm4931, %v7280, 0
  %7320 = vmatprep.subr.mxu0 %v7302
  %7321 = vmatpush1.msra.mxu0 %v7301
  %7322 = vmatprep.subr.mxu0 %v7306
  %7323 = vmatpush1.msra.mxu0 %v7305
  %7324 = vmatprep.subr.mxu0 0.0
  %7325 = vmatpush1.msra.mxu0 0.0
  %7326 = vmatprep.subr.mxu0 0.0
  %7327 = vmatpush1.msra.mxu0 0.0
  %7328 = vmatprep.subr.mxu0 0.0
  %7329 = vmatpush1.msra.mxu0 0.0
  %7330 = vmatprep.subr.mxu0 0.0
  %7331 = vmatpush1.msra.mxu0 0.0
  %7332 = vmatprep.subr.mxu0 0.0
  %7333 = vmatpush1.msra.mxu0 0.0
  %7334 = vmatprep.subr.mxu0 0.0
  %7335 = vmatpush1.msra.mxu0 0.0
  %7336 = vmatprep.subr.mxu0 0.0
  %7337 = vmatpush1.msra.mxu0 0.0
  %7338 = vmatprep.subr.mxu0 0.0
  %7339 = vmatpush1.msra.mxu0 0.0
  %7340 = vmatprep.subr.mxu0 0.0
  %7341 = vmatpush1.msra.mxu0 0.0
  %7342 = vmatprep.subr.mxu0 0.0
  %7343 = vmatpush1.msra.mxu0 0.0
  %7344 = vmatprep.subr.mxu0 0.0
  %7345 = vmatpush1.msra.mxu0 0.0
  %7346 = vmatprep.subr.mxu0 0.0
  %7347 = vmatpush1.msra.mxu0 0.0
  %7348 = vmatprep.subr.mxu0 0.0
  %7349 = vmatpush1.msra.mxu0 0.0
  %7350 = vmatprep.subr.mxu0 0.0
  %7351 = vmatpush1.msra.mxu0 0.0
  %7352 = vmatprep.subr.mxu0 0.0
  %7353 = vmatpush1.msra.mxu0 0.0
  %7354 = vmatprep.subr.mxu0 0.0
  %7355 = vmatpush1.msra.mxu0 0.0
  %7356 = vmatprep.subr.mxu0 0.0
  %7357 = vmatpush1.msra.mxu0 0.0
  %7358 = vmatprep.subr.mxu0 0.0
  %7359 = vmatpush1.msra.mxu0 0.0
  %7360 = vmatprep.subr.mxu0 0.0
  %7361 = vmatpush1.msra.mxu0 0.0
  %7362 = vmatprep.subr.mxu0 0.0
  %7363 = vmatpush1.msra.mxu0 0.0
  %7364 = vmatprep.subr.mxu0 0.0
  %7365 = vmatpush1.msra.mxu0 0.0
  %7366 = vmatprep.subr.mxu0 0.0
  %7367 = vmatpush1.msra.mxu0 0.0
  %7368 = vmatprep.subr.mxu0 0.0
  %7369 = vmatpush1.msra.mxu0 0.0
  %7370 = vmatprep.subr.mxu0 0.0
  %7371 = vmatpush1.msra.mxu0 0.0
  %7372 = vmatprep.subr.mxu0 0.0
  %7373 = vmatpush1.msra.mxu0 0.0
  %7374 = vmatprep.subr.mxu0 0.0
  %7375 = vmatpush1.msra.mxu0 0.0
  %7376 = vmatprep.subr.mxu0 0.0
  %7377 = vmatpush1.msra.mxu0 0.0
  %7378 = vmatprep.subr.mxu0 0.0
  %7379 = vmatpush1.msra.mxu0 0.0
  %7380 = vmatprep.subr.mxu0 0.0
  %7381 = vmatpush1.msra.mxu0 0.0
  %7382 = vmatprep.subr.mxu0 0.0
  %7383 = vmatpush1.msra.mxu0 0.0
  %7384 = vmatprep.mubr.f32.mxu0 0.0
  %7385 = vmatmul.mubr.f32.gmra.mrb[0].mxu0 %v7318
  %v7386 = vpop.f32.mrb[0].mxu0
  %v7387 = vadd.f32 0.0, %v7386
  %v7388 = vpop.f32.mrb[0].mxu0
  %v7389 = vadd.f32 0.0, %v7388
  %7390 = vdwg.mxu0
  %7391 = vmatprep.subr.mxu0 %v7304
  %7392 = vmatpush1.msra.mxu0 %v7303
  %7393 = vmatprep.subr.mxu0 %v7308
  %7394 = vmatpush1.msra.mxu0 %v7307
  %7395 = vmatprep.subr.mxu0 0.0
  %7396 = vmatpush1.msra.mxu0 0.0
  %7397 = vmatprep.subr.mxu0 0.0
  %7398 = vmatpush1.msra.mxu0 0.0
  %7399 = vmatprep.subr.mxu0 0.0
  %7400 = vmatpush1.msra.mxu0 0.0
  %7401 = vmatprep.subr.mxu0 0.0
  %7402 = vmatpush1.msra.mxu0 0.0
  %7403 = vmatprep.subr.mxu0 0.0
  %7404 = vmatpush1.msra.mxu0 0.0
  %7405 = vmatprep.subr.mxu0 0.0
  %7406 = vmatpush1.msra.mxu0 0.0
  %7407 = vmatprep.subr.mxu0 0.0
  %7408 = vmatpush1.msra.mxu0 0.0
  %7409 = vmatprep.subr.mxu0 0.0
  %7410 = vmatpush1.msra.mxu0 0.0
  %7411 = vmatprep.subr.mxu0 0.0
  %7412 = vmatpush1.msra.mxu0 0.0
  %7413 = vmatprep.subr.mxu0 0.0
  %7414 = vmatpush1.msra.mxu0 0.0
  %7415 = vmatprep.subr.mxu0 0.0
  %7416 = vmatpush1.msra.mxu0 0.0
  %7417 = vmatprep.subr.mxu0 0.0
  %7418 = vmatpush1.msra.mxu0 0.0
  %7419 = vmatprep.subr.mxu0 0.0
  %7420 = vmatpush1.msra.mxu0 0.0
  %7421 = vmatprep.subr.mxu0 0.0
  %7422 = vmatpush1.msra.mxu0 0.0
  %7423 = vmatprep.subr.mxu0 0.0
  %7424 = vmatpush1.msra.mxu0 0.0
  %7425 = vmatprep.subr.mxu0 0.0
  %7426 = vmatpush1.msra.mxu0 0.0
  %7427 = vmatprep.subr.mxu0 0.0
  %7428 = vmatpush1.msra.mxu0 0.0
  %7429 = vmatprep.subr.mxu0 0.0
  %7430 = vmatpush1.msra.mxu0 0.0
  %7431 = vmatprep.subr.mxu0 0.0
  %7432 = vmatpush1.msra.mxu0 0.0
  %7433 = vmatprep.subr.mxu0 0.0
  %7434 = vmatpush1.msra.mxu0 0.0
  %7435 = vmatprep.subr.mxu0 0.0
  %7436 = vmatpush1.msra.mxu0 0.0
  %7437 = vmatprep.subr.mxu0 0.0
  %7438 = vmatpush1.msra.mxu0 0.0
  %7439 = vmatprep.subr.mxu0 0.0
  %7440 = vmatpush1.msra.mxu0 0.0
  %7441 = vmatprep.subr.mxu0 0.0
  %7442 = vmatpush1.msra.mxu0 0.0
  %7443 = vmatprep.subr.mxu0 0.0
  %7444 = vmatpush1.msra.mxu0 0.0
  %7445 = vmatprep.subr.mxu0 0.0
  %7446 = vmatpush1.msra.mxu0 0.0
  %7447 = vmatprep.subr.mxu0 0.0
  %7448 = vmatpush1.msra.mxu0 0.0
  %7449 = vmatprep.subr.mxu0 0.0
  %7450 = vmatpush1.msra.mxu0 0.0
  %7451 = vmatprep.subr.mxu0 0.0
  %7452 = vmatpush1.msra.mxu0 0.0
  %7453 = vmatprep.subr.mxu0 0.0
  %7454 = vmatpush1.msra.mxu0 0.0
  %7455 = vmatprep.mubr.f32.mxu0 0.0
  %7456 = vmatmul.mubr.f32.gmra.mrb[0].mxu0 %v7318
  %v7457 = vpop.f32.mrb[0].mxu0
  %v7458 = vadd.f32 0.0, %v7457
  %v7459 = vpop.f32.mrb[0].mxu0
  %v7460 = vadd.f32 0.0, %v7459
  %7461 = vdwg.mxu0
  %v7462 = vadd.f32 %v7275, %v7387
  %v7463 = vadd.f32 %v7276, %v7389
  %v7464 = vadd.f32 %v7277, %v7458
  %v7465 = vadd.f32 %v7278, %v7460
  %s7466 = scalar_lea.vmem %s3, 112
  %v7467 = vld [vmem:[%s7466] sm:$0xff]
  %7468 = vrot.lane.b32.xlu0 %v4875, 76
  %v7469 = vpop.permute.xlu0 %7468
  %7470 = vrot.lane.b32.xlu0 %v4876, 76
  %v7471 = vpop.permute.xlu0 %7470
  %7472 = vrot.lane.b32.xlu0 %v4877, 76
  %v7473 = vpop.permute.xlu0 %7472
  %7474 = vrot.lane.b32.xlu0 %v4878, 76
  %v7475 = vpop.permute.xlu0 %7474
  %7476 = vrot.lane.b32.xlu0 %v4879, 76
  %v7477 = vpop.permute.xlu0 %7476
  %7478 = vrot.lane.b32.xlu0 %v4880, 76
  %v7479 = vpop.permute.xlu0 %7478
  %7480 = vrot.lane.b32.xlu0 %v4881, 76
  %v7481 = vpop.permute.xlu0 %7480
  %7482 = vrot.lane.b32.xlu0 %v4882, 76
  %v7483 = vpop.permute.xlu0 %7482
  %7484 = vrot.lane.b32.xlu0 %v4883, 76
  %v7485 = vpop.permute.xlu0 %7484
  %7486 = vrot.lane.b32.xlu0 %v4884, 76
  %v7487 = vpop.permute.xlu0 %7486
  %v7488 = vsel %vm2675, %v7469, %v7471
  %v7489 = vsel %vm2675, %v7471, %v7473
  %v7490 = vsel %vm2675, %v7473, %v7475
  %v7491 = vsel %vm2675, %v7475, %v7477
  %v7492 = vsel %vm2675, %v7479, %v7481
  %v7493 = vsel %vm2675, %v7481, %v7483
  %v7494 = vsel %vm2675, %v7483, %v7485
  %v7495 = vsel %vm2675, %v7485, %v7487
  %v7505 = vsel %vm4931, %v7467, 0
  %7507 = vmatprep.subr.mxu0 %v7489
  %7508 = vmatpush1.msra.mxu0 %v7488
  %7509 = vmatprep.subr.mxu0 %v7493
  %7510 = vmatpush1.msra.mxu0 %v7492
  %7511 = vmatprep.subr.mxu0 0.0
  %7512 = vmatpush1.msra.mxu0 0.0
  %7513 = vmatprep.subr.mxu0 0.0
  %7514 = vmatpush1.msra.mxu0 0.0
  %7515 = vmatprep.subr.mxu0 0.0
  %7516 = vmatpush1.msra.mxu0 0.0
  %7517 = vmatprep.subr.mxu0 0.0
  %7518 = vmatpush1.msra.mxu0 0.0
  %7519 = vmatprep.subr.mxu0 0.0
  %7520 = vmatpush1.msra.mxu0 0.0
  %7521 = vmatprep.subr.mxu0 0.0
  %7522 = vmatpush1.msra.mxu0 0.0
  %7523 = vmatprep.subr.mxu0 0.0
  %7524 = vmatpush1.msra.mxu0 0.0
  %7525 = vmatprep.subr.mxu0 0.0
  %7526 = vmatpush1.msra.mxu0 0.0
  %7527 = vmatprep.subr.mxu0 0.0
  %7528 = vmatpush1.msra.mxu0 0.0
  %7529 = vmatprep.subr.mxu0 0.0
  %7530 = vmatpush1.msra.mxu0 0.0
  %7531 = vmatprep.subr.mxu0 0.0
  %7532 = vmatpush1.msra.mxu0 0.0
  %7533 = vmatprep.subr.mxu0 0.0
  %7534 = vmatpush1.msra.mxu0 0.0
  %7535 = vmatprep.subr.mxu0 0.0
  %7536 = vmatpush1.msra.mxu0 0.0
  %7537 = vmatprep.subr.mxu0 0.0
  %7538 = vmatpush1.msra.mxu0 0.0
  %7539 = vmatprep.subr.mxu0 0.0
  %7540 = vmatpush1.msra.mxu0 0.0
  %7541 = vmatprep.subr.mxu0 0.0
  %7542 = vmatpush1.msra.mxu0 0.0
  %7543 = vmatprep.subr.mxu0 0.0
  %7544 = vmatpush1.msra.mxu0 0.0
  %7545 = vmatprep.subr.mxu0 0.0
  %7546 = vmatpush1.msra.mxu0 0.0
  %7547 = vmatprep.subr.mxu0 0.0
  %7548 = vmatpush1.msra.mxu0 0.0
  %7549 = vmatprep.subr.mxu0 0.0
  %7550 = vmatpush1.msra.mxu0 0.0
  %7551 = vmatprep.subr.mxu0 0.0
  %7552 = vmatpush1.msra.mxu0 0.0
  %7553 = vmatprep.subr.mxu0 0.0
  %7554 = vmatpush1.msra.mxu0 0.0
  %7555 = vmatprep.subr.mxu0 0.0
  %7556 = vmatpush1.msra.mxu0 0.0
  %7557 = vmatprep.subr.mxu0 0.0
  %7558 = vmatpush1.msra.mxu0 0.0
  %7559 = vmatprep.subr.mxu0 0.0
  %7560 = vmatpush1.msra.mxu0 0.0
  %7561 = vmatprep.subr.mxu0 0.0
  %7562 = vmatpush1.msra.mxu0 0.0
  %7563 = vmatprep.subr.mxu0 0.0
  %7564 = vmatpush1.msra.mxu0 0.0
  %7565 = vmatprep.subr.mxu0 0.0
  %7566 = vmatpush1.msra.mxu0 0.0
  %7567 = vmatprep.subr.mxu0 0.0
  %7568 = vmatpush1.msra.mxu0 0.0
  %7569 = vmatprep.subr.mxu0 0.0
  %7570 = vmatpush1.msra.mxu0 0.0
  %7571 = vmatprep.mubr.f32.mxu0 0.0
  %7572 = vmatmul.mubr.f32.gmra.mrb[0].mxu0 %v7505
  %v7573 = vpop.f32.mrb[0].mxu0
  %v7574 = vadd.f32 0.0, %v7573
  %v7575 = vpop.f32.mrb[0].mxu0
  %v7576 = vadd.f32 0.0, %v7575
  %7577 = vdwg.mxu0
  %7578 = vmatprep.subr.mxu0 %v7491
  %7579 = vmatpush1.msra.mxu0 %v7490
  %7580 = vmatprep.subr.mxu0 %v7495
  %7581 = vmatpush1.msra.mxu0 %v7494
  %7582 = vmatprep.subr.mxu0 0.0
  %7583 = vmatpush1.msra.mxu0 0.0
  %7584 = vmatprep.subr.mxu0 0.0
  %7585 = vmatpush1.msra.mxu0 0.0
  %7586 = vmatprep.subr.mxu0 0.0
  %7587 = vmatpush1.msra.mxu0 0.0
  %7588 = vmatprep.subr.mxu0 0.0
  %7589 = vmatpush1.msra.mxu0 0.0
  %7590 = vmatprep.subr.mxu0 0.0
  %7591 = vmatpush1.msra.mxu0 0.0
  %7592 = vmatprep.subr.mxu0 0.0
  %7593 = vmatpush1.msra.mxu0 0.0
  %7594 = vmatprep.subr.mxu0 0.0
  %7595 = vmatpush1.msra.mxu0 0.0
  %7596 = vmatprep.subr.mxu0 0.0
  %7597 = vmatpush1.msra.mxu0 0.0
  %7598 = vmatprep.subr.mxu0 0.0
  %7599 = vmatpush1.msra.mxu0 0.0
  %7600 = vmatprep.subr.mxu0 0.0
  %7601 = vmatpush1.msra.mxu0 0.0
  %7602 = vmatprep.subr.mxu0 0.0
  %7603 = vmatpush1.msra.mxu0 0.0
  %7604 = vmatprep.subr.mxu0 0.0
  %7605 = vmatpush1.msra.mxu0 0.0
  %7606 = vmatprep.subr.mxu0 0.0
  %7607 = vmatpush1.msra.mxu0 0.0
  %7608 = vmatprep.subr.mxu0 0.0
  %7609 = vmatpush1.msra.mxu0 0.0
  %7610 = vmatprep.subr.mxu0 0.0
  %7611 = vmatpush1.msra.mxu0 0.0
  %7612 = vmatprep.subr.mxu0 0.0
  %7613 = vmatpush1.msra.mxu0 0.0
  %7614 = vmatprep.subr.mxu0 0.0
  %7615 = vmatpush1.msra.mxu0 0.0
  %7616 = vmatprep.subr.mxu0 0.0
  %7617 = vmatpush1.msra.mxu0 0.0
  %7618 = vmatprep.subr.mxu0 0.0
  %7619 = vmatpush1.msra.mxu0 0.0
  %7620 = vmatprep.subr.mxu0 0.0
  %7621 = vmatpush1.msra.mxu0 0.0
  %7622 = vmatprep.subr.mxu0 0.0
  %7623 = vmatpush1.msra.mxu0 0.0
  %7624 = vmatprep.subr.mxu0 0.0
  %7625 = vmatpush1.msra.mxu0 0.0
  %7626 = vmatprep.subr.mxu0 0.0
  %7627 = vmatpush1.msra.mxu0 0.0
  %7628 = vmatprep.subr.mxu0 0.0
  %7629 = vmatpush1.msra.mxu0 0.0
  %7630 = vmatprep.subr.mxu0 0.0
  %7631 = vmatpush1.msra.mxu0 0.0
  %7632 = vmatprep.subr.mxu0 0.0
  %7633 = vmatpush1.msra.mxu0 0.0
  %7634 = vmatprep.subr.mxu0 0.0
  %7635 = vmatpush1.msra.mxu0 0.0
  %7636 = vmatprep.subr.mxu0 0.0
  %7637 = vmatpush1.msra.mxu0 0.0
  %7638 = vmatprep.subr.mxu0 0.0
  %7639 = vmatpush1.msra.mxu0 0.0
  %7640 = vmatprep.subr.mxu0 0.0
  %7641 = vmatpush1.msra.mxu0 0.0
  %7642 = vmatprep.mubr.f32.mxu0 0.0
  %7643 = vmatmul.mubr.f32.gmra.mrb[0].mxu0 %v7505
  %v7644 = vpop.f32.mrb[0].mxu0
  %v7645 = vadd.f32 0.0, %v7644
  %v7646 = vpop.f32.mrb[0].mxu0
  %v7647 = vadd.f32 0.0, %v7646
  %7648 = vdwg.mxu0
  %v7649 = vadd.f32 %v7462, %v7574
  %v7650 = vadd.f32 %v7463, %v7576
  %v7651 = vadd.f32 %v7464, %v7645
  %v7652 = vadd.f32 %v7465, %v7647
  %s7653 = scalar_lea.vmem %s3, 120
  %v7654 = vld [vmem:[%s7653] sm:$0xff]
  %7655 = vrot.lane.b32.xlu0 %v4875, 56
  %v7656 = vpop.permute.xlu0 %7655
  %7657 = vrot.lane.b32.xlu0 %v4876, 56
  %v7658 = vpop.permute.xlu0 %7657
  %7659 = vrot.lane.b32.xlu0 %v4877, 56
  %v7660 = vpop.permute.xlu0 %7659
  %7661 = vrot.lane.b32.xlu0 %v4878, 56
  %v7662 = vpop.permute.xlu0 %7661
  %7663 = vrot.lane.b32.xlu0 %v4879, 56
  %v7664 = vpop.permute.xlu0 %7663
  %7665 = vrot.lane.b32.xlu0 %v4880, 56
  %v7666 = vpop.permute.xlu0 %7665
  %7667 = vrot.lane.b32.xlu0 %v4881, 56
  %v7668 = vpop.permute.xlu0 %7667
  %7669 = vrot.lane.b32.xlu0 %v4882, 56
  %v7670 = vpop.permute.xlu0 %7669
  %7671 = vrot.lane.b32.xlu0 %v4883, 56
  %v7672 = vpop.permute.xlu0 %7671
  %7673 = vrot.lane.b32.xlu0 %v4884, 56
  %v7674 = vpop.permute.xlu0 %7673
  %v7675 = vsel %vm2865, %v7656, %v7658
  %v7676 = vsel %vm2865, %v7658, %v7660
  %v7677 = vsel %vm2865, %v7660, %v7662
  %v7678 = vsel %vm2865, %v7662, %v7664
  %v7679 = vsel %vm2865, %v7666, %v7668
  %v7680 = vsel %vm2865, %v7668, %v7670
  %v7681 = vsel %vm2865, %v7670, %v7672
  %v7682 = vsel %vm2865, %v7672, %v7674
  %v7692 = vsel %vm4931, %v7654, 0
  %7694 = vmatprep.subr.mxu0 %v7676
  %7695 = vmatpush1.msra.mxu0 %v7675
  %7696 = vmatprep.subr.mxu0 %v7680
  %7697 = vmatpush1.msra.mxu0 %v7679
  %7698 = vmatprep.subr.mxu0 0.0
  %7699 = vmatpush1.msra.mxu0 0.0
  %7700 = vmatprep.subr.mxu0 0.0
  %7701 = vmatpush1.msra.mxu0 0.0
  %7702 = vmatprep.subr.mxu0 0.0
  %7703 = vmatpush1.msra.mxu0 0.0
  %7704 = vmatprep.subr.mxu0 0.0
  %7705 = vmatpush1.msra.mxu0 0.0
  %7706 = vmatprep.subr.mxu0 0.0
  %7707 = vmatpush1.msra.mxu0 0.0
  %7708 = vmatprep.subr.mxu0 0.0
  %7709 = vmatpush1.msra.mxu0 0.0
  %7710 = vmatprep.subr.mxu0 0.0
  %7711 = vmatpush1.msra.mxu0 0.0
  %7712 = vmatprep.subr.mxu0 0.0
  %7713 = vmatpush1.msra.mxu0 0.0
  %7714 = vmatprep.subr.mxu0 0.0
  %7715 = vmatpush1.msra.mxu0 0.0
  %7716 = vmatprep.subr.mxu0 0.0
  %7717 = vmatpush1.msra.mxu0 0.0
  %7718 = vmatprep.subr.mxu0 0.0
  %7719 = vmatpush1.msra.mxu0 0.0
  %7720 = vmatprep.subr.mxu0 0.0
  %7721 = vmatpush1.msra.mxu0 0.0
  %7722 = vmatprep.subr.mxu0 0.0
  %7723 = vmatpush1.msra.mxu0 0.0
  %7724 = vmatprep.subr.mxu0 0.0
  %7725 = vmatpush1.msra.mxu0 0.0
  %7726 = vmatprep.subr.mxu0 0.0
  %7727 = vmatpush1.msra.mxu0 0.0
  %7728 = vmatprep.subr.mxu0 0.0
  %7729 = vmatpush1.msra.mxu0 0.0
  %7730 = vmatprep.subr.mxu0 0.0
  %7731 = vmatpush1.msra.mxu0 0.0
  %7732 = vmatprep.subr.mxu0 0.0
  %7733 = vmatpush1.msra.mxu0 0.0
  %7734 = vmatprep.subr.mxu0 0.0
  %7735 = vmatpush1.msra.mxu0 0.0
  %7736 = vmatprep.subr.mxu0 0.0
  %7737 = vmatpush1.msra.mxu0 0.0
  %7738 = vmatprep.subr.mxu0 0.0
  %7739 = vmatpush1.msra.mxu0 0.0
  %7740 = vmatprep.subr.mxu0 0.0
  %7741 = vmatpush1.msra.mxu0 0.0
  %7742 = vmatprep.subr.mxu0 0.0
  %7743 = vmatpush1.msra.mxu0 0.0
  %7744 = vmatprep.subr.mxu0 0.0
  %7745 = vmatpush1.msra.mxu0 0.0
  %7746 = vmatprep.subr.mxu0 0.0
  %7747 = vmatpush1.msra.mxu0 0.0
  %7748 = vmatprep.subr.mxu0 0.0
  %7749 = vmatpush1.msra.mxu0 0.0
  %7750 = vmatprep.subr.mxu0 0.0
  %7751 = vmatpush1.msra.mxu0 0.0
  %7752 = vmatprep.subr.mxu0 0.0
  %7753 = vmatpush1.msra.mxu0 0.0
  %7754 = vmatprep.subr.mxu0 0.0
  %7755 = vmatpush1.msra.mxu0 0.0
  %7756 = vmatprep.subr.mxu0 0.0
  %7757 = vmatpush1.msra.mxu0 0.0
  %7758 = vmatprep.mubr.f32.mxu0 0.0
  %7759 = vmatmul.mubr.f32.gmra.mrb[0].mxu0 %v7692
  %v7760 = vpop.f32.mrb[0].mxu0
  %v7761 = vadd.f32 0.0, %v7760
  %v7762 = vpop.f32.mrb[0].mxu0
  %v7763 = vadd.f32 0.0, %v7762
  %7764 = vdwg.mxu0
  %7765 = vmatprep.subr.mxu0 %v7678
  %7766 = vmatpush1.msra.mxu0 %v7677
  %7767 = vmatprep.subr.mxu0 %v7682
  %7768 = vmatpush1.msra.mxu0 %v7681
  %7769 = vmatprep.subr.mxu0 0.0
  %7770 = vmatpush1.msra.mxu0 0.0
  %7771 = vmatprep.subr.mxu0 0.0
  %7772 = vmatpush1.msra.mxu0 0.0
  %7773 = vmatprep.subr.mxu0 0.0
  %7774 = vmatpush1.msra.mxu0 0.0
  %7775 = vmatprep.subr.mxu0 0.0
  %7776 = vmatpush1.msra.mxu0 0.0
  %7777 = vmatprep.subr.mxu0 0.0
  %7778 = vmatpush1.msra.mxu0 0.0
  %7779 = vmatprep.subr.mxu0 0.0
  %7780 = vmatpush1.msra.mxu0 0.0
  %7781 = vmatprep.subr.mxu0 0.0
  %7782 = vmatpush1.msra.mxu0 0.0
  %7783 = vmatprep.subr.mxu0 0.0
  %7784 = vmatpush1.msra.mxu0 0.0
  %7785 = vmatprep.subr.mxu0 0.0
  %7786 = vmatpush1.msra.mxu0 0.0
  %7787 = vmatprep.subr.mxu0 0.0
  %7788 = vmatpush1.msra.mxu0 0.0
  %7789 = vmatprep.subr.mxu0 0.0
  %7790 = vmatpush1.msra.mxu0 0.0
  %7791 = vmatprep.subr.mxu0 0.0
  %7792 = vmatpush1.msra.mxu0 0.0
  %7793 = vmatprep.subr.mxu0 0.0
  %7794 = vmatpush1.msra.mxu0 0.0
  %7795 = vmatprep.subr.mxu0 0.0
  %7796 = vmatpush1.msra.mxu0 0.0
  %7797 = vmatprep.subr.mxu0 0.0
  %7798 = vmatpush1.msra.mxu0 0.0
  %7799 = vmatprep.subr.mxu0 0.0
  %7800 = vmatpush1.msra.mxu0 0.0
  %7801 = vmatprep.subr.mxu0 0.0
  %7802 = vmatpush1.msra.mxu0 0.0
  %7803 = vmatprep.subr.mxu0 0.0
  %7804 = vmatpush1.msra.mxu0 0.0
  %7805 = vmatprep.subr.mxu0 0.0
  %7806 = vmatpush1.msra.mxu0 0.0
  %7807 = vmatprep.subr.mxu0 0.0
  %7808 = vmatpush1.msra.mxu0 0.0
  %7809 = vmatprep.subr.mxu0 0.0
  %7810 = vmatpush1.msra.mxu0 0.0
  %7811 = vmatprep.subr.mxu0 0.0
  %7812 = vmatpush1.msra.mxu0 0.0
  %7813 = vmatprep.subr.mxu0 0.0
  %7814 = vmatpush1.msra.mxu0 0.0
  %7815 = vmatprep.subr.mxu0 0.0
  %7816 = vmatpush1.msra.mxu0 0.0
  %7817 = vmatprep.subr.mxu0 0.0
  %7818 = vmatpush1.msra.mxu0 0.0
  %7819 = vmatprep.subr.mxu0 0.0
  %7820 = vmatpush1.msra.mxu0 0.0
  %7821 = vmatprep.subr.mxu0 0.0
  %7822 = vmatpush1.msra.mxu0 0.0
  %7823 = vmatprep.subr.mxu0 0.0
  %7824 = vmatpush1.msra.mxu0 0.0
  %7825 = vmatprep.subr.mxu0 0.0
  %7826 = vmatpush1.msra.mxu0 0.0
  %7827 = vmatprep.subr.mxu0 0.0
  %7828 = vmatpush1.msra.mxu0 0.0
  %7829 = vmatprep.mubr.f32.mxu0 0.0
  %7830 = vmatmul.mubr.f32.gmra.mrb[0].mxu0 %v7692
  %v7831 = vpop.f32.mrb[0].mxu0
  %v7832 = vadd.f32 0.0, %v7831
  %v7833 = vpop.f32.mrb[0].mxu0
  %v7834 = vadd.f32 0.0, %v7833
  %7835 = vdwg.mxu0
  %v7836 = vadd.f32 %v7649, %v7761
  %v7837 = vadd.f32 %v7650, %v7763
  %v7838 = vadd.f32 %v7651, %v7832
  %v7839 = vadd.f32 %v7652, %v7834
  %s7840 = scalar_lea.vmem %s3, 128
  %v7841 = vld [vmem:[%s7840] sm:$0xff]
  %7842 = vrot.lane.b32.xlu0 %v4875, 55
  %v7843 = vpop.permute.xlu0 %7842
  %7844 = vrot.lane.b32.xlu0 %v4876, 55
  %v7845 = vpop.permute.xlu0 %7844
  %7846 = vrot.lane.b32.xlu0 %v4877, 55
  %v7847 = vpop.permute.xlu0 %7846
  %7848 = vrot.lane.b32.xlu0 %v4878, 55
  %v7849 = vpop.permute.xlu0 %7848
  %7850 = vrot.lane.b32.xlu0 %v4879, 55
  %v7851 = vpop.permute.xlu0 %7850
  %7852 = vrot.lane.b32.xlu0 %v4880, 55
  %v7853 = vpop.permute.xlu0 %7852
  %7854 = vrot.lane.b32.xlu0 %v4881, 55
  %v7855 = vpop.permute.xlu0 %7854
  %7856 = vrot.lane.b32.xlu0 %v4882, 55
  %v7857 = vpop.permute.xlu0 %7856
  %7858 = vrot.lane.b32.xlu0 %v4883, 55
  %v7859 = vpop.permute.xlu0 %7858
  %7860 = vrot.lane.b32.xlu0 %v4884, 55
  %v7861 = vpop.permute.xlu0 %7860
  %v7862 = vsel %vm3055, %v7843, %v7845
  %v7863 = vsel %vm3055, %v7845, %v7847
  %v7864 = vsel %vm3055, %v7847, %v7849
  %v7865 = vsel %vm3055, %v7849, %v7851
  %v7866 = vsel %vm3055, %v7853, %v7855
  %v7867 = vsel %vm3055, %v7855, %v7857
  %v7868 = vsel %vm3055, %v7857, %v7859
  %v7869 = vsel %vm3055, %v7859, %v7861
  %v7879 = vsel %vm4931, %v7841, 0
  %7881 = vmatprep.subr.mxu0 %v7863
  %7882 = vmatpush1.msra.mxu0 %v7862
  %7883 = vmatprep.subr.mxu0 %v7867
  %7884 = vmatpush1.msra.mxu0 %v7866
  %7885 = vmatprep.subr.mxu0 0.0
  %7886 = vmatpush1.msra.mxu0 0.0
  %7887 = vmatprep.subr.mxu0 0.0
  %7888 = vmatpush1.msra.mxu0 0.0
  %7889 = vmatprep.subr.mxu0 0.0
  %7890 = vmatpush1.msra.mxu0 0.0
  %7891 = vmatprep.subr.mxu0 0.0
  %7892 = vmatpush1.msra.mxu0 0.0
  %7893 = vmatprep.subr.mxu0 0.0
  %7894 = vmatpush1.msra.mxu0 0.0
  %7895 = vmatprep.subr.mxu0 0.0
  %7896 = vmatpush1.msra.mxu0 0.0
  %7897 = vmatprep.subr.mxu0 0.0
  %7898 = vmatpush1.msra.mxu0 0.0
  %7899 = vmatprep.subr.mxu0 0.0
  %7900 = vmatpush1.msra.mxu0 0.0
  %7901 = vmatprep.subr.mxu0 0.0
  %7902 = vmatpush1.msra.mxu0 0.0
  %7903 = vmatprep.subr.mxu0 0.0
  %7904 = vmatpush1.msra.mxu0 0.0
  %7905 = vmatprep.subr.mxu0 0.0
  %7906 = vmatpush1.msra.mxu0 0.0
  %7907 = vmatprep.subr.mxu0 0.0
  %7908 = vmatpush1.msra.mxu0 0.0
  %7909 = vmatprep.subr.mxu0 0.0
  %7910 = vmatpush1.msra.mxu0 0.0
  %7911 = vmatprep.subr.mxu0 0.0
  %7912 = vmatpush1.msra.mxu0 0.0
  %7913 = vmatprep.subr.mxu0 0.0
  %7914 = vmatpush1.msra.mxu0 0.0
  %7915 = vmatprep.subr.mxu0 0.0
  %7916 = vmatpush1.msra.mxu0 0.0
  %7917 = vmatprep.subr.mxu0 0.0
  %7918 = vmatpush1.msra.mxu0 0.0
  %7919 = vmatprep.subr.mxu0 0.0
  %7920 = vmatpush1.msra.mxu0 0.0
  %7921 = vmatprep.subr.mxu0 0.0
  %7922 = vmatpush1.msra.mxu0 0.0
  %7923 = vmatprep.subr.mxu0 0.0
  %7924 = vmatpush1.msra.mxu0 0.0
  %7925 = vmatprep.subr.mxu0 0.0
  %7926 = vmatpush1.msra.mxu0 0.0
  %7927 = vmatprep.subr.mxu0 0.0
  %7928 = vmatpush1.msra.mxu0 0.0
  %7929 = vmatprep.subr.mxu0 0.0
  %7930 = vmatpush1.msra.mxu0 0.0
  %7931 = vmatprep.subr.mxu0 0.0
  %7932 = vmatpush1.msra.mxu0 0.0
  %7933 = vmatprep.subr.mxu0 0.0
  %7934 = vmatpush1.msra.mxu0 0.0
  %7935 = vmatprep.subr.mxu0 0.0
  %7936 = vmatpush1.msra.mxu0 0.0
  %7937 = vmatprep.subr.mxu0 0.0
  %7938 = vmatpush1.msra.mxu0 0.0
  %7939 = vmatprep.subr.mxu0 0.0
  %7940 = vmatpush1.msra.mxu0 0.0
  %7941 = vmatprep.subr.mxu0 0.0
  %7942 = vmatpush1.msra.mxu0 0.0
  %7943 = vmatprep.subr.mxu0 0.0
  %7944 = vmatpush1.msra.mxu0 0.0
  %7945 = vmatprep.mubr.f32.mxu0 0.0
  %7946 = vmatmul.mubr.f32.gmra.mrb[0].mxu0 %v7879
  %v7947 = vpop.f32.mrb[0].mxu0
  %v7948 = vadd.f32 0.0, %v7947
  %v7949 = vpop.f32.mrb[0].mxu0
  %v7950 = vadd.f32 0.0, %v7949
  %7951 = vdwg.mxu0
  %7952 = vmatprep.subr.mxu0 %v7865
  %7953 = vmatpush1.msra.mxu0 %v7864
  %7954 = vmatprep.subr.mxu0 %v7869
  %7955 = vmatpush1.msra.mxu0 %v7868
  %7956 = vmatprep.subr.mxu0 0.0
  %7957 = vmatpush1.msra.mxu0 0.0
  %7958 = vmatprep.subr.mxu0 0.0
  %7959 = vmatpush1.msra.mxu0 0.0
  %7960 = vmatprep.subr.mxu0 0.0
  %7961 = vmatpush1.msra.mxu0 0.0
  %7962 = vmatprep.subr.mxu0 0.0
  %7963 = vmatpush1.msra.mxu0 0.0
  %7964 = vmatprep.subr.mxu0 0.0
  %7965 = vmatpush1.msra.mxu0 0.0
  %7966 = vmatprep.subr.mxu0 0.0
  %7967 = vmatpush1.msra.mxu0 0.0
  %7968 = vmatprep.subr.mxu0 0.0
  %7969 = vmatpush1.msra.mxu0 0.0
  %7970 = vmatprep.subr.mxu0 0.0
  %7971 = vmatpush1.msra.mxu0 0.0
  %7972 = vmatprep.subr.mxu0 0.0
  %7973 = vmatpush1.msra.mxu0 0.0
  %7974 = vmatprep.subr.mxu0 0.0
  %7975 = vmatpush1.msra.mxu0 0.0
  %7976 = vmatprep.subr.mxu0 0.0
  %7977 = vmatpush1.msra.mxu0 0.0
  %7978 = vmatprep.subr.mxu0 0.0
  %7979 = vmatpush1.msra.mxu0 0.0
  %7980 = vmatprep.subr.mxu0 0.0
  %7981 = vmatpush1.msra.mxu0 0.0
  %7982 = vmatprep.subr.mxu0 0.0
  %7983 = vmatpush1.msra.mxu0 0.0
  %7984 = vmatprep.subr.mxu0 0.0
  %7985 = vmatpush1.msra.mxu0 0.0
  %7986 = vmatprep.subr.mxu0 0.0
  %7987 = vmatpush1.msra.mxu0 0.0
  %7988 = vmatprep.subr.mxu0 0.0
  %7989 = vmatpush1.msra.mxu0 0.0
  %7990 = vmatprep.subr.mxu0 0.0
  %7991 = vmatpush1.msra.mxu0 0.0
  %7992 = vmatprep.subr.mxu0 0.0
  %7993 = vmatpush1.msra.mxu0 0.0
  %7994 = vmatprep.subr.mxu0 0.0
  %7995 = vmatpush1.msra.mxu0 0.0
  %7996 = vmatprep.subr.mxu0 0.0
  %7997 = vmatpush1.msra.mxu0 0.0
  %7998 = vmatprep.subr.mxu0 0.0
  %7999 = vmatpush1.msra.mxu0 0.0
  %8000 = vmatprep.subr.mxu0 0.0
  %8001 = vmatpush1.msra.mxu0 0.0
  %8002 = vmatprep.subr.mxu0 0.0
  %8003 = vmatpush1.msra.mxu0 0.0
  %8004 = vmatprep.subr.mxu0 0.0
  %8005 = vmatpush1.msra.mxu0 0.0
  %8006 = vmatprep.subr.mxu0 0.0
  %8007 = vmatpush1.msra.mxu0 0.0
  %8008 = vmatprep.subr.mxu0 0.0
  %8009 = vmatpush1.msra.mxu0 0.0
  %8010 = vmatprep.subr.mxu0 0.0
  %8011 = vmatpush1.msra.mxu0 0.0
  %8012 = vmatprep.subr.mxu0 0.0
  %8013 = vmatpush1.msra.mxu0 0.0
  %8014 = vmatprep.subr.mxu0 0.0
  %8015 = vmatpush1.msra.mxu0 0.0
  %8016 = vmatprep.mubr.f32.mxu0 0.0
  %8017 = vmatmul.mubr.f32.gmra.mrb[0].mxu0 %v7879
  %v8018 = vpop.f32.mrb[0].mxu0
  %v8019 = vadd.f32 0.0, %v8018
  %v8020 = vpop.f32.mrb[0].mxu0
  %v8021 = vadd.f32 0.0, %v8020
  %8022 = vdwg.mxu0
  %v8023 = vadd.f32 %v7836, %v7948
  %v8024 = vadd.f32 %v7837, %v7950
  %v8025 = vadd.f32 %v7838, %v8019
  %v8026 = vadd.f32 %v7839, %v8021
  %s8027 = scalar_lea.vmem %s3, 136
  %v8028 = vld [vmem:[%s8027] sm:$0xff]
  %8029 = vrot.lane.b32.xlu0 %v4875, 54
  %v8030 = vpop.permute.xlu0 %8029
  %8031 = vrot.lane.b32.xlu0 %v4876, 54
  %v8032 = vpop.permute.xlu0 %8031
  %8033 = vrot.lane.b32.xlu0 %v4877, 54
  %v8034 = vpop.permute.xlu0 %8033
  %8035 = vrot.lane.b32.xlu0 %v4878, 54
  %v8036 = vpop.permute.xlu0 %8035
  %8037 = vrot.lane.b32.xlu0 %v4879, 54
  %v8038 = vpop.permute.xlu0 %8037
  %8039 = vrot.lane.b32.xlu0 %v4880, 54
  %v8040 = vpop.permute.xlu0 %8039
  %8041 = vrot.lane.b32.xlu0 %v4881, 54
  %v8042 = vpop.permute.xlu0 %8041
  %8043 = vrot.lane.b32.xlu0 %v4882, 54
  %v8044 = vpop.permute.xlu0 %8043
  %8045 = vrot.lane.b32.xlu0 %v4883, 54
  %v8046 = vpop.permute.xlu0 %8045
  %8047 = vrot.lane.b32.xlu0 %v4884, 54
  %v8048 = vpop.permute.xlu0 %8047
  %v8049 = vsel %vm3245, %v8030, %v8032
  %v8050 = vsel %vm3245, %v8032, %v8034
  %v8051 = vsel %vm3245, %v8034, %v8036
  %v8052 = vsel %vm3245, %v8036, %v8038
  %v8053 = vsel %vm3245, %v8040, %v8042
  %v8054 = vsel %vm3245, %v8042, %v8044
  %v8055 = vsel %vm3245, %v8044, %v8046
  %v8056 = vsel %vm3245, %v8046, %v8048
  %v8066 = vsel %vm4931, %v8028, 0
  %8068 = vmatprep.subr.mxu0 %v8050
  %8069 = vmatpush1.msra.mxu0 %v8049
  %8070 = vmatprep.subr.mxu0 %v8054
  %8071 = vmatpush1.msra.mxu0 %v8053
  %8072 = vmatprep.subr.mxu0 0.0
  %8073 = vmatpush1.msra.mxu0 0.0
  %8074 = vmatprep.subr.mxu0 0.0
  %8075 = vmatpush1.msra.mxu0 0.0
  %8076 = vmatprep.subr.mxu0 0.0
  %8077 = vmatpush1.msra.mxu0 0.0
  %8078 = vmatprep.subr.mxu0 0.0
  %8079 = vmatpush1.msra.mxu0 0.0
  %8080 = vmatprep.subr.mxu0 0.0
  %8081 = vmatpush1.msra.mxu0 0.0
  %8082 = vmatprep.subr.mxu0 0.0
  %8083 = vmatpush1.msra.mxu0 0.0
  %8084 = vmatprep.subr.mxu0 0.0
  %8085 = vmatpush1.msra.mxu0 0.0
  %8086 = vmatprep.subr.mxu0 0.0
  %8087 = vmatpush1.msra.mxu0 0.0
  %8088 = vmatprep.subr.mxu0 0.0
  %8089 = vmatpush1.msra.mxu0 0.0
  %8090 = vmatprep.subr.mxu0 0.0
  %8091 = vmatpush1.msra.mxu0 0.0
  %8092 = vmatprep.subr.mxu0 0.0
  %8093 = vmatpush1.msra.mxu0 0.0
  %8094 = vmatprep.subr.mxu0 0.0
  %8095 = vmatpush1.msra.mxu0 0.0
  %8096 = vmatprep.subr.mxu0 0.0
  %8097 = vmatpush1.msra.mxu0 0.0
  %8098 = vmatprep.subr.mxu0 0.0
  %8099 = vmatpush1.msra.mxu0 0.0
  %8100 = vmatprep.subr.mxu0 0.0
  %8101 = vmatpush1.msra.mxu0 0.0
  %8102 = vmatprep.subr.mxu0 0.0
  %8103 = vmatpush1.msra.mxu0 0.0
  %8104 = vmatprep.subr.mxu0 0.0
  %8105 = vmatpush1.msra.mxu0 0.0
  %8106 = vmatprep.subr.mxu0 0.0
  %8107 = vmatpush1.msra.mxu0 0.0
  %8108 = vmatprep.subr.mxu0 0.0
  %8109 = vmatpush1.msra.mxu0 0.0
  %8110 = vmatprep.subr.mxu0 0.0
  %8111 = vmatpush1.msra.mxu0 0.0
  %8112 = vmatprep.subr.mxu0 0.0
  %8113 = vmatpush1.msra.mxu0 0.0
  %8114 = vmatprep.subr.mxu0 0.0
  %8115 = vmatpush1.msra.mxu0 0.0
  %8116 = vmatprep.subr.mxu0 0.0
  %8117 = vmatpush1.msra.mxu0 0.0
  %8118 = vmatprep.subr.mxu0 0.0
  %8119 = vmatpush1.msra.mxu0 0.0
  %8120 = vmatprep.subr.mxu0 0.0
  %8121 = vmatpush1.msra.mxu0 0.0
  %8122 = vmatprep.subr.mxu0 0.0
  %8123 = vmatpush1.msra.mxu0 0.0
  %8124 = vmatprep.subr.mxu0 0.0
  %8125 = vmatpush1.msra.mxu0 0.0
  %8126 = vmatprep.subr.mxu0 0.0
  %8127 = vmatpush1.msra.mxu0 0.0
  %8128 = vmatprep.subr.mxu0 0.0
  %8129 = vmatpush1.msra.mxu0 0.0
  %8130 = vmatprep.subr.mxu0 0.0
  %8131 = vmatpush1.msra.mxu0 0.0
  %8132 = vmatprep.mubr.f32.mxu0 0.0
  %8133 = vmatmul.mubr.f32.gmra.mrb[0].mxu0 %v8066
  %v8134 = vpop.f32.mrb[0].mxu0
  %v8135 = vadd.f32 0.0, %v8134
  %v8136 = vpop.f32.mrb[0].mxu0
  %v8137 = vadd.f32 0.0, %v8136
  %8138 = vdwg.mxu0
  %8139 = vmatprep.subr.mxu0 %v8052
  %8140 = vmatpush1.msra.mxu0 %v8051
  %8141 = vmatprep.subr.mxu0 %v8056
  %8142 = vmatpush1.msra.mxu0 %v8055
  %8143 = vmatprep.subr.mxu0 0.0
  %8144 = vmatpush1.msra.mxu0 0.0
  %8145 = vmatprep.subr.mxu0 0.0
  %8146 = vmatpush1.msra.mxu0 0.0
  %8147 = vmatprep.subr.mxu0 0.0
  %8148 = vmatpush1.msra.mxu0 0.0
  %8149 = vmatprep.subr.mxu0 0.0
  %8150 = vmatpush1.msra.mxu0 0.0
  %8151 = vmatprep.subr.mxu0 0.0
  %8152 = vmatpush1.msra.mxu0 0.0
  %8153 = vmatprep.subr.mxu0 0.0
  %8154 = vmatpush1.msra.mxu0 0.0
  %8155 = vmatprep.subr.mxu0 0.0
  %8156 = vmatpush1.msra.mxu0 0.0
  %8157 = vmatprep.subr.mxu0 0.0
  %8158 = vmatpush1.msra.mxu0 0.0
  %8159 = vmatprep.subr.mxu0 0.0
  %8160 = vmatpush1.msra.mxu0 0.0
  %8161 = vmatprep.subr.mxu0 0.0
  %8162 = vmatpush1.msra.mxu0 0.0
  %8163 = vmatprep.subr.mxu0 0.0
  %8164 = vmatpush1.msra.mxu0 0.0
  %8165 = vmatprep.subr.mxu0 0.0
  %8166 = vmatpush1.msra.mxu0 0.0
  %8167 = vmatprep.subr.mxu0 0.0
  %8168 = vmatpush1.msra.mxu0 0.0
  %8169 = vmatprep.subr.mxu0 0.0
  %8170 = vmatpush1.msra.mxu0 0.0
  %8171 = vmatprep.subr.mxu0 0.0
  %8172 = vmatpush1.msra.mxu0 0.0
  %8173 = vmatprep.subr.mxu0 0.0
  %8174 = vmatpush1.msra.mxu0 0.0
  %8175 = vmatprep.subr.mxu0 0.0
  %8176 = vmatpush1.msra.mxu0 0.0
  %8177 = vmatprep.subr.mxu0 0.0
  %8178 = vmatpush1.msra.mxu0 0.0
  %8179 = vmatprep.subr.mxu0 0.0
  %8180 = vmatpush1.msra.mxu0 0.0
  %8181 = vmatprep.subr.mxu0 0.0
  %8182 = vmatpush1.msra.mxu0 0.0
  %8183 = vmatprep.subr.mxu0 0.0
  %8184 = vmatpush1.msra.mxu0 0.0
  %8185 = vmatprep.subr.mxu0 0.0
  %8186 = vmatpush1.msra.mxu0 0.0
  %8187 = vmatprep.subr.mxu0 0.0
  %8188 = vmatpush1.msra.mxu0 0.0
  %8189 = vmatprep.subr.mxu0 0.0
  %8190 = vmatpush1.msra.mxu0 0.0
  %8191 = vmatprep.subr.mxu0 0.0
  %8192 = vmatpush1.msra.mxu0 0.0
  %8193 = vmatprep.subr.mxu0 0.0
  %8194 = vmatpush1.msra.mxu0 0.0
  %8195 = vmatprep.subr.mxu0 0.0
  %8196 = vmatpush1.msra.mxu0 0.0
  %8197 = vmatprep.subr.mxu0 0.0
  %8198 = vmatpush1.msra.mxu0 0.0
  %8199 = vmatprep.subr.mxu0 0.0
  %8200 = vmatpush1.msra.mxu0 0.0
  %8201 = vmatprep.subr.mxu0 0.0
  %8202 = vmatpush1.msra.mxu0 0.0
  %8203 = vmatprep.mubr.f32.mxu0 0.0
  %8204 = vmatmul.mubr.f32.gmra.mrb[0].mxu0 %v8066
  %v8205 = vpop.f32.mrb[0].mxu0
  %v8206 = vadd.f32 0.0, %v8205
  %v8207 = vpop.f32.mrb[0].mxu0
  %v8208 = vadd.f32 0.0, %v8207
  %8209 = vdwg.mxu0
  %v8210 = vadd.f32 %v8023, %v8135
  %v8211 = vadd.f32 %v8024, %v8137
  %v8212 = vadd.f32 %v8025, %v8206
  %v8213 = vadd.f32 %v8026, %v8208
  %s8214 = scalar_lea.vmem %s3, 144
  %v8215 = vld [vmem:[%s8214] sm:$0xff]
  %8216 = vrot.lane.b32.xlu0 %v4875, 53
  %v8217 = vpop.permute.xlu0 %8216
  %8218 = vrot.lane.b32.xlu0 %v4876, 53
  %v8219 = vpop.permute.xlu0 %8218
  %8220 = vrot.lane.b32.xlu0 %v4877, 53
  %v8221 = vpop.permute.xlu0 %8220
  %8222 = vrot.lane.b32.xlu0 %v4878, 53
  %v8223 = vpop.permute.xlu0 %8222
  %8224 = vrot.lane.b32.xlu0 %v4879, 53
  %v8225 = vpop.permute.xlu0 %8224
  %8226 = vrot.lane.b32.xlu0 %v4880, 53
  %v8227 = vpop.permute.xlu0 %8226
  %8228 = vrot.lane.b32.xlu0 %v4881, 53
  %v8229 = vpop.permute.xlu0 %8228
  %8230 = vrot.lane.b32.xlu0 %v4882, 53
  %v8231 = vpop.permute.xlu0 %8230
  %8232 = vrot.lane.b32.xlu0 %v4883, 53
  %v8233 = vpop.permute.xlu0 %8232
  %8234 = vrot.lane.b32.xlu0 %v4884, 53
  %v8235 = vpop.permute.xlu0 %8234
  %v8236 = vsel %vm3435, %v8217, %v8219
  %v8237 = vsel %vm3435, %v8219, %v8221
  %v8238 = vsel %vm3435, %v8221, %v8223
  %v8239 = vsel %vm3435, %v8223, %v8225
  %v8240 = vsel %vm3435, %v8227, %v8229
  %v8241 = vsel %vm3435, %v8229, %v8231
  %v8242 = vsel %vm3435, %v8231, %v8233
  %v8243 = vsel %vm3435, %v8233, %v8235
  %v8253 = vsel %vm4931, %v8215, 0
  %8255 = vmatprep.subr.mxu0 %v8237
  %8256 = vmatpush1.msra.mxu0 %v8236
  %8257 = vmatprep.subr.mxu0 %v8241
  %8258 = vmatpush1.msra.mxu0 %v8240
  %8259 = vmatprep.subr.mxu0 0.0
  %8260 = vmatpush1.msra.mxu0 0.0
  %8261 = vmatprep.subr.mxu0 0.0
  %8262 = vmatpush1.msra.mxu0 0.0
  %8263 = vmatprep.subr.mxu0 0.0
  %8264 = vmatpush1.msra.mxu0 0.0
  %8265 = vmatprep.subr.mxu0 0.0
  %8266 = vmatpush1.msra.mxu0 0.0
  %8267 = vmatprep.subr.mxu0 0.0
  %8268 = vmatpush1.msra.mxu0 0.0
  %8269 = vmatprep.subr.mxu0 0.0
  %8270 = vmatpush1.msra.mxu0 0.0
  %8271 = vmatprep.subr.mxu0 0.0
  %8272 = vmatpush1.msra.mxu0 0.0
  %8273 = vmatprep.subr.mxu0 0.0
  %8274 = vmatpush1.msra.mxu0 0.0
  %8275 = vmatprep.subr.mxu0 0.0
  %8276 = vmatpush1.msra.mxu0 0.0
  %8277 = vmatprep.subr.mxu0 0.0
  %8278 = vmatpush1.msra.mxu0 0.0
  %8279 = vmatprep.subr.mxu0 0.0
  %8280 = vmatpush1.msra.mxu0 0.0
  %8281 = vmatprep.subr.mxu0 0.0
  %8282 = vmatpush1.msra.mxu0 0.0
  %8283 = vmatprep.subr.mxu0 0.0
  %8284 = vmatpush1.msra.mxu0 0.0
  %8285 = vmatprep.subr.mxu0 0.0
  %8286 = vmatpush1.msra.mxu0 0.0
  %8287 = vmatprep.subr.mxu0 0.0
  %8288 = vmatpush1.msra.mxu0 0.0
  %8289 = vmatprep.subr.mxu0 0.0
  %8290 = vmatpush1.msra.mxu0 0.0
  %8291 = vmatprep.subr.mxu0 0.0
  %8292 = vmatpush1.msra.mxu0 0.0
  %8293 = vmatprep.subr.mxu0 0.0
  %8294 = vmatpush1.msra.mxu0 0.0
  %8295 = vmatprep.subr.mxu0 0.0
  %8296 = vmatpush1.msra.mxu0 0.0
  %8297 = vmatprep.subr.mxu0 0.0
  %8298 = vmatpush1.msra.mxu0 0.0
  %8299 = vmatprep.subr.mxu0 0.0
  %8300 = vmatpush1.msra.mxu0 0.0
  %8301 = vmatprep.subr.mxu0 0.0
  %8302 = vmatpush1.msra.mxu0 0.0
  %8303 = vmatprep.subr.mxu0 0.0
  %8304 = vmatpush1.msra.mxu0 0.0
  %8305 = vmatprep.subr.mxu0 0.0
  %8306 = vmatpush1.msra.mxu0 0.0
  %8307 = vmatprep.subr.mxu0 0.0
  %8308 = vmatpush1.msra.mxu0 0.0
  %8309 = vmatprep.subr.mxu0 0.0
  %8310 = vmatpush1.msra.mxu0 0.0
  %8311 = vmatprep.subr.mxu0 0.0
  %8312 = vmatpush1.msra.mxu0 0.0
  %8313 = vmatprep.subr.mxu0 0.0
  %8314 = vmatpush1.msra.mxu0 0.0
  %8315 = vmatprep.subr.mxu0 0.0
  %8316 = vmatpush1.msra.mxu0 0.0
  %8317 = vmatprep.subr.mxu0 0.0
  %8318 = vmatpush1.msra.mxu0 0.0
  %8319 = vmatprep.mubr.f32.mxu0 0.0
  %8320 = vmatmul.mubr.f32.gmra.mrb[0].mxu0 %v8253
  %v8321 = vpop.f32.mrb[0].mxu0
  %v8322 = vadd.f32 0.0, %v8321
  %v8323 = vpop.f32.mrb[0].mxu0
  %v8324 = vadd.f32 0.0, %v8323
  %8325 = vdwg.mxu0
  %8326 = vmatprep.subr.mxu0 %v8239
  %8327 = vmatpush1.msra.mxu0 %v8238
  %8328 = vmatprep.subr.mxu0 %v8243
  %8329 = vmatpush1.msra.mxu0 %v8242
  %8330 = vmatprep.subr.mxu0 0.0
  %8331 = vmatpush1.msra.mxu0 0.0
  %8332 = vmatprep.subr.mxu0 0.0
  %8333 = vmatpush1.msra.mxu0 0.0
  %8334 = vmatprep.subr.mxu0 0.0
  %8335 = vmatpush1.msra.mxu0 0.0
  %8336 = vmatprep.subr.mxu0 0.0
  %8337 = vmatpush1.msra.mxu0 0.0
  %8338 = vmatprep.subr.mxu0 0.0
  %8339 = vmatpush1.msra.mxu0 0.0
  %8340 = vmatprep.subr.mxu0 0.0
  %8341 = vmatpush1.msra.mxu0 0.0
  %8342 = vmatprep.subr.mxu0 0.0
  %8343 = vmatpush1.msra.mxu0 0.0
  %8344 = vmatprep.subr.mxu0 0.0
  %8345 = vmatpush1.msra.mxu0 0.0
  %8346 = vmatprep.subr.mxu0 0.0
  %8347 = vmatpush1.msra.mxu0 0.0
  %8348 = vmatprep.subr.mxu0 0.0
  %8349 = vmatpush1.msra.mxu0 0.0
  %8350 = vmatprep.subr.mxu0 0.0
  %8351 = vmatpush1.msra.mxu0 0.0
  %8352 = vmatprep.subr.mxu0 0.0
  %8353 = vmatpush1.msra.mxu0 0.0
  %8354 = vmatprep.subr.mxu0 0.0
  %8355 = vmatpush1.msra.mxu0 0.0
  %8356 = vmatprep.subr.mxu0 0.0
  %8357 = vmatpush1.msra.mxu0 0.0
  %8358 = vmatprep.subr.mxu0 0.0
  %8359 = vmatpush1.msra.mxu0 0.0
  %8360 = vmatprep.subr.mxu0 0.0
  %8361 = vmatpush1.msra.mxu0 0.0
  %8362 = vmatprep.subr.mxu0 0.0
  %8363 = vmatpush1.msra.mxu0 0.0
  %8364 = vmatprep.subr.mxu0 0.0
  %8365 = vmatpush1.msra.mxu0 0.0
  %8366 = vmatprep.subr.mxu0 0.0
  %8367 = vmatpush1.msra.mxu0 0.0
  %8368 = vmatprep.subr.mxu0 0.0
  %8369 = vmatpush1.msra.mxu0 0.0
  %8370 = vmatprep.subr.mxu0 0.0
  %8371 = vmatpush1.msra.mxu0 0.0
  %8372 = vmatprep.subr.mxu0 0.0
  %8373 = vmatpush1.msra.mxu0 0.0
  %8374 = vmatprep.subr.mxu0 0.0
  %8375 = vmatpush1.msra.mxu0 0.0
  %8376 = vmatprep.subr.mxu0 0.0
  %8377 = vmatpush1.msra.mxu0 0.0
  %8378 = vmatprep.subr.mxu0 0.0
  %8379 = vmatpush1.msra.mxu0 0.0
  %8380 = vmatprep.subr.mxu0 0.0
  %8381 = vmatpush1.msra.mxu0 0.0
  %8382 = vmatprep.subr.mxu0 0.0
  %8383 = vmatpush1.msra.mxu0 0.0
  %8384 = vmatprep.subr.mxu0 0.0
  %8385 = vmatpush1.msra.mxu0 0.0
  %8386 = vmatprep.subr.mxu0 0.0
  %8387 = vmatpush1.msra.mxu0 0.0
  %8388 = vmatprep.subr.mxu0 0.0
  %8389 = vmatpush1.msra.mxu0 0.0
  %8390 = vmatprep.mubr.f32.mxu0 0.0
  %8391 = vmatmul.mubr.f32.gmra.mrb[0].mxu0 %v8253
  %v8392 = vpop.f32.mrb[0].mxu0
  %v8393 = vadd.f32 0.0, %v8392
  %v8394 = vpop.f32.mrb[0].mxu0
  %v8395 = vadd.f32 0.0, %v8394
  %8396 = vdwg.mxu0
  %v8397 = vadd.f32 %v8210, %v8322
  %v8398 = vadd.f32 %v8211, %v8324
  %v8399 = vadd.f32 %v8212, %v8393
  %v8400 = vadd.f32 %v8213, %v8395
  %s8401 = scalar_lea.vmem %s3, 152
  %v8402 = vld [vmem:[%s8401] sm:$0xff]
  %8403 = vrot.lane.b32.xlu0 %v4875, 52
  %v8404 = vpop.permute.xlu0 %8403
  %8405 = vrot.lane.b32.xlu0 %v4876, 52
  %v8406 = vpop.permute.xlu0 %8405
  %8407 = vrot.lane.b32.xlu0 %v4877, 52
  %v8408 = vpop.permute.xlu0 %8407
  %8409 = vrot.lane.b32.xlu0 %v4878, 52
  %v8410 = vpop.permute.xlu0 %8409
  %8411 = vrot.lane.b32.xlu0 %v4879, 52
  %v8412 = vpop.permute.xlu0 %8411
  %8413 = vrot.lane.b32.xlu0 %v4880, 52
  %v8414 = vpop.permute.xlu0 %8413
  %8415 = vrot.lane.b32.xlu0 %v4881, 52
  %v8416 = vpop.permute.xlu0 %8415
  %8417 = vrot.lane.b32.xlu0 %v4882, 52
  %v8418 = vpop.permute.xlu0 %8417
  %8419 = vrot.lane.b32.xlu0 %v4883, 52
  %v8420 = vpop.permute.xlu0 %8419
  %8421 = vrot.lane.b32.xlu0 %v4884, 52
  %v8422 = vpop.permute.xlu0 %8421
  %v8423 = vsel %vm3625, %v8404, %v8406
  %v8424 = vsel %vm3625, %v8406, %v8408
  %v8425 = vsel %vm3625, %v8408, %v8410
  %v8426 = vsel %vm3625, %v8410, %v8412
  %v8427 = vsel %vm3625, %v8414, %v8416
  %v8428 = vsel %vm3625, %v8416, %v8418
  %v8429 = vsel %vm3625, %v8418, %v8420
  %v8430 = vsel %vm3625, %v8420, %v8422
  %v8440 = vsel %vm4931, %v8402, 0
  %8442 = vmatprep.subr.mxu0 %v8424
  %8443 = vmatpush1.msra.mxu0 %v8423
  %8444 = vmatprep.subr.mxu0 %v8428
  %8445 = vmatpush1.msra.mxu0 %v8427
  %8446 = vmatprep.subr.mxu0 0.0
  %8447 = vmatpush1.msra.mxu0 0.0
  %8448 = vmatprep.subr.mxu0 0.0
  %8449 = vmatpush1.msra.mxu0 0.0
  %8450 = vmatprep.subr.mxu0 0.0
  %8451 = vmatpush1.msra.mxu0 0.0
  %8452 = vmatprep.subr.mxu0 0.0
  %8453 = vmatpush1.msra.mxu0 0.0
  %8454 = vmatprep.subr.mxu0 0.0
  %8455 = vmatpush1.msra.mxu0 0.0
  %8456 = vmatprep.subr.mxu0 0.0
  %8457 = vmatpush1.msra.mxu0 0.0
  %8458 = vmatprep.subr.mxu0 0.0
  %8459 = vmatpush1.msra.mxu0 0.0
  %8460 = vmatprep.subr.mxu0 0.0
  %8461 = vmatpush1.msra.mxu0 0.0
  %8462 = vmatprep.subr.mxu0 0.0
  %8463 = vmatpush1.msra.mxu0 0.0
  %8464 = vmatprep.subr.mxu0 0.0
  %8465 = vmatpush1.msra.mxu0 0.0
  %8466 = vmatprep.subr.mxu0 0.0
  %8467 = vmatpush1.msra.mxu0 0.0
  %8468 = vmatprep.subr.mxu0 0.0
  %8469 = vmatpush1.msra.mxu0 0.0
  %8470 = vmatprep.subr.mxu0 0.0
  %8471 = vmatpush1.msra.mxu0 0.0
  %8472 = vmatprep.subr.mxu0 0.0
  %8473 = vmatpush1.msra.mxu0 0.0
  %8474 = vmatprep.subr.mxu0 0.0
  %8475 = vmatpush1.msra.mxu0 0.0
  %8476 = vmatprep.subr.mxu0 0.0
  %8477 = vmatpush1.msra.mxu0 0.0
  %8478 = vmatprep.subr.mxu0 0.0
  %8479 = vmatpush1.msra.mxu0 0.0
  %8480 = vmatprep.subr.mxu0 0.0
  %8481 = vmatpush1.msra.mxu0 0.0
  %8482 = vmatprep.subr.mxu0 0.0
  %8483 = vmatpush1.msra.mxu0 0.0
  %8484 = vmatprep.subr.mxu0 0.0
  %8485 = vmatpush1.msra.mxu0 0.0
  %8486 = vmatprep.subr.mxu0 0.0
  %8487 = vmatpush1.msra.mxu0 0.0
  %8488 = vmatprep.subr.mxu0 0.0
  %8489 = vmatpush1.msra.mxu0 0.0
  %8490 = vmatprep.subr.mxu0 0.0
  %8491 = vmatpush1.msra.mxu0 0.0
  %8492 = vmatprep.subr.mxu0 0.0
  %8493 = vmatpush1.msra.mxu0 0.0
  %8494 = vmatprep.subr.mxu0 0.0
  %8495 = vmatpush1.msra.mxu0 0.0
  %8496 = vmatprep.subr.mxu0 0.0
  %8497 = vmatpush1.msra.mxu0 0.0
  %8498 = vmatprep.subr.mxu0 0.0
  %8499 = vmatpush1.msra.mxu0 0.0
  %8500 = vmatprep.subr.mxu0 0.0
  %8501 = vmatpush1.msra.mxu0 0.0
  %8502 = vmatprep.subr.mxu0 0.0
  %8503 = vmatpush1.msra.mxu0 0.0
  %8504 = vmatprep.subr.mxu0 0.0
  %8505 = vmatpush1.msra.mxu0 0.0
  %8506 = vmatprep.mubr.f32.mxu0 0.0
  %8507 = vmatmul.mubr.f32.gmra.mrb[0].mxu0 %v8440
  %v8508 = vpop.f32.mrb[0].mxu0
  %v8509 = vadd.f32 0.0, %v8508
  %v8510 = vpop.f32.mrb[0].mxu0
  %v8511 = vadd.f32 0.0, %v8510
  %8512 = vdwg.mxu0
  %8513 = vmatprep.subr.mxu0 %v8426
  %8514 = vmatpush1.msra.mxu0 %v8425
  %8515 = vmatprep.subr.mxu0 %v8430
  %8516 = vmatpush1.msra.mxu0 %v8429
  %8517 = vmatprep.subr.mxu0 0.0
  %8518 = vmatpush1.msra.mxu0 0.0
  %8519 = vmatprep.subr.mxu0 0.0
  %8520 = vmatpush1.msra.mxu0 0.0
  %8521 = vmatprep.subr.mxu0 0.0
  %8522 = vmatpush1.msra.mxu0 0.0
  %8523 = vmatprep.subr.mxu0 0.0
  %8524 = vmatpush1.msra.mxu0 0.0
  %8525 = vmatprep.subr.mxu0 0.0
  %8526 = vmatpush1.msra.mxu0 0.0
  %8527 = vmatprep.subr.mxu0 0.0
  %8528 = vmatpush1.msra.mxu0 0.0
  %8529 = vmatprep.subr.mxu0 0.0
  %8530 = vmatpush1.msra.mxu0 0.0
  %8531 = vmatprep.subr.mxu0 0.0
  %8532 = vmatpush1.msra.mxu0 0.0
  %8533 = vmatprep.subr.mxu0 0.0
  %8534 = vmatpush1.msra.mxu0 0.0
  %8535 = vmatprep.subr.mxu0 0.0
  %8536 = vmatpush1.msra.mxu0 0.0
  %8537 = vmatprep.subr.mxu0 0.0
  %8538 = vmatpush1.msra.mxu0 0.0
  %8539 = vmatprep.subr.mxu0 0.0
  %8540 = vmatpush1.msra.mxu0 0.0
  %8541 = vmatprep.subr.mxu0 0.0
  %8542 = vmatpush1.msra.mxu0 0.0
  %8543 = vmatprep.subr.mxu0 0.0
  %8544 = vmatpush1.msra.mxu0 0.0
  %8545 = vmatprep.subr.mxu0 0.0
  %8546 = vmatpush1.msra.mxu0 0.0
  %8547 = vmatprep.subr.mxu0 0.0
  %8548 = vmatpush1.msra.mxu0 0.0
  %8549 = vmatprep.subr.mxu0 0.0
  %8550 = vmatpush1.msra.mxu0 0.0
  %8551 = vmatprep.subr.mxu0 0.0
  %8552 = vmatpush1.msra.mxu0 0.0
  %8553 = vmatprep.subr.mxu0 0.0
  %8554 = vmatpush1.msra.mxu0 0.0
  %8555 = vmatprep.subr.mxu0 0.0
  %8556 = vmatpush1.msra.mxu0 0.0
  %8557 = vmatprep.subr.mxu0 0.0
  %8558 = vmatpush1.msra.mxu0 0.0
  %8559 = vmatprep.subr.mxu0 0.0
  %8560 = vmatpush1.msra.mxu0 0.0
  %8561 = vmatprep.subr.mxu0 0.0
  %8562 = vmatpush1.msra.mxu0 0.0
  %8563 = vmatprep.subr.mxu0 0.0
  %8564 = vmatpush1.msra.mxu0 0.0
  %8565 = vmatprep.subr.mxu0 0.0
  %8566 = vmatpush1.msra.mxu0 0.0
  %8567 = vmatprep.subr.mxu0 0.0
  %8568 = vmatpush1.msra.mxu0 0.0
  %8569 = vmatprep.subr.mxu0 0.0
  %8570 = vmatpush1.msra.mxu0 0.0
  %8571 = vmatprep.subr.mxu0 0.0
  %8572 = vmatpush1.msra.mxu0 0.0
  %8573 = vmatprep.subr.mxu0 0.0
  %8574 = vmatpush1.msra.mxu0 0.0
  %8575 = vmatprep.subr.mxu0 0.0
  %8576 = vmatpush1.msra.mxu0 0.0
  %8577 = vmatprep.mubr.f32.mxu0 0.0
  %8578 = vmatmul.mubr.f32.gmra.mrb[0].mxu0 %v8440
  %v8579 = vpop.f32.mrb[0].mxu0
  %v8580 = vadd.f32 0.0, %v8579
  %v8581 = vpop.f32.mrb[0].mxu0
  %v8582 = vadd.f32 0.0, %v8581
  %8583 = vdwg.mxu0
  %v8584 = vadd.f32 %v8397, %v8509
  %v8585 = vadd.f32 %v8398, %v8511
  %v8586 = vadd.f32 %v8399, %v8580
  %v8587 = vadd.f32 %v8400, %v8582
  %s8588 = scalar_lea.vmem %s3, 160
  %v8589 = vld [vmem:[%s8588] sm:$0xff]
  %8590 = vrot.lane.b32.xlu0 %v4875, 32
  %v8591 = vpop.permute.xlu0 %8590
  %8592 = vrot.lane.b32.xlu0 %v4876, 32
  %v8593 = vpop.permute.xlu0 %8592
  %8594 = vrot.lane.b32.xlu0 %v4877, 32
  %v8595 = vpop.permute.xlu0 %8594
  %8596 = vrot.lane.b32.xlu0 %v4878, 32
  %v8597 = vpop.permute.xlu0 %8596
  %8598 = vrot.lane.b32.xlu0 %v4879, 32
  %v8599 = vpop.permute.xlu0 %8598
  %8600 = vrot.lane.b32.xlu0 %v4880, 32
  %v8601 = vpop.permute.xlu0 %8600
  %8602 = vrot.lane.b32.xlu0 %v4881, 32
  %v8603 = vpop.permute.xlu0 %8602
  %8604 = vrot.lane.b32.xlu0 %v4882, 32
  %v8605 = vpop.permute.xlu0 %8604
  %8606 = vrot.lane.b32.xlu0 %v4883, 32
  %v8607 = vpop.permute.xlu0 %8606
  %8608 = vrot.lane.b32.xlu0 %v4884, 32
  %v8609 = vpop.permute.xlu0 %8608
  %v8610 = vsel %vm3815, %v8591, %v8593
  %v8611 = vsel %vm3815, %v8593, %v8595
  %v8612 = vsel %vm3815, %v8595, %v8597
  %v8613 = vsel %vm3815, %v8597, %v8599
  %v8614 = vsel %vm3815, %v8601, %v8603
  %v8615 = vsel %vm3815, %v8603, %v8605
  %v8616 = vsel %vm3815, %v8605, %v8607
  %v8617 = vsel %vm3815, %v8607, %v8609
  %v8627 = vsel %vm4931, %v8589, 0
  %8629 = vmatprep.subr.mxu0 %v8611
  %8630 = vmatpush1.msra.mxu0 %v8610
  %8631 = vmatprep.subr.mxu0 %v8615
  %8632 = vmatpush1.msra.mxu0 %v8614
  %8633 = vmatprep.subr.mxu0 0.0
  %8634 = vmatpush1.msra.mxu0 0.0
  %8635 = vmatprep.subr.mxu0 0.0
  %8636 = vmatpush1.msra.mxu0 0.0
  %8637 = vmatprep.subr.mxu0 0.0
  %8638 = vmatpush1.msra.mxu0 0.0
  %8639 = vmatprep.subr.mxu0 0.0
  %8640 = vmatpush1.msra.mxu0 0.0
  %8641 = vmatprep.subr.mxu0 0.0
  %8642 = vmatpush1.msra.mxu0 0.0
  %8643 = vmatprep.subr.mxu0 0.0
  %8644 = vmatpush1.msra.mxu0 0.0
  %8645 = vmatprep.subr.mxu0 0.0
  %8646 = vmatpush1.msra.mxu0 0.0
  %8647 = vmatprep.subr.mxu0 0.0
  %8648 = vmatpush1.msra.mxu0 0.0
  %8649 = vmatprep.subr.mxu0 0.0
  %8650 = vmatpush1.msra.mxu0 0.0
  %8651 = vmatprep.subr.mxu0 0.0
  %8652 = vmatpush1.msra.mxu0 0.0
  %8653 = vmatprep.subr.mxu0 0.0
  %8654 = vmatpush1.msra.mxu0 0.0
  %8655 = vmatprep.subr.mxu0 0.0
  %8656 = vmatpush1.msra.mxu0 0.0
  %8657 = vmatprep.subr.mxu0 0.0
  %8658 = vmatpush1.msra.mxu0 0.0
  %8659 = vmatprep.subr.mxu0 0.0
  %8660 = vmatpush1.msra.mxu0 0.0
  %8661 = vmatprep.subr.mxu0 0.0
  %8662 = vmatpush1.msra.mxu0 0.0
  %8663 = vmatprep.subr.mxu0 0.0
  %8664 = vmatpush1.msra.mxu0 0.0
  %8665 = vmatprep.subr.mxu0 0.0
  %8666 = vmatpush1.msra.mxu0 0.0
  %8667 = vmatprep.subr.mxu0 0.0
  %8668 = vmatpush1.msra.mxu0 0.0
  %8669 = vmatprep.subr.mxu0 0.0
  %8670 = vmatpush1.msra.mxu0 0.0
  %8671 = vmatprep.subr.mxu0 0.0
  %8672 = vmatpush1.msra.mxu0 0.0
  %8673 = vmatprep.subr.mxu0 0.0
  %8674 = vmatpush1.msra.mxu0 0.0
  %8675 = vmatprep.subr.mxu0 0.0
  %8676 = vmatpush1.msra.mxu0 0.0
  %8677 = vmatprep.subr.mxu0 0.0
  %8678 = vmatpush1.msra.mxu0 0.0
  %8679 = vmatprep.subr.mxu0 0.0
  %8680 = vmatpush1.msra.mxu0 0.0
  %8681 = vmatprep.subr.mxu0 0.0
  %8682 = vmatpush1.msra.mxu0 0.0
  %8683 = vmatprep.subr.mxu0 0.0
  %8684 = vmatpush1.msra.mxu0 0.0
  %8685 = vmatprep.subr.mxu0 0.0
  %8686 = vmatpush1.msra.mxu0 0.0
  %8687 = vmatprep.subr.mxu0 0.0
  %8688 = vmatpush1.msra.mxu0 0.0
  %8689 = vmatprep.subr.mxu0 0.0
  %8690 = vmatpush1.msra.mxu0 0.0
  %8691 = vmatprep.subr.mxu0 0.0
  %8692 = vmatpush1.msra.mxu0 0.0
  %8693 = vmatprep.mubr.f32.mxu0 0.0
  %8694 = vmatmul.mubr.f32.gmra.mrb[0].mxu0 %v8627
  %v8695 = vpop.f32.mrb[0].mxu0
  %v8696 = vadd.f32 0.0, %v8695
  %v8697 = vpop.f32.mrb[0].mxu0
  %v8698 = vadd.f32 0.0, %v8697
  %8699 = vdwg.mxu0
  %8700 = vmatprep.subr.mxu0 %v8613
  %8701 = vmatpush1.msra.mxu0 %v8612
  %8702 = vmatprep.subr.mxu0 %v8617
  %8703 = vmatpush1.msra.mxu0 %v8616
  %8704 = vmatprep.subr.mxu0 0.0
  %8705 = vmatpush1.msra.mxu0 0.0
  %8706 = vmatprep.subr.mxu0 0.0
  %8707 = vmatpush1.msra.mxu0 0.0
  %8708 = vmatprep.subr.mxu0 0.0
  %8709 = vmatpush1.msra.mxu0 0.0
  %8710 = vmatprep.subr.mxu0 0.0
  %8711 = vmatpush1.msra.mxu0 0.0
  %8712 = vmatprep.subr.mxu0 0.0
  %8713 = vmatpush1.msra.mxu0 0.0
  %8714 = vmatprep.subr.mxu0 0.0
  %8715 = vmatpush1.msra.mxu0 0.0
  %8716 = vmatprep.subr.mxu0 0.0
  %8717 = vmatpush1.msra.mxu0 0.0
  %8718 = vmatprep.subr.mxu0 0.0
  %8719 = vmatpush1.msra.mxu0 0.0
  %8720 = vmatprep.subr.mxu0 0.0
  %8721 = vmatpush1.msra.mxu0 0.0
  %8722 = vmatprep.subr.mxu0 0.0
  %8723 = vmatpush1.msra.mxu0 0.0
  %8724 = vmatprep.subr.mxu0 0.0
  %8725 = vmatpush1.msra.mxu0 0.0
  %8726 = vmatprep.subr.mxu0 0.0
  %8727 = vmatpush1.msra.mxu0 0.0
  %8728 = vmatprep.subr.mxu0 0.0
  %8729 = vmatpush1.msra.mxu0 0.0
  %8730 = vmatprep.subr.mxu0 0.0
  %8731 = vmatpush1.msra.mxu0 0.0
  %8732 = vmatprep.subr.mxu0 0.0
  %8733 = vmatpush1.msra.mxu0 0.0
  %8734 = vmatprep.subr.mxu0 0.0
  %8735 = vmatpush1.msra.mxu0 0.0
  %8736 = vmatprep.subr.mxu0 0.0
  %8737 = vmatpush1.msra.mxu0 0.0
  %8738 = vmatprep.subr.mxu0 0.0
  %8739 = vmatpush1.msra.mxu0 0.0
  %8740 = vmatprep.subr.mxu0 0.0
  %8741 = vmatpush1.msra.mxu0 0.0
  %8742 = vmatprep.subr.mxu0 0.0
  %8743 = vmatpush1.msra.mxu0 0.0
  %8744 = vmatprep.subr.mxu0 0.0
  %8745 = vmatpush1.msra.mxu0 0.0
  %8746 = vmatprep.subr.mxu0 0.0
  %8747 = vmatpush1.msra.mxu0 0.0
  %8748 = vmatprep.subr.mxu0 0.0
  %8749 = vmatpush1.msra.mxu0 0.0
  %8750 = vmatprep.subr.mxu0 0.0
  %8751 = vmatpush1.msra.mxu0 0.0
  %8752 = vmatprep.subr.mxu0 0.0
  %8753 = vmatpush1.msra.mxu0 0.0
  %8754 = vmatprep.subr.mxu0 0.0
  %8755 = vmatpush1.msra.mxu0 0.0
  %8756 = vmatprep.subr.mxu0 0.0
  %8757 = vmatpush1.msra.mxu0 0.0
  %8758 = vmatprep.subr.mxu0 0.0
  %8759 = vmatpush1.msra.mxu0 0.0
  %8760 = vmatprep.subr.mxu0 0.0
  %8761 = vmatpush1.msra.mxu0 0.0
  %8762 = vmatprep.subr.mxu0 0.0
  %8763 = vmatpush1.msra.mxu0 0.0
  %8764 = vmatprep.mubr.f32.mxu0 0.0
  %8765 = vmatmul.mubr.f32.gmra.mrb[0].mxu0 %v8627
  %v8766 = vpop.f32.mrb[0].mxu0
  %v8767 = vadd.f32 0.0, %v8766
  %v8768 = vpop.f32.mrb[0].mxu0
  %v8769 = vadd.f32 0.0, %v8768
  %8770 = vdwg.mxu0
  %v8771 = vadd.f32 %v8584, %v8696
  %v8772 = vadd.f32 %v8585, %v8698
  %v8773 = vadd.f32 %v8586, %v8767
  %v8774 = vadd.f32 %v8587, %v8769
  %s8775 = scalar_lea.vmem %s3, 168
  %v8776 = vld [vmem:[%s8775] sm:$0xff]
  %8777 = vrot.lane.b32.xlu0 %v4875, 31
  %v8778 = vpop.permute.xlu0 %8777
  %8779 = vrot.lane.b32.xlu0 %v4876, 31
  %v8780 = vpop.permute.xlu0 %8779
  %8781 = vrot.lane.b32.xlu0 %v4877, 31
  %v8782 = vpop.permute.xlu0 %8781
  %8783 = vrot.lane.b32.xlu0 %v4878, 31
  %v8784 = vpop.permute.xlu0 %8783
  %8785 = vrot.lane.b32.xlu0 %v4879, 31
  %v8786 = vpop.permute.xlu0 %8785
  %8787 = vrot.lane.b32.xlu0 %v4880, 31
  %v8788 = vpop.permute.xlu0 %8787
  %8789 = vrot.lane.b32.xlu0 %v4881, 31
  %v8790 = vpop.permute.xlu0 %8789
  %8791 = vrot.lane.b32.xlu0 %v4882, 31
  %v8792 = vpop.permute.xlu0 %8791
  %8793 = vrot.lane.b32.xlu0 %v4883, 31
  %v8794 = vpop.permute.xlu0 %8793
  %8795 = vrot.lane.b32.xlu0 %v4884, 31
  %v8796 = vpop.permute.xlu0 %8795
  %v8797 = vsel %vm4005, %v8778, %v8780
  %v8798 = vsel %vm4005, %v8780, %v8782
  %v8799 = vsel %vm4005, %v8782, %v8784
  %v8800 = vsel %vm4005, %v8784, %v8786
  %v8801 = vsel %vm4005, %v8788, %v8790
  %v8802 = vsel %vm4005, %v8790, %v8792
  %v8803 = vsel %vm4005, %v8792, %v8794
  %v8804 = vsel %vm4005, %v8794, %v8796
  %v8814 = vsel %vm4931, %v8776, 0
  %8816 = vmatprep.subr.mxu0 %v8798
  %8817 = vmatpush1.msra.mxu0 %v8797
  %8818 = vmatprep.subr.mxu0 %v8802
  %8819 = vmatpush1.msra.mxu0 %v8801
  %8820 = vmatprep.subr.mxu0 0.0
  %8821 = vmatpush1.msra.mxu0 0.0
  %8822 = vmatprep.subr.mxu0 0.0
  %8823 = vmatpush1.msra.mxu0 0.0
  %8824 = vmatprep.subr.mxu0 0.0
  %8825 = vmatpush1.msra.mxu0 0.0
  %8826 = vmatprep.subr.mxu0 0.0
  %8827 = vmatpush1.msra.mxu0 0.0
  %8828 = vmatprep.subr.mxu0 0.0
  %8829 = vmatpush1.msra.mxu0 0.0
  %8830 = vmatprep.subr.mxu0 0.0
  %8831 = vmatpush1.msra.mxu0 0.0
  %8832 = vmatprep.subr.mxu0 0.0
  %8833 = vmatpush1.msra.mxu0 0.0
  %8834 = vmatprep.subr.mxu0 0.0
  %8835 = vmatpush1.msra.mxu0 0.0
  %8836 = vmatprep.subr.mxu0 0.0
  %8837 = vmatpush1.msra.mxu0 0.0
  %8838 = vmatprep.subr.mxu0 0.0
  %8839 = vmatpush1.msra.mxu0 0.0
  %8840 = vmatprep.subr.mxu0 0.0
  %8841 = vmatpush1.msra.mxu0 0.0
  %8842 = vmatprep.subr.mxu0 0.0
  %8843 = vmatpush1.msra.mxu0 0.0
  %8844 = vmatprep.subr.mxu0 0.0
  %8845 = vmatpush1.msra.mxu0 0.0
  %8846 = vmatprep.subr.mxu0 0.0
  %8847 = vmatpush1.msra.mxu0 0.0
  %8848 = vmatprep.subr.mxu0 0.0
  %8849 = vmatpush1.msra.mxu0 0.0
  %8850 = vmatprep.subr.mxu0 0.0
  %8851 = vmatpush1.msra.mxu0 0.0
  %8852 = vmatprep.subr.mxu0 0.0
  %8853 = vmatpush1.msra.mxu0 0.0
  %8854 = vmatprep.subr.mxu0 0.0
  %8855 = vmatpush1.msra.mxu0 0.0
  %8856 = vmatprep.subr.mxu0 0.0
  %8857 = vmatpush1.msra.mxu0 0.0
  %8858 = vmatprep.subr.mxu0 0.0
  %8859 = vmatpush1.msra.mxu0 0.0
  %8860 = vmatprep.subr.mxu0 0.0
  %8861 = vmatpush1.msra.mxu0 0.0
  %8862 = vmatprep.subr.mxu0 0.0
  %8863 = vmatpush1.msra.mxu0 0.0
  %8864 = vmatprep.subr.mxu0 0.0
  %8865 = vmatpush1.msra.mxu0 0.0
  %8866 = vmatprep.subr.mxu0 0.0
  %8867 = vmatpush1.msra.mxu0 0.0
  %8868 = vmatprep.subr.mxu0 0.0
  %8869 = vmatpush1.msra.mxu0 0.0
  %8870 = vmatprep.subr.mxu0 0.0
  %8871 = vmatpush1.msra.mxu0 0.0
  %8872 = vmatprep.subr.mxu0 0.0
  %8873 = vmatpush1.msra.mxu0 0.0
  %8874 = vmatprep.subr.mxu0 0.0
  %8875 = vmatpush1.msra.mxu0 0.0
  %8876 = vmatprep.subr.mxu0 0.0
  %8877 = vmatpush1.msra.mxu0 0.0
  %8878 = vmatprep.subr.mxu0 0.0
  %8879 = vmatpush1.msra.mxu0 0.0
  %8880 = vmatprep.mubr.f32.mxu0 0.0
  %8881 = vmatmul.mubr.f32.gmra.mrb[0].mxu0 %v8814
  %v8882 = vpop.f32.mrb[0].mxu0
  %v8883 = vadd.f32 0.0, %v8882
  %v8884 = vpop.f32.mrb[0].mxu0
  %v8885 = vadd.f32 0.0, %v8884
  %8886 = vdwg.mxu0
  %8887 = vmatprep.subr.mxu0 %v8800
  %8888 = vmatpush1.msra.mxu0 %v8799
  %8889 = vmatprep.subr.mxu0 %v8804
  %8890 = vmatpush1.msra.mxu0 %v8803
  %8891 = vmatprep.subr.mxu0 0.0
  %8892 = vmatpush1.msra.mxu0 0.0
  %8893 = vmatprep.subr.mxu0 0.0
  %8894 = vmatpush1.msra.mxu0 0.0
  %8895 = vmatprep.subr.mxu0 0.0
  %8896 = vmatpush1.msra.mxu0 0.0
  %8897 = vmatprep.subr.mxu0 0.0
  %8898 = vmatpush1.msra.mxu0 0.0
  %8899 = vmatprep.subr.mxu0 0.0
  %8900 = vmatpush1.msra.mxu0 0.0
  %8901 = vmatprep.subr.mxu0 0.0
  %8902 = vmatpush1.msra.mxu0 0.0
  %8903 = vmatprep.subr.mxu0 0.0
  %8904 = vmatpush1.msra.mxu0 0.0
  %8905 = vmatprep.subr.mxu0 0.0
  %8906 = vmatpush1.msra.mxu0 0.0
  %8907 = vmatprep.subr.mxu0 0.0
  %8908 = vmatpush1.msra.mxu0 0.0
  %8909 = vmatprep.subr.mxu0 0.0
  %8910 = vmatpush1.msra.mxu0 0.0
  %8911 = vmatprep.subr.mxu0 0.0
  %8912 = vmatpush1.msra.mxu0 0.0
  %8913 = vmatprep.subr.mxu0 0.0
  %8914 = vmatpush1.msra.mxu0 0.0
  %8915 = vmatprep.subr.mxu0 0.0
  %8916 = vmatpush1.msra.mxu0 0.0
  %8917 = vmatprep.subr.mxu0 0.0
  %8918 = vmatpush1.msra.mxu0 0.0
  %8919 = vmatprep.subr.mxu0 0.0
  %8920 = vmatpush1.msra.mxu0 0.0
  %8921 = vmatprep.subr.mxu0 0.0
  %8922 = vmatpush1.msra.mxu0 0.0
  %8923 = vmatprep.subr.mxu0 0.0
  %8924 = vmatpush1.msra.mxu0 0.0
  %8925 = vmatprep.subr.mxu0 0.0
  %8926 = vmatpush1.msra.mxu0 0.0
  %8927 = vmatprep.subr.mxu0 0.0
  %8928 = vmatpush1.msra.mxu0 0.0
  %8929 = vmatprep.subr.mxu0 0.0
  %8930 = vmatpush1.msra.mxu0 0.0
  %8931 = vmatprep.subr.mxu0 0.0
  %8932 = vmatpush1.msra.mxu0 0.0
  %8933 = vmatprep.subr.mxu0 0.0
  %8934 = vmatpush1.msra.mxu0 0.0
  %8935 = vmatprep.subr.mxu0 0.0
  %8936 = vmatpush1.msra.mxu0 0.0
  %8937 = vmatprep.subr.mxu0 0.0
  %8938 = vmatpush1.msra.mxu0 0.0
  %8939 = vmatprep.subr.mxu0 0.0
  %8940 = vmatpush1.msra.mxu0 0.0
  %8941 = vmatprep.subr.mxu0 0.0
  %8942 = vmatpush1.msra.mxu0 0.0
  %8943 = vmatprep.subr.mxu0 0.0
  %8944 = vmatpush1.msra.mxu0 0.0
  %8945 = vmatprep.subr.mxu0 0.0
  %8946 = vmatpush1.msra.mxu0 0.0
  %8947 = vmatprep.subr.mxu0 0.0
  %8948 = vmatpush1.msra.mxu0 0.0
  %8949 = vmatprep.subr.mxu0 0.0
  %8950 = vmatpush1.msra.mxu0 0.0
  %8951 = vmatprep.mubr.f32.mxu0 0.0
  %8952 = vmatmul.mubr.f32.gmra.mrb[0].mxu0 %v8814
  %v8953 = vpop.f32.mrb[0].mxu0
  %v8954 = vadd.f32 0.0, %v8953
  %v8955 = vpop.f32.mrb[0].mxu0
  %v8956 = vadd.f32 0.0, %v8955
  %8957 = vdwg.mxu0
  %v8958 = vadd.f32 %v8771, %v8883
  %v8959 = vadd.f32 %v8772, %v8885
  %v8960 = vadd.f32 %v8773, %v8954
  %v8961 = vadd.f32 %v8774, %v8956
  %s8962 = scalar_lea.vmem %s3, 176
  %v8963 = vld [vmem:[%s8962] sm:$0xff]
  %8964 = vrot.lane.b32.xlu0 %v4875, 30
  %v8965 = vpop.permute.xlu0 %8964
  %8966 = vrot.lane.b32.xlu0 %v4876, 30
  %v8967 = vpop.permute.xlu0 %8966
  %8968 = vrot.lane.b32.xlu0 %v4877, 30
  %v8969 = vpop.permute.xlu0 %8968
  %8970 = vrot.lane.b32.xlu0 %v4878, 30
  %v8971 = vpop.permute.xlu0 %8970
  %8972 = vrot.lane.b32.xlu0 %v4879, 30
  %v8973 = vpop.permute.xlu0 %8972
  %8974 = vrot.lane.b32.xlu0 %v4880, 30
  %v8975 = vpop.permute.xlu0 %8974
  %8976 = vrot.lane.b32.xlu0 %v4881, 30
  %v8977 = vpop.permute.xlu0 %8976
  %8978 = vrot.lane.b32.xlu0 %v4882, 30
  %v8979 = vpop.permute.xlu0 %8978
  %8980 = vrot.lane.b32.xlu0 %v4883, 30
  %v8981 = vpop.permute.xlu0 %8980
  %8982 = vrot.lane.b32.xlu0 %v4884, 30
  %v8983 = vpop.permute.xlu0 %8982
  %v8984 = vsel %vm4195, %v8965, %v8967
  %v8985 = vsel %vm4195, %v8967, %v8969
  %v8986 = vsel %vm4195, %v8969, %v8971
  %v8987 = vsel %vm4195, %v8971, %v8973
  %v8988 = vsel %vm4195, %v8975, %v8977
  %v8989 = vsel %vm4195, %v8977, %v8979
  %v8990 = vsel %vm4195, %v8979, %v8981
  %v8991 = vsel %vm4195, %v8981, %v8983
  %v9001 = vsel %vm4931, %v8963, 0
  %9003 = vmatprep.subr.mxu0 %v8985
  %9004 = vmatpush1.msra.mxu0 %v8984
  %9005 = vmatprep.subr.mxu0 %v8989
  %9006 = vmatpush1.msra.mxu0 %v8988
  %9007 = vmatprep.subr.mxu0 0.0
  %9008 = vmatpush1.msra.mxu0 0.0
  %9009 = vmatprep.subr.mxu0 0.0
  %9010 = vmatpush1.msra.mxu0 0.0
  %9011 = vmatprep.subr.mxu0 0.0
  %9012 = vmatpush1.msra.mxu0 0.0
  %9013 = vmatprep.subr.mxu0 0.0
  %9014 = vmatpush1.msra.mxu0 0.0
  %9015 = vmatprep.subr.mxu0 0.0
  %9016 = vmatpush1.msra.mxu0 0.0
  %9017 = vmatprep.subr.mxu0 0.0
  %9018 = vmatpush1.msra.mxu0 0.0
  %9019 = vmatprep.subr.mxu0 0.0
  %9020 = vmatpush1.msra.mxu0 0.0
  %9021 = vmatprep.subr.mxu0 0.0
  %9022 = vmatpush1.msra.mxu0 0.0
  %9023 = vmatprep.subr.mxu0 0.0
  %9024 = vmatpush1.msra.mxu0 0.0
  %9025 = vmatprep.subr.mxu0 0.0
  %9026 = vmatpush1.msra.mxu0 0.0
  %9027 = vmatprep.subr.mxu0 0.0
  %9028 = vmatpush1.msra.mxu0 0.0
  %9029 = vmatprep.subr.mxu0 0.0
  %9030 = vmatpush1.msra.mxu0 0.0
  %9031 = vmatprep.subr.mxu0 0.0
  %9032 = vmatpush1.msra.mxu0 0.0
  %9033 = vmatprep.subr.mxu0 0.0
  %9034 = vmatpush1.msra.mxu0 0.0
  %9035 = vmatprep.subr.mxu0 0.0
  %9036 = vmatpush1.msra.mxu0 0.0
  %9037 = vmatprep.subr.mxu0 0.0
  %9038 = vmatpush1.msra.mxu0 0.0
  %9039 = vmatprep.subr.mxu0 0.0
  %9040 = vmatpush1.msra.mxu0 0.0
  %9041 = vmatprep.subr.mxu0 0.0
  %9042 = vmatpush1.msra.mxu0 0.0
  %9043 = vmatprep.subr.mxu0 0.0
  %9044 = vmatpush1.msra.mxu0 0.0
  %9045 = vmatprep.subr.mxu0 0.0
  %9046 = vmatpush1.msra.mxu0 0.0
  %9047 = vmatprep.subr.mxu0 0.0
  %9048 = vmatpush1.msra.mxu0 0.0
  %9049 = vmatprep.subr.mxu0 0.0
  %9050 = vmatpush1.msra.mxu0 0.0
  %9051 = vmatprep.subr.mxu0 0.0
  %9052 = vmatpush1.msra.mxu0 0.0
  %9053 = vmatprep.subr.mxu0 0.0
  %9054 = vmatpush1.msra.mxu0 0.0
  %9055 = vmatprep.subr.mxu0 0.0
  %9056 = vmatpush1.msra.mxu0 0.0
  %9057 = vmatprep.subr.mxu0 0.0
  %9058 = vmatpush1.msra.mxu0 0.0
  %9059 = vmatprep.subr.mxu0 0.0
  %9060 = vmatpush1.msra.mxu0 0.0
  %9061 = vmatprep.subr.mxu0 0.0
  %9062 = vmatpush1.msra.mxu0 0.0
  %9063 = vmatprep.subr.mxu0 0.0
  %9064 = vmatpush1.msra.mxu0 0.0
  %9065 = vmatprep.subr.mxu0 0.0
  %9066 = vmatpush1.msra.mxu0 0.0
  %9067 = vmatprep.mubr.f32.mxu0 0.0
  %9068 = vmatmul.mubr.f32.gmra.mrb[0].mxu0 %v9001
  %v9069 = vpop.f32.mrb[0].mxu0
  %v9070 = vadd.f32 0.0, %v9069
  %v9071 = vpop.f32.mrb[0].mxu0
  %v9072 = vadd.f32 0.0, %v9071
  %9073 = vdwg.mxu0
  %9074 = vmatprep.subr.mxu0 %v8987
  %9075 = vmatpush1.msra.mxu0 %v8986
  %9076 = vmatprep.subr.mxu0 %v8991
  %9077 = vmatpush1.msra.mxu0 %v8990
  %9078 = vmatprep.subr.mxu0 0.0
  %9079 = vmatpush1.msra.mxu0 0.0
  %9080 = vmatprep.subr.mxu0 0.0
  %9081 = vmatpush1.msra.mxu0 0.0
  %9082 = vmatprep.subr.mxu0 0.0
  %9083 = vmatpush1.msra.mxu0 0.0
  %9084 = vmatprep.subr.mxu0 0.0
  %9085 = vmatpush1.msra.mxu0 0.0
  %9086 = vmatprep.subr.mxu0 0.0
  %9087 = vmatpush1.msra.mxu0 0.0
  %9088 = vmatprep.subr.mxu0 0.0
  %9089 = vmatpush1.msra.mxu0 0.0
  %9090 = vmatprep.subr.mxu0 0.0
  %9091 = vmatpush1.msra.mxu0 0.0
  %9092 = vmatprep.subr.mxu0 0.0
  %9093 = vmatpush1.msra.mxu0 0.0
  %9094 = vmatprep.subr.mxu0 0.0
  %9095 = vmatpush1.msra.mxu0 0.0
  %9096 = vmatprep.subr.mxu0 0.0
  %9097 = vmatpush1.msra.mxu0 0.0
  %9098 = vmatprep.subr.mxu0 0.0
  %9099 = vmatpush1.msra.mxu0 0.0
  %9100 = vmatprep.subr.mxu0 0.0
  %9101 = vmatpush1.msra.mxu0 0.0
  %9102 = vmatprep.subr.mxu0 0.0
  %9103 = vmatpush1.msra.mxu0 0.0
  %9104 = vmatprep.subr.mxu0 0.0
  %9105 = vmatpush1.msra.mxu0 0.0
  %9106 = vmatprep.subr.mxu0 0.0
  %9107 = vmatpush1.msra.mxu0 0.0
  %9108 = vmatprep.subr.mxu0 0.0
  %9109 = vmatpush1.msra.mxu0 0.0
  %9110 = vmatprep.subr.mxu0 0.0
  %9111 = vmatpush1.msra.mxu0 0.0
  %9112 = vmatprep.subr.mxu0 0.0
  %9113 = vmatpush1.msra.mxu0 0.0
  %9114 = vmatprep.subr.mxu0 0.0
  %9115 = vmatpush1.msra.mxu0 0.0
  %9116 = vmatprep.subr.mxu0 0.0
  %9117 = vmatpush1.msra.mxu0 0.0
  %9118 = vmatprep.subr.mxu0 0.0
  %9119 = vmatpush1.msra.mxu0 0.0
  %9120 = vmatprep.subr.mxu0 0.0
  %9121 = vmatpush1.msra.mxu0 0.0
  %9122 = vmatprep.subr.mxu0 0.0
  %9123 = vmatpush1.msra.mxu0 0.0
  %9124 = vmatprep.subr.mxu0 0.0
  %9125 = vmatpush1.msra.mxu0 0.0
  %9126 = vmatprep.subr.mxu0 0.0
  %9127 = vmatpush1.msra.mxu0 0.0
  %9128 = vmatprep.subr.mxu0 0.0
  %9129 = vmatpush1.msra.mxu0 0.0
  %9130 = vmatprep.subr.mxu0 0.0
  %9131 = vmatpush1.msra.mxu0 0.0
  %9132 = vmatprep.subr.mxu0 0.0
  %9133 = vmatpush1.msra.mxu0 0.0
  %9134 = vmatprep.subr.mxu0 0.0
  %9135 = vmatpush1.msra.mxu0 0.0
  %9136 = vmatprep.subr.mxu0 0.0
  %9137 = vmatpush1.msra.mxu0 0.0
  %9138 = vmatprep.mubr.f32.mxu0 0.0
  %9139 = vmatmul.mubr.f32.gmra.mrb[0].mxu0 %v9001
  %v9140 = vpop.f32.mrb[0].mxu0
  %v9141 = vadd.f32 0.0, %v9140
  %v9142 = vpop.f32.mrb[0].mxu0
  %v9143 = vadd.f32 0.0, %v9142
  %9144 = vdwg.mxu0
  %v9145 = vadd.f32 %v8958, %v9070
  %v9146 = vadd.f32 %v8959, %v9072
  %v9147 = vadd.f32 %v8960, %v9141
  %v9148 = vadd.f32 %v8961, %v9143
  %s9149 = scalar_lea.vmem %s3, 184
  %v9150 = vld [vmem:[%s9149] sm:$0xff]
  %9151 = vrot.lane.b32.xlu0 %v4875, 29
  %v9152 = vpop.permute.xlu0 %9151
  %9153 = vrot.lane.b32.xlu0 %v4876, 29
  %v9154 = vpop.permute.xlu0 %9153
  %9155 = vrot.lane.b32.xlu0 %v4877, 29
  %v9156 = vpop.permute.xlu0 %9155
  %9157 = vrot.lane.b32.xlu0 %v4878, 29
  %v9158 = vpop.permute.xlu0 %9157
  %9159 = vrot.lane.b32.xlu0 %v4879, 29
  %v9160 = vpop.permute.xlu0 %9159
  %9161 = vrot.lane.b32.xlu0 %v4880, 29
  %v9162 = vpop.permute.xlu0 %9161
  %9163 = vrot.lane.b32.xlu0 %v4881, 29
  %v9164 = vpop.permute.xlu0 %9163
  %9165 = vrot.lane.b32.xlu0 %v4882, 29
  %v9166 = vpop.permute.xlu0 %9165
  %9167 = vrot.lane.b32.xlu0 %v4883, 29
  %v9168 = vpop.permute.xlu0 %9167
  %9169 = vrot.lane.b32.xlu0 %v4884, 29
  %v9170 = vpop.permute.xlu0 %9169
  %v9171 = vsel %vm4385, %v9152, %v9154
  %v9172 = vsel %vm4385, %v9154, %v9156
  %v9173 = vsel %vm4385, %v9156, %v9158
  %v9174 = vsel %vm4385, %v9158, %v9160
  %v9175 = vsel %vm4385, %v9162, %v9164
  %v9176 = vsel %vm4385, %v9164, %v9166
  %v9177 = vsel %vm4385, %v9166, %v9168
  %v9178 = vsel %vm4385, %v9168, %v9170
  %v9188 = vsel %vm4931, %v9150, 0
  %9190 = vmatprep.subr.mxu0 %v9172
  %9191 = vmatpush1.msra.mxu0 %v9171
  %9192 = vmatprep.subr.mxu0 %v9176
  %9193 = vmatpush1.msra.mxu0 %v9175
  %9194 = vmatprep.subr.mxu0 0.0
  %9195 = vmatpush1.msra.mxu0 0.0
  %9196 = vmatprep.subr.mxu0 0.0
  %9197 = vmatpush1.msra.mxu0 0.0
  %9198 = vmatprep.subr.mxu0 0.0
  %9199 = vmatpush1.msra.mxu0 0.0
  %9200 = vmatprep.subr.mxu0 0.0
  %9201 = vmatpush1.msra.mxu0 0.0
  %9202 = vmatprep.subr.mxu0 0.0
  %9203 = vmatpush1.msra.mxu0 0.0
  %9204 = vmatprep.subr.mxu0 0.0
  %9205 = vmatpush1.msra.mxu0 0.0
  %9206 = vmatprep.subr.mxu0 0.0
  %9207 = vmatpush1.msra.mxu0 0.0
  %9208 = vmatprep.subr.mxu0 0.0
  %9209 = vmatpush1.msra.mxu0 0.0
  %9210 = vmatprep.subr.mxu0 0.0
  %9211 = vmatpush1.msra.mxu0 0.0
  %9212 = vmatprep.subr.mxu0 0.0
  %9213 = vmatpush1.msra.mxu0 0.0
  %9214 = vmatprep.subr.mxu0 0.0
  %9215 = vmatpush1.msra.mxu0 0.0
  %9216 = vmatprep.subr.mxu0 0.0
  %9217 = vmatpush1.msra.mxu0 0.0
  %9218 = vmatprep.subr.mxu0 0.0
  %9219 = vmatpush1.msra.mxu0 0.0
  %9220 = vmatprep.subr.mxu0 0.0
  %9221 = vmatpush1.msra.mxu0 0.0
  %9222 = vmatprep.subr.mxu0 0.0
  %9223 = vmatpush1.msra.mxu0 0.0
  %9224 = vmatprep.subr.mxu0 0.0
  %9225 = vmatpush1.msra.mxu0 0.0
  %9226 = vmatprep.subr.mxu0 0.0
  %9227 = vmatpush1.msra.mxu0 0.0
  %9228 = vmatprep.subr.mxu0 0.0
  %9229 = vmatpush1.msra.mxu0 0.0
  %9230 = vmatprep.subr.mxu0 0.0
  %9231 = vmatpush1.msra.mxu0 0.0
  %9232 = vmatprep.subr.mxu0 0.0
  %9233 = vmatpush1.msra.mxu0 0.0
  %9234 = vmatprep.subr.mxu0 0.0
  %9235 = vmatpush1.msra.mxu0 0.0
  %9236 = vmatprep.subr.mxu0 0.0
  %9237 = vmatpush1.msra.mxu0 0.0
  %9238 = vmatprep.subr.mxu0 0.0
  %9239 = vmatpush1.msra.mxu0 0.0
  %9240 = vmatprep.subr.mxu0 0.0
  %9241 = vmatpush1.msra.mxu0 0.0
  %9242 = vmatprep.subr.mxu0 0.0
  %9243 = vmatpush1.msra.mxu0 0.0
  %9244 = vmatprep.subr.mxu0 0.0
  %9245 = vmatpush1.msra.mxu0 0.0
  %9246 = vmatprep.subr.mxu0 0.0
  %9247 = vmatpush1.msra.mxu0 0.0
  %9248 = vmatprep.subr.mxu0 0.0
  %9249 = vmatpush1.msra.mxu0 0.0
  %9250 = vmatprep.subr.mxu0 0.0
  %9251 = vmatpush1.msra.mxu0 0.0
  %9252 = vmatprep.subr.mxu0 0.0
  %9253 = vmatpush1.msra.mxu0 0.0
  %9254 = vmatprep.mubr.f32.mxu0 0.0
  %9255 = vmatmul.mubr.f32.gmra.mrb[0].mxu0 %v9188
  %v9256 = vpop.f32.mrb[0].mxu0
  %v9257 = vadd.f32 0.0, %v9256
  %v9258 = vpop.f32.mrb[0].mxu0
  %v9259 = vadd.f32 0.0, %v9258
  %9260 = vdwg.mxu0
  %9261 = vmatprep.subr.mxu0 %v9174
  %9262 = vmatpush1.msra.mxu0 %v9173
  %9263 = vmatprep.subr.mxu0 %v9178
  %9264 = vmatpush1.msra.mxu0 %v9177
  %9265 = vmatprep.subr.mxu0 0.0
  %9266 = vmatpush1.msra.mxu0 0.0
  %9267 = vmatprep.subr.mxu0 0.0
  %9268 = vmatpush1.msra.mxu0 0.0
  %9269 = vmatprep.subr.mxu0 0.0
  %9270 = vmatpush1.msra.mxu0 0.0
  %9271 = vmatprep.subr.mxu0 0.0
  %9272 = vmatpush1.msra.mxu0 0.0
  %9273 = vmatprep.subr.mxu0 0.0
  %9274 = vmatpush1.msra.mxu0 0.0
  %9275 = vmatprep.subr.mxu0 0.0
  %9276 = vmatpush1.msra.mxu0 0.0
  %9277 = vmatprep.subr.mxu0 0.0
  %9278 = vmatpush1.msra.mxu0 0.0
  %9279 = vmatprep.subr.mxu0 0.0
  %9280 = vmatpush1.msra.mxu0 0.0
  %9281 = vmatprep.subr.mxu0 0.0
  %9282 = vmatpush1.msra.mxu0 0.0
  %9283 = vmatprep.subr.mxu0 0.0
  %9284 = vmatpush1.msra.mxu0 0.0
  %9285 = vmatprep.subr.mxu0 0.0
  %9286 = vmatpush1.msra.mxu0 0.0
  %9287 = vmatprep.subr.mxu0 0.0
  %9288 = vmatpush1.msra.mxu0 0.0
  %9289 = vmatprep.subr.mxu0 0.0
  %9290 = vmatpush1.msra.mxu0 0.0
  %9291 = vmatprep.subr.mxu0 0.0
  %9292 = vmatpush1.msra.mxu0 0.0
  %9293 = vmatprep.subr.mxu0 0.0
  %9294 = vmatpush1.msra.mxu0 0.0
  %9295 = vmatprep.subr.mxu0 0.0
  %9296 = vmatpush1.msra.mxu0 0.0
  %9297 = vmatprep.subr.mxu0 0.0
  %9298 = vmatpush1.msra.mxu0 0.0
  %9299 = vmatprep.subr.mxu0 0.0
  %9300 = vmatpush1.msra.mxu0 0.0
  %9301 = vmatprep.subr.mxu0 0.0
  %9302 = vmatpush1.msra.mxu0 0.0
  %9303 = vmatprep.subr.mxu0 0.0
  %9304 = vmatpush1.msra.mxu0 0.0
  %9305 = vmatprep.subr.mxu0 0.0
  %9306 = vmatpush1.msra.mxu0 0.0
  %9307 = vmatprep.subr.mxu0 0.0
  %9308 = vmatpush1.msra.mxu0 0.0
  %9309 = vmatprep.subr.mxu0 0.0
  %9310 = vmatpush1.msra.mxu0 0.0
  %9311 = vmatprep.subr.mxu0 0.0
  %9312 = vmatpush1.msra.mxu0 0.0
  %9313 = vmatprep.subr.mxu0 0.0
  %9314 = vmatpush1.msra.mxu0 0.0
  %9315 = vmatprep.subr.mxu0 0.0
  %9316 = vmatpush1.msra.mxu0 0.0
  %9317 = vmatprep.subr.mxu0 0.0
  %9318 = vmatpush1.msra.mxu0 0.0
  %9319 = vmatprep.subr.mxu0 0.0
  %9320 = vmatpush1.msra.mxu0 0.0
  %9321 = vmatprep.subr.mxu0 0.0
  %9322 = vmatpush1.msra.mxu0 0.0
  %9323 = vmatprep.subr.mxu0 0.0
  %9324 = vmatpush1.msra.mxu0 0.0
  %9325 = vmatprep.mubr.f32.mxu0 0.0
  %9326 = vmatmul.mubr.f32.gmra.mrb[0].mxu0 %v9188
  %v9327 = vpop.f32.mrb[0].mxu0
  %v9328 = vadd.f32 0.0, %v9327
  %v9329 = vpop.f32.mrb[0].mxu0
  %v9330 = vadd.f32 0.0, %v9329
  %9331 = vdwg.mxu0
  %v9332 = vadd.f32 %v9145, %v9257
  %v9333 = vadd.f32 %v9146, %v9259
  %v9334 = vadd.f32 %v9147, %v9328
  %v9335 = vadd.f32 %v9148, %v9330
  %s9336 = scalar_lea.vmem %s3, 192
  %v9337 = vld [vmem:[%s9336] sm:$0xff]
  %9338 = vrot.lane.b32.xlu0 %v4875, 28
  %v9339 = vpop.permute.xlu0 %9338
  %9340 = vrot.lane.b32.xlu0 %v4876, 28
  %v9341 = vpop.permute.xlu0 %9340
  %9342 = vrot.lane.b32.xlu0 %v4877, 28
  %v9343 = vpop.permute.xlu0 %9342
  %9344 = vrot.lane.b32.xlu0 %v4878, 28
  %v9345 = vpop.permute.xlu0 %9344
  %9346 = vrot.lane.b32.xlu0 %v4879, 28
  %v9347 = vpop.permute.xlu0 %9346
  %9348 = vrot.lane.b32.xlu0 %v4880, 28
  %v9349 = vpop.permute.xlu0 %9348
  %9350 = vrot.lane.b32.xlu0 %v4881, 28
  %v9351 = vpop.permute.xlu0 %9350
  %9352 = vrot.lane.b32.xlu0 %v4882, 28
  %v9353 = vpop.permute.xlu0 %9352
  %9354 = vrot.lane.b32.xlu0 %v4883, 28
  %v9355 = vpop.permute.xlu0 %9354
  %9356 = vrot.lane.b32.xlu0 %v4884, 28
  %v9357 = vpop.permute.xlu0 %9356
  %v9358 = vsel %vm4575, %v9339, %v9341
  %v9359 = vsel %vm4575, %v9341, %v9343
  %v9360 = vsel %vm4575, %v9343, %v9345
  %v9361 = vsel %vm4575, %v9345, %v9347
  %v9362 = vsel %vm4575, %v9349, %v9351
  %v9363 = vsel %vm4575, %v9351, %v9353
  %v9364 = vsel %vm4575, %v9353, %v9355
  %v9365 = vsel %vm4575, %v9355, %v9357
  %v9375 = vsel %vm4931, %v9337, 0
  %9377 = vmatprep.subr.mxu0 %v9359
  %9378 = vmatpush1.msra.mxu0 %v9358
  %9379 = vmatprep.subr.mxu0 %v9363
  %9380 = vmatpush1.msra.mxu0 %v9362
  %9381 = vmatprep.subr.mxu0 0.0
  %9382 = vmatpush1.msra.mxu0 0.0
  %9383 = vmatprep.subr.mxu0 0.0
  %9384 = vmatpush1.msra.mxu0 0.0
  %9385 = vmatprep.subr.mxu0 0.0
  %9386 = vmatpush1.msra.mxu0 0.0
  %9387 = vmatprep.subr.mxu0 0.0
  %9388 = vmatpush1.msra.mxu0 0.0
  %9389 = vmatprep.subr.mxu0 0.0
  %9390 = vmatpush1.msra.mxu0 0.0
  %9391 = vmatprep.subr.mxu0 0.0
  %9392 = vmatpush1.msra.mxu0 0.0
  %9393 = vmatprep.subr.mxu0 0.0
  %9394 = vmatpush1.msra.mxu0 0.0
  %9395 = vmatprep.subr.mxu0 0.0
  %9396 = vmatpush1.msra.mxu0 0.0
  %9397 = vmatprep.subr.mxu0 0.0
  %9398 = vmatpush1.msra.mxu0 0.0
  %9399 = vmatprep.subr.mxu0 0.0
  %9400 = vmatpush1.msra.mxu0 0.0
  %9401 = vmatprep.subr.mxu0 0.0
  %9402 = vmatpush1.msra.mxu0 0.0
  %9403 = vmatprep.subr.mxu0 0.0
  %9404 = vmatpush1.msra.mxu0 0.0
  %9405 = vmatprep.subr.mxu0 0.0
  %9406 = vmatpush1.msra.mxu0 0.0
  %9407 = vmatprep.subr.mxu0 0.0
  %9408 = vmatpush1.msra.mxu0 0.0
  %9409 = vmatprep.subr.mxu0 0.0
  %9410 = vmatpush1.msra.mxu0 0.0
  %9411 = vmatprep.subr.mxu0 0.0
  %9412 = vmatpush1.msra.mxu0 0.0
  %9413 = vmatprep.subr.mxu0 0.0
  %9414 = vmatpush1.msra.mxu0 0.0
  %9415 = vmatprep.subr.mxu0 0.0
  %9416 = vmatpush1.msra.mxu0 0.0
  %9417 = vmatprep.subr.mxu0 0.0
  %9418 = vmatpush1.msra.mxu0 0.0
  %9419 = vmatprep.subr.mxu0 0.0
  %9420 = vmatpush1.msra.mxu0 0.0
  %9421 = vmatprep.subr.mxu0 0.0
  %9422 = vmatpush1.msra.mxu0 0.0
  %9423 = vmatprep.subr.mxu0 0.0
  %9424 = vmatpush1.msra.mxu0 0.0
  %9425 = vmatprep.subr.mxu0 0.0
  %9426 = vmatpush1.msra.mxu0 0.0
  %9427 = vmatprep.subr.mxu0 0.0
  %9428 = vmatpush1.msra.mxu0 0.0
  %9429 = vmatprep.subr.mxu0 0.0
  %9430 = vmatpush1.msra.mxu0 0.0
  %9431 = vmatprep.subr.mxu0 0.0
  %9432 = vmatpush1.msra.mxu0 0.0
  %9433 = vmatprep.subr.mxu0 0.0
  %9434 = vmatpush1.msra.mxu0 0.0
  %9435 = vmatprep.subr.mxu0 0.0
  %9436 = vmatpush1.msra.mxu0 0.0
  %9437 = vmatprep.subr.mxu0 0.0
  %9438 = vmatpush1.msra.mxu0 0.0
  %9439 = vmatprep.subr.mxu0 0.0
  %9440 = vmatpush1.msra.mxu0 0.0
  %9441 = vmatprep.mubr.f32.mxu0 0.0
  %9442 = vmatmul.mubr.f32.gmra.mrb[0].mxu0 %v9375
  %v9443 = vpop.f32.mrb[0].mxu0
  %v9444 = vadd.f32 0.0, %v9443
  %v9445 = vpop.f32.mrb[0].mxu0
  %v9446 = vadd.f32 0.0, %v9445
  %9447 = vdwg.mxu0
  %9448 = vmatprep.subr.mxu0 %v9361
  %9449 = vmatpush1.msra.mxu0 %v9360
  %9450 = vmatprep.subr.mxu0 %v9365
  %9451 = vmatpush1.msra.mxu0 %v9364
  %9452 = vmatprep.subr.mxu0 0.0
  %9453 = vmatpush1.msra.mxu0 0.0
  %9454 = vmatprep.subr.mxu0 0.0
  %9455 = vmatpush1.msra.mxu0 0.0
  %9456 = vmatprep.subr.mxu0 0.0
  %9457 = vmatpush1.msra.mxu0 0.0
  %9458 = vmatprep.subr.mxu0 0.0
  %9459 = vmatpush1.msra.mxu0 0.0
  %9460 = vmatprep.subr.mxu0 0.0
  %9461 = vmatpush1.msra.mxu0 0.0
  %9462 = vmatprep.subr.mxu0 0.0
  %9463 = vmatpush1.msra.mxu0 0.0
  %9464 = vmatprep.subr.mxu0 0.0
  %9465 = vmatpush1.msra.mxu0 0.0
  %9466 = vmatprep.subr.mxu0 0.0
  %9467 = vmatpush1.msra.mxu0 0.0
  %9468 = vmatprep.subr.mxu0 0.0
  %9469 = vmatpush1.msra.mxu0 0.0
  %9470 = vmatprep.subr.mxu0 0.0
  %9471 = vmatpush1.msra.mxu0 0.0
  %9472 = vmatprep.subr.mxu0 0.0
  %9473 = vmatpush1.msra.mxu0 0.0
  %9474 = vmatprep.subr.mxu0 0.0
  %9475 = vmatpush1.msra.mxu0 0.0
  %9476 = vmatprep.subr.mxu0 0.0
  %9477 = vmatpush1.msra.mxu0 0.0
  %9478 = vmatprep.subr.mxu0 0.0
  %9479 = vmatpush1.msra.mxu0 0.0
  %9480 = vmatprep.subr.mxu0 0.0
  %9481 = vmatpush1.msra.mxu0 0.0
  %9482 = vmatprep.subr.mxu0 0.0
  %9483 = vmatpush1.msra.mxu0 0.0
  %9484 = vmatprep.subr.mxu0 0.0
  %9485 = vmatpush1.msra.mxu0 0.0
  %9486 = vmatprep.subr.mxu0 0.0
  %9487 = vmatpush1.msra.mxu0 0.0
  %9488 = vmatprep.subr.mxu0 0.0
  %9489 = vmatpush1.msra.mxu0 0.0
  %9490 = vmatprep.subr.mxu0 0.0
  %9491 = vmatpush1.msra.mxu0 0.0
  %9492 = vmatprep.subr.mxu0 0.0
  %9493 = vmatpush1.msra.mxu0 0.0
  %9494 = vmatprep.subr.mxu0 0.0
  %9495 = vmatpush1.msra.mxu0 0.0
  %9496 = vmatprep.subr.mxu0 0.0
  %9497 = vmatpush1.msra.mxu0 0.0
  %9498 = vmatprep.subr.mxu0 0.0
  %9499 = vmatpush1.msra.mxu0 0.0
  %9500 = vmatprep.subr.mxu0 0.0
  %9501 = vmatpush1.msra.mxu0 0.0
  %9502 = vmatprep.subr.mxu0 0.0
  %9503 = vmatpush1.msra.mxu0 0.0
  %9504 = vmatprep.subr.mxu0 0.0
  %9505 = vmatpush1.msra.mxu0 0.0
  %9506 = vmatprep.subr.mxu0 0.0
  %9507 = vmatpush1.msra.mxu0 0.0
  %9508 = vmatprep.subr.mxu0 0.0
  %9509 = vmatpush1.msra.mxu0 0.0
  %9510 = vmatprep.subr.mxu0 0.0
  %9511 = vmatpush1.msra.mxu0 0.0
  %9512 = vmatprep.mubr.f32.mxu0 0.0
  %9513 = vmatmul.mubr.f32.gmra.mrb[0].mxu0 %v9375
  %v9514 = vpop.f32.mrb[0].mxu0
  %v9515 = vadd.f32 0.0, %v9514
  %v9516 = vpop.f32.mrb[0].mxu0
  %v9517 = vadd.f32 0.0, %v9516
  %9518 = vdwg.mxu0
  %v9519 = vadd.f32 %v9332, %v9444
  %v9520 = vadd.f32 %v9333, %v9446
  %v9521 = vadd.f32 %v9334, %v9515
  %v9522 = vadd.f32 %v9335, %v9517
  %v9523 = vld [vmem:[%s4] sm:$0xff]
  %9525 = vset.pattern.permute.xlu0 0
  %9526 = vperm.xlu0 %9525, %v9523
  %v9527 = vpop.permute.xlu0 %9526
  %v9529 = vadd.f32 %v9519, %v9527
  %v9530 = vadd.f32 %v9520, %v9527
  %v9531 = vadd.f32 %v9521, %v9527
  %v9532 = vadd.f32 %v9522, %v9527
  %v9533 = vmul.f32 %v9529, 0.5
  %v9534 = vmul.f32 %v9530, 0.5
  %v9535 = vmul.f32 %v9531, 0.5
  %v9536 = vmul.f32 %v9532, 0.5
  %v9537 = vmul.f32 %v9529, 0.70710677
  %v9538 = vmul.f32 %v9530, 0.70710677
  %v9539 = vmul.f32 %v9531, 0.70710677
  %v9540 = vmul.f32 %v9532, 0.70710677
  %v9541 = verf.f32.pop %v9537
  %v9542 = verf.f32.pop %v9538
  %v9543 = verf.f32.pop %v9539
  %v9544 = verf.f32.pop %v9540
  %v9545 = vadd.f32 %v9541, 1.0
  %v9546 = vadd.f32 %v9542, 1.0
  %v9547 = vadd.f32 %v9543, 1.0
  %v9548 = vadd.f32 %v9544, 1.0
  %v9549 = vmul.f32 %v9533, %v9545
  %v9550 = vmul.f32 %v9534, %v9546
  %v9551 = vmul.f32 %v9535, %v9547
  %v9552 = vmul.f32 %v9536, %v9548
  %9553 = vst [vmem:[%s6] sm:$0xff] %v9549
  %9554 = vst [vmem:[%s6 + $0x8] sm:$0xff] %v9550
  %9555 = vst [vmem:[%s6 + $0x10] sm:$0xff] %v9551
  %9556 = vst [vmem:[%s6 + $0x18] sm:$0xff] %v9552
  // Predicated region
  $region26: #{forward.1} parent=0 // pred_check
    _
  $region27: #{forward.1} parent=0 // pred_check_branch
    %9558 = sbr.rel (0) target = $region29
  $region28: #{forward.1} parent=0 // pred_region
    _
  $region29: #{forward.1} parent=0 // pred_fallthru
    _
  // Predicated region
  $region30: #{forward.1} parent=0 // pred_check
    _
  $region31: #{forward.1} parent=0 // pred_check_branch
    %9560 = sbr.rel (0) target = $region33
  $region32: #{forward.1} parent=0 // pred_region
    _
  $region33: #{forward.1} parent=0 // pred_fallthru
    _

</llo_original>
